<compile_context>
chip_gen: v7x
topology: tpu7x:2x2x1
jax: 0.10.0
libtpu: 0.0.40
codegen_flags: <defaults>
</compile_context>

<pallas_src>
import functools

import numpy as np
import jax
import jax.numpy as jnp
from jax.experimental import pallas as pl
from jax.experimental.pallas import tpu as pltpu


def _round_up(x, m=128):
    return ((x + m - 1) // m) * m


def _const_spec(shape):
    nd = len(shape)
    return pl.BlockSpec(shape, lambda t, _nd=nd: (0,) * _nd)


def _conv_shift_masks(h, w, hwp, k):
    """Per-tap lane-shift amounts + in-bounds masks for a k x k, pad=k//2 conv
    applied to a zero-padded (H, W) map flattened to length hwp."""
    p = k // 2
    q = np.arange(hwp)
    i, j = q // w, q % w
    masks, shifts = [], []
    for dy in range(-p, p + 1):
        for dx in range(-p, p + 1):
            off = dy * w + dx
            shifts.append(int((-off) % hwp))
            ok = ((i < h) & (i + dy >= 0) & (i + dy < h)
                  & (j + dx >= 0) & (j + dx < w))
            masks.append(ok.astype(np.float32))
    return np.stack(masks, axis=0), shifts


# ----------------------------- fused decoder kernel --------------------------

def _decoder_kernel(
        # inputs (resident in VMEM across the whole grid)
        feats_ref, mask_ref, lay_ref, offm_ref,
        wp_ref, bp_ref, ws_ref, bs_ref,
        wg1_ref, bg1_ref, wq_ref, bq_ref,
        wcov_ref, bcov_ref, wlg_ref, blg_ref,
        wg2_ref, bg2_ref, wc1_ref, bc1_ref, wc2_ref, bc2_ref,
        # per-step outputs
        cls_ref, logit_ref,
        # loop-carried VMEM scratch
        pf_s, st_s, ctx_s, sw_s, cw_s, cat_s,
        *, hw_true, cfp, hdp, cpp, k2, shifts):
    t = pl.program_id(0)
    bsz, hwp, _ = feats_ref.shape

    # ---------------- init_state (fused, runs only at t == 0) ----------------
    @pl.when(t == 0)
    def _init():
        f = feats_ref[...]                                  # (B, HWp, Cfp)
        m = mask_ref[...]                                   # (B, HWp)
        f2 = f.reshape(bsz * hwp, cfp)
        pf = jnp.dot(f2, wp_ref[...], preferred_element_type=jnp.float32)
        pf = pf.reshape(bsz, hwp, cpp) + bp_ref[...][None]
        pf_s[...] = pf * m[:, :, None]                      # masked projection
        sp = jnp.dot(f2, ws_ref[...], preferred_element_type=jnp.float32)
        sp = sp.reshape(bsz, hwp, hdp)
        inv_msum = pl.reciprocal(
            jnp.maximum(jnp.sum(m, axis=1, keepdims=True), 1.0), approx=True)
        # reference sums per-pixel (proj + bias) over the true H*W pixels
        st_s[...] = (jnp.sum(sp, axis=1) + float(hw_true) * bs_ref[...]) * inv_msum
        ctx_s[...] = jnp.sum(f, axis=1) * inv_msum
        sw_s[...] = jnp.zeros_like(sw_s)
        cw_s[...] = jnp.zeros_like(cw_s)

    ctx = ctx_s[...]                                        # (B, Cfp)
    st = st_s[...]                                          # (B, Hdp)
    sw = sw_s[...]                                          # (B, HWp)
    cw = cw_s[...]                                          # (B, HWp)
    feats = feats_ref[...]                                  # (B, HWp, Cfp)
    mask = mask_ref[...]                                    # (B, HWp)

    def gru(x, h, wg_ref, bg_ref):
        # One fused matmul: cat([x, h]) @ Wg -> [r+, z+, gi_n, gh_n] blocks.
        cat_s[:, :cfp] = x
        cat_s[:, cfp:] = h
        g = jnp.dot(cat_s[...], wg_ref[...],
                    preferred_element_type=jnp.float32) + bg_ref[...]
        r = jax.nn.sigmoid(g[:, 0:hdp])
        z = jax.nn.sigmoid(g[:, hdp:2 * hdp])
        n = jnp.tanh(g[:, 2 * hdp:3 * hdp] + r * g[:, 3 * hdp:4 * hdp])
        return (1.0 - z) * n + z * h

    # lm_rnn1
    s1 = gru(ctx, st, wg1_ref, bg1_ref)

    # ------------------- ImageAttention (training branch) --------------------
    # fused query transform on cat([context, new_state])
    cat_s[:, :cfp] = ctx
    cat_s[:, cfp:] = s1
    q = jnp.dot(cat_s[...], wq_ref[...],
                preferred_element_type=jnp.float32) + bq_ref[...]     # (B, Cpp)

    # k x k coverage convs via XLU rolls of the flat attention maps + MAC.
    def rolled(x, s):
        return x if s == 0 else pltpu.roll(x, shift=s, axis=1)

    conv = jnp.zeros((bsz, hwp, cpp), jnp.float32)
    for o in range(k2):
        rmask = offm_ref[o:o + 1, :]                         # (1, HWp)
        ssw = rolled(sw, shifts[o]) * rmask                  # zero-padded shift
        scw = rolled(cw, shifts[o]) * rmask
        conv = (conv
                + ssw[:, :, None] * wcov_ref[o:o + 1][None]
                + scw[:, :, None] * wcov_ref[k2 + o:k2 + o + 1][None])

    fusion = pf_s[...] + q[:, None, :] + conv + bcov_ref[...][None]
    tfuse = jnp.tanh(fusion)
    # logit_transform (1x1 conv, single output channel).  Kept as multiply +
    # lane reduce: a (B*HW, Cp) @ (Cp, 1) matmul would need a (B*HW,1)->(B,HW)
    # relayout that costs more than the reduction it saves.
    logit = jnp.sum(tfuse * wlg_ref[...][None], axis=2) + blg_ref[...]  # (B,HWp)
    logit_ref[0, :, :] = logit

    # masked softmax over H*W (kept in f32)
    masked = logit - (1.0 - mask) * 1e8
    e = jnp.exp(masked - jnp.max(masked, axis=1, keepdims=True))
    sw_s[...] = e * pl.reciprocal(jnp.sum(e, axis=1, keepdims=True), approx=True)

    # training-mode context: mean of feats over pixels where layout == t
    lay = (lay_ref[...] == t).astype(jnp.float32)            # (B, HWp)
    cnt = jnp.sum(lay, axis=1, keepdims=True)
    ctx_sum = jnp.sum(feats * lay[:, :, None], axis=1)       # (B, Cfp)
    nctx = jnp.where(cnt > 0.0,
                     ctx_sum * pl.reciprocal(jnp.maximum(cnt, 1.0), approx=True),
                     0.0)
    ctx_s[...] = nctx
    cw_s[...] = jnp.minimum(lay + cw, 1.0)

    # lm_rnn2
    s2 = gru(nctx, s1, wg2_ref, bg2_ref)
    st_s[...] = s2

    # struct_cls: Linear(cat([context, state])) -> Tanh -> Linear
    cat_s[:, :cfp] = nctx
    cat_s[:, cfp:] = s2
    h1 = jnp.tanh(jnp.dot(cat_s[...], wc1_ref[...],
                          preferred_element_type=jnp.float32) + bc1_ref[...])
    cls_ref[0, :, :] = (jnp.dot(h1, wc2_ref[...],
                                preferred_element_type=jnp.float32)
                        + bc2_ref[...])


# ------------------------------ parameter init --------------------------------

def init_params(key, vocab_size, feat_dim, lm_state_dim, proj_dim, cover_kernel):
    assert proj_dim == feat_dim, "reference training branch requires proj_dim == feat_dim"
    cf, hd, cp, V = feat_dim, lm_state_dim, proj_dim, vocab_size
    cfp, hdp, cpp, Vp = (_round_up(cf), _round_up(hd), _round_up(cp), _round_up(V))
    k2 = cover_kernel * cover_kernel
    keys = iter(jax.random.split(key, 48))

    def w(shape, scale=0.1):
        return (scale * jax.random.normal(next(keys), shape)).astype(jnp.float32)

    def pad2(x, s0, s1):
        return jnp.zeros((s0, s1), jnp.float32).at[:x.shape[0], :x.shape[1]].set(x)

    # init_state projections (1x1 convs)
    wp = pad2(w((cf, cp)), cfp, cpp)
    bp = pad2(w((1, cp)), 1, cpp)
    ws = pad2(w((cf, hd)), cfp, hdp)
    bs = pad2(w((1, hd)), 1, hdp)

    def fused_gru(din, dinp):
        # PyTorch GRUCell gate order [r, z, n]; fused column blocks:
        #   [r (bih+bhh), z (bih+bhh), gi_n, gh_n], each hdp wide.
        wih, whh = w((din, 3 * hd)), w((hd, 3 * hd))
        bih, bhh = w((1, 3 * hd)), w((1, 3 * hd))
        Wg = jnp.zeros((dinp + hdp, 4 * hdp), jnp.float32)
        bg = jnp.zeros((1, 4 * hdp), jnp.float32)
        for gate, blk in ((0, 0), (1, 1)):                    # r, z (summed)
            Wg = Wg.at[:din, blk * hdp:blk * hdp + hd].set(
                wih[:, gate * hd:(gate + 1) * hd])
            Wg = Wg.at[dinp:dinp + hd, blk * hdp:blk * hdp + hd].set(
                whh[:, gate * hd:(gate + 1) * hd])
            bg = bg.at[0, blk * hdp:blk * hdp + hd].set(
                bih[0, gate * hd:(gate + 1) * hd] + bhh[0, gate * hd:(gate + 1) * hd])
        Wg = Wg.at[:din, 2 * hdp:2 * hdp + hd].set(wih[:, 2 * hd:3 * hd])   # gi_n
        bg = bg.at[0, 2 * hdp:2 * hdp + hd].set(bih[0, 2 * hd:3 * hd])
        Wg = Wg.at[dinp:dinp + hd, 3 * hdp:3 * hdp + hd].set(whh[:, 2 * hd:3 * hd])  # gh_n
        bg = bg.at[0, 3 * hdp:3 * hdp + hd].set(bhh[0, 2 * hd:3 * hd])
        return Wg, bg

    wg1, bg1 = fused_gru(cf, cfp)
    wg2, bg2 = fused_gru(cf, cfp)

    # ImageAttention: fused query transform on cat([context, state])
    wq = jnp.zeros((cfp + hdp, cpp), jnp.float32)
    wq = wq.at[:cf, :cp].set(w((cf, cp)))
    wq = wq.at[cfp:cfp + hd, :cp].set(w((hd, cp)))
    bq = pad2(w((1, cp)), 1, cpp)
    # coverage convs: rows [0:k2] = weight_transform, [k2:2k2] = cum_weight_transform
    wcov = pad2(jnp.concatenate([w((k2, cp)), w((k2, cp))], axis=0), 2 * k2, cpp)
    bcov = pad2(w((1, cp)) + w((1, cp)), 1, cpp)              # both conv biases
    wlg = pad2(w((1, cp)), 1, cpp)
    blg = w((1, 1))

    # struct_cls
    wc1 = jnp.zeros((cfp + hdp, hdp), jnp.float32)
    wc1 = wc1.at[:cf, :hd].set(w((cf, hd)))
    wc1 = wc1.at[cfp:cfp + hd, :hd].set(w((hd, hd)))
    bc1 = pad2(w((1, hd)), 1, hdp)
    wc2 = pad2(w((hd, V)), hdp, Vp)
    bc2 = pad2(w((1, V)), 1, Vp)

    return dict(wp=wp, bp=bp, ws=ws, bs=bs, wg1=wg1, bg1=bg1, wq=wq, bq=bq,
                wcov=wcov, bcov=bcov, wlg=wlg, blg=blg, wg2=wg2, bg2=bg2,
                wc1=wc1, bc1=bc1, wc2=wc2, bc2=bc2,
                dims=dict(cf=cf, hd=hd, cp=cp, vocab=V,
                          cfp=cfp, hdp=hdp, cpp=cpp, Vp=Vp, k=cover_kernel))


# --------------------------- training-mode forward ----------------------------

def decoder_forward_train(params, feats, feats_mask, cls_labels, labels_mask,
                          layouts, max_length, att_threshold=0.5,
                          spatial_att_logit_loss_weight=1.0):
    dims = params["dims"]
    cf, V = dims["cf"], dims["vocab"]
    cfp, hdp, cpp, Vp, k = dims["cfp"], dims["hdp"], dims["cpp"], dims["Vp"], dims["k"]
    b, _, h, w = feats.shape
    hw = h * w
    hwp = _round_up(hw)
    k2 = k * k

    # lane-dense padded inputs (padded channels / pixels are zero, layouts = -1)
    feats_flat = jnp.transpose(feats, (0, 2, 3, 1)).reshape(b, hw, cf)
    feats_p = jnp.zeros((b, hwp, cfp), jnp.float32).at[:, :hw, :cf].set(feats_flat)
    mask_p = jnp.zeros((b, hwp), jnp.float32).at[:, :hw].set(
        feats_mask.reshape(b, hw).astype(jnp.float32))
    lay_flat = layouts.reshape(b, hw).astype(jnp.int32)
    lay_p = jnp.full((b, hwp), -1, jnp.int32).at[:, :hw].set(lay_flat)

    offmask_np, shifts = _conv_shift_masks(h, w, hwp, k)
    offmask = jnp.asarray(offmask_np)

    args = (feats_p, mask_p, lay_p, offmask,
            params["wp"], params["bp"], params["ws"], params["bs"],
            params["wg1"], params["bg1"], params["wq"], params["bq"],
            params["wcov"], params["bcov"], params["wlg"], params["blg"],
            params["wg2"], params["bg2"], params["wc1"], params["bc1"],
            params["wc2"], params["bc2"])

    kernel = functools.partial(
        _decoder_kernel, hw_true=hw, cfp=cfp, hdp=hdp, cpp=cpp, k2=k2,
        shifts=tuple(shifts))

    grid_spec = pltpu.PrefetchScalarGridSpec(
        num_scalar_prefetch=0,
        grid=(max_length,),
        in_specs=[_const_spec(a.shape) for a in args],
        out_specs=[pl.BlockSpec((1, b, Vp), lambda t: (t, 0, 0)),
                   pl.BlockSpec((1, b, hwp), lambda t: (t, 0, 0))],
        scratch_shapes=[pltpu.VMEM((b, hwp, cpp), jnp.float32),   # project_feats
                        pltpu.VMEM((b, hdp), jnp.float32),        # GRU state
                        pltpu.VMEM((b, cfp), jnp.float32),        # context
                        pltpu.VMEM((b, hwp), jnp.float32),        # spatial att w
                        pltpu.VMEM((b, hwp), jnp.float32),        # cum att w
                        pltpu.VMEM((b, cfp + hdp), jnp.float32)]) # concat buffer

    cls_all, att_all = pl.pallas_call(
        kernel,
        out_shape=(jax.ShapeDtypeStruct((max_length, b, Vp), jnp.float32),
                   jax.ShapeDtypeStruct((max_length, b, hwp), jnp.float32)),
        grid_spec=grid_spec,
        compiler_params=pltpu.CompilerParams(
            dimension_semantics=("arbitrary",),
            vmem_limit_bytes=64 * 1024 * 1024),
    )(*args)

    # ------------------ losses / preds (plain-JAX glue) -----------------------
    cls_logits = cls_all[:, :, :V]                                 # (T, B, V)
    att_logit = att_all[:, :, :hw]                                 # (T, B, HW)

    # cross-entropy with ignore_index = -1
    lbl = jnp.transpose(cls_labels)                                # (T, B)
    lmask = jnp.transpose(labels_mask).astype(jnp.float32)
    logz = jax.nn.logsumexp(cls_logits, axis=2)
    safe = jnp.clip(lbl, 0, V - 1)
    picked = jnp.take_along_axis(cls_logits, safe[..., None], axis=2)[..., 0]
    ce = jnp.where(lbl == -1, 0.0, logz - picked) * lmask          # (T, B)

    # BCE-with-logits spatial loss, masked to valid layout pixels
    tsteps = jnp.arange(max_length, dtype=jnp.int32)[:, None, None]
    target = (lay_flat[None] == tsteps).astype(jnp.float32)        # (T, B, HW)
    valid = (lay_flat != -1).astype(jnp.float32)[None]
    bce = jnp.logaddexp(0.0, att_logit) - att_logit * target
    any_t = jnp.any(lay_flat[None] == tsteps, axis=2)              # (T, B)
    sp_t = jnp.where(any_t, jnp.sum(bce * valid, axis=2), 0.0)

    valid_cls_len = jnp.sum((labels_mask == 1) & (cls_labels != -1),
                            axis=1).astype(jnp.float32)
    valid_sp_len = (jnp.max(lay_flat, axis=1) + 1).astype(jnp.float32)
    cls_loss = jnp.mean(jnp.sum(ce, axis=0) / valid_cls_len)
    sp_loss = spatial_att_logit_loss_weight * jnp.mean(
        jnp.sum(sp_t, axis=0) / valid_sp_len)

    spatial_att_logit_preds = jnp.transpose(
        jax.nn.sigmoid(att_logit) > att_threshold, (1, 0, 2))      # (B, T, HW)
    loss_cache = dict(
        cls_loss=cls_loss,
        spatial_att_logit_loss=sp_loss,
        cls_preds=jnp.transpose(jnp.argmax(cls_logits, axis=2)))   # (B, T)
    # TODO(synk): AccMetric / CellMergeAcc and the inference-time beam search
    # (gen_proposals, data-dependent proposal expansion) are external/undefined
    # in the reference module and are not reproduced here.
    return spatial_att_logit_preds, loss_cache


# ------------------------------------ main ------------------------------------

if __name__ == "__main__":
    key = jax.random.PRNGKey(0)
    vocab_size = 16
    feat_dim = 32
    proj_dim = 32          # must equal feat_dim (see note in init_params)
    lm_state_dim = 32
    cover_kernel = 3
    b, h, w = 2, 8, 8
    T = 4

    kp, kf = jax.random.split(key)
    params = init_params(kp, vocab_size, feat_dim, lm_state_dim, proj_dim,
                         cover_kernel)

    feats = jax.random.normal(kf, (b, feat_dim, h, w), jnp.float32)   # NCHW input
    feats_mask = jnp.ones((b, 1, h, w), jnp.float32)

    # layouts: quadrant regions labelled 0..3, one invalid (-1) pixel per sample
    layouts = jnp.zeros((b, h, w), jnp.int32)
    layouts = layouts.at[:, :h // 2, w // 2:].set(1)
    layouts = layouts.at[:, h // 2:, :w // 2].set(2)
    layouts = layouts.at[:, h // 2:, w // 2:].set(3)
    layouts = layouts.at[:, 0, 0].set(-1)

    cls_labels = jnp.array([[1, 2, 3, 4], [5, 6, 7, 0]], jnp.int32)
    labels_mask = jnp.ones((b, T), jnp.float32)

    preds, cache = decoder_forward_train(
        params, feats, feats_mask, cls_labels, labels_mask, layouts,
        max_length=T, att_threshold=0.5, spatial_att_logit_loss_weight=1.0)
    jax.block_until_ready((preds, cache))
    print("KERNEL_OK")
</pallas_src>

<mosaic_0001>
module attributes {stable_mosaic.version = 11 : i64} {
  func.func @_decoder_kernel(%arg0: i32, %arg1: memref<2x128x128xf32, #tpu.memory_space<vmem>>, %arg2: memref<2x128xf32, #tpu.memory_space<vmem>>, %arg3: memref<2x128xi32, #tpu.memory_space<vmem>>, %arg4: memref<9x128xf32, #tpu.memory_space<vmem>>, %arg5: memref<128x128xf32, #tpu.memory_space<vmem>>, %arg6: memref<1x128xf32, #tpu.memory_space<vmem>>, %arg7: memref<128x128xf32, #tpu.memory_space<vmem>>, %arg8: memref<1x128xf32, #tpu.memory_space<vmem>>, %arg9: memref<256x512xf32, #tpu.memory_space<vmem>>, %arg10: memref<1x512xf32, #tpu.memory_space<vmem>>, %arg11: memref<256x128xf32, #tpu.memory_space<vmem>>, %arg12: memref<1x128xf32, #tpu.memory_space<vmem>>, %arg13: memref<18x128xf32, #tpu.memory_space<vmem>>, %arg14: memref<1x128xf32, #tpu.memory_space<vmem>>, %arg15: memref<1x128xf32, #tpu.memory_space<vmem>>, %arg16: memref<1x1xf32, #tpu.memory_space<vmem>>, %arg17: memref<256x512xf32, #tpu.memory_space<vmem>>, %arg18: memref<1x512xf32, #tpu.memory_space<vmem>>, %arg19: memref<256x128xf32, #tpu.memory_space<vmem>>, %arg20: memref<1x128xf32, #tpu.memory_space<vmem>>, %arg21: memref<128x128xf32, #tpu.memory_space<vmem>>, %arg22: memref<1x128xf32, #tpu.memory_space<vmem>>, %arg23: memref<1x2x128xf32, #tpu.memory_space<vmem>>, %arg24: memref<1x2x128xf32, #tpu.memory_space<vmem>>, %arg25: memref<2x128x128xf32, #tpu.memory_space<vmem>>, %arg26: memref<2x128xf32, #tpu.memory_space<vmem>>, %arg27: memref<2x128xf32, #tpu.memory_space<vmem>>, %arg28: memref<2x128xf32, #tpu.memory_space<vmem>>, %arg29: memref<2x128xf32, #tpu.memory_space<vmem>>, %arg30: memref<2x256xf32, #tpu.memory_space<vmem>>) attributes {dimension_semantics = [#tpu.dimension_semantics<arbitrary>], iteration_bounds = array<i64: 4>, scalar_prefetch = 0 : i64, scratch_operands = 6 : i64, tpu.core_type = #tpu.core_type<tc>, window_params = [{pipeline_mode = #tpu.pipeline_mode<synchronous>, transform_indices = @transform_0, window_bounds = array<i64: 2, 128, 128>}, {pipeline_mode = #tpu.pipeline_mode<synchronous>, transform_indices = @transform_1, window_bounds = array<i64: 2, 128>}, {pipeline_mode = #tpu.pipeline_mode<synchronous>, transform_indices = @transform_2, window_bounds = array<i64: 2, 128>}, {pipeline_mode = #tpu.pipeline_mode<synchronous>, transform_indices = @transform_3, window_bounds = array<i64: 9, 128>}, {pipeline_mode = #tpu.pipeline_mode<synchronous>, transform_indices = @transform_4, window_bounds = array<i64: 128, 128>}, {pipeline_mode = #tpu.pipeline_mode<synchronous>, transform_indices = @transform_5, window_bounds = array<i64: 1, 128>}, {pipeline_mode = #tpu.pipeline_mode<synchronous>, transform_indices = @transform_6, window_bounds = array<i64: 128, 128>}, {pipeline_mode = #tpu.pipeline_mode<synchronous>, transform_indices = @transform_7, window_bounds = array<i64: 1, 128>}, {pipeline_mode = #tpu.pipeline_mode<synchronous>, transform_indices = @transform_8, window_bounds = array<i64: 256, 512>}, {pipeline_mode = #tpu.pipeline_mode<synchronous>, transform_indices = @transform_9, window_bounds = array<i64: 1, 512>}, {pipeline_mode = #tpu.pipeline_mode<synchronous>, transform_indices = @transform_10, window_bounds = array<i64: 256, 128>}, {pipeline_mode = #tpu.pipeline_mode<synchronous>, transform_indices = @transform_11, window_bounds = array<i64: 1, 128>}, {pipeline_mode = #tpu.pipeline_mode<synchronous>, transform_indices = @transform_12, window_bounds = array<i64: 18, 128>}, {pipeline_mode = #tpu.pipeline_mode<synchronous>, transform_indices = @transform_13, window_bounds = array<i64: 1, 128>}, {pipeline_mode = #tpu.pipeline_mode<synchronous>, transform_indices = @transform_14, window_bounds = array<i64: 1, 128>}, {pipeline_mode = #tpu.pipeline_mode<synchronous>, transform_indices = @transform_15, window_bounds = array<i64: 1, 1>}, {pipeline_mode = #tpu.pipeline_mode<synchronous>, transform_indices = @transform_16, window_bounds = array<i64: 256, 512>}, {pipeline_mode = #tpu.pipeline_mode<synchronous>, transform_indices = @transform_17, window_bounds = array<i64: 1, 512>}, {pipeline_mode = #tpu.pipeline_mode<synchronous>, transform_indices = @transform_18, window_bounds = array<i64: 256, 128>}, {pipeline_mode = #tpu.pipeline_mode<synchronous>, transform_indices = @transform_19, window_bounds = array<i64: 1, 128>}, {pipeline_mode = #tpu.pipeline_mode<synchronous>, transform_indices = @transform_20, window_bounds = array<i64: 128, 128>}, {pipeline_mode = #tpu.pipeline_mode<synchronous>, transform_indices = @transform_21, window_bounds = array<i64: 1, 128>}, {transform_indices = @transform_22, window_bounds = array<i64: 1, 2, 128>}, {transform_indices = @transform_23, window_bounds = array<i64: 1, 2, 128>}]} {
    %c0_i32 = arith.constant 0 : i32
    %0 = arith.cmpi eq, %arg0, %c0_i32 : i32
    %1 = arith.extui %0 : i1 to i32
    %c0_i32_0 = arith.constant 0 : i32
    %2 = arith.cmpi ne, %1, %c0_i32_0 : i32
    scf.if %2 {
      %c0_148 = arith.constant 0 : index
      %c0_149 = arith.constant 0 : index
      %c0_150 = arith.constant 0 : index
      %347 = vector.load %arg1[%c0_148, %c0_149, %c0_150] : memref<2x128x128xf32, #tpu.memory_space<vmem>>, vector<2x128x128xf32>
      %c0_151 = arith.constant 0 : index
      %c0_152 = arith.constant 0 : index
      %348 = vector.load %arg2[%c0_151, %c0_152] : memref<2x128xf32, #tpu.memory_space<vmem>>, vector<2x128xf32>
      %349 = vector.shape_cast %347 : vector<2x128x128xf32> to vector<256x128xf32>
      %c0_153 = arith.constant 0 : index
      %c0_154 = arith.constant 0 : index
      %350 = vector.load %arg5[%c0_153, %c0_154] : memref<128x128xf32, #tpu.memory_space<vmem>>, vector<128x128xf32>
      %cst_155 = arith.constant dense<0.000000e+00> : vector<256x128xf32>
      %351 = tpu.matmul %349, %350, %cst_155 {dimension_numbers = #tpu.dot_dimension_numbers<[1], [0], [0], [1], [0, 0, 1, 1], [], []>} : vector<256x128xf32>, vector<128x128xf32>, vector<256x128xf32> -> vector<256x128xf32>
      %352 = vector.shape_cast %351 : vector<256x128xf32> to vector<2x128x128xf32>
      %c0_156 = arith.constant 0 : index
      %c0_157 = arith.constant 0 : index
      %353 = vector.load %arg6[%c0_156, %c0_157] : memref<1x128xf32, #tpu.memory_space<vmem>>, vector<1x128xf32>
      %354 = vector.shape_cast %353 : vector<1x128xf32> to vector<1x1x128xf32>
      %355 = vector.broadcast %354 : vector<1x1x128xf32> to vector<2x128x128xf32>
      %356 = arith.addf %352, %355 : vector<2x128x128xf32>
      %357 = vector.shape_cast %348 : vector<2x128xf32> to vector<2x128x1xf32>
      %358 = vector.broadcast %357 : vector<2x128x1xf32> to vector<2x128x128xf32>
      %359 = arith.mulf %356, %358 : vector<2x128x128xf32>
      %c0_158 = arith.constant 0 : index
      %c0_159 = arith.constant 0 : index
      %c0_160 = arith.constant 0 : index
      %360 = vector.load %arg25[%c0_158, %c0_159, %c0_160] : memref<2x128x128xf32, #tpu.memory_space<vmem>>, vector<2x128x128xf32>
      tpu.vector_store %arg25[%c0_158, %c0_159, %c0_160], %359 {strides = array<i32>} : memref<2x128x128xf32, #tpu.memory_space<vmem>>, vector<2x128x128xf32>,
      %c0_161 = arith.constant 0 : index
      %c0_162 = arith.constant 0 : index
      %361 = vector.load %arg7[%c0_161, %c0_162] : memref<128x128xf32, #tpu.memory_space<vmem>>, vector<128x128xf32>
      %cst_163 = arith.constant dense<0.000000e+00> : vector<256x128xf32>
      %362 = tpu.matmul %349, %361, %cst_163 {dimension_numbers = #tpu.dot_dimension_numbers<[1], [0], [0], [1], [0, 0, 1, 1], [], []>} : vector<256x128xf32>, vector<128x128xf32>, vector<256x128xf32> -> vector<256x128xf32>
      %363 = vector.shape_cast %362 : vector<256x128xf32> to vector<2x128x128xf32>
      %cst_164 = arith.constant dense<0.000000e+00> : vector<2xf32>
      %364 = vector.multi_reduction <add>, %348, %cst_164 [1] : vector<2x128xf32> to vector<2xf32>
      %365 = vector.shape_cast %364 : vector<2xf32> to vector<2x1xf32>
      %cst_165 = arith.constant 1.000000e+00 : f32
      %366 = vector.broadcast %cst_165 : f32 to vector<2x1xf32>
      %367 = arith.maximumf %365, %366 : vector<2x1xf32>
      %368 = tpu.reciprocal %367 {approx = true} : vector<2x1xf32> -> vector<2x1xf32>
      %cst_166 = arith.constant dense<0.000000e+00> : vector<2x128xf32>
      %369 = vector.multi_reduction <add>, %363, %cst_166 [1] : vector<2x128x128xf32> to vector<2x128xf32>
      %c0_167 = arith.constant 0 : index
      %c0_168 = arith.constant 0 : index
      %370 = vector.load %arg8[%c0_167, %c0_168] : memref<1x128xf32, #tpu.memory_space<vmem>>, vector<1x128xf32>
      %cst_169 = arith.constant 6.400000e+01 : f32
      %371 = vector.broadcast %cst_169 : f32 to vector<1x128xf32>
      %372 = arith.mulf %371, %370 : vector<1x128xf32>
      %373 = vector.broadcast %372 : vector<1x128xf32> to vector<2x128xf32>
      %374 = arith.addf %369, %373 : vector<2x128xf32>
      %375 = vector.broadcast %368 : vector<2x1xf32> to vector<2x128xf32>
      %376 = arith.mulf %374, %375 : vector<2x128xf32>
      %c0_170 = arith.constant 0 : index
      %c0_171 = arith.constant 0 : index
      %377 = vector.load %arg26[%c0_170, %c0_171] : memref<2x128xf32, #tpu.memory_space<vmem>>, vector<2x128xf32>
      tpu.vector_store %arg26[%c0_170, %c0_171], %376 {strides = array<i32>} : memref<2x128xf32, #tpu.memory_space<vmem>>, vector<2x128xf32>,
      %cst_172 = arith.constant dense<0.000000e+00> : vector<2x128xf32>
      %378 = vector.multi_reduction <add>, %347, %cst_172 [1] : vector<2x128x128xf32> to vector<2x128xf32>
      %379 = vector.broadcast %368 : vector<2x1xf32> to vector<2x128xf32>
      %380 = arith.mulf %378, %379 : vector<2x128xf32>
      %c0_173 = arith.constant 0 : index
      %c0_174 = arith.constant 0 : index
      %381 = vector.load %arg27[%c0_173, %c0_174] : memref<2x128xf32, #tpu.memory_space<vmem>>, vector<2x128xf32>
      tpu.vector_store %arg27[%c0_173, %c0_174], %380 {strides = array<i32>} : memref<2x128xf32, #tpu.memory_space<vmem>>, vector<2x128xf32>,
      %cst_175 = arith.constant 0.000000e+00 : f32
      %382 = vector.broadcast %cst_175 : f32 to vector<2x128xf32>
      %c0_176 = arith.constant 0 : index
      %c0_177 = arith.constant 0 : index
      %383 = vector.load %arg28[%c0_176, %c0_177] : memref<2x128xf32, #tpu.memory_space<vmem>>, vector<2x128xf32>
      tpu.vector_store %arg28[%c0_176, %c0_177], %382 {strides = array<i32>} : memref<2x128xf32, #tpu.memory_space<vmem>>, vector<2x128xf32>,
      %cst_178 = arith.constant 0.000000e+00 : f32
      %384 = vector.broadcast %cst_178 : f32 to vector<2x128xf32>
      %c0_179 = arith.constant 0 : index
      %c0_180 = arith.constant 0 : index
      %385 = vector.load %arg29[%c0_179, %c0_180] : memref<2x128xf32, #tpu.memory_space<vmem>>, vector<2x128xf32>
      tpu.vector_store %arg29[%c0_179, %c0_180], %384 {strides = array<i32>} : memref<2x128xf32, #tpu.memory_space<vmem>>, vector<2x128xf32>,
    } else {
    }
    %c0 = arith.constant 0 : index
    %c0_1 = arith.constant 0 : index
    %3 = vector.load %arg27[%c0, %c0_1] : memref<2x128xf32, #tpu.memory_space<vmem>>, vector<2x128xf32>
    %c0_2 = arith.constant 0 : index
    %c0_3 = arith.constant 0 : index
    %4 = vector.load %arg26[%c0_2, %c0_3] : memref<2x128xf32, #tpu.memory_space<vmem>>, vector<2x128xf32>
    %c0_4 = arith.constant 0 : index
    %c0_5 = arith.constant 0 : index
    %5 = vector.load %arg28[%c0_4, %c0_5] : memref<2x128xf32, #tpu.memory_space<vmem>>, vector<2x128xf32>
    %c0_6 = arith.constant 0 : index
    %c0_7 = arith.constant 0 : index
    %6 = vector.load %arg29[%c0_6, %c0_7] : memref<2x128xf32, #tpu.memory_space<vmem>>, vector<2x128xf32>
    %c0_8 = arith.constant 0 : index
    %c0_9 = arith.constant 0 : index
    %c0_10 = arith.constant 0 : index
    %7 = vector.load %arg1[%c0_8, %c0_9, %c0_10] : memref<2x128x128xf32, #tpu.memory_space<vmem>>, vector<2x128x128xf32>
    %c0_11 = arith.constant 0 : index
    %c0_12 = arith.constant 0 : index
    %8 = vector.load %arg2[%c0_11, %c0_12] : memref<2x128xf32, #tpu.memory_space<vmem>>, vector<2x128xf32>
    %c0_13 = arith.constant 0 : index
    %c0_14 = arith.constant 0 : index
    %9 = vector.load %arg30[%c0_13, %c0_14] : memref<2x256xf32, #tpu.memory_space<vmem>>, vector<2x128xf32>
    tpu.vector_store %arg30[%c0_13, %c0_14], %3 {strides = array<i32>} : memref<2x256xf32, #tpu.memory_space<vmem>>, vector<2x128xf32>,
    %c0_15 = arith.constant 0 : index
    %c128 = arith.constant 128 : index
    %10 = vector.load %arg30[%c0_15, %c128] : memref<2x256xf32, #tpu.memory_space<vmem>>, vector<2x128xf32>
    tpu.vector_store %arg30[%c0_15, %c128], %4 {strides = array<i32>} : memref<2x256xf32, #tpu.memory_space<vmem>>, vector<2x128xf32>,
    %c0_16 = arith.constant 0 : index
    %c0_17 = arith.constant 0 : index
    %11 = vector.load %arg30[%c0_16, %c0_17] : memref<2x256xf32, #tpu.memory_space<vmem>>, vector<2x256xf32>
    %c0_18 = arith.constant 0 : index
    %c0_19 = arith.constant 0 : index
    %12 = vector.load %arg9[%c0_18, %c0_19] : memref<256x512xf32, #tpu.memory_space<vmem>>, vector<256x512xf32>
    %cst = arith.constant dense<0.000000e+00> : vector<2x512xf32>
    %13 = tpu.matmul %11, %12, %cst {dimension_numbers = #tpu.dot_dimension_numbers<[1], [0], [0], [1], [0, 0, 1, 1], [], []>} : vector<2x256xf32>, vector<256x512xf32>, vector<2x512xf32> -> vector<2x512xf32>
    %c0_20 = arith.constant 0 : index
    %c0_21 = arith.constant 0 : index
    %14 = vector.load %arg10[%c0_20, %c0_21] : memref<1x512xf32, #tpu.memory_space<vmem>>, vector<1x512xf32>
    %15 = vector.broadcast %14 : vector<1x512xf32> to vector<2x512xf32>
    %16 = arith.addf %13, %15 : vector<2x512xf32>
    %17 = vector.extract_strided_slice %16 {offsets = [0, 0], sizes = [2, 128], strides = [1, 1]} : vector<2x512xf32> to vector<2x128xf32>
    %18 = arith.negf %17 : vector<2x128xf32>
    %19 = math.exp %18 : vector<2x128xf32>
    %cst_22 = arith.constant 1.000000e+00 : f32
    %20 = vector.broadcast %cst_22 : f32 to vector<2x128xf32>
    %21 = arith.addf %20, %19 : vector<2x128xf32>
    %22 = arith.divf %20, %21 : vector<2x128xf32>
    %23 = vector.extract_strided_slice %16 {offsets = [0, 128], sizes = [2, 128], strides = [1, 1]} : vector<2x512xf32> to vector<2x128xf32>
    %24 = arith.negf %23 : vector<2x128xf32>
    %25 = math.exp %24 : vector<2x128xf32>
    %cst_23 = arith.constant 1.000000e+00 : f32
    %26 = vector.broadcast %cst_23 : f32 to vector<2x128xf32>
    %27 = arith.addf %26, %25 : vector<2x128xf32>
    %28 = arith.divf %26, %27 : vector<2x128xf32>
    %29 = vector.extract_strided_slice %16 {offsets = [0, 256], sizes = [2, 128], strides = [1, 1]} : vector<2x512xf32> to vector<2x128xf32>
    %30 = vector.extract_strided_slice %16 {offsets = [0, 384], sizes = [2, 128], strides = [1, 1]} : vector<2x512xf32> to vector<2x128xf32>
    %31 = arith.mulf %22, %30 : vector<2x128xf32>
    %32 = arith.addf %29, %31 : vector<2x128xf32>
    %33 = math.tanh %32 : vector<2x128xf32>
    %cst_24 = arith.constant 1.000000e+00 : f32
    %34 = vector.broadcast %cst_24 : f32 to vector<2x128xf32>
    %35 = arith.subf %34, %28 : vector<2x128xf32>
    %36 = arith.mulf %35, %33 : vector<2x128xf32>
    %37 = arith.mulf %28, %4 : vector<2x128xf32>
    %38 = arith.addf %36, %37 : vector<2x128xf32>
    %c0_25 = arith.constant 0 : index
    %c0_26 = arith.constant 0 : index
    %39 = vector.load %arg30[%c0_25, %c0_26] : memref<2x256xf32, #tpu.memory_space<vmem>>, vector<2x128xf32>
    tpu.vector_store %arg30[%c0_25, %c0_26], %3 {strides = array<i32>} : memref<2x256xf32, #tpu.memory_space<vmem>>, vector<2x128xf32>,
    %c0_27 = arith.constant 0 : index
    %c128_28 = arith.constant 128 : index
    %40 = vector.load %arg30[%c0_27, %c128_28] : memref<2x256xf32, #tpu.memory_space<vmem>>, vector<2x128xf32>
    tpu.vector_store %arg30[%c0_27, %c128_28], %38 {strides = array<i32>} : memref<2x256xf32, #tpu.memory_space<vmem>>, vector<2x128xf32>,
    %c0_29 = arith.constant 0 : index
    %c0_30 = arith.constant 0 : index
    %41 = vector.load %arg30[%c0_29, %c0_30] : memref<2x256xf32, #tpu.memory_space<vmem>>, vector<2x256xf32>
    %c0_31 = arith.constant 0 : index
    %c0_32 = arith.constant 0 : index
    %42 = vector.load %arg11[%c0_31, %c0_32] : memref<256x128xf32, #tpu.memory_space<vmem>>, vector<256x128xf32>
    %cst_33 = arith.constant dense<0.000000e+00> : vector<2x128xf32>
    %43 = tpu.matmul %41, %42, %cst_33 {dimension_numbers = #tpu.dot_dimension_numbers<[1], [0], [0], [1], [0, 0, 1, 1], [], []>} : vector<2x256xf32>, vector<256x128xf32>, vector<2x128xf32> -> vector<2x128xf32>
    %c0_34 = arith.constant 0 : index
    %c0_35 = arith.constant 0 : index
    %44 = vector.load %arg12[%c0_34, %c0_35] : memref<1x128xf32, #tpu.memory_space<vmem>>, vector<1x128xf32>
    %45 = vector.broadcast %44 : vector<1x128xf32> to vector<2x128xf32>
    %46 = arith.addf %43, %45 : vector<2x128xf32>
    %cst_36 = arith.constant 0.000000e+00 : f32
    %47 = vector.broadcast %cst_36 : f32 to vector<2x128x128xf32>
    %c0_37 = arith.constant 0 : index
    %c0_38 = arith.constant 0 : index
    %48 = vector.load %arg4[%c0_37, %c0_38] : memref<9x128xf32, #tpu.memory_space<vmem>>, vector<1x128xf32>
    %c9_i32 = arith.constant 9 : i32
    %49 = tpu.dynamic_rotate %5 by %c9_i32 dim 1 : vector<2x128xf32>, i32 -> vector<2x128xf32>
    %50 = vector.broadcast %48 : vector<1x128xf32> to vector<2x128xf32>
    %51 = arith.mulf %49, %50 : vector<2x128xf32>
    %c9_i32_39 = arith.constant 9 : i32
    %52 = tpu.dynamic_rotate %6 by %c9_i32_39 dim 1 : vector<2x128xf32>, i32 -> vector<2x128xf32>
    %53 = vector.broadcast %48 : vector<1x128xf32> to vector<2x128xf32>
    %54 = arith.mulf %52, %53 : vector<2x128xf32>
    %55 = vector.shape_cast %51 : vector<2x128xf32> to vector<2x128x1xf32>
    %c0_40 = arith.constant 0 : index
    %c0_41 = arith.constant 0 : index
    %56 = vector.load %arg13[%c0_40, %c0_41] : memref<18x128xf32, #tpu.memory_space<vmem>>, vector<1x128xf32>
    %57 = vector.shape_cast %56 : vector<1x128xf32> to vector<1x1x128xf32>
    %58 = vector.broadcast %55 : vector<2x128x1xf32> to vector<2x128x128xf32>
    %59 = vector.broadcast %57 : vector<1x1x128xf32> to vector<2x128x128xf32>
    %60 = arith.mulf %58, %59 : vector<2x128x128xf32>
    %61 = arith.addf %47, %60 : vector<2x128x128xf32>
    %62 = vector.shape_cast %54 : vector<2x128xf32> to vector<2x128x1xf32>
    %c9 = arith.constant 9 : index
    %c0_42 = arith.constant 0 : index
    %63 = vector.load %arg13[%c9, %c0_42] : memref<18x128xf32, #tpu.memory_space<vmem>>, vector<1x128xf32>
    %64 = vector.shape_cast %63 : vector<1x128xf32> to vector<1x1x128xf32>
    %65 = vector.broadcast %62 : vector<2x128x1xf32> to vector<2x128x128xf32>
    %66 = vector.broadcast %64 : vector<1x1x128xf32> to vector<2x128x128xf32>
    %67 = arith.mulf %65, %66 : vector<2x128x128xf32>
    %68 = arith.addf %61, %67 : vector<2x128x128xf32>
    %c1 = arith.constant 1 : index
    %c0_43 = arith.constant 0 : index
    %69 = vector.load %arg4[%c1, %c0_43] : memref<9x128xf32, #tpu.memory_space<vmem>>, vector<1x128xf32>
    %c8_i32 = arith.constant 8 : i32
    %70 = tpu.dynamic_rotate %5 by %c8_i32 dim 1 : vector<2x128xf32>, i32 -> vector<2x128xf32>
    %71 = vector.broadcast %69 : vector<1x128xf32> to vector<2x128xf32>
    %72 = arith.mulf %70, %71 : vector<2x128xf32>
    %c8_i32_44 = arith.constant 8 : i32
    %73 = tpu.dynamic_rotate %6 by %c8_i32_44 dim 1 : vector<2x128xf32>, i32 -> vector<2x128xf32>
    %74 = vector.broadcast %69 : vector<1x128xf32> to vector<2x128xf32>
    %75 = arith.mulf %73, %74 : vector<2x128xf32>
    %76 = vector.shape_cast %72 : vector<2x128xf32> to vector<2x128x1xf32>
    %c1_45 = arith.constant 1 : index
    %c0_46 = arith.constant 0 : index
    %77 = vector.load %arg13[%c1_45, %c0_46] : memref<18x128xf32, #tpu.memory_space<vmem>>, vector<1x128xf32>
    %78 = vector.shape_cast %77 : vector<1x128xf32> to vector<1x1x128xf32>
    %79 = vector.broadcast %76 : vector<2x128x1xf32> to vector<2x128x128xf32>
    %80 = vector.broadcast %78 : vector<1x1x128xf32> to vector<2x128x128xf32>
    %81 = arith.mulf %79, %80 : vector<2x128x128xf32>
    %82 = arith.addf %68, %81 : vector<2x128x128xf32>
    %83 = vector.shape_cast %75 : vector<2x128xf32> to vector<2x128x1xf32>
    %c10 = arith.constant 10 : index
    %c0_47 = arith.constant 0 : index
    %84 = vector.load %arg13[%c10, %c0_47] : memref<18x128xf32, #tpu.memory_space<vmem>>, vector<1x128xf32>
    %85 = vector.shape_cast %84 : vector<1x128xf32> to vector<1x1x128xf32>
    %86 = vector.broadcast %83 : vector<2x128x1xf32> to vector<2x128x128xf32>
    %87 = vector.broadcast %85 : vector<1x1x128xf32> to vector<2x128x128xf32>
    %88 = arith.mulf %86, %87 : vector<2x128x128xf32>
    %89 = arith.addf %82, %88 : vector<2x128x128xf32>
    %c2 = arith.constant 2 : index
    %c0_48 = arith.constant 0 : index
    %90 = vector.load %arg4[%c2, %c0_48] : memref<9x128xf32, #tpu.memory_space<vmem>>, vector<1x128xf32>
    %c7_i32 = arith.constant 7 : i32
    %91 = tpu.dynamic_rotate %5 by %c7_i32 dim 1 : vector<2x128xf32>, i32 -> vector<2x128xf32>
    %92 = vector.broadcast %90 : vector<1x128xf32> to vector<2x128xf32>
    %93 = arith.mulf %91, %92 : vector<2x128xf32>
    %c7_i32_49 = arith.constant 7 : i32
    %94 = tpu.dynamic_rotate %6 by %c7_i32_49 dim 1 : vector<2x128xf32>, i32 -> vector<2x128xf32>
    %95 = vector.broadcast %90 : vector<1x128xf32> to vector<2x128xf32>
    %96 = arith.mulf %94, %95 : vector<2x128xf32>
    %97 = vector.shape_cast %93 : vector<2x128xf32> to vector<2x128x1xf32>
    %c2_50 = arith.constant 2 : index
    %c0_51 = arith.constant 0 : index
    %98 = vector.load %arg13[%c2_50, %c0_51] : memref<18x128xf32, #tpu.memory_space<vmem>>, vector<1x128xf32>
    %99 = vector.shape_cast %98 : vector<1x128xf32> to vector<1x1x128xf32>
    %100 = vector.broadcast %97 : vector<2x128x1xf32> to vector<2x128x128xf32>
    %101 = vector.broadcast %99 : vector<1x1x128xf32> to vector<2x128x128xf32>
    %102 = arith.mulf %100, %101 : vector<2x128x128xf32>
    %103 = arith.addf %89, %102 : vector<2x128x128xf32>
    %104 = vector.shape_cast %96 : vector<2x128xf32> to vector<2x128x1xf32>
    %c11 = arith.constant 11 : index
    %c0_52 = arith.constant 0 : index
    %105 = vector.load %arg13[%c11, %c0_52] : memref<18x128xf32, #tpu.memory_space<vmem>>, vector<1x128xf32>
    %106 = vector.shape_cast %105 : vector<1x128xf32> to vector<1x1x128xf32>
    %107 = vector.broadcast %104 : vector<2x128x1xf32> to vector<2x128x128xf32>
    %108 = vector.broadcast %106 : vector<1x1x128xf32> to vector<2x128x128xf32>
    %109 = arith.mulf %107, %108 : vector<2x128x128xf32>
    %110 = arith.addf %103, %109 : vector<2x128x128xf32>
    %c3 = arith.constant 3 : index
    %c0_53 = arith.constant 0 : index
    %111 = vector.load %arg4[%c3, %c0_53] : memref<9x128xf32, #tpu.memory_space<vmem>>, vector<1x128xf32>
    %c1_i32 = arith.constant 1 : i32
    %112 = tpu.dynamic_rotate %5 by %c1_i32 dim 1 : vector<2x128xf32>, i32 -> vector<2x128xf32>
    %113 = vector.broadcast %111 : vector<1x128xf32> to vector<2x128xf32>
    %114 = arith.mulf %112, %113 : vector<2x128xf32>
    %c1_i32_54 = arith.constant 1 : i32
    %115 = tpu.dynamic_rotate %6 by %c1_i32_54 dim 1 : vector<2x128xf32>, i32 -> vector<2x128xf32>
    %116 = vector.broadcast %111 : vector<1x128xf32> to vector<2x128xf32>
    %117 = arith.mulf %115, %116 : vector<2x128xf32>
    %118 = vector.shape_cast %114 : vector<2x128xf32> to vector<2x128x1xf32>
    %c3_55 = arith.constant 3 : index
    %c0_56 = arith.constant 0 : index
    %119 = vector.load %arg13[%c3_55, %c0_56] : memref<18x128xf32, #tpu.memory_space<vmem>>, vector<1x128xf32>
    %120 = vector.shape_cast %119 : vector<1x128xf32> to vector<1x1x128xf32>
    %121 = vector.broadcast %118 : vector<2x128x1xf32> to vector<2x128x128xf32>
    %122 = vector.broadcast %120 : vector<1x1x128xf32> to vector<2x128x128xf32>
    %123 = arith.mulf %121, %122 : vector<2x128x128xf32>
    %124 = arith.addf %110, %123 : vector<2x128x128xf32>
    %125 = vector.shape_cast %117 : vector<2x128xf32> to vector<2x128x1xf32>
    %c12 = arith.constant 12 : index
    %c0_57 = arith.constant 0 : index
    %126 = vector.load %arg13[%c12, %c0_57] : memref<18x128xf32, #tpu.memory_space<vmem>>, vector<1x128xf32>
    %127 = vector.shape_cast %126 : vector<1x128xf32> to vector<1x1x128xf32>
    %128 = vector.broadcast %125 : vector<2x128x1xf32> to vector<2x128x128xf32>
    %129 = vector.broadcast %127 : vector<1x1x128xf32> to vector<2x128x128xf32>
    %130 = arith.mulf %128, %129 : vector<2x128x128xf32>
    %131 = arith.addf %124, %130 : vector<2x128x128xf32>
    %c4 = arith.constant 4 : index
    %c0_58 = arith.constant 0 : index
    %132 = vector.load %arg4[%c4, %c0_58] : memref<9x128xf32, #tpu.memory_space<vmem>>, vector<1x128xf32>
    %133 = vector.broadcast %132 : vector<1x128xf32> to vector<2x128xf32>
    %134 = arith.mulf %5, %133 : vector<2x128xf32>
    %135 = vector.broadcast %132 : vector<1x128xf32> to vector<2x128xf32>
    %136 = arith.mulf %6, %135 : vector<2x128xf32>
    %137 = vector.shape_cast %134 : vector<2x128xf32> to vector<2x128x1xf32>
    %c4_59 = arith.constant 4 : index
    %c0_60 = arith.constant 0 : index
    %138 = vector.load %arg13[%c4_59, %c0_60] : memref<18x128xf32, #tpu.memory_space<vmem>>, vector<1x128xf32>
    %139 = vector.shape_cast %138 : vector<1x128xf32> to vector<1x1x128xf32>
    %140 = vector.broadcast %137 : vector<2x128x1xf32> to vector<2x128x128xf32>
    %141 = vector.broadcast %139 : vector<1x1x128xf32> to vector<2x128x128xf32>
    %142 = arith.mulf %140, %141 : vector<2x128x128xf32>
    %143 = arith.addf %131, %142 : vector<2x128x128xf32>
    %144 = vector.shape_cast %136 : vector<2x128xf32> to vector<2x128x1xf32>
    %c13 = arith.constant 13 : index
    %c0_61 = arith.constant 0 : index
    %145 = vector.load %arg13[%c13, %c0_61] : memref<18x128xf32, #tpu.memory_space<vmem>>, vector<1x128xf32>
    %146 = vector.shape_cast %145 : vector<1x128xf32> to vector<1x1x128xf32>
    %147 = vector.broadcast %144 : vector<2x128x1xf32> to vector<2x128x128xf32>
    %148 = vector.broadcast %146 : vector<1x1x128xf32> to vector<2x128x128xf32>
    %149 = arith.mulf %147, %148 : vector<2x128x128xf32>
    %150 = arith.addf %143, %149 : vector<2x128x128xf32>
    %c5 = arith.constant 5 : index
    %c0_62 = arith.constant 0 : index
    %151 = vector.load %arg4[%c5, %c0_62] : memref<9x128xf32, #tpu.memory_space<vmem>>, vector<1x128xf32>
    %c127_i32 = arith.constant 127 : i32
    %152 = tpu.dynamic_rotate %5 by %c127_i32 dim 1 : vector<2x128xf32>, i32 -> vector<2x128xf32>
    %153 = vector.broadcast %151 : vector<1x128xf32> to vector<2x128xf32>
    %154 = arith.mulf %152, %153 : vector<2x128xf32>
    %c127_i32_63 = arith.constant 127 : i32
    %155 = tpu.dynamic_rotate %6 by %c127_i32_63 dim 1 : vector<2x128xf32>, i32 -> vector<2x128xf32>
    %156 = vector.broadcast %151 : vector<1x128xf32> to vector<2x128xf32>
    %157 = arith.mulf %155, %156 : vector<2x128xf32>
    %158 = vector.shape_cast %154 : vector<2x128xf32> to vector<2x128x1xf32>
    %c5_64 = arith.constant 5 : index
    %c0_65 = arith.constant 0 : index
    %159 = vector.load %arg13[%c5_64, %c0_65] : memref<18x128xf32, #tpu.memory_space<vmem>>, vector<1x128xf32>
    %160 = vector.shape_cast %159 : vector<1x128xf32> to vector<1x1x128xf32>
    %161 = vector.broadcast %158 : vector<2x128x1xf32> to vector<2x128x128xf32>
    %162 = vector.broadcast %160 : vector<1x1x128xf32> to vector<2x128x128xf32>
    %163 = arith.mulf %161, %162 : vector<2x128x128xf32>
    %164 = arith.addf %150, %163 : vector<2x128x128xf32>
    %165 = vector.shape_cast %157 : vector<2x128xf32> to vector<2x128x1xf32>
    %c14 = arith.constant 14 : index
    %c0_66 = arith.constant 0 : index
    %166 = vector.load %arg13[%c14, %c0_66] : memref<18x128xf32, #tpu.memory_space<vmem>>, vector<1x128xf32>
    %167 = vector.shape_cast %166 : vector<1x128xf32> to vector<1x1x128xf32>
    %168 = vector.broadcast %165 : vector<2x128x1xf32> to vector<2x128x128xf32>
    %169 = vector.broadcast %167 : vector<1x1x128xf32> to vector<2x128x128xf32>
    %170 = arith.mulf %168, %169 : vector<2x128x128xf32>
    %171 = arith.addf %164, %170 : vector<2x128x128xf32>
    %c6 = arith.constant 6 : index
    %c0_67 = arith.constant 0 : index
    %172 = vector.load %arg4[%c6, %c0_67] : memref<9x128xf32, #tpu.memory_space<vmem>>, vector<1x128xf32>
    %c121_i32 = arith.constant 121 : i32
    %173 = tpu.dynamic_rotate %5 by %c121_i32 dim 1 : vector<2x128xf32>, i32 -> vector<2x128xf32>
    %174 = vector.broadcast %172 : vector<1x128xf32> to vector<2x128xf32>
    %175 = arith.mulf %173, %174 : vector<2x128xf32>
    %c121_i32_68 = arith.constant 121 : i32
    %176 = tpu.dynamic_rotate %6 by %c121_i32_68 dim 1 : vector<2x128xf32>, i32 -> vector<2x128xf32>
    %177 = vector.broadcast %172 : vector<1x128xf32> to vector<2x128xf32>
    %178 = arith.mulf %176, %177 : vector<2x128xf32>
    %179 = vector.shape_cast %175 : vector<2x128xf32> to vector<2x128x1xf32>
    %c6_69 = arith.constant 6 : index
    %c0_70 = arith.constant 0 : index
    %180 = vector.load %arg13[%c6_69, %c0_70] : memref<18x128xf32, #tpu.memory_space<vmem>>, vector<1x128xf32>
    %181 = vector.shape_cast %180 : vector<1x128xf32> to vector<1x1x128xf32>
    %182 = vector.broadcast %179 : vector<2x128x1xf32> to vector<2x128x128xf32>
    %183 = vector.broadcast %181 : vector<1x1x128xf32> to vector<2x128x128xf32>
    %184 = arith.mulf %182, %183 : vector<2x128x128xf32>
    %185 = arith.addf %171, %184 : vector<2x128x128xf32>
    %186 = vector.shape_cast %178 : vector<2x128xf32> to vector<2x128x1xf32>
    %c15 = arith.constant 15 : index
    %c0_71 = arith.constant 0 : index
    %187 = vector.load %arg13[%c15, %c0_71] : memref<18x128xf32, #tpu.memory_space<vmem>>, vector<1x128xf32>
    %188 = vector.shape_cast %187 : vector<1x128xf32> to vector<1x1x128xf32>
    %189 = vector.broadcast %186 : vector<2x128x1xf32> to vector<2x128x128xf32>
    %190 = vector.broadcast %188 : vector<1x1x128xf32> to vector<2x128x128xf32>
    %191 = arith.mulf %189, %190 : vector<2x128x128xf32>
    %192 = arith.addf %185, %191 : vector<2x128x128xf32>
    %c7 = arith.constant 7 : index
    %c0_72 = arith.constant 0 : index
    %193 = vector.load %arg4[%c7, %c0_72] : memref<9x128xf32, #tpu.memory_space<vmem>>, vector<1x128xf32>
    %c120_i32 = arith.constant 120 : i32
    %194 = tpu.dynamic_rotate %5 by %c120_i32 dim 1 : vector<2x128xf32>, i32 -> vector<2x128xf32>
    %195 = vector.broadcast %193 : vector<1x128xf32> to vector<2x128xf32>
    %196 = arith.mulf %194, %195 : vector<2x128xf32>
    %c120_i32_73 = arith.constant 120 : i32
    %197 = tpu.dynamic_rotate %6 by %c120_i32_73 dim 1 : vector<2x128xf32>, i32 -> vector<2x128xf32>
    %198 = vector.broadcast %193 : vector<1x128xf32> to vector<2x128xf32>
    %199 = arith.mulf %197, %198 : vector<2x128xf32>
    %200 = vector.shape_cast %196 : vector<2x128xf32> to vector<2x128x1xf32>
    %c7_74 = arith.constant 7 : index
    %c0_75 = arith.constant 0 : index
    %201 = vector.load %arg13[%c7_74, %c0_75] : memref<18x128xf32, #tpu.memory_space<vmem>>, vector<1x128xf32>
    %202 = vector.shape_cast %201 : vector<1x128xf32> to vector<1x1x128xf32>
    %203 = vector.broadcast %200 : vector<2x128x1xf32> to vector<2x128x128xf32>
    %204 = vector.broadcast %202 : vector<1x1x128xf32> to vector<2x128x128xf32>
    %205 = arith.mulf %203, %204 : vector<2x128x128xf32>
    %206 = arith.addf %192, %205 : vector<2x128x128xf32>
    %207 = vector.shape_cast %199 : vector<2x128xf32> to vector<2x128x1xf32>
    %c16 = arith.constant 16 : index
    %c0_76 = arith.constant 0 : index
    %208 = vector.load %arg13[%c16, %c0_76] : memref<18x128xf32, #tpu.memory_space<vmem>>, vector<1x128xf32>
    %209 = vector.shape_cast %208 : vector<1x128xf32> to vector<1x1x128xf32>
    %210 = vector.broadcast %207 : vector<2x128x1xf32> to vector<2x128x128xf32>
    %211 = vector.broadcast %209 : vector<1x1x128xf32> to vector<2x128x128xf32>
    %212 = arith.mulf %210, %211 : vector<2x128x128xf32>
    %213 = arith.addf %206, %212 : vector<2x128x128xf32>
    %c8 = arith.constant 8 : index
    %c0_77 = arith.constant 0 : index
    %214 = vector.load %arg4[%c8, %c0_77] : memref<9x128xf32, #tpu.memory_space<vmem>>, vector<1x128xf32>
    %c119_i32 = arith.constant 119 : i32
    %215 = tpu.dynamic_rotate %5 by %c119_i32 dim 1 : vector<2x128xf32>, i32 -> vector<2x128xf32>
    %216 = vector.broadcast %214 : vector<1x128xf32> to vector<2x128xf32>
    %217 = arith.mulf %215, %216 : vector<2x128xf32>
    %c119_i32_78 = arith.constant 119 : i32
    %218 = tpu.dynamic_rotate %6 by %c119_i32_78 dim 1 : vector<2x128xf32>, i32 -> vector<2x128xf32>
    %219 = vector.broadcast %214 : vector<1x128xf32> to vector<2x128xf32>
    %220 = arith.mulf %218, %219 : vector<2x128xf32>
    %221 = vector.shape_cast %217 : vector<2x128xf32> to vector<2x128x1xf32>
    %c8_79 = arith.constant 8 : index
    %c0_80 = arith.constant 0 : index
    %222 = vector.load %arg13[%c8_79, %c0_80] : memref<18x128xf32, #tpu.memory_space<vmem>>, vector<1x128xf32>
    %223 = vector.shape_cast %222 : vector<1x128xf32> to vector<1x1x128xf32>
    %224 = vector.broadcast %221 : vector<2x128x1xf32> to vector<2x128x128xf32>
    %225 = vector.broadcast %223 : vector<1x1x128xf32> to vector<2x128x128xf32>
    %226 = arith.mulf %224, %225 : vector<2x128x128xf32>
    %227 = arith.addf %213, %226 : vector<2x128x128xf32>
    %228 = vector.shape_cast %220 : vector<2x128xf32> to vector<2x128x1xf32>
    %c17 = arith.constant 17 : index
    %c0_81 = arith.constant 0 : index
    %229 = vector.load %arg13[%c17, %c0_81] : memref<18x128xf32, #tpu.memory_space<vmem>>, vector<1x128xf32>
    %230 = vector.shape_cast %229 : vector<1x128xf32> to vector<1x1x128xf32>
    %231 = vector.broadcast %228 : vector<2x128x1xf32> to vector<2x128x128xf32>
    %232 = vector.broadcast %230 : vector<1x1x128xf32> to vector<2x128x128xf32>
    %233 = arith.mulf %231, %232 : vector<2x128x128xf32>
    %234 = arith.addf %227, %233 : vector<2x128x128xf32>
    %c0_82 = arith.constant 0 : index
    %c0_83 = arith.constant 0 : index
    %c0_84 = arith.constant 0 : index
    %235 = vector.load %arg25[%c0_82, %c0_83, %c0_84] : memref<2x128x128xf32, #tpu.memory_space<vmem>>, vector<2x128x128xf32>
    %236 = vector.shape_cast %46 : vector<2x128xf32> to vector<2x1x128xf32>
    %237 = vector.broadcast %236 : vector<2x1x128xf32> to vector<2x128x128xf32>
    %238 = arith.addf %235, %237 : vector<2x128x128xf32>
    %239 = arith.addf %238, %234 : vector<2x128x128xf32>
    %c0_85 = arith.constant 0 : index
    %c0_86 = arith.constant 0 : index
    %240 = vector.load %arg14[%c0_85, %c0_86] : memref<1x128xf32, #tpu.memory_space<vmem>>, vector<1x128xf32>
    %241 = vector.shape_cast %240 : vector<1x128xf32> to vector<1x1x128xf32>
    %242 = vector.broadcast %241 : vector<1x1x128xf32> to vector<2x128x128xf32>
    %243 = arith.addf %239, %242 : vector<2x128x128xf32>
    %244 = math.tanh %243 : vector<2x128x128xf32>
    %c0_87 = arith.constant 0 : index
    %c0_88 = arith.constant 0 : index
    %245 = vector.load %arg15[%c0_87, %c0_88] : memref<1x128xf32, #tpu.memory_space<vmem>>, vector<1x128xf32>
    %246 = vector.shape_cast %245 : vector<1x128xf32> to vector<1x1x128xf32>
    %247 = vector.broadcast %246 : vector<1x1x128xf32> to vector<2x128x128xf32>
    %248 = arith.mulf %244, %247 : vector<2x128x128xf32>
    %cst_89 = arith.constant dense<0.000000e+00> : vector<2x128xf32>
    %249 = vector.multi_reduction <add>, %248, %cst_89 [2] : vector<2x128x128xf32> to vector<2x128xf32>
    %c0_90 = arith.constant 0 : index
    %c0_91 = arith.constant 0 : index
    %250 = vector.load %arg16[%c0_90, %c0_91] : memref<1x1xf32, #tpu.memory_space<vmem>>, vector<1x1xf32>
    %251 = vector.broadcast %250 : vector<1x1xf32> to vector<2x128xf32>
    %252 = arith.addf %249, %251 : vector<2x128xf32>
    %c0_92 = arith.constant 0 : index
    %c0_93 = arith.constant 0 : index
    %c0_94 = arith.constant 0 : index
    %253 = vector.load %arg24[%c0_92, %c0_93, %c0_94] : memref<1x2x128xf32, #tpu.memory_space<vmem>>, vector<1x2x128xf32>
    %254 = vector.shape_cast %253 : vector<1x2x128xf32> to vector<2x128xf32>
    %255 = vector.shape_cast %252 : vector<2x128xf32> to vector<1x2x128xf32>
    tpu.vector_store %arg24[%c0_92, %c0_93, %c0_94], %255 {strides = array<i32>} : memref<1x2x128xf32, #tpu.memory_space<vmem>>, vector<1x2x128xf32>,
    %cst_95 = arith.constant 1.000000e+00 : f32
    %256 = vector.broadcast %cst_95 : f32 to vector<2x128xf32>
    %257 = arith.subf %256, %8 : vector<2x128xf32>
    %cst_96 = arith.constant 1.000000e+08 : f32
    %258 = vector.broadcast %cst_96 : f32 to vector<2x128xf32>
    %259 = arith.mulf %257, %258 : vector<2x128xf32>
    %260 = arith.subf %252, %259 : vector<2x128xf32>
    %cst_97 = arith.constant dense<0xFF800000> : vector<2xf32>
    %261 = vector.multi_reduction <maximumf>, %260, %cst_97 [1] : vector<2x128xf32> to vector<2xf32>
    %262 = vector.shape_cast %261 : vector<2xf32> to vector<2x1xf32>
    %263 = vector.broadcast %262 : vector<2x1xf32> to vector<2x128xf32>
    %264 = arith.subf %260, %263 : vector<2x128xf32>
    %265 = math.exp %264 : vector<2x128xf32>
    %cst_98 = arith.constant dense<0.000000e+00> : vector<2xf32>
    %266 = vector.multi_reduction <add>, %265, %cst_98 [1] : vector<2x128xf32> to vector<2xf32>
    %267 = vector.shape_cast %266 : vector<2xf32> to vector<2x1xf32>
    %268 = tpu.reciprocal %267 {approx = true} : vector<2x1xf32> -> vector<2x1xf32>
    %269 = vector.broadcast %268 : vector<2x1xf32> to vector<2x128xf32>
    %270 = arith.mulf %265, %269 : vector<2x128xf32>
    %c0_99 = arith.constant 0 : index
    %c0_100 = arith.constant 0 : index
    %271 = vector.load %arg28[%c0_99, %c0_100] : memref<2x128xf32, #tpu.memory_space<vmem>>, vector<2x128xf32>
    tpu.vector_store %arg28[%c0_99, %c0_100], %270 {strides = array<i32>} : memref<2x128xf32, #tpu.memory_space<vmem>>, vector<2x128xf32>,
    %c0_101 = arith.constant 0 : index
    %c0_102 = arith.constant 0 : index
    %272 = vector.load %arg3[%c0_101, %c0_102] : memref<2x128xi32, #tpu.memory_space<vmem>>, vector<2x128xi32>
    %273 = vector.broadcast %arg0 : i32 to vector<2x128xi32>
    %274 = arith.cmpi eq, %272, %273 : vector<2x128xi32>
    %275 = arith.extui %274 : vector<2x128xi1> to vector<2x128xi32>
    %276 = arith.sitofp %275 : vector<2x128xi32> to vector<2x128xf32>
    %cst_103 = arith.constant dense<0.000000e+00> : vector<2xf32>
    %277 = vector.multi_reduction <add>, %276, %cst_103 [1] : vector<2x128xf32> to vector<2xf32>
    %278 = vector.shape_cast %277 : vector<2xf32> to vector<2x1xf32>
    %279 = vector.shape_cast %276 : vector<2x128xf32> to vector<2x128x1xf32>
    %280 = vector.broadcast %279 : vector<2x128x1xf32> to vector<2x128x128xf32>
    %281 = arith.mulf %7, %280 : vector<2x128x128xf32>
    %cst_104 = arith.constant dense<0.000000e+00> : vector<2x128xf32>
    %282 = vector.multi_reduction <add>, %281, %cst_104 [1] : vector<2x128x128xf32> to vector<2x128xf32>
    %cst_105 = arith.constant 0.000000e+00 : f32
    %283 = vector.broadcast %cst_105 : f32 to vector<2x1xf32>
    %284 = arith.cmpf ogt, %278, %283 : vector<2x1xf32>
    %cst_106 = arith.constant 1.000000e+00 : f32
    %285 = vector.broadcast %cst_106 : f32 to vector<2x1xf32>
    %286 = arith.maximumf %278, %285 : vector<2x1xf32>
    %287 = tpu.reciprocal %286 {approx = true} : vector<2x1xf32> -> vector<2x1xf32>
    %288 = vector.broadcast %287 : vector<2x1xf32> to vector<2x128xf32>
    %289 = arith.mulf %282, %288 : vector<2x128xf32>
    %cst_107 = arith.constant 0.000000e+00 : f32
    %290 = vector.shape_cast %284 : vector<2x1xi1> to vector<2x1xi1>
    %291 = vector.broadcast %290 : vector<2x1xi1> to vector<2x128xi1>
    %292 = vector.broadcast %cst_107 : f32 to vector<2x128xf32>
    %293 = arith.select %291, %289, %292 : vector<2x128xi1>, vector<2x128xf32>
    %c0_108 = arith.constant 0 : index
    %c0_109 = arith.constant 0 : index
    %294 = vector.load %arg27[%c0_108, %c0_109] : memref<2x128xf32, #tpu.memory_space<vmem>>, vector<2x128xf32>
    tpu.vector_store %arg27[%c0_108, %c0_109], %293 {strides = array<i32>} : memref<2x128xf32, #tpu.memory_space<vmem>>, vector<2x128xf32>,
    %295 = arith.addf %276, %6 : vector<2x128xf32>
    %cst_110 = arith.constant 1.000000e+00 : f32
    %296 = vector.broadcast %cst_110 : f32 to vector<2x128xf32>
    %297 = arith.minimumf %295, %296 : vector<2x128xf32>
    %c0_111 = arith.constant 0 : index
    %c0_112 = arith.constant 0 : index
    %298 = vector.load %arg29[%c0_111, %c0_112] : memref<2x128xf32, #tpu.memory_space<vmem>>, vector<2x128xf32>
    tpu.vector_store %arg29[%c0_111, %c0_112], %297 {strides = array<i32>} : memref<2x128xf32, #tpu.memory_space<vmem>>, vector<2x128xf32>,
    %c0_113 = arith.constant 0 : index
    %c0_114 = arith.constant 0 : index
    %299 = vector.load %arg30[%c0_113, %c0_114] : memref<2x256xf32, #tpu.memory_space<vmem>>, vector<2x128xf32>
    tpu.vector_store %arg30[%c0_113, %c0_114], %293 {strides = array<i32>} : memref<2x256xf32, #tpu.memory_space<vmem>>, vector<2x128xf32>,
    %c0_115 = arith.constant 0 : index
    %c128_116 = arith.constant 128 : index
    %300 = vector.load %arg30[%c0_115, %c128_116] : memref<2x256xf32, #tpu.memory_space<vmem>>, vector<2x128xf32>
    tpu.vector_store %arg30[%c0_115, %c128_116], %38 {strides = array<i32>} : memref<2x256xf32, #tpu.memory_space<vmem>>, vector<2x128xf32>,
    %c0_117 = arith.constant 0 : index
    %c0_118 = arith.constant 0 : index
    %301 = vector.load %arg30[%c0_117, %c0_118] : memref<2x256xf32, #tpu.memory_space<vmem>>, vector<2x256xf32>
    %c0_119 = arith.constant 0 : index
    %c0_120 = arith.constant 0 : index
    %302 = vector.load %arg17[%c0_119, %c0_120] : memref<256x512xf32, #tpu.memory_space<vmem>>, vector<256x512xf32>
    %cst_121 = arith.constant dense<0.000000e+00> : vector<2x512xf32>
    %303 = tpu.matmul %301, %302, %cst_121 {dimension_numbers = #tpu.dot_dimension_numbers<[1], [0], [0], [1], [0, 0, 1, 1], [], []>} : vector<2x256xf32>, vector<256x512xf32>, vector<2x512xf32> -> vector<2x512xf32>
    %c0_122 = arith.constant 0 : index
    %c0_123 = arith.constant 0 : index
    %304 = vector.load %arg18[%c0_122, %c0_123] : memref<1x512xf32, #tpu.memory_space<vmem>>, vector<1x512xf32>
    %305 = vector.broadcast %304 : vector<1x512xf32> to vector<2x512xf32>
    %306 = arith.addf %303, %305 : vector<2x512xf32>
    %307 = vector.extract_strided_slice %306 {offsets = [0, 0], sizes = [2, 128], strides = [1, 1]} : vector<2x512xf32> to vector<2x128xf32>
    %308 = arith.negf %307 : vector<2x128xf32>
    %309 = math.exp %308 : vector<2x128xf32>
    %cst_124 = arith.constant 1.000000e+00 : f32
    %310 = vector.broadcast %cst_124 : f32 to vector<2x128xf32>
    %311 = arith.addf %310, %309 : vector<2x128xf32>
    %312 = arith.divf %310, %311 : vector<2x128xf32>
    %313 = vector.extract_strided_slice %306 {offsets = [0, 128], sizes = [2, 128], strides = [1, 1]} : vector<2x512xf32> to vector<2x128xf32>
    %314 = arith.negf %313 : vector<2x128xf32>
    %315 = math.exp %314 : vector<2x128xf32>
    %cst_125 = arith.constant 1.000000e+00 : f32
    %316 = vector.broadcast %cst_125 : f32 to vector<2x128xf32>
    %317 = arith.addf %316, %315 : vector<2x128xf32>
    %318 = arith.divf %316, %317 : vector<2x128xf32>
    %319 = vector.extract_strided_slice %306 {offsets = [0, 256], sizes = [2, 128], strides = [1, 1]} : vector<2x512xf32> to vector<2x128xf32>
    %320 = vector.extract_strided_slice %306 {offsets = [0, 384], sizes = [2, 128], strides = [1, 1]} : vector<2x512xf32> to vector<2x128xf32>
    %321 = arith.mulf %312, %320 : vector<2x128xf32>
    %322 = arith.addf %319, %321 : vector<2x128xf32>
    %323 = math.tanh %322 : vector<2x128xf32>
    %cst_126 = arith.constant 1.000000e+00 : f32
    %324 = vector.broadcast %cst_126 : f32 to vector<2x128xf32>
    %325 = arith.subf %324, %318 : vector<2x128xf32>
    %326 = arith.mulf %325, %323 : vector<2x128xf32>
    %327 = arith.mulf %318, %38 : vector<2x128xf32>
    %328 = arith.addf %326, %327 : vector<2x128xf32>
    %c0_127 = arith.constant 0 : index
    %c0_128 = arith.constant 0 : index
    %329 = vector.load %arg26[%c0_127, %c0_128] : memref<2x128xf32, #tpu.memory_space<vmem>>, vector<2x128xf32>
    tpu.vector_store %arg26[%c0_127, %c0_128], %328 {strides = array<i32>} : memref<2x128xf32, #tpu.memory_space<vmem>>, vector<2x128xf32>,
    %c0_129 = arith.constant 0 : index
    %c0_130 = arith.constant 0 : index
    %330 = vector.load %arg30[%c0_129, %c0_130] : memref<2x256xf32, #tpu.memory_space<vmem>>, vector<2x128xf32>
    tpu.vector_store %arg30[%c0_129, %c0_130], %293 {strides = array<i32>} : memref<2x256xf32, #tpu.memory_space<vmem>>, vector<2x128xf32>,
    %c0_131 = arith.constant 0 : index
    %c128_132 = arith.constant 128 : index
    %331 = vector.load %arg30[%c0_131, %c128_132] : memref<2x256xf32, #tpu.memory_space<vmem>>, vector<2x128xf32>
    tpu.vector_store %arg30[%c0_131, %c128_132], %328 {strides = array<i32>} : memref<2x256xf32, #tpu.memory_space<vmem>>, vector<2x128xf32>,
    %c0_133 = arith.constant 0 : index
    %c0_134 = arith.constant 0 : index
    %332 = vector.load %arg30[%c0_133, %c0_134] : memref<2x256xf32, #tpu.memory_space<vmem>>, vector<2x256xf32>
    %c0_135 = arith.constant 0 : index
    %c0_136 = arith.constant 0 : index
    %333 = vector.load %arg19[%c0_135, %c0_136] : memref<256x128xf32, #tpu.memory_space<vmem>>, vector<256x128xf32>
    %cst_137 = arith.constant dense<0.000000e+00> : vector<2x128xf32>
    %334 = tpu.matmul %332, %333, %cst_137 {dimension_numbers = #tpu.dot_dimension_numbers<[1], [0], [0], [1], [0, 0, 1, 1], [], []>} : vector<2x256xf32>, vector<256x128xf32>, vector<2x128xf32> -> vector<2x128xf32>
    %c0_138 = arith.constant 0 : index
    %c0_139 = arith.constant 0 : index
    %335 = vector.load %arg20[%c0_138, %c0_139] : memref<1x128xf32, #tpu.memory_space<vmem>>, vector<1x128xf32>
    %336 = vector.broadcast %335 : vector<1x128xf32> to vector<2x128xf32>
    %337 = arith.addf %334, %336 : vector<2x128xf32>
    %338 = math.tanh %337 : vector<2x128xf32>
    %c0_140 = arith.constant 0 : index
    %c0_141 = arith.constant 0 : index
    %339 = vector.load %arg21[%c0_140, %c0_141] : memref<128x128xf32, #tpu.memory_space<vmem>>, vector<128x128xf32>
    %cst_142 = arith.constant dense<0.000000e+00> : vector<2x128xf32>
    %340 = tpu.matmul %338, %339, %cst_142 {dimension_numbers = #tpu.dot_dimension_numbers<[1], [0], [0], [1], [0, 0, 1, 1], [], []>} : vector<2x128xf32>, vector<128x128xf32>, vector<2x128xf32> -> vector<2x128xf32>
    %c0_143 = arith.constant 0 : index
    %c0_144 = arith.constant 0 : index
    %341 = vector.load %arg22[%c0_143, %c0_144] : memref<1x128xf32, #tpu.memory_space<vmem>>, vector<1x128xf32>
    %342 = vector.broadcast %341 : vector<1x128xf32> to vector<2x128xf32>
    %343 = arith.addf %340, %342 : vector<2x128xf32>
    %c0_145 = arith.constant 0 : index
    %c0_146 = arith.constant 0 : index
    %c0_147 = arith.constant 0 : index
    %344 = vector.load %arg23[%c0_145, %c0_146, %c0_147] : memref<1x2x128xf32, #tpu.memory_space<vmem>>, vector<1x2x128xf32>
    %345 = vector.shape_cast %344 : vector<1x2x128xf32> to vector<2x128xf32>
    %346 = vector.shape_cast %343 : vector<2x128xf32> to vector<1x2x128xf32>
    tpu.vector_store %arg23[%c0_145, %c0_146, %c0_147], %346 {strides = array<i32>} : memref<1x2x128xf32, #tpu.memory_space<vmem>>, vector<1x2x128xf32>,
    return
  }
  func.func @transform_0(%arg0: i32) -> (i32, i32, i32) {
    %c0_i32 = arith.constant 0 : i32
    %c0_i32_0 = arith.constant 0 : i32
    %c0_i32_1 = arith.constant 0 : i32
    %c0_i32_2 = arith.constant 0 : i32
    return %c0_i32, %c0_i32_0, %c0_i32_1 : i32, i32, i32
  }
  func.func @transform_1(%arg0: i32) -> (i32, i32) {
    %c0_i32 = arith.constant 0 : i32
    %c0_i32_0 = arith.constant 0 : i32
    %c0_i32_1 = arith.constant 0 : i32
    return %c0_i32, %c0_i32_0 : i32, i32
  }
  func.func @transform_2(%arg0: i32) -> (i32, i32) {
    %c0_i32 = arith.constant 0 : i32
    %c0_i32_0 = arith.constant 0 : i32
    %c0_i32_1 = arith.constant 0 : i32
    return %c0_i32, %c0_i32_0 : i32, i32
  }
  func.func @transform_3(%arg0: i32) -> (i32, i32) {
    %c0_i32 = arith.constant 0 : i32
    %c0_i32_0 = arith.constant 0 : i32
    %c0_i32_1 = arith.constant 0 : i32
    return %c0_i32, %c0_i32_0 : i32, i32
  }
  func.func @transform_4(%arg0: i32) -> (i32, i32) {
    %c0_i32 = arith.constant 0 : i32
    %c0_i32_0 = arith.constant 0 : i32
    %c0_i32_1 = arith.constant 0 : i32
    return %c0_i32, %c0_i32_0 : i32, i32
  }
  func.func @transform_5(%arg0: i32) -> (i32, i32) {
    %c0_i32 = arith.constant 0 : i32
    %c0_i32_0 = arith.constant 0 : i32
    %c0_i32_1 = arith.constant 0 : i32
    return %c0_i32, %c0_i32_0 : i32, i32
  }
  func.func @transform_6(%arg0: i32) -> (i32, i32) {
    %c0_i32 = arith.constant 0 : i32
    %c0_i32_0 = arith.constant 0 : i32
    %c0_i32_1 = arith.constant 0 : i32
    return %c0_i32, %c0_i32_0 : i32, i32
  }
  func.func @transform_7(%arg0: i32) -> (i32, i32) {
    %c0_i32 = arith.constant 0 : i32
    %c0_i32_0 = arith.constant 0 : i32
    %c0_i32_1 = arith.constant 0 : i32
    return %c0_i32, %c0_i32_0 : i32, i32
  }
  func.func @transform_8(%arg0: i32) -> (i32, i32) {
    %c0_i32 = arith.constant 0 : i32
    %c0_i32_0 = arith.constant 0 : i32
    %c0_i32_1 = arith.constant 0 : i32
    return %c0_i32, %c0_i32_0 : i32, i32
  }
  func.func @transform_9(%arg0: i32) -> (i32, i32) {
    %c0_i32 = arith.constant 0 : i32
    %c0_i32_0 = arith.constant 0 : i32
    %c0_i32_1 = arith.constant 0 : i32
    return %c0_i32, %c0_i32_0 : i32, i32
  }
  func.func @transform_10(%arg0: i32) -> (i32, i32) {
    %c0_i32 = arith.constant 0 : i32
    %c0_i32_0 = arith.constant 0 : i32
    %c0_i32_1 = arith.constant 0 : i32
    return %c0_i32, %c0_i32_0 : i32, i32
  }
  func.func @transform_11(%arg0: i32) -> (i32, i32) {
    %c0_i32 = arith.constant 0 : i32
    %c0_i32_0 = arith.constant 0 : i32
    %c0_i32_1 = arith.constant 0 : i32
    return %c0_i32, %c0_i32_0 : i32, i32
  }
  func.func @transform_12(%arg0: i32) -> (i32, i32) {
    %c0_i32 = arith.constant 0 : i32
    %c0_i32_0 = arith.constant 0 : i32
    %c0_i32_1 = arith.constant 0 : i32
    return %c0_i32, %c0_i32_0 : i32, i32
  }
  func.func @transform_13(%arg0: i32) -> (i32, i32) {
    %c0_i32 = arith.constant 0 : i32
    %c0_i32_0 = arith.constant 0 : i32
    %c0_i32_1 = arith.constant 0 : i32
    return %c0_i32, %c0_i32_0 : i32, i32
  }
  func.func @transform_14(%arg0: i32) -> (i32, i32) {
    %c0_i32 = arith.constant 0 : i32
    %c0_i32_0 = arith.constant 0 : i32
    %c0_i32_1 = arith.constant 0 : i32
    return %c0_i32, %c0_i32_0 : i32, i32
  }
  func.func @transform_15(%arg0: i32) -> (i32, i32) {
    %c0_i32 = arith.constant 0 : i32
    %c0_i32_0 = arith.constant 0 : i32
    %c0_i32_1 = arith.constant 0 : i32
    return %c0_i32, %c0_i32_0 : i32, i32
  }
  func.func @transform_16(%arg0: i32) -> (i32, i32) {
    %c0_i32 = arith.constant 0 : i32
    %c0_i32_0 = arith.constant 0 : i32
    %c0_i32_1 = arith.constant 0 : i32
    return %c0_i32, %c0_i32_0 : i32, i32
  }
  func.func @transform_17(%arg0: i32) -> (i32, i32) {
    %c0_i32 = arith.constant 0 : i32
    %c0_i32_0 = arith.constant 0 : i32
    %c0_i32_1 = arith.constant 0 : i32
    return %c0_i32, %c0_i32_0 : i32, i32
  }
  func.func @transform_18(%arg0: i32) -> (i32, i32) {
    %c0_i32 = arith.constant 0 : i32
    %c0_i32_0 = arith.constant 0 : i32
    %c0_i32_1 = arith.constant 0 : i32
    return %c0_i32, %c0_i32_0 : i32, i32
  }
  func.func @transform_19(%arg0: i32) -> (i32, i32) {
    %c0_i32 = arith.constant 0 : i32
    %c0_i32_0 = arith.constant 0 : i32
    %c0_i32_1 = arith.constant 0 : i32
    return %c0_i32, %c0_i32_0 : i32, i32
  }
  func.func @transform_20(%arg0: i32) -> (i32, i32) {
    %c0_i32 = arith.constant 0 : i32
    %c0_i32_0 = arith.constant 0 : i32
    %c0_i32_1 = arith.constant 0 : i32
    return %c0_i32, %c0_i32_0 : i32, i32
  }
  func.func @transform_21(%arg0: i32) -> (i32, i32) {
    %c0_i32 = arith.constant 0 : i32
    %c0_i32_0 = arith.constant 0 : i32
    %c0_i32_1 = arith.constant 0 : i32
    return %c0_i32, %c0_i32_0 : i32, i32
  }
  func.func @transform_22(%arg0: i32) -> (i32, i32, i32) {
    %c0_i32 = arith.constant 0 : i32
    %c0_i32_0 = arith.constant 0 : i32
    %c0_i32_1 = arith.constant 0 : i32
    return %arg0, %c0_i32, %c0_i32_0 : i32, i32, i32
  }
  func.func @transform_23(%arg0: i32) -> (i32, i32, i32) {
    %c0_i32 = arith.constant 0 : i32
    %c0_i32_0 = arith.constant 0 : i32
    %c0_i32_1 = arith.constant 0 : i32
    return %arg0, %c0_i32, %c0_i32_0 : i32, i32, i32
  }
}

</mosaic_0001>

<llo_original>
// kernel: tpu_custom_call.1
$region0: #{tpu_custom_call.1}
  #allocation0 [shape = 'u32[]', space=smem, size = 0x4, offset = 0x4, fixed_abs, tag = 'smem constant byte address 0x4 - core index']
  #allocation1 [shape = 'u32[144,128]{1,0:T(1,128)}', space=vmem, size = 0x12000, scoped, tag = 'internal scratch']
  #allocation2 [shape = 'f32[2,128,128]{2,1,0:T(8,128)}', space=vmem, size = 0x20000, scoped, tag = 'scratch operand']
  #allocation3 [shape = 'f32[2,128]{1,0:T(2,128)}', space=vmem, size = 0x400, scoped, tag = 'scratch operand']
  #allocation4 [shape = 'f32[2,128]{1,0:T(2,128)}', space=vmem, size = 0x400, scoped, tag = 'scratch operand']
  #allocation5 [shape = 'f32[2,128]{1,0:T(2,128)}', space=vmem, size = 0x400, scoped, tag = 'scratch operand']
  #allocation6 [shape = 'f32[2,128]{1,0:T(2,128)}', space=vmem, size = 0x400, scoped, tag = 'scratch operand']
  #allocation7 [shape = 'f32[2,256]{1,0:T(2,128)}', space=vmem, size = 0x800, scoped, tag = 'scratch operand']
  #allocation8 [shape = 'f32[1,1]{1,0:T(1,128)S(1)}', space=vmem, size = 0x200, scoped, tag = 'scoped memory for tpu_custom_call.1']
  %s0 = inlined_call_operand.hbm [shape: f32[2,128,128], index: 0, kind: input, shape index: {}]
  %s1 = inlined_call_operand.hbm [shape: f32[2,128], index: 1, kind: input, shape index: {}]
  %s2 = inlined_call_operand.hbm [shape: s32[2,128], index: 2, kind: input, shape index: {}]
  %s3 = inlined_call_operand.hbm [shape: f32[9,128], index: 3, kind: input, shape index: {}]
  %s4 = inlined_call_operand.hbm [shape: f32[128,128], index: 4, kind: input, shape index: {}]
  %s5 = inlined_call_operand.hbm [shape: f32[1,128], index: 5, kind: input, shape index: {}]
  %s6 = inlined_call_operand.hbm [shape: f32[128,128], index: 6, kind: input, shape index: {}]
  %s7 = inlined_call_operand.hbm [shape: f32[1,128], index: 7, kind: input, shape index: {}]
  %s8 = inlined_call_operand.hbm [shape: f32[256,512], index: 8, kind: input, shape index: {}]
  %s9 = inlined_call_operand.hbm [shape: f32[1,512], index: 9, kind: input, shape index: {}]
  %s10 = inlined_call_operand.hbm [shape: f32[256,128], index: 10, kind: input, shape index: {}]
  %s11 = inlined_call_operand.hbm [shape: f32[1,128], index: 11, kind: input, shape index: {}]
  %s12 = inlined_call_operand.hbm [shape: f32[18,128], index: 12, kind: input, shape index: {}]
  %s13 = inlined_call_operand.hbm [shape: f32[1,128], index: 13, kind: input, shape index: {}]
  %s14 = inlined_call_operand.hbm [shape: f32[1,128], index: 14, kind: input, shape index: {}]
  %s15 = inlined_call_operand.<no memory space> [shape: f32[1,1], index: 15, kind: input, shape index: {}]
  %s16 = inlined_call_operand.hbm [shape: f32[256,512], index: 16, kind: input, shape index: {}]
  %s17 = inlined_call_operand.hbm [shape: f32[1,512], index: 17, kind: input, shape index: {}]
  %s18 = inlined_call_operand.hbm [shape: f32[256,128], index: 18, kind: input, shape index: {}]
  %s19 = inlined_call_operand.hbm [shape: f32[1,128], index: 19, kind: input, shape index: {}]
  %s20 = inlined_call_operand.hbm [shape: f32[128,128], index: 20, kind: input, shape index: {}]
  %s21 = inlined_call_operand.hbm [shape: f32[1,128], index: 21, kind: input, shape index: {}]
  %s22 = inlined_call_operand.hbm [shape: f32[4,2,128], index: 22, kind: output, shape index: {0}]
  %s23 = inlined_call_operand.hbm [shape: f32[4,2,128], index: 23, kind: output, shape index: {1}]
  %24 = xla_tuple %s22, %s23
  %s25 = sld [smem:[#allocation0]]
  $region217: #{tpu_custom_call.1} parent=0
    _
  %s27 = ssub.s32 1, %s25
  %s28 = scalar_select 0, %s27, %s25
  %v29 = vstv %s15
  %30 = vst [vmem:[#allocation8] sm:$0x1] %v29
  $region1: #{tpu_custom_call.1} parent=0
    #allocation9 [shape = 'u8[131072]{0}', space=vmem, size = 0x20000, scoped, tag = 'input window, operand 0, single buffered']
    #allocation10 [shape = 's32[2]{0}', space=sflag, size = 0x8, scoped, tag = 'scoped memory for tpu_custom_call.1']
    #allocation11 [shape = 's32[2]{0}', space=sflag, size = 0x8, scoped, tag = 'scoped memory for tpu_custom_call.1']
    #allocation12 [shape = 'u8[1024]{0}', space=vmem, size = 0x400, scoped, tag = 'input window, operand 1, single buffered']
    #allocation13 [shape = 's32[1]{0}', space=sflag, size = 0x4, scoped, tag = 'scoped memory for tpu_custom_call.1']
    #allocation14 [shape = 'u8[1024]{0}', space=vmem, size = 0x400, scoped, tag = 'input window, operand 2, single buffered']
    #allocation15 [shape = 'u8[8192]{0}', space=vmem, size = 0x2000, scoped, tag = 'input window, operand 3, single buffered']
    #allocation16 [shape = 's32[1]{0}', space=sflag, size = 0x4, scoped, tag = 'scoped memory for tpu_custom_call.1']
    #allocation17 [shape = 'u8[65536]{0}', space=vmem, size = 0x10000, scoped, tag = 'input window, operand 4, single buffered']
    #allocation18 [shape = 'u8[512]{0}', space=vmem, size = 0x400, scoped, tag = 'input window, operand 5, single buffered']
    #allocation19 [shape = 's32[1]{0}', space=sflag, size = 0x4, scoped, tag = 'scoped memory for tpu_custom_call.1']
    #allocation20 [shape = 'u8[65536]{0}', space=vmem, size = 0x10000, scoped, tag = 'input window, operand 6, single buffered']
    #allocation21 [shape = 'u8[512]{0}', space=vmem, size = 0x400, scoped, tag = 'input window, operand 7, single buffered']
    #allocation22 [shape = 's32[1]{0}', space=sflag, size = 0x4, scoped, tag = 'scoped memory for tpu_custom_call.1']
    #allocation23 [shape = 'u8[524288]{0}', space=vmem, size = 0x80000, scoped, tag = 'input window, operand 8, single buffered']
    #allocation24 [shape = 'u8[2048]{0}', space=vmem, size = 0x800, scoped, tag = 'input window, operand 9, single buffered']
    #allocation25 [shape = 's32[1]{0}', space=sflag, size = 0x4, scoped, tag = 'scoped memory for tpu_custom_call.1']
    #allocation26 [shape = 'u8[131072]{0}', space=vmem, size = 0x20000, scoped, tag = 'input window, operand 10, single buffered']
    #allocation27 [shape = 'u8[512]{0}', space=vmem, size = 0x400, scoped, tag = 'input window, operand 11, single buffered']
    #allocation28 [shape = 's32[1]{0}', space=sflag, size = 0x4, scoped, tag = 'scoped memory for tpu_custom_call.1']
    #allocation29 [shape = 'u8[12288]{0}', space=vmem, size = 0x3000, scoped, tag = 'input window, operand 12, single buffered']
    #allocation30 [shape = 'u8[512]{0}', space=vmem, size = 0x400, scoped, tag = 'input window, operand 13, single buffered']
    #allocation31 [shape = 's32[1]{0}', space=sflag, size = 0x4, scoped, tag = 'scoped memory for tpu_custom_call.1']
    #allocation32 [shape = 'u8[512]{0}', space=vmem, size = 0x400, scoped, tag = 'input window, operand 14, single buffered']
    #allocation33 [shape = 'u8[524288]{0}', space=vmem, size = 0x80000, scoped, tag = 'input window, operand 16, single buffered']
    #allocation34 [shape = 's32[1]{0}', space=sflag, size = 0x4, scoped, tag = 'scoped memory for tpu_custom_call.1']
    #allocation35 [shape = 'u8[2048]{0}', space=vmem, size = 0x800, scoped, tag = 'input window, operand 17, single buffered']
    #allocation36 [shape = 'u8[131072]{0}', space=vmem, size = 0x20000, scoped, tag = 'input window, operand 18, single buffered']
    #allocation37 [shape = 's32[1]{0}', space=sflag, size = 0x4, scoped, tag = 'scoped memory for tpu_custom_call.1']
    #allocation38 [shape = 'u8[512]{0}', space=vmem, size = 0x400, scoped, tag = 'input window, operand 19, single buffered']
    #allocation39 [shape = 'u8[65536]{0}', space=vmem, size = 0x10000, scoped, tag = 'input window, operand 20, single buffered']
    #allocation40 [shape = 's32[1]{0}', space=sflag, size = 0x4, scoped, tag = 'scoped memory for tpu_custom_call.1']
    #allocation41 [shape = 'u8[512]{0}', space=vmem, size = 0x400, scoped, tag = 'input window, operand 21, single buffered']
    #allocation42 [shape = 'u8[2048]{0}', space=vmem, size = 0x800, scoped, tag = 'output window, operand 0']
    #allocation43 [shape = 'u8[2048]{0}', space=vmem, size = 0x800, scoped, tag = 'output window, operand 1']
    #allocation44 [shape = 's32[2]{0}', space=sflag, size = 0x8, scoped, tag = 'scoped memory for tpu_custom_call.1']
    %31 = vsyncpa [#allocation10], 0
    %32 = vsyncpa [#allocation13], 0
    %33 = vsyncpa [#allocation16], 0
    %34 = vsyncpa [#allocation19], 0
    %35 = vsyncpa [#allocation22], 0
    %36 = vsyncpa [#allocation25], 0
    %37 = vsyncpa [#allocation28], 0
    %38 = vsyncpa [#allocation31], 0
    %39 = vsyncpa [#allocation34], 0
    %40 = vsyncpa [#allocation37], 0
    %41 = vsyncpa [#allocation40], 0
    %42 = vsyncpa [#allocation11], 0
    %s43 = scalar_lea.sflag [#allocation11], 1
    %44 = vsyncpa %s43, 0
    %45 = vsyncpa [#allocation44], 0
    %s46 = scalar_lea.sflag [#allocation44], 1
    %47 = vsyncpa %s46, 0
    loop: start=0, step=1, limit=6
    $region2: #{tpu_custom_call.1} parent=1 // loop_pre_header
      _
    $region3: #{tpu_custom_call.1} parent=1 // loop_header
      %s49 = sphi 0, %s53
      %p50 = scmp.ge.s32.totalorder %s49, 6
      %s57 = sphi 0, %s57
      %s59 = sphi 0, %s57
      %s60 = sphi 0, %s59
      %s74 = sphi 0, %s60
      %s78 = sphi 0, %s78
      %s80 = sphi 0, %s78
      %s81 = sphi 0, %s80
      %s95 = sphi 0, %s81
      %s99 = sphi 0, %s99
      %s101 = sphi 0, %s99
      %s102 = sphi 0, %s101
      %s116 = sphi 0, %s102
      %s120 = sphi 0, %s120
      %s122 = sphi 0, %s120
      %s123 = sphi 0, %s122
      %s137 = sphi 0, %s123
      %s141 = sphi 0, %s141
      %s143 = sphi 0, %s141
      %s144 = sphi 0, %s143
      %s158 = sphi 0, %s144
      %s162 = sphi 0, %s162
      %s164 = sphi 0, %s162
      %s165 = sphi 0, %s164
      %s179 = sphi 0, %s165
      %s183 = sphi 0, %s183
      %s185 = sphi 0, %s183
      %s186 = sphi 0, %s185
      %s200 = sphi 0, %s186
      %s204 = sphi 0, %s204
      %s206 = sphi 0, %s204
      %s207 = sphi 0, %s206
      %s221 = sphi 0, %s207
      %s225 = sphi 0, %s225
      %s227 = sphi 0, %s225
      %s228 = sphi 0, %s227
      %s242 = sphi 0, %s228
      %s246 = sphi 0, %s246
      %s248 = sphi 0, %s246
      %s249 = sphi 0, %s248
      %s263 = sphi 0, %s249
      %s267 = sphi 0, %s267
      %s269 = sphi 0, %s267
      %s270 = sphi 0, %s269
      %s284 = sphi 0, %s270
      %s288 = sphi 0, %s288
      %s290 = sphi 0, %s288
      %s291 = sphi 0, %s290
      %s305 = sphi 0, %s291
      %s309 = sphi 0, %s309
      %s311 = sphi 0, %s309
      %s312 = sphi 0, %s311
      %s326 = sphi 0, %s312
      %s330 = sphi 0, %s330
      %s332 = sphi 0, %s330
      %s333 = sphi 0, %s332
      %s347 = sphi 0, %s333
      %s351 = sphi 0, %s351
      %s353 = sphi 0, %s351
      %s354 = sphi 0, %s353
      %s368 = sphi 0, %s354
      %s372 = sphi 0, %s372
      %s374 = sphi 0, %s372
      %s375 = sphi 0, %s374
      %s389 = sphi 0, %s375
      %s393 = sphi 0, %s393
      %s395 = sphi 0, %s393
      %s396 = sphi 0, %s395
      %s410 = sphi 0, %s396
      %s414 = sphi 0, %s414
      %s416 = sphi 0, %s414
      %s417 = sphi 0, %s416
      %s431 = sphi 0, %s417
      %s435 = sphi 0, %s435
      %s437 = sphi 0, %s435
      %s438 = sphi 0, %s437
      %s452 = sphi 0, %s438
      %s456 = sphi 0, %s456
      %s458 = sphi 0, %s456
      %s459 = sphi 0, %s458
      %s473 = sphi 0, %s459
      %s477 = sphi 0, %s477
      %s479 = sphi 0, %s477
      %s480 = sphi 0, %s479
      %s494 = sphi 0, %s480
      %s498 = sphi 0, %s498
      %s500 = sphi 0, %s498
      %s501 = sphi 0, %s500
      %s515 = sphi 0, %s501
      %s521 = sphi 0, %s523
      %s524 = sphi 0, %s521
      %s525 = sphi 0, %s524
      %s541 = sphi 0, %s525
      %s547 = sphi 0, %s549
      %s550 = sphi 0, %s547
      %s551 = sphi 0, %s550
      %s567 = sphi 0, %s551
    $region4: #{tpu_custom_call.1} parent=1 // loop_header_branch
      %52 = sbr.rel (%p50) target = $region8
    $region5: #{tpu_custom_call.1} parent=1 // loop_body
      %s54 = ssub.s32 %s49, 1
      %s55 = ssub.s32 %s49, 2
      %s56 = sadd.s32 %s49, 1
      %s58 = sadd.s32 %s57, 1
      %p61 = scmp.eq.s32.totalorder %s49, 3
      %p62 = scmp.ne.s32.totalorder %s57, %s59
      %p63 = scmp.eq.s32.totalorder %s49, 0
      %p64 = por %p62, %p63
      %p65 = scmp.ne.s32.totalorder %s57, %s59
      %p66 = scmp.eq.s32.totalorder %s54, 3
      %p67 = por %p65, %p66
      %p68 = scmp.ne.s32.totalorder %s59, %s60
      %p69 = scmp.eq.s32.totalorder %s54, 0
      %p70 = por %p68, %p69
      %p71 = scmp.ne.s32.totalorder %s59, %s60
      %p72 = scmp.eq.s32.totalorder %s55, 3
      %p73 = por %p71, %p72
      %p75 = scmp.ne.s32.totalorder %s60, %s74
      %p76 = scmp.eq.s32.totalorder %s55, 0
      %p77 = por %p75, %p76
      %s79 = sadd.s32 %s78, 1
      %p82 = scmp.eq.s32.totalorder %s49, 3
      %p83 = scmp.ne.s32.totalorder %s78, %s80
      %p84 = scmp.eq.s32.totalorder %s49, 0
      %p85 = por %p83, %p84
      %p86 = scmp.ne.s32.totalorder %s78, %s80
      %p87 = scmp.eq.s32.totalorder %s54, 3
      %p88 = por %p86, %p87
      %p89 = scmp.ne.s32.totalorder %s80, %s81
      %p90 = scmp.eq.s32.totalorder %s54, 0
      %p91 = por %p89, %p90
      %p92 = scmp.ne.s32.totalorder %s80, %s81
      %p93 = scmp.eq.s32.totalorder %s55, 3
      %p94 = por %p92, %p93
      %p96 = scmp.ne.s32.totalorder %s81, %s95
      %p97 = scmp.eq.s32.totalorder %s55, 0
      %p98 = por %p96, %p97
      %s100 = sadd.s32 %s99, 1
      %p103 = scmp.eq.s32.totalorder %s49, 3
      %p104 = scmp.ne.s32.totalorder %s99, %s101
      %p105 = scmp.eq.s32.totalorder %s49, 0
      %p106 = por %p104, %p105
      %p107 = scmp.ne.s32.totalorder %s99, %s101
      %p108 = scmp.eq.s32.totalorder %s54, 3
      %p109 = por %p107, %p108
      %p110 = scmp.ne.s32.totalorder %s101, %s102
      %p111 = scmp.eq.s32.totalorder %s54, 0
      %p112 = por %p110, %p111
      %p113 = scmp.ne.s32.totalorder %s101, %s102
      %p114 = scmp.eq.s32.totalorder %s55, 3
      %p115 = por %p113, %p114
      %p117 = scmp.ne.s32.totalorder %s102, %s116
      %p118 = scmp.eq.s32.totalorder %s55, 0
      %p119 = por %p117, %p118
      %s121 = sadd.s32 %s120, 1
      %p124 = scmp.eq.s32.totalorder %s49, 3
      %p125 = scmp.ne.s32.totalorder %s120, %s122
      %p126 = scmp.eq.s32.totalorder %s49, 0
      %p127 = por %p125, %p126
      %p128 = scmp.ne.s32.totalorder %s120, %s122
      %p129 = scmp.eq.s32.totalorder %s54, 3
      %p130 = por %p128, %p129
      %p131 = scmp.ne.s32.totalorder %s122, %s123
      %p132 = scmp.eq.s32.totalorder %s54, 0
      %p133 = por %p131, %p132
      %p134 = scmp.ne.s32.totalorder %s122, %s123
      %p135 = scmp.eq.s32.totalorder %s55, 3
      %p136 = por %p134, %p135
      %p138 = scmp.ne.s32.totalorder %s123, %s137
      %p139 = scmp.eq.s32.totalorder %s55, 0
      %p140 = por %p138, %p139
      %s142 = sadd.s32 %s141, 1
      %p145 = scmp.eq.s32.totalorder %s49, 3
      %p146 = scmp.ne.s32.totalorder %s141, %s143
      %p147 = scmp.eq.s32.totalorder %s49, 0
      %p148 = por %p146, %p147
      %p149 = scmp.ne.s32.totalorder %s141, %s143
      %p150 = scmp.eq.s32.totalorder %s54, 3
      %p151 = por %p149, %p150
      %p152 = scmp.ne.s32.totalorder %s143, %s144
      %p153 = scmp.eq.s32.totalorder %s54, 0
      %p154 = por %p152, %p153
      %p155 = scmp.ne.s32.totalorder %s143, %s144
      %p156 = scmp.eq.s32.totalorder %s55, 3
      %p157 = por %p155, %p156
      %p159 = scmp.ne.s32.totalorder %s144, %s158
      %p160 = scmp.eq.s32.totalorder %s55, 0
      %p161 = por %p159, %p160
      %s163 = sadd.s32 %s162, 1
      %p166 = scmp.eq.s32.totalorder %s49, 3
      %p167 = scmp.ne.s32.totalorder %s162, %s164
      %p168 = scmp.eq.s32.totalorder %s49, 0
      %p169 = por %p167, %p168
      %p170 = scmp.ne.s32.totalorder %s162, %s164
      %p171 = scmp.eq.s32.totalorder %s54, 3
      %p172 = por %p170, %p171
      %p173 = scmp.ne.s32.totalorder %s164, %s165
      %p174 = scmp.eq.s32.totalorder %s54, 0
      %p175 = por %p173, %p174
      %p176 = scmp.ne.s32.totalorder %s164, %s165
      %p177 = scmp.eq.s32.totalorder %s55, 3
      %p178 = por %p176, %p177
      %p180 = scmp.ne.s32.totalorder %s165, %s179
      %p181 = scmp.eq.s32.totalorder %s55, 0
      %p182 = por %p180, %p181
      %s184 = sadd.s32 %s183, 1
      %p187 = scmp.eq.s32.totalorder %s49, 3
      %p188 = scmp.ne.s32.totalorder %s183, %s185
      %p189 = scmp.eq.s32.totalorder %s49, 0
      %p190 = por %p188, %p189
      %p191 = scmp.ne.s32.totalorder %s183, %s185
      %p192 = scmp.eq.s32.totalorder %s54, 3
      %p193 = por %p191, %p192
      %p194 = scmp.ne.s32.totalorder %s185, %s186
      %p195 = scmp.eq.s32.totalorder %s54, 0
      %p196 = por %p194, %p195
      %p197 = scmp.ne.s32.totalorder %s185, %s186
      %p198 = scmp.eq.s32.totalorder %s55, 3
      %p199 = por %p197, %p198
      %p201 = scmp.ne.s32.totalorder %s186, %s200
      %p202 = scmp.eq.s32.totalorder %s55, 0
      %p203 = por %p201, %p202
      %s205 = sadd.s32 %s204, 1
      %p208 = scmp.eq.s32.totalorder %s49, 3
      %p209 = scmp.ne.s32.totalorder %s204, %s206
      %p210 = scmp.eq.s32.totalorder %s49, 0
      %p211 = por %p209, %p210
      %p212 = scmp.ne.s32.totalorder %s204, %s206
      %p213 = scmp.eq.s32.totalorder %s54, 3
      %p214 = por %p212, %p213
      %p215 = scmp.ne.s32.totalorder %s206, %s207
      %p216 = scmp.eq.s32.totalorder %s54, 0
      %p217 = por %p215, %p216
      %p218 = scmp.ne.s32.totalorder %s206, %s207
      %p219 = scmp.eq.s32.totalorder %s55, 3
      %p220 = por %p218, %p219
      %p222 = scmp.ne.s32.totalorder %s207, %s221
      %p223 = scmp.eq.s32.totalorder %s55, 0
      %p224 = por %p222, %p223
      %s226 = sadd.s32 %s225, 1
      %p229 = scmp.eq.s32.totalorder %s49, 3
      %p230 = scmp.ne.s32.totalorder %s225, %s227
      %p231 = scmp.eq.s32.totalorder %s49, 0
      %p232 = por %p230, %p231
      %p233 = scmp.ne.s32.totalorder %s225, %s227
      %p234 = scmp.eq.s32.totalorder %s54, 3
      %p235 = por %p233, %p234
      %p236 = scmp.ne.s32.totalorder %s227, %s228
      %p237 = scmp.eq.s32.totalorder %s54, 0
      %p238 = por %p236, %p237
      %p239 = scmp.ne.s32.totalorder %s227, %s228
      %p240 = scmp.eq.s32.totalorder %s55, 3
      %p241 = por %p239, %p240
      %p243 = scmp.ne.s32.totalorder %s228, %s242
      %p244 = scmp.eq.s32.totalorder %s55, 0
      %p245 = por %p243, %p244
      %s247 = sadd.s32 %s246, 1
      %p250 = scmp.eq.s32.totalorder %s49, 3
      %p251 = scmp.ne.s32.totalorder %s246, %s248
      %p252 = scmp.eq.s32.totalorder %s49, 0
      %p253 = por %p251, %p252
      %p254 = scmp.ne.s32.totalorder %s246, %s248
      %p255 = scmp.eq.s32.totalorder %s54, 3
      %p256 = por %p254, %p255
      %p257 = scmp.ne.s32.totalorder %s248, %s249
      %p258 = scmp.eq.s32.totalorder %s54, 0
      %p259 = por %p257, %p258
      %p260 = scmp.ne.s32.totalorder %s248, %s249
      %p261 = scmp.eq.s32.totalorder %s55, 3
      %p262 = por %p260, %p261
      %p264 = scmp.ne.s32.totalorder %s249, %s263
      %p265 = scmp.eq.s32.totalorder %s55, 0
      %p266 = por %p264, %p265
      %s268 = sadd.s32 %s267, 1
      %p271 = scmp.eq.s32.totalorder %s49, 3
      %p272 = scmp.ne.s32.totalorder %s267, %s269
      %p273 = scmp.eq.s32.totalorder %s49, 0
      %p274 = por %p272, %p273
      %p275 = scmp.ne.s32.totalorder %s267, %s269
      %p276 = scmp.eq.s32.totalorder %s54, 3
      %p277 = por %p275, %p276
      %p278 = scmp.ne.s32.totalorder %s269, %s270
      %p279 = scmp.eq.s32.totalorder %s54, 0
      %p280 = por %p278, %p279
      %p281 = scmp.ne.s32.totalorder %s269, %s270
      %p282 = scmp.eq.s32.totalorder %s55, 3
      %p283 = por %p281, %p282
      %p285 = scmp.ne.s32.totalorder %s270, %s284
      %p286 = scmp.eq.s32.totalorder %s55, 0
      %p287 = por %p285, %p286
      %s289 = sadd.s32 %s288, 1
      %p292 = scmp.eq.s32.totalorder %s49, 3
      %p293 = scmp.ne.s32.totalorder %s288, %s290
      %p294 = scmp.eq.s32.totalorder %s49, 0
      %p295 = por %p293, %p294
      %p296 = scmp.ne.s32.totalorder %s288, %s290
      %p297 = scmp.eq.s32.totalorder %s54, 3
      %p298 = por %p296, %p297
      %p299 = scmp.ne.s32.totalorder %s290, %s291
      %p300 = scmp.eq.s32.totalorder %s54, 0
      %p301 = por %p299, %p300
      %p302 = scmp.ne.s32.totalorder %s290, %s291
      %p303 = scmp.eq.s32.totalorder %s55, 3
      %p304 = por %p302, %p303
      %p306 = scmp.ne.s32.totalorder %s291, %s305
      %p307 = scmp.eq.s32.totalorder %s55, 0
      %p308 = por %p306, %p307
      %s310 = sadd.s32 %s309, 1
      %p313 = scmp.eq.s32.totalorder %s49, 3
      %p314 = scmp.ne.s32.totalorder %s309, %s311
      %p315 = scmp.eq.s32.totalorder %s49, 0
      %p316 = por %p314, %p315
      %p317 = scmp.ne.s32.totalorder %s309, %s311
      %p318 = scmp.eq.s32.totalorder %s54, 3
      %p319 = por %p317, %p318
      %p320 = scmp.ne.s32.totalorder %s311, %s312
      %p321 = scmp.eq.s32.totalorder %s54, 0
      %p322 = por %p320, %p321
      %p323 = scmp.ne.s32.totalorder %s311, %s312
      %p324 = scmp.eq.s32.totalorder %s55, 3
      %p325 = por %p323, %p324
      %p327 = scmp.ne.s32.totalorder %s312, %s326
      %p328 = scmp.eq.s32.totalorder %s55, 0
      %p329 = por %p327, %p328
      %s331 = sadd.s32 %s330, 1
      %p334 = scmp.eq.s32.totalorder %s49, 3
      %p335 = scmp.ne.s32.totalorder %s330, %s332
      %p336 = scmp.eq.s32.totalorder %s49, 0
      %p337 = por %p335, %p336
      %p338 = scmp.ne.s32.totalorder %s330, %s332
      %p339 = scmp.eq.s32.totalorder %s54, 3
      %p340 = por %p338, %p339
      %p341 = scmp.ne.s32.totalorder %s332, %s333
      %p342 = scmp.eq.s32.totalorder %s54, 0
      %p343 = por %p341, %p342
      %p344 = scmp.ne.s32.totalorder %s332, %s333
      %p345 = scmp.eq.s32.totalorder %s55, 3
      %p346 = por %p344, %p345
      %p348 = scmp.ne.s32.totalorder %s333, %s347
      %p349 = scmp.eq.s32.totalorder %s55, 0
      %p350 = por %p348, %p349
      %s352 = sadd.s32 %s351, 1
      %p355 = scmp.eq.s32.totalorder %s49, 3
      %p356 = scmp.ne.s32.totalorder %s351, %s353
      %p357 = scmp.eq.s32.totalorder %s49, 0
      %p358 = por %p356, %p357
      %p359 = scmp.ne.s32.totalorder %s351, %s353
      %p360 = scmp.eq.s32.totalorder %s54, 3
      %p361 = por %p359, %p360
      %p362 = scmp.ne.s32.totalorder %s353, %s354
      %p363 = scmp.eq.s32.totalorder %s54, 0
      %p364 = por %p362, %p363
      %p365 = scmp.ne.s32.totalorder %s353, %s354
      %p366 = scmp.eq.s32.totalorder %s55, 3
      %p367 = por %p365, %p366
      %p369 = scmp.ne.s32.totalorder %s354, %s368
      %p370 = scmp.eq.s32.totalorder %s55, 0
      %p371 = por %p369, %p370
      %s373 = sadd.s32 %s372, 1
      %p376 = scmp.eq.s32.totalorder %s49, 3
      %p377 = scmp.ne.s32.totalorder %s372, %s374
      %p378 = scmp.eq.s32.totalorder %s49, 0
      %p379 = por %p377, %p378
      %p380 = scmp.ne.s32.totalorder %s372, %s374
      %p381 = scmp.eq.s32.totalorder %s54, 3
      %p382 = por %p380, %p381
      %p383 = scmp.ne.s32.totalorder %s374, %s375
      %p384 = scmp.eq.s32.totalorder %s54, 0
      %p385 = por %p383, %p384
      %p386 = scmp.ne.s32.totalorder %s374, %s375
      %p387 = scmp.eq.s32.totalorder %s55, 3
      %p388 = por %p386, %p387
      %p390 = scmp.ne.s32.totalorder %s375, %s389
      %p391 = scmp.eq.s32.totalorder %s55, 0
      %p392 = por %p390, %p391
      %s394 = sadd.s32 %s393, 1
      %p397 = scmp.eq.s32.totalorder %s49, 3
      %p398 = scmp.ne.s32.totalorder %s393, %s395
      %p399 = scmp.eq.s32.totalorder %s49, 0
      %p400 = por %p398, %p399
      %p401 = scmp.ne.s32.totalorder %s393, %s395
      %p402 = scmp.eq.s32.totalorder %s54, 3
      %p403 = por %p401, %p402
      %p404 = scmp.ne.s32.totalorder %s395, %s396
      %p405 = scmp.eq.s32.totalorder %s54, 0
      %p406 = por %p404, %p405
      %p407 = scmp.ne.s32.totalorder %s395, %s396
      %p408 = scmp.eq.s32.totalorder %s55, 3
      %p409 = por %p407, %p408
      %p411 = scmp.ne.s32.totalorder %s396, %s410
      %p412 = scmp.eq.s32.totalorder %s55, 0
      %p413 = por %p411, %p412
      %s415 = sadd.s32 %s414, 1
      %p418 = scmp.eq.s32.totalorder %s49, 3
      %p419 = scmp.ne.s32.totalorder %s414, %s416
      %p420 = scmp.eq.s32.totalorder %s49, 0
      %p421 = por %p419, %p420
      %p422 = scmp.ne.s32.totalorder %s414, %s416
      %p423 = scmp.eq.s32.totalorder %s54, 3
      %p424 = por %p422, %p423
      %p425 = scmp.ne.s32.totalorder %s416, %s417
      %p426 = scmp.eq.s32.totalorder %s54, 0
      %p427 = por %p425, %p426
      %p428 = scmp.ne.s32.totalorder %s416, %s417
      %p429 = scmp.eq.s32.totalorder %s55, 3
      %p430 = por %p428, %p429
      %p432 = scmp.ne.s32.totalorder %s417, %s431
      %p433 = scmp.eq.s32.totalorder %s55, 0
      %p434 = por %p432, %p433
      %s436 = sadd.s32 %s435, 1
      %p439 = scmp.eq.s32.totalorder %s49, 3
      %p440 = scmp.ne.s32.totalorder %s435, %s437
      %p441 = scmp.eq.s32.totalorder %s49, 0
      %p442 = por %p440, %p441
      %p443 = scmp.ne.s32.totalorder %s435, %s437
      %p444 = scmp.eq.s32.totalorder %s54, 3
      %p445 = por %p443, %p444
      %p446 = scmp.ne.s32.totalorder %s437, %s438
      %p447 = scmp.eq.s32.totalorder %s54, 0
      %p448 = por %p446, %p447
      %p449 = scmp.ne.s32.totalorder %s437, %s438
      %p450 = scmp.eq.s32.totalorder %s55, 3
      %p451 = por %p449, %p450
      %p453 = scmp.ne.s32.totalorder %s438, %s452
      %p454 = scmp.eq.s32.totalorder %s55, 0
      %p455 = por %p453, %p454
      %s457 = sadd.s32 %s456, 1
      %p460 = scmp.eq.s32.totalorder %s49, 3
      %p461 = scmp.ne.s32.totalorder %s456, %s458
      %p462 = scmp.eq.s32.totalorder %s49, 0
      %p463 = por %p461, %p462
      %p464 = scmp.ne.s32.totalorder %s456, %s458
      %p465 = scmp.eq.s32.totalorder %s54, 3
      %p466 = por %p464, %p465
      %p467 = scmp.ne.s32.totalorder %s458, %s459
      %p468 = scmp.eq.s32.totalorder %s54, 0
      %p469 = por %p467, %p468
      %p470 = scmp.ne.s32.totalorder %s458, %s459
      %p471 = scmp.eq.s32.totalorder %s55, 3
      %p472 = por %p470, %p471
      %p474 = scmp.ne.s32.totalorder %s459, %s473
      %p475 = scmp.eq.s32.totalorder %s55, 0
      %p476 = por %p474, %p475
      %s478 = sadd.s32 %s477, 1
      %p481 = scmp.eq.s32.totalorder %s49, 3
      %p482 = scmp.ne.s32.totalorder %s477, %s479
      %p483 = scmp.eq.s32.totalorder %s49, 0
      %p484 = por %p482, %p483
      %p485 = scmp.ne.s32.totalorder %s477, %s479
      %p486 = scmp.eq.s32.totalorder %s54, 3
      %p487 = por %p485, %p486
      %p488 = scmp.ne.s32.totalorder %s479, %s480
      %p489 = scmp.eq.s32.totalorder %s54, 0
      %p490 = por %p488, %p489
      %p491 = scmp.ne.s32.totalorder %s479, %s480
      %p492 = scmp.eq.s32.totalorder %s55, 3
      %p493 = por %p491, %p492
      %p495 = scmp.ne.s32.totalorder %s480, %s494
      %p496 = scmp.eq.s32.totalorder %s55, 0
      %p497 = por %p495, %p496
      %s499 = sadd.s32 %s498, 1
      %p502 = scmp.eq.s32.totalorder %s49, 3
      %p503 = scmp.ne.s32.totalorder %s498, %s500
      %p504 = scmp.eq.s32.totalorder %s49, 0
      %p505 = por %p503, %p504
      %p506 = scmp.ne.s32.totalorder %s498, %s500
      %p507 = scmp.eq.s32.totalorder %s54, 3
      %p508 = por %p506, %p507
      %p509 = scmp.ne.s32.totalorder %s500, %s501
      %p510 = scmp.eq.s32.totalorder %s54, 0
      %p511 = por %p509, %p510
      %p512 = scmp.ne.s32.totalorder %s500, %s501
      %p513 = scmp.eq.s32.totalorder %s55, 3
      %p514 = por %p512, %p513
      %p516 = scmp.ne.s32.totalorder %s501, %s515
      %p517 = scmp.eq.s32.totalorder %s55, 0
      %p518 = por %p516, %p517
      %s519 = ssub.s32 %s49, %s56
      %p520 = scmp.eq.s32.totalorder %s519, 0
      %s522 = sadd.s32 %s521, 1
      %s523 = scalar_select %p520, %s521, %s522
      %p526 = pneg %p520
      %p527 = scmp.eq.s32.totalorder %s49, 3
      %p528 = por %p526, %p527
      %p529 = scmp.ne.s32.totalorder %s521, %s524
      %p530 = scmp.eq.s32.totalorder %s49, 0
      %p531 = por %p529, %p530
      %p532 = scmp.ne.s32.totalorder %s521, %s524
      %p533 = scmp.eq.s32.totalorder %s54, 3
      %p534 = por %p532, %p533
      %p535 = scmp.ne.s32.totalorder %s524, %s525
      %p536 = scmp.eq.s32.totalorder %s54, 0
      %p537 = por %p535, %p536
      %p538 = scmp.ne.s32.totalorder %s524, %s525
      %p539 = scmp.eq.s32.totalorder %s55, 3
      %p540 = por %p538, %p539
      %p542 = scmp.ne.s32.totalorder %s525, %s541
      %p543 = scmp.eq.s32.totalorder %s55, 0
      %p544 = por %p542, %p543
      %s545 = ssub.s32 %s49, %s56
      %p546 = scmp.eq.s32.totalorder %s545, 0
      %s548 = sadd.s32 %s547, 1
      %s549 = scalar_select %p546, %s547, %s548
      %p552 = pneg %p546
      %p553 = scmp.eq.s32.totalorder %s49, 3
      %p554 = por %p552, %p553
      %p555 = scmp.ne.s32.totalorder %s547, %s550
      %p556 = scmp.eq.s32.totalorder %s49, 0
      %p557 = por %p555, %p556
      %p558 = scmp.ne.s32.totalorder %s547, %s550
      %p559 = scmp.eq.s32.totalorder %s54, 3
      %p560 = por %p558, %p559
      %p561 = scmp.ne.s32.totalorder %s550, %s551
      %p562 = scmp.eq.s32.totalorder %s54, 0
      %p563 = por %p561, %p562
      %p564 = scmp.ne.s32.totalorder %s550, %s551
      %p565 = scmp.eq.s32.totalorder %s55, 3
      %p566 = por %p564, %p565
      %p568 = scmp.ne.s32.totalorder %s551, %s567
      %p569 = scmp.eq.s32.totalorder %s55, 0
      %p570 = por %p568, %p569
      %p571 = scmp.le.s32.totalorder 1, %s49
      %p572 = scmp.lt.s32.totalorder %s49, 5
      %p573 = pnand %p571, %p572
      %p574 = pneg %p573
      // Predicated region
      $region9: #{tpu_custom_call.1} parent=5 // pred_check
        _
      $region10: #{tpu_custom_call.1} parent=5 // pred_check_branch
        %576 = sbr.rel (%p573) target = $region12
      $region11: #{tpu_custom_call.1} parent=5 // pred_region
        %s577 = ssub.s32 %s49, 1
        // Predicated region
        $region13: #{tpu_custom_call.1} parent=11 // pred_check
          %p578 = pneg %p70
        $region14: #{tpu_custom_call.1} parent=11 // pred_check_branch
          %580 = sbr.rel (%p578) target = $region16
        $region15: #{tpu_custom_call.1} parent=11 // pred_region
          %s582 = ssub.s32 4096, 4096
          %583 = vsyncadd [#allocation10], %s582
          %s584 = sshll.u32 [#allocation9], 4
          %s585 = int_to_ptr.vmem [resolvable:$true] %s584
          %590 = dma.hbm_to_vmem [thread:$0]  %s0, 4096, %s585, [#allocation10], 128, 128, 8
        $region16: #{tpu_custom_call.1} parent=11 // pred_fallthru
          _
        // Predicated region
        $region17: #{tpu_custom_call.1} parent=11 // pred_check
          %p591 = pneg %p91
        $region18: #{tpu_custom_call.1} parent=11 // pred_check_branch
          %593 = sbr.rel (%p591) target = $region20
        $region19: #{tpu_custom_call.1} parent=11 // pred_region
          %s595 = ssub.s32 32, 32
          %596 = vsyncadd [#allocation13], %s595
          %s598 = sshll.u32 [#allocation12], 4
          %s599 = int_to_ptr.vmem [resolvable:$true] %s598
          %601 = dma.hbm_to_vmem [thread:$0]  %s1, 32, %s599, [#allocation13]
        $region20: #{tpu_custom_call.1} parent=11 // pred_fallthru
          _
        // Predicated region
        $region21: #{tpu_custom_call.1} parent=11 // pred_check
          %p602 = pneg %p112
        $region22: #{tpu_custom_call.1} parent=11 // pred_check_branch
          %604 = sbr.rel (%p602) target = $region24
        $region23: #{tpu_custom_call.1} parent=11 // pred_region
          %s606 = ssub.s32 32, 32
          %607 = vsyncadd [#allocation13], %s606
          %s609 = sshll.u32 [#allocation14], 4
          %s610 = int_to_ptr.vmem [resolvable:$true] %s609
          %612 = dma.hbm_to_vmem [thread:$0]  %s2, 32, %s610, [#allocation13]
        $region24: #{tpu_custom_call.1} parent=11 // pred_fallthru
          _
        // Predicated region
        $region25: #{tpu_custom_call.1} parent=11 // pred_check
          %p613 = pneg %p133
        $region26: #{tpu_custom_call.1} parent=11 // pred_check_branch
          %615 = sbr.rel (%p613) target = $region28
        $region27: #{tpu_custom_call.1} parent=11 // pred_region
          %s617 = ssub.s32 256, 256
          %618 = vsyncadd [#allocation16], %s617
          %s619 = sshll.u32 [#allocation15], 4
          %s620 = int_to_ptr.vmem [resolvable:$true] %s619
          %625 = dma.hbm_to_vmem [thread:$0]  %s3, 256, %s620, [#allocation16], 128, 128, 8
        $region28: #{tpu_custom_call.1} parent=11 // pred_fallthru
          _
        // Predicated region
        $region29: #{tpu_custom_call.1} parent=11 // pred_check
          %p626 = pneg %p154
        $region30: #{tpu_custom_call.1} parent=11 // pred_check_branch
          %628 = sbr.rel (%p626) target = $region32
        $region31: #{tpu_custom_call.1} parent=11 // pred_region
          %s630 = ssub.s32 2048, 2048
          %631 = vsyncadd [#allocation16], %s630
          %s632 = sshll.u32 [#allocation17], 4
          %s633 = int_to_ptr.vmem [resolvable:$true] %s632
          %638 = dma.hbm_to_vmem [thread:$0]  %s4, 2048, %s633, [#allocation16], 128, 128, 8
        $region32: #{tpu_custom_call.1} parent=11 // pred_fallthru
          _
        // Predicated region
        $region33: #{tpu_custom_call.1} parent=11 // pred_check
          %p639 = pneg %p175
        $region34: #{tpu_custom_call.1} parent=11 // pred_check_branch
          %641 = sbr.rel (%p639) target = $region36
        $region35: #{tpu_custom_call.1} parent=11 // pred_region
          %s643 = ssub.s32 16, 16
          %644 = vsyncadd [#allocation19], %s643
          %s646 = sshll.u32 [#allocation18], 4
          %s647 = int_to_ptr.vmem [resolvable:$true] %s646
          %649 = dma.hbm_to_vmem [thread:$0]  %s5, 16, %s647, [#allocation19]
        $region36: #{tpu_custom_call.1} parent=11 // pred_fallthru
          _
        // Predicated region
        $region37: #{tpu_custom_call.1} parent=11 // pred_check
          %p650 = pneg %p196
        $region38: #{tpu_custom_call.1} parent=11 // pred_check_branch
          %652 = sbr.rel (%p650) target = $region40
        $region39: #{tpu_custom_call.1} parent=11 // pred_region
          %s654 = ssub.s32 2048, 2048
          %655 = vsyncadd [#allocation19], %s654
          %s656 = sshll.u32 [#allocation20], 4
          %s657 = int_to_ptr.vmem [resolvable:$true] %s656
          %662 = dma.hbm_to_vmem [thread:$0]  %s6, 2048, %s657, [#allocation19], 128, 128, 8
        $region40: #{tpu_custom_call.1} parent=11 // pred_fallthru
          _
        // Predicated region
        $region41: #{tpu_custom_call.1} parent=11 // pred_check
          %p663 = pneg %p217
        $region42: #{tpu_custom_call.1} parent=11 // pred_check_branch
          %665 = sbr.rel (%p663) target = $region44
        $region43: #{tpu_custom_call.1} parent=11 // pred_region
          %s667 = ssub.s32 16, 16
          %668 = vsyncadd [#allocation22], %s667
          %s670 = sshll.u32 [#allocation21], 4
          %s671 = int_to_ptr.vmem [resolvable:$true] %s670
          %673 = dma.hbm_to_vmem [thread:$0]  %s7, 16, %s671, [#allocation22]
        $region44: #{tpu_custom_call.1} parent=11 // pred_fallthru
          _
        // Predicated region
        $region45: #{tpu_custom_call.1} parent=11 // pred_check
          %p674 = pneg %p238
        $region46: #{tpu_custom_call.1} parent=11 // pred_check_branch
          %676 = sbr.rel (%p674) target = $region48
        $region47: #{tpu_custom_call.1} parent=11 // pred_region
          %s678 = ssub.s32 16384, 16384
          %679 = vsyncadd [#allocation22], %s678
          %s680 = sshll.u32 [#allocation23], 4
          %s681 = int_to_ptr.vmem [resolvable:$true] %s680
          %686 = dma.hbm_to_vmem [thread:$0]  %s8, 16384, %s681, [#allocation22], 512, 512, 32
        $region48: #{tpu_custom_call.1} parent=11 // pred_fallthru
          _
        // Predicated region
        $region49: #{tpu_custom_call.1} parent=11 // pred_check
          %p687 = pneg %p259
        $region50: #{tpu_custom_call.1} parent=11 // pred_check_branch
          %689 = sbr.rel (%p687) target = $region52
        $region51: #{tpu_custom_call.1} parent=11 // pred_region
          %s691 = ssub.s32 64, 64
          %692 = vsyncadd [#allocation25], %s691
          %s694 = sshll.u32 [#allocation24], 4
          %s695 = int_to_ptr.vmem [resolvable:$true] %s694
          %697 = dma.hbm_to_vmem [thread:$0]  %s9, 64, %s695, [#allocation25]
        $region52: #{tpu_custom_call.1} parent=11 // pred_fallthru
          _
        // Predicated region
        $region53: #{tpu_custom_call.1} parent=11 // pred_check
          %p698 = pneg %p280
        $region54: #{tpu_custom_call.1} parent=11 // pred_check_branch
          %700 = sbr.rel (%p698) target = $region56
        $region55: #{tpu_custom_call.1} parent=11 // pred_region
          %s702 = ssub.s32 4096, 4096
          %703 = vsyncadd [#allocation25], %s702
          %s704 = sshll.u32 [#allocation26], 4
          %s705 = int_to_ptr.vmem [resolvable:$true] %s704
          %710 = dma.hbm_to_vmem [thread:$0]  %s10, 4096, %s705, [#allocation25], 128, 128, 8
        $region56: #{tpu_custom_call.1} parent=11 // pred_fallthru
          _
        // Predicated region
        $region57: #{tpu_custom_call.1} parent=11 // pred_check
          %p711 = pneg %p301
        $region58: #{tpu_custom_call.1} parent=11 // pred_check_branch
          %713 = sbr.rel (%p711) target = $region60
        $region59: #{tpu_custom_call.1} parent=11 // pred_region
          %s715 = ssub.s32 16, 16
          %716 = vsyncadd [#allocation28], %s715
          %s718 = sshll.u32 [#allocation27], 4
          %s719 = int_to_ptr.vmem [resolvable:$true] %s718
          %721 = dma.hbm_to_vmem [thread:$0]  %s11, 16, %s719, [#allocation28]
        $region60: #{tpu_custom_call.1} parent=11 // pred_fallthru
          _
        // Predicated region
        $region61: #{tpu_custom_call.1} parent=11 // pred_check
          %p722 = pneg %p322
        $region62: #{tpu_custom_call.1} parent=11 // pred_check_branch
          %724 = sbr.rel (%p722) target = $region64
        $region63: #{tpu_custom_call.1} parent=11 // pred_region
          %s726 = ssub.s32 384, 384
          %727 = vsyncadd [#allocation28], %s726
          %s728 = sshll.u32 [#allocation29], 4
          %s729 = int_to_ptr.vmem [resolvable:$true] %s728
          %734 = dma.hbm_to_vmem [thread:$0]  %s12, 384, %s729, [#allocation28], 128, 128, 8
        $region64: #{tpu_custom_call.1} parent=11 // pred_fallthru
          _
        // Predicated region
        $region65: #{tpu_custom_call.1} parent=11 // pred_check
          %p735 = pneg %p343
        $region66: #{tpu_custom_call.1} parent=11 // pred_check_branch
          %737 = sbr.rel (%p735) target = $region68
        $region67: #{tpu_custom_call.1} parent=11 // pred_region
          %s739 = ssub.s32 16, 16
          %740 = vsyncadd [#allocation31], %s739
          %s742 = sshll.u32 [#allocation30], 4
          %s743 = int_to_ptr.vmem [resolvable:$true] %s742
          %745 = dma.hbm_to_vmem [thread:$0]  %s13, 16, %s743, [#allocation31]
        $region68: #{tpu_custom_call.1} parent=11 // pred_fallthru
          _
        // Predicated region
        $region69: #{tpu_custom_call.1} parent=11 // pred_check
          %p746 = pneg %p364
        $region70: #{tpu_custom_call.1} parent=11 // pred_check_branch
          %748 = sbr.rel (%p746) target = $region72
        $region71: #{tpu_custom_call.1} parent=11 // pred_region
          %s750 = ssub.s32 16, 16
          %751 = vsyncadd [#allocation31], %s750
          %s753 = sshll.u32 [#allocation32], 4
          %s754 = int_to_ptr.vmem [resolvable:$true] %s753
          %756 = dma.hbm_to_vmem [thread:$0]  %s14, 16, %s754, [#allocation31]
        $region72: #{tpu_custom_call.1} parent=11 // pred_fallthru
          _
        // Predicated region
        $region73: #{tpu_custom_call.1} parent=11 // pred_check
          %p757 = pneg %p385
        $region74: #{tpu_custom_call.1} parent=11 // pred_check_branch
          %759 = sbr.rel (%p757) target = $region76
        $region75: #{tpu_custom_call.1} parent=11 // pred_region
          _
        $region76: #{tpu_custom_call.1} parent=11 // pred_fallthru
          _
        // Predicated region
        $region77: #{tpu_custom_call.1} parent=11 // pred_check
          %p760 = pneg %p406
        $region78: #{tpu_custom_call.1} parent=11 // pred_check_branch
          %762 = sbr.rel (%p760) target = $region80
        $region79: #{tpu_custom_call.1} parent=11 // pred_region
          %s764 = ssub.s32 16384, 16384
          %765 = vsyncadd [#allocation34], %s764
          %s766 = sshll.u32 [#allocation33], 4
          %s767 = int_to_ptr.vmem [resolvable:$true] %s766
          %772 = dma.hbm_to_vmem [thread:$0]  %s16, 16384, %s767, [#allocation34], 512, 512, 32
        $region80: #{tpu_custom_call.1} parent=11 // pred_fallthru
          _
        // Predicated region
        $region81: #{tpu_custom_call.1} parent=11 // pred_check
          %p773 = pneg %p427
        $region82: #{tpu_custom_call.1} parent=11 // pred_check_branch
          %775 = sbr.rel (%p773) target = $region84
        $region83: #{tpu_custom_call.1} parent=11 // pred_region
          %s777 = ssub.s32 64, 64
          %778 = vsyncadd [#allocation34], %s777
          %s780 = sshll.u32 [#allocation35], 4
          %s781 = int_to_ptr.vmem [resolvable:$true] %s780
          %783 = dma.hbm_to_vmem [thread:$0]  %s17, 64, %s781, [#allocation34]
        $region84: #{tpu_custom_call.1} parent=11 // pred_fallthru
          _
        // Predicated region
        $region85: #{tpu_custom_call.1} parent=11 // pred_check
          %p784 = pneg %p448
        $region86: #{tpu_custom_call.1} parent=11 // pred_check_branch
          %786 = sbr.rel (%p784) target = $region88
        $region87: #{tpu_custom_call.1} parent=11 // pred_region
          %s788 = ssub.s32 4096, 4096
          %789 = vsyncadd [#allocation37], %s788
          %s790 = sshll.u32 [#allocation36], 4
          %s791 = int_to_ptr.vmem [resolvable:$true] %s790
          %796 = dma.hbm_to_vmem [thread:$0]  %s18, 4096, %s791, [#allocation37], 128, 128, 8
        $region88: #{tpu_custom_call.1} parent=11 // pred_fallthru
          _
        // Predicated region
        $region89: #{tpu_custom_call.1} parent=11 // pred_check
          %p797 = pneg %p469
        $region90: #{tpu_custom_call.1} parent=11 // pred_check_branch
          %799 = sbr.rel (%p797) target = $region92
        $region91: #{tpu_custom_call.1} parent=11 // pred_region
          %s801 = ssub.s32 16, 16
          %802 = vsyncadd [#allocation37], %s801
          %s804 = sshll.u32 [#allocation38], 4
          %s805 = int_to_ptr.vmem [resolvable:$true] %s804
          %807 = dma.hbm_to_vmem [thread:$0]  %s19, 16, %s805, [#allocation37]
        $region92: #{tpu_custom_call.1} parent=11 // pred_fallthru
          _
        // Predicated region
        $region93: #{tpu_custom_call.1} parent=11 // pred_check
          %p808 = pneg %p490
        $region94: #{tpu_custom_call.1} parent=11 // pred_check_branch
          %810 = sbr.rel (%p808) target = $region96
        $region95: #{tpu_custom_call.1} parent=11 // pred_region
          %s812 = ssub.s32 2048, 2048
          %813 = vsyncadd [#allocation40], %s812
          %s814 = sshll.u32 [#allocation39], 4
          %s815 = int_to_ptr.vmem [resolvable:$true] %s814
          %820 = dma.hbm_to_vmem [thread:$0]  %s20, 2048, %s815, [#allocation40], 128, 128, 8
        $region96: #{tpu_custom_call.1} parent=11 // pred_fallthru
          _
        // Predicated region
        $region97: #{tpu_custom_call.1} parent=11 // pred_check
          %p821 = pneg %p511
        $region98: #{tpu_custom_call.1} parent=11 // pred_check_branch
          %823 = sbr.rel (%p821) target = $region100
        $region99: #{tpu_custom_call.1} parent=11 // pred_region
          %s825 = ssub.s32 16, 16
          %826 = vsyncadd [#allocation40], %s825
          %s828 = sshll.u32 [#allocation41], 4
          %s829 = int_to_ptr.vmem [resolvable:$true] %s828
          %831 = dma.hbm_to_vmem [thread:$0]  %s21, 16, %s829, [#allocation40]
        $region100: #{tpu_custom_call.1} parent=11 // pred_fallthru
          _
      $region12: #{tpu_custom_call.1} parent=5 // pred_fallthru
        _
      %p832 = scmp.lt.s32.totalorder %s49, 4
      // Predicated region
      $region101: #{tpu_custom_call.1} parent=5 // pred_check
        %p833 = pneg %p832
      $region102: #{tpu_custom_call.1} parent=5 // pred_check_branch
        %835 = sbr.rel (%p833) target = $region104
      $region103: #{tpu_custom_call.1} parent=5 // pred_region
        _
      $region104: #{tpu_custom_call.1} parent=5 // pred_fallthru
        _
      %p836 = scmp.le.s32.totalorder 1, %s49
      %p837 = scmp.lt.s32.totalorder %s49, 5
      %p838 = pnand %p836, %p837
      %p839 = pneg %p838
      // Predicated region
      $region105: #{tpu_custom_call.1} parent=5 // pred_check
        _
      $region106: #{tpu_custom_call.1} parent=5 // pred_check_branch
        %841 = sbr.rel (%p838) target = $region108
      $region107: #{tpu_custom_call.1} parent=5 // pred_region
        %s842 = ssub.s32 %s49, 1
        // Predicated region
        $region109: #{tpu_custom_call.1} parent=107 // pred_check
          %p843 = pneg %p70
        $region110: #{tpu_custom_call.1} parent=107 // pred_check_branch
          %845 = sbr.rel (%p843) target = $region112
        $region111: #{tpu_custom_call.1} parent=107 // pred_region
          %846 = dma.done [#allocation10], 4096
        $region112: #{tpu_custom_call.1} parent=107 // pred_fallthru
          _
        // Predicated region
        $region113: #{tpu_custom_call.1} parent=107 // pred_check
          %p847 = pneg %p91
        $region114: #{tpu_custom_call.1} parent=107 // pred_check_branch
          %849 = sbr.rel (%p847) target = $region116
        $region115: #{tpu_custom_call.1} parent=107 // pred_region
          %850 = dma.done [#allocation13], 32
        $region116: #{tpu_custom_call.1} parent=107 // pred_fallthru
          _
        // Predicated region
        $region117: #{tpu_custom_call.1} parent=107 // pred_check
          %p851 = pneg %p112
        $region118: #{tpu_custom_call.1} parent=107 // pred_check_branch
          %853 = sbr.rel (%p851) target = $region120
        $region119: #{tpu_custom_call.1} parent=107 // pred_region
          %854 = dma.done [#allocation13], 32
        $region120: #{tpu_custom_call.1} parent=107 // pred_fallthru
          _
        // Predicated region
        $region121: #{tpu_custom_call.1} parent=107 // pred_check
          %p855 = pneg %p133
        $region122: #{tpu_custom_call.1} parent=107 // pred_check_branch
          %857 = sbr.rel (%p855) target = $region124
        $region123: #{tpu_custom_call.1} parent=107 // pred_region
          %858 = dma.done [#allocation16], 256
        $region124: #{tpu_custom_call.1} parent=107 // pred_fallthru
          _
        // Predicated region
        $region125: #{tpu_custom_call.1} parent=107 // pred_check
          %p859 = pneg %p154
        $region126: #{tpu_custom_call.1} parent=107 // pred_check_branch
          %861 = sbr.rel (%p859) target = $region128
        $region127: #{tpu_custom_call.1} parent=107 // pred_region
          %862 = dma.done [#allocation16], 2048
        $region128: #{tpu_custom_call.1} parent=107 // pred_fallthru
          _
        // Predicated region
        $region129: #{tpu_custom_call.1} parent=107 // pred_check
          %p863 = pneg %p175
        $region130: #{tpu_custom_call.1} parent=107 // pred_check_branch
          %865 = sbr.rel (%p863) target = $region132
        $region131: #{tpu_custom_call.1} parent=107 // pred_region
          %866 = dma.done [#allocation19], 16
        $region132: #{tpu_custom_call.1} parent=107 // pred_fallthru
          _
        // Predicated region
        $region133: #{tpu_custom_call.1} parent=107 // pred_check
          %p867 = pneg %p196
        $region134: #{tpu_custom_call.1} parent=107 // pred_check_branch
          %869 = sbr.rel (%p867) target = $region136
        $region135: #{tpu_custom_call.1} parent=107 // pred_region
          %870 = dma.done [#allocation19], 2048
        $region136: #{tpu_custom_call.1} parent=107 // pred_fallthru
          _
        // Predicated region
        $region137: #{tpu_custom_call.1} parent=107 // pred_check
          %p871 = pneg %p217
        $region138: #{tpu_custom_call.1} parent=107 // pred_check_branch
          %873 = sbr.rel (%p871) target = $region140
        $region139: #{tpu_custom_call.1} parent=107 // pred_region
          %874 = dma.done [#allocation22], 16
        $region140: #{tpu_custom_call.1} parent=107 // pred_fallthru
          _
        // Predicated region
        $region141: #{tpu_custom_call.1} parent=107 // pred_check
          %p875 = pneg %p238
        $region142: #{tpu_custom_call.1} parent=107 // pred_check_branch
          %877 = sbr.rel (%p875) target = $region144
        $region143: #{tpu_custom_call.1} parent=107 // pred_region
          %878 = dma.done [#allocation22], 16384
        $region144: #{tpu_custom_call.1} parent=107 // pred_fallthru
          _
        // Predicated region
        $region145: #{tpu_custom_call.1} parent=107 // pred_check
          %p879 = pneg %p259
        $region146: #{tpu_custom_call.1} parent=107 // pred_check_branch
          %881 = sbr.rel (%p879) target = $region148
        $region147: #{tpu_custom_call.1} parent=107 // pred_region
          %882 = dma.done [#allocation25], 64
        $region148: #{tpu_custom_call.1} parent=107 // pred_fallthru
          _
        // Predicated region
        $region149: #{tpu_custom_call.1} parent=107 // pred_check
          %p883 = pneg %p280
        $region150: #{tpu_custom_call.1} parent=107 // pred_check_branch
          %885 = sbr.rel (%p883) target = $region152
        $region151: #{tpu_custom_call.1} parent=107 // pred_region
          %886 = dma.done [#allocation25], 4096
        $region152: #{tpu_custom_call.1} parent=107 // pred_fallthru
          _
        // Predicated region
        $region153: #{tpu_custom_call.1} parent=107 // pred_check
          %p887 = pneg %p301
        $region154: #{tpu_custom_call.1} parent=107 // pred_check_branch
          %889 = sbr.rel (%p887) target = $region156
        $region155: #{tpu_custom_call.1} parent=107 // pred_region
          %890 = dma.done [#allocation28], 16
        $region156: #{tpu_custom_call.1} parent=107 // pred_fallthru
          _
        // Predicated region
        $region157: #{tpu_custom_call.1} parent=107 // pred_check
          %p891 = pneg %p322
        $region158: #{tpu_custom_call.1} parent=107 // pred_check_branch
          %893 = sbr.rel (%p891) target = $region160
        $region159: #{tpu_custom_call.1} parent=107 // pred_region
          %894 = dma.done [#allocation28], 384
        $region160: #{tpu_custom_call.1} parent=107 // pred_fallthru
          _
        // Predicated region
        $region161: #{tpu_custom_call.1} parent=107 // pred_check
          %p895 = pneg %p343
        $region162: #{tpu_custom_call.1} parent=107 // pred_check_branch
          %897 = sbr.rel (%p895) target = $region164
        $region163: #{tpu_custom_call.1} parent=107 // pred_region
          %898 = dma.done [#allocation31], 16
        $region164: #{tpu_custom_call.1} parent=107 // pred_fallthru
          _
        // Predicated region
        $region165: #{tpu_custom_call.1} parent=107 // pred_check
          %p899 = pneg %p364
        $region166: #{tpu_custom_call.1} parent=107 // pred_check_branch
          %901 = sbr.rel (%p899) target = $region168
        $region167: #{tpu_custom_call.1} parent=107 // pred_region
          %902 = dma.done [#allocation31], 16
        $region168: #{tpu_custom_call.1} parent=107 // pred_fallthru
          _
        // Predicated region
        $region169: #{tpu_custom_call.1} parent=107 // pred_check
          %p903 = pneg %p406
        $region170: #{tpu_custom_call.1} parent=107 // pred_check_branch
          %905 = sbr.rel (%p903) target = $region172
        $region171: #{tpu_custom_call.1} parent=107 // pred_region
          %906 = dma.done [#allocation34], 16384
        $region172: #{tpu_custom_call.1} parent=107 // pred_fallthru
          _
        // Predicated region
        $region173: #{tpu_custom_call.1} parent=107 // pred_check
          %p907 = pneg %p427
        $region174: #{tpu_custom_call.1} parent=107 // pred_check_branch
          %909 = sbr.rel (%p907) target = $region176
        $region175: #{tpu_custom_call.1} parent=107 // pred_region
          %910 = dma.done [#allocation34], 64
        $region176: #{tpu_custom_call.1} parent=107 // pred_fallthru
          _
        // Predicated region
        $region177: #{tpu_custom_call.1} parent=107 // pred_check
          %p911 = pneg %p448
        $region178: #{tpu_custom_call.1} parent=107 // pred_check_branch
          %913 = sbr.rel (%p911) target = $region180
        $region179: #{tpu_custom_call.1} parent=107 // pred_region
          %914 = dma.done [#allocation37], 4096
        $region180: #{tpu_custom_call.1} parent=107 // pred_fallthru
          _
        // Predicated region
        $region181: #{tpu_custom_call.1} parent=107 // pred_check
          %p915 = pneg %p469
        $region182: #{tpu_custom_call.1} parent=107 // pred_check_branch
          %917 = sbr.rel (%p915) target = $region184
        $region183: #{tpu_custom_call.1} parent=107 // pred_region
          %918 = dma.done [#allocation37], 16
        $region184: #{tpu_custom_call.1} parent=107 // pred_fallthru
          _
        // Predicated region
        $region185: #{tpu_custom_call.1} parent=107 // pred_check
          %p919 = pneg %p490
        $region186: #{tpu_custom_call.1} parent=107 // pred_check_branch
          %921 = sbr.rel (%p919) target = $region188
        $region187: #{tpu_custom_call.1} parent=107 // pred_region
          %922 = dma.done [#allocation40], 2048
        $region188: #{tpu_custom_call.1} parent=107 // pred_fallthru
          _
        // Predicated region
        $region189: #{tpu_custom_call.1} parent=107 // pred_check
          %p923 = pneg %p511
        $region190: #{tpu_custom_call.1} parent=107 // pred_check_branch
          %925 = sbr.rel (%p923) target = $region192
        $region191: #{tpu_custom_call.1} parent=107 // pred_region
          %926 = dma.done [#allocation40], 16
        $region192: #{tpu_custom_call.1} parent=107 // pred_fallthru
          _
        %p927 = pneg %p70
        %p928 = pneg %p67
        %p929 = pneg %p91
        %p930 = pneg %p88
        %p931 = pneg %p112
        %p932 = pneg %p109
        %p933 = pneg %p133
        %p934 = pneg %p130
        %p935 = pneg %p154
        %p936 = pneg %p151
        %p937 = pneg %p175
        %p938 = pneg %p172
        %p939 = pneg %p196
        %p940 = pneg %p193
        %p941 = pneg %p217
        %p942 = pneg %p214
        %p943 = pneg %p238
        %p944 = pneg %p235
        %p945 = pneg %p259
        %p946 = pneg %p256
        %p947 = pneg %p280
        %p948 = pneg %p277
        %p949 = pneg %p301
        %p950 = pneg %p298
        %p951 = pneg %p322
        %p952 = pneg %p319
        %p953 = pneg %p343
        %p954 = pneg %p340
        %p955 = pneg %p364
        %p956 = pneg %p361
        %p957 = pneg %p385
        %p958 = pneg %p382
        %p959 = pneg %p406
        %p960 = pneg %p403
        %p961 = pneg %p427
        %p962 = pneg %p424
        %p963 = pneg %p448
        %p964 = pneg %p445
        %p965 = pneg %p469
        %p966 = pneg %p466
        %p967 = pneg %p490
        %p968 = pneg %p487
        %p969 = pneg %p511
        %p970 = pneg %p508
        %p971 = pneg %p537
        %p972 = pneg %p534
        %s973 = sand.u32 %s524, 1
        %s974 = scalar_lea.sflag [#allocation11], %s973
        %s975 = sand.u32 %s524, 1
        %s976 = smul.addr %s975, 2
        %s977 = scalar_lea.vmem [#allocation42], %s976
        %p978 = pneg %p563
        %p979 = pneg %p560
        %s980 = sand.u32 %s550, 1
        %s981 = scalar_lea.sflag [#allocation44], %s980
        %s982 = sand.u32 %s550, 1
        %s983 = smul.addr %s982, 2
        %s984 = scalar_lea.vmem [#allocation43], %s983
        %p985 = scmp.eq.s32.totalorder %s54, 0
        // Predicated region
        $region193: #{tpu_custom_call.1} parent=107 // pred_check
          %p986 = pneg %p985
        $region194: #{tpu_custom_call.1} parent=107 // pred_check_branch
          %988 = sbr.rel (%p986) target = $region196
        $region195: #{tpu_custom_call.1} parent=107 // pred_region
          %v989 = vld [vmem:[#allocation9] sm:$0xff]
          %v990 = vld [vmem:[#allocation9 + $0x8] sm:$0xff]
          %v991 = vld [vmem:[#allocation9 + $0x10] sm:$0xff]
          %v992 = vld [vmem:[#allocation9 + $0x18] sm:$0xff]
          %v993 = vld [vmem:[#allocation9 + $0x20] sm:$0xff]
          %v994 = vld [vmem:[#allocation9 + $0x28] sm:$0xff]
          %v995 = vld [vmem:[#allocation9 + $0x30] sm:$0xff]
          %v996 = vld [vmem:[#allocation9 + $0x38] sm:$0xff]
          %v997 = vld [vmem:[#allocation9 + $0x40] sm:$0xff]
          %v998 = vld [vmem:[#allocation9 + $0x48] sm:$0xff]
          %v999 = vld [vmem:[#allocation9 + $0x50] sm:$0xff]
          %v1000 = vld [vmem:[#allocation9 + $0x58] sm:$0xff]
          %v1001 = vld [vmem:[#allocation9 + $0x60] sm:$0xff]
          %v1002 = vld [vmem:[#allocation9 + $0x68] sm:$0xff]
          %v1003 = vld [vmem:[#allocation9 + $0x70] sm:$0xff]
          %v1004 = vld [vmem:[#allocation9 + $0x78] sm:$0xff]
          %v1005 = vld [vmem:[#allocation9 + $0x80] sm:$0xff]
          %v1006 = vld [vmem:[#allocation9 + $0x88] sm:$0xff]
          %v1007 = vld [vmem:[#allocation9 + $0x90] sm:$0xff]
          %v1008 = vld [vmem:[#allocation9 + $0x98] sm:$0xff]
          %v1009 = vld [vmem:[#allocation9 + $0xa0] sm:$0xff]
          %v1010 = vld [vmem:[#allocation9 + $0xa8] sm:$0xff]
          %v1011 = vld [vmem:[#allocation9 + $0xb0] sm:$0xff]
          %v1012 = vld [vmem:[#allocation9 + $0xb8] sm:$0xff]
          %v1013 = vld [vmem:[#allocation9 + $0xc0] sm:$0xff]
          %v1014 = vld [vmem:[#allocation9 + $0xc8] sm:$0xff]
          %v1015 = vld [vmem:[#allocation9 + $0xd0] sm:$0xff]
          %v1016 = vld [vmem:[#allocation9 + $0xd8] sm:$0xff]
          %v1017 = vld [vmem:[#allocation9 + $0xe0] sm:$0xff]
          %v1018 = vld [vmem:[#allocation9 + $0xe8] sm:$0xff]
          %v1019 = vld [vmem:[#allocation9 + $0xf0] sm:$0xff]
          %v1020 = vld [vmem:[#allocation9 + $0xf8] sm:$0xff]
          %v1021 = vld [vmem:[#allocation12] sm:$0x3]
          %v1022 = vld [vmem:[#allocation17] sm:$0xff]
          %v1023 = vld [vmem:[#allocation17 + $0x8] sm:$0xff]
          %v1024 = vld [vmem:[#allocation17 + $0x10] sm:$0xff]
          %v1025 = vld [vmem:[#allocation17 + $0x18] sm:$0xff]
          %v1026 = vld [vmem:[#allocation17 + $0x20] sm:$0xff]
          %v1027 = vld [vmem:[#allocation17 + $0x28] sm:$0xff]
          %v1028 = vld [vmem:[#allocation17 + $0x30] sm:$0xff]
          %v1029 = vld [vmem:[#allocation17 + $0x38] sm:$0xff]
          %v1030 = vld [vmem:[#allocation17 + $0x40] sm:$0xff]
          %v1031 = vld [vmem:[#allocation17 + $0x48] sm:$0xff]
          %v1032 = vld [vmem:[#allocation17 + $0x50] sm:$0xff]
          %v1033 = vld [vmem:[#allocation17 + $0x58] sm:$0xff]
          %v1034 = vld [vmem:[#allocation17 + $0x60] sm:$0xff]
          %v1035 = vld [vmem:[#allocation17 + $0x68] sm:$0xff]
          %v1036 = vld [vmem:[#allocation17 + $0x70] sm:$0xff]
          %v1037 = vld [vmem:[#allocation17 + $0x78] sm:$0xff]
          %1038 = vmatprep.subr.mxu0 0.0
          %1039 = vmatpush1.msra.mxu0 %v1022
          %1040 = vmatprep.subr.mxu0 0.0
          %1041 = vmatpush1.msra.mxu0 %v1023
          %1042 = vmatprep.subr.mxu0 0.0
          %1043 = vmatpush1.msra.mxu0 %v1024
          %1044 = vmatprep.subr.mxu0 0.0
          %1045 = vmatpush1.msra.mxu0 %v1025
          %1046 = vmatprep.subr.mxu0 0.0
          %1047 = vmatpush1.msra.mxu0 %v1026
          %1048 = vmatprep.subr.mxu0 0.0
          %1049 = vmatpush1.msra.mxu0 %v1027
          %1050 = vmatprep.subr.mxu0 0.0
          %1051 = vmatpush1.msra.mxu0 %v1028
          %1052 = vmatprep.subr.mxu0 0.0
          %1053 = vmatpush1.msra.mxu0 %v1029
          %1054 = vmatprep.subr.mxu0 0.0
          %1055 = vmatpush1.msra.mxu0 %v1030
          %1056 = vmatprep.subr.mxu0 0.0
          %1057 = vmatpush1.msra.mxu0 %v1031
          %1058 = vmatprep.subr.mxu0 0.0
          %1059 = vmatpush1.msra.mxu0 %v1032
          %1060 = vmatprep.subr.mxu0 0.0
          %1061 = vmatpush1.msra.mxu0 %v1033
          %1062 = vmatprep.subr.mxu0 0.0
          %1063 = vmatpush1.msra.mxu0 %v1034
          %1064 = vmatprep.subr.mxu0 0.0
          %1065 = vmatpush1.msra.mxu0 %v1035
          %1066 = vmatprep.subr.mxu0 0.0
          %1067 = vmatpush1.msra.mxu0 %v1036
          %1068 = vmatprep.subr.mxu0 0.0
          %1069 = vmatpush1.msra.mxu0 %v1037
          %1070 = vmatprep.subr.mxu0 0.0
          %1071 = vmatpush1.msra.mxu0 0.0
          %1072 = vmatprep.subr.mxu0 0.0
          %1073 = vmatpush1.msra.mxu0 0.0
          %1074 = vmatprep.subr.mxu0 0.0
          %1075 = vmatpush1.msra.mxu0 0.0
          %1076 = vmatprep.subr.mxu0 0.0
          %1077 = vmatpush1.msra.mxu0 0.0
          %1078 = vmatprep.subr.mxu0 0.0
          %1079 = vmatpush1.msra.mxu0 0.0
          %1080 = vmatprep.subr.mxu0 0.0
          %1081 = vmatpush1.msra.mxu0 0.0
          %1082 = vmatprep.subr.mxu0 0.0
          %1083 = vmatpush1.msra.mxu0 0.0
          %1084 = vmatprep.subr.mxu0 0.0
          %1085 = vmatpush1.msra.mxu0 0.0
          %1086 = vmatprep.subr.mxu0 0.0
          %1087 = vmatpush1.msra.mxu0 0.0
          %1088 = vmatprep.subr.mxu0 0.0
          %1089 = vmatpush1.msra.mxu0 0.0
          %1090 = vmatprep.subr.mxu0 0.0
          %1091 = vmatpush1.msra.mxu0 0.0
          %1092 = vmatprep.subr.mxu0 0.0
          %1093 = vmatpush1.msra.mxu0 0.0
          %1094 = vmatprep.subr.mxu0 0.0
          %1095 = vmatpush1.msra.mxu0 0.0
          %1096 = vmatprep.subr.mxu0 0.0
          %1097 = vmatpush1.msra.mxu0 0.0
          %1098 = vmatprep.subr.mxu0 0.0
          %1099 = vmatpush1.msra.mxu0 0.0
          %1100 = vmatprep.subr.mxu0 0.0
          %1101 = vmatpush1.msra.mxu0 0.0
          %1102 = vmatprep.mubr.f32.mxu0 0.0
          %1103 = vmatmul.mubr.f32.gmra.mrb[0].mxu0 %v989
          %v1104 = vpop.f32.mrb[0].mxu0
          %v1105 = vadd.f32 0.0, %v1104
          %v1106 = vpop.f32.mrb[0].mxu0
          %1107 = vmatprep.mubr.f32.mxu0 0.0
          %1108 = vmatmul.mubr.f32.gmra.mrb[0].mxu0 %v990
          %v1109 = vpop.f32.mrb[0].mxu0
          %v1110 = vadd.f32 0.0, %v1109
          %v1111 = vpop.f32.mrb[0].mxu0
          %1112 = vmatprep.mubr.f32.mxu0 0.0
          %1113 = vmatmul.mubr.f32.gmra.mrb[0].mxu0 %v991
          %v1114 = vpop.f32.mrb[0].mxu0
          %v1115 = vadd.f32 0.0, %v1114
          %v1116 = vpop.f32.mrb[0].mxu0
          %1117 = vmatprep.mubr.f32.mxu0 0.0
          %1118 = vmatmul.mubr.f32.gmra.mrb[0].mxu0 %v992
          %v1119 = vpop.f32.mrb[0].mxu0
          %v1120 = vadd.f32 0.0, %v1119
          %v1121 = vpop.f32.mrb[0].mxu0
          %1122 = vmatprep.mubr.f32.mxu0 0.0
          %1123 = vmatmul.mubr.f32.gmra.mrb[0].mxu0 %v993
          %v1124 = vpop.f32.mrb[0].mxu0
          %v1125 = vadd.f32 0.0, %v1124
          %v1126 = vpop.f32.mrb[0].mxu0
          %1127 = vmatprep.mubr.f32.mxu0 0.0
          %1128 = vmatmul.mubr.f32.gmra.mrb[0].mxu0 %v994
          %v1129 = vpop.f32.mrb[0].mxu0
          %v1130 = vadd.f32 0.0, %v1129
          %v1131 = vpop.f32.mrb[0].mxu0
          %1132 = vmatprep.mubr.f32.mxu0 0.0
          %1133 = vmatmul.mubr.f32.gmra.mrb[0].mxu0 %v995
          %v1134 = vpop.f32.mrb[0].mxu0
          %v1135 = vadd.f32 0.0, %v1134
          %v1136 = vpop.f32.mrb[0].mxu0
          %1137 = vmatprep.mubr.f32.mxu0 0.0
          %1138 = vmatmul.mubr.f32.gmra.mrb[0].mxu0 %v996
          %v1139 = vpop.f32.mrb[0].mxu0
          %v1140 = vadd.f32 0.0, %v1139
          %v1141 = vpop.f32.mrb[0].mxu0
          %1142 = vmatprep.mubr.f32.mxu0 0.0
          %1143 = vmatmul.mubr.f32.gmra.mrb[0].mxu0 %v997
          %v1144 = vpop.f32.mrb[0].mxu0
          %v1145 = vadd.f32 0.0, %v1144
          %v1146 = vpop.f32.mrb[0].mxu0
          %1147 = vmatprep.mubr.f32.mxu0 0.0
          %1148 = vmatmul.mubr.f32.gmra.mrb[0].mxu0 %v998
          %v1149 = vpop.f32.mrb[0].mxu0
          %v1150 = vadd.f32 0.0, %v1149
          %v1151 = vpop.f32.mrb[0].mxu0
          %1152 = vmatprep.mubr.f32.mxu0 0.0
          %1153 = vmatmul.mubr.f32.gmra.mrb[0].mxu0 %v999
          %v1154 = vpop.f32.mrb[0].mxu0
          %v1155 = vadd.f32 0.0, %v1154
          %v1156 = vpop.f32.mrb[0].mxu0
          %1157 = vmatprep.mubr.f32.mxu0 0.0
          %1158 = vmatmul.mubr.f32.gmra.mrb[0].mxu0 %v1000
          %v1159 = vpop.f32.mrb[0].mxu0
          %v1160 = vadd.f32 0.0, %v1159
          %v1161 = vpop.f32.mrb[0].mxu0
          %1162 = vmatprep.mubr.f32.mxu0 0.0
          %1163 = vmatmul.mubr.f32.gmra.mrb[0].mxu0 %v1001
          %v1164 = vpop.f32.mrb[0].mxu0
          %v1165 = vadd.f32 0.0, %v1164
          %v1166 = vpop.f32.mrb[0].mxu0
          %1167 = vmatprep.mubr.f32.mxu0 0.0
          %1168 = vmatmul.mubr.f32.gmra.mrb[0].mxu0 %v1002
          %v1169 = vpop.f32.mrb[0].mxu0
          %v1170 = vadd.f32 0.0, %v1169
          %v1171 = vpop.f32.mrb[0].mxu0
          %1172 = vmatprep.mubr.f32.mxu0 0.0
          %1173 = vmatmul.mubr.f32.gmra.mrb[0].mxu0 %v1003
          %v1174 = vpop.f32.mrb[0].mxu0
          %v1175 = vadd.f32 0.0, %v1174
          %v1176 = vpop.f32.mrb[0].mxu0
          %1177 = vmatprep.mubr.f32.mxu0 0.0
          %1178 = vmatmul.mubr.f32.gmra.mrb[0].mxu0 %v1004
          %v1179 = vpop.f32.mrb[0].mxu0
          %v1180 = vadd.f32 0.0, %v1179
          %v1181 = vpop.f32.mrb[0].mxu0
          %1182 = vmatprep.mubr.f32.mxu0 0.0
          %1183 = vmatmul.mubr.f32.gmra.mrb[0].mxu0 %v1005
          %v1184 = vpop.f32.mrb[0].mxu0
          %v1185 = vadd.f32 0.0, %v1184
          %v1186 = vpop.f32.mrb[0].mxu0
          %1187 = vmatprep.mubr.f32.mxu0 0.0
          %1188 = vmatmul.mubr.f32.gmra.mrb[0].mxu0 %v1006
          %v1189 = vpop.f32.mrb[0].mxu0
          %v1190 = vadd.f32 0.0, %v1189
          %v1191 = vpop.f32.mrb[0].mxu0
          %1192 = vmatprep.mubr.f32.mxu0 0.0
          %1193 = vmatmul.mubr.f32.gmra.mrb[0].mxu0 %v1007
          %v1194 = vpop.f32.mrb[0].mxu0
          %v1195 = vadd.f32 0.0, %v1194
          %v1196 = vpop.f32.mrb[0].mxu0
          %1197 = vmatprep.mubr.f32.mxu0 0.0
          %1198 = vmatmul.mubr.f32.gmra.mrb[0].mxu0 %v1008
          %v1199 = vpop.f32.mrb[0].mxu0
          %v1200 = vadd.f32 0.0, %v1199
          %v1201 = vpop.f32.mrb[0].mxu0
          %1202 = vmatprep.mubr.f32.mxu0 0.0
          %1203 = vmatmul.mubr.f32.gmra.mrb[0].mxu0 %v1009
          %v1204 = vpop.f32.mrb[0].mxu0
          %v1205 = vadd.f32 0.0, %v1204
          %v1206 = vpop.f32.mrb[0].mxu0
          %1207 = vmatprep.mubr.f32.mxu0 0.0
          %1208 = vmatmul.mubr.f32.gmra.mrb[0].mxu0 %v1010
          %v1209 = vpop.f32.mrb[0].mxu0
          %v1210 = vadd.f32 0.0, %v1209
          %v1211 = vpop.f32.mrb[0].mxu0
          %1212 = vmatprep.mubr.f32.mxu0 0.0
          %1213 = vmatmul.mubr.f32.gmra.mrb[0].mxu0 %v1011
          %v1214 = vpop.f32.mrb[0].mxu0
          %v1215 = vadd.f32 0.0, %v1214
          %v1216 = vpop.f32.mrb[0].mxu0
          %1217 = vmatprep.mubr.f32.mxu0 0.0
          %1218 = vmatmul.mubr.f32.gmra.mrb[0].mxu0 %v1012
          %v1219 = vpop.f32.mrb[0].mxu0
          %v1220 = vadd.f32 0.0, %v1219
          %v1221 = vpop.f32.mrb[0].mxu0
          %1222 = vmatprep.mubr.f32.mxu0 0.0
          %1223 = vmatmul.mubr.f32.gmra.mrb[0].mxu0 %v1013
          %v1224 = vpop.f32.mrb[0].mxu0
          %v1225 = vadd.f32 0.0, %v1224
          %v1226 = vpop.f32.mrb[0].mxu0
          %1227 = vmatprep.mubr.f32.mxu0 0.0
          %1228 = vmatmul.mubr.f32.gmra.mrb[0].mxu0 %v1014
          %v1229 = vpop.f32.mrb[0].mxu0
          %v1230 = vadd.f32 0.0, %v1229
          %v1231 = vpop.f32.mrb[0].mxu0
          %1232 = vmatprep.mubr.f32.mxu0 0.0
          %1233 = vmatmul.mubr.f32.gmra.mrb[0].mxu0 %v1015
          %v1234 = vpop.f32.mrb[0].mxu0
          %v1235 = vadd.f32 0.0, %v1234
          %v1236 = vpop.f32.mrb[0].mxu0
          %1237 = vmatprep.mubr.f32.mxu0 0.0
          %1238 = vmatmul.mubr.f32.gmra.mrb[0].mxu0 %v1016
          %v1239 = vpop.f32.mrb[0].mxu0
          %v1240 = vadd.f32 0.0, %v1239
          %v1241 = vpop.f32.mrb[0].mxu0
          %1242 = vmatprep.mubr.f32.mxu0 0.0
          %1243 = vmatmul.mubr.f32.gmra.mrb[0].mxu0 %v1017
          %v1244 = vpop.f32.mrb[0].mxu0
          %v1245 = vadd.f32 0.0, %v1244
          %v1246 = vpop.f32.mrb[0].mxu0
          %1247 = vmatprep.mubr.f32.mxu0 0.0
          %1248 = vmatmul.mubr.f32.gmra.mrb[0].mxu0 %v1018
          %v1249 = vpop.f32.mrb[0].mxu0
          %v1250 = vadd.f32 0.0, %v1249
          %v1251 = vpop.f32.mrb[0].mxu0
          %1252 = vmatprep.mubr.f32.mxu0 0.0
          %1253 = vmatmul.mubr.f32.gmra.mrb[0].mxu0 %v1019
          %v1254 = vpop.f32.mrb[0].mxu0
          %v1255 = vadd.f32 0.0, %v1254
          %v1256 = vpop.f32.mrb[0].mxu0
          %1257 = vmatprep.mubr.f32.mxu0 0.0
          %1258 = vmatmul.mubr.f32.gmra.mrb[0].mxu0 %v1020
          %v1259 = vpop.f32.mrb[0].mxu0
          %v1260 = vadd.f32 0.0, %v1259
          %v1261 = vpop.f32.mrb[0].mxu0
          %1262 = vdwg.mxu0
          %v1263 = vld [vmem:[#allocation18] sm:$0x1]
          %v1265 = vlaneseq
          %v1266 = vshrl.u32 %v1265, 7
          %v1267 = vsub.s32 0, %v1266
          %v1268 = vrot.slane %v1263, %v1267
          %v1270 = vadd.f32 %v1105, %v1268
          %v1271 = vadd.f32 %v1110, %v1268
          %v1272 = vadd.f32 %v1115, %v1268
          %v1273 = vadd.f32 %v1120, %v1268
          %v1274 = vadd.f32 %v1125, %v1268
          %v1275 = vadd.f32 %v1130, %v1268
          %v1276 = vadd.f32 %v1135, %v1268
          %v1277 = vadd.f32 %v1140, %v1268
          %v1278 = vadd.f32 %v1145, %v1268
          %v1279 = vadd.f32 %v1150, %v1268
          %v1280 = vadd.f32 %v1155, %v1268
          %v1281 = vadd.f32 %v1160, %v1268
          %v1282 = vadd.f32 %v1165, %v1268
          %v1283 = vadd.f32 %v1170, %v1268
          %v1284 = vadd.f32 %v1175, %v1268
          %v1285 = vadd.f32 %v1180, %v1268
          %v1286 = vadd.f32 %v1185, %v1268
          %v1287 = vadd.f32 %v1190, %v1268
          %v1288 = vadd.f32 %v1195, %v1268
          %v1289 = vadd.f32 %v1200, %v1268
          %v1290 = vadd.f32 %v1205, %v1268
          %v1291 = vadd.f32 %v1210, %v1268
          %v1292 = vadd.f32 %v1215, %v1268
          %v1293 = vadd.f32 %v1220, %v1268
          %v1294 = vadd.f32 %v1225, %v1268
          %v1295 = vadd.f32 %v1230, %v1268
          %v1296 = vadd.f32 %v1235, %v1268
          %v1297 = vadd.f32 %v1240, %v1268
          %v1298 = vadd.f32 %v1245, %v1268
          %v1299 = vadd.f32 %v1250, %v1268
          %v1300 = vadd.f32 %v1255, %v1268
          %v1301 = vadd.f32 %v1260, %v1268
          %v1302 = vlaneseq
          %v1303 = vshrl.u32 %v1302, 7
          %v1304 = vsub.s32 0, %v1303
          %v1305 = vrot.slane %v1021, %v1304
          %1307 = vbcast.lane.b32.xlu0 %v1305, 256
          %v1308 = vpop.permute.xlu0 %1307
          %s1310 = sor.u32 256, 8
          %1311 = vbcast.lane.b32.xlu0 %v1305, %s1310
          %v1312 = vpop.permute.xlu0 %1311
          %s1314 = sor.u32 256, 16
          %1315 = vbcast.lane.b32.xlu0 %v1305, %s1314
          %v1316 = vpop.permute.xlu0 %1315
          %s1318 = sor.u32 256, 24
          %1319 = vbcast.lane.b32.xlu0 %v1305, %s1318
          %v1320 = vpop.permute.xlu0 %1319
          %s1322 = sor.u32 256, 32
          %1323 = vbcast.lane.b32.xlu0 %v1305, %s1322
          %v1324 = vpop.permute.xlu0 %1323
          %s1326 = sor.u32 256, 40
          %1327 = vbcast.lane.b32.xlu0 %v1305, %s1326
          %v1328 = vpop.permute.xlu0 %1327
          %s1330 = sor.u32 256, 48
          %1331 = vbcast.lane.b32.xlu0 %v1305, %s1330
          %v1332 = vpop.permute.xlu0 %1331
          %s1334 = sor.u32 256, 56
          %1335 = vbcast.lane.b32.xlu0 %v1305, %s1334
          %v1336 = vpop.permute.xlu0 %1335
          %s1338 = sor.u32 256, 64
          %1339 = vbcast.lane.b32.xlu0 %v1305, %s1338
          %v1340 = vpop.permute.xlu0 %1339
          %s1342 = sor.u32 256, 72
          %1343 = vbcast.lane.b32.xlu0 %v1305, %s1342
          %v1344 = vpop.permute.xlu0 %1343
          %s1346 = sor.u32 256, 80
          %1347 = vbcast.lane.b32.xlu0 %v1305, %s1346
          %v1348 = vpop.permute.xlu0 %1347
          %s1350 = sor.u32 256, 88
          %1351 = vbcast.lane.b32.xlu0 %v1305, %s1350
          %v1352 = vpop.permute.xlu0 %1351
          %s1354 = sor.u32 256, 96
          %1355 = vbcast.lane.b32.xlu0 %v1305, %s1354
          %v1356 = vpop.permute.xlu0 %1355
          %s1358 = sor.u32 256, 104
          %1359 = vbcast.lane.b32.xlu0 %v1305, %s1358
          %v1360 = vpop.permute.xlu0 %1359
          %s1362 = sor.u32 256, 112
          %1363 = vbcast.lane.b32.xlu0 %v1305, %s1362
          %v1364 = vpop.permute.xlu0 %1363
          %s1366 = sor.u32 256, 120
          %1367 = vbcast.lane.b32.xlu0 %v1305, %s1366
          %v1368 = vpop.permute.xlu0 %1367
          %v1369 = vlaneseq
          %v1370 = vshrl.u32 %v1369, 7
          %v1371 = vsub.s32 1, %v1370
          %v1372 = vrot.slane %v1021, %v1371
          %1374 = vbcast.lane.b32.xlu0 %v1372, 256
          %v1375 = vpop.permute.xlu0 %1374
          %s1377 = sor.u32 256, 8
          %1378 = vbcast.lane.b32.xlu0 %v1372, %s1377
          %v1379 = vpop.permute.xlu0 %1378
          %s1381 = sor.u32 256, 16
          %1382 = vbcast.lane.b32.xlu0 %v1372, %s1381
          %v1383 = vpop.permute.xlu0 %1382
          %s1385 = sor.u32 256, 24
          %1386 = vbcast.lane.b32.xlu0 %v1372, %s1385
          %v1387 = vpop.permute.xlu0 %1386
          %s1389 = sor.u32 256, 32
          %1390 = vbcast.lane.b32.xlu0 %v1372, %s1389
          %v1391 = vpop.permute.xlu0 %1390
          %s1393 = sor.u32 256, 40
          %1394 = vbcast.lane.b32.xlu0 %v1372, %s1393
          %v1395 = vpop.permute.xlu0 %1394
          %s1397 = sor.u32 256, 48
          %1398 = vbcast.lane.b32.xlu0 %v1372, %s1397
          %v1399 = vpop.permute.xlu0 %1398
          %s1401 = sor.u32 256, 56
          %1402 = vbcast.lane.b32.xlu0 %v1372, %s1401
          %v1403 = vpop.permute.xlu0 %1402
          %s1405 = sor.u32 256, 64
          %1406 = vbcast.lane.b32.xlu0 %v1372, %s1405
          %v1407 = vpop.permute.xlu0 %1406
          %s1409 = sor.u32 256, 72
          %1410 = vbcast.lane.b32.xlu0 %v1372, %s1409
          %v1411 = vpop.permute.xlu0 %1410
          %s1413 = sor.u32 256, 80
          %1414 = vbcast.lane.b32.xlu0 %v1372, %s1413
          %v1415 = vpop.permute.xlu0 %1414
          %s1417 = sor.u32 256, 88
          %1418 = vbcast.lane.b32.xlu0 %v1372, %s1417
          %v1419 = vpop.permute.xlu0 %1418
          %s1421 = sor.u32 256, 96
          %1422 = vbcast.lane.b32.xlu0 %v1372, %s1421
          %v1423 = vpop.permute.xlu0 %1422
          %s1425 = sor.u32 256, 104
          %1426 = vbcast.lane.b32.xlu0 %v1372, %s1425
          %v1427 = vpop.permute.xlu0 %1426
          %s1429 = sor.u32 256, 112
          %1430 = vbcast.lane.b32.xlu0 %v1372, %s1429
          %v1431 = vpop.permute.xlu0 %1430
          %s1433 = sor.u32 256, 120
          %1434 = vbcast.lane.b32.xlu0 %v1372, %s1433
          %v1435 = vpop.permute.xlu0 %1434
          %v1436 = vmul.f32 %v1270, %v1308
          %v1437 = vmul.f32 %v1271, %v1312
          %v1438 = vmul.f32 %v1272, %v1316
          %v1439 = vmul.f32 %v1273, %v1320
          %v1440 = vmul.f32 %v1274, %v1324
          %v1441 = vmul.f32 %v1275, %v1328
          %v1442 = vmul.f32 %v1276, %v1332
          %v1443 = vmul.f32 %v1277, %v1336
          %v1444 = vmul.f32 %v1278, %v1340
          %v1445 = vmul.f32 %v1279, %v1344
          %v1446 = vmul.f32 %v1280, %v1348
          %v1447 = vmul.f32 %v1281, %v1352
          %v1448 = vmul.f32 %v1282, %v1356
          %v1449 = vmul.f32 %v1283, %v1360
          %v1450 = vmul.f32 %v1284, %v1364
          %v1451 = vmul.f32 %v1285, %v1368
          %v1452 = vmul.f32 %v1286, %v1375
          %v1453 = vmul.f32 %v1287, %v1379
          %v1454 = vmul.f32 %v1288, %v1383
          %v1455 = vmul.f32 %v1289, %v1387
          %v1456 = vmul.f32 %v1290, %v1391
          %v1457 = vmul.f32 %v1291, %v1395
          %v1458 = vmul.f32 %v1292, %v1399
          %v1459 = vmul.f32 %v1293, %v1403
          %v1460 = vmul.f32 %v1294, %v1407
          %v1461 = vmul.f32 %v1295, %v1411
          %v1462 = vmul.f32 %v1296, %v1415
          %v1463 = vmul.f32 %v1297, %v1419
          %v1464 = vmul.f32 %v1298, %v1423
          %v1465 = vmul.f32 %v1299, %v1427
          %v1466 = vmul.f32 %v1300, %v1431
          %v1467 = vmul.f32 %v1301, %v1435
          %1468 = vst [vmem:[#allocation2] sm:$0xff] %v1436
          %1469 = vst [vmem:[#allocation2 + $0x8] sm:$0xff] %v1437
          %1470 = vst [vmem:[#allocation2 + $0x10] sm:$0xff] %v1438
          %1471 = vst [vmem:[#allocation2 + $0x18] sm:$0xff] %v1439
          %1472 = vst [vmem:[#allocation2 + $0x20] sm:$0xff] %v1440
          %1473 = vst [vmem:[#allocation2 + $0x28] sm:$0xff] %v1441
          %1474 = vst [vmem:[#allocation2 + $0x30] sm:$0xff] %v1442
          %1475 = vst [vmem:[#allocation2 + $0x38] sm:$0xff] %v1443
          %1476 = vst [vmem:[#allocation2 + $0x40] sm:$0xff] %v1444
          %1477 = vst [vmem:[#allocation2 + $0x48] sm:$0xff] %v1445
          %1478 = vst [vmem:[#allocation2 + $0x50] sm:$0xff] %v1446
          %1479 = vst [vmem:[#allocation2 + $0x58] sm:$0xff] %v1447
          %1480 = vst [vmem:[#allocation2 + $0x60] sm:$0xff] %v1448
          %1481 = vst [vmem:[#allocation2 + $0x68] sm:$0xff] %v1449
          %1482 = vst [vmem:[#allocation2 + $0x70] sm:$0xff] %v1450
          %1483 = vst [vmem:[#allocation2 + $0x78] sm:$0xff] %v1451
          %1484 = vst [vmem:[#allocation2 + $0x80] sm:$0xff] %v1452
          %1485 = vst [vmem:[#allocation2 + $0x88] sm:$0xff] %v1453
          %1486 = vst [vmem:[#allocation2 + $0x90] sm:$0xff] %v1454
          %1487 = vst [vmem:[#allocation2 + $0x98] sm:$0xff] %v1455
          %1488 = vst [vmem:[#allocation2 + $0xa0] sm:$0xff] %v1456
          %1489 = vst [vmem:[#allocation2 + $0xa8] sm:$0xff] %v1457
          %1490 = vst [vmem:[#allocation2 + $0xb0] sm:$0xff] %v1458
          %1491 = vst [vmem:[#allocation2 + $0xb8] sm:$0xff] %v1459
          %1492 = vst [vmem:[#allocation2 + $0xc0] sm:$0xff] %v1460
          %1493 = vst [vmem:[#allocation2 + $0xc8] sm:$0xff] %v1461
          %1494 = vst [vmem:[#allocation2 + $0xd0] sm:$0xff] %v1462
          %1495 = vst [vmem:[#allocation2 + $0xd8] sm:$0xff] %v1463
          %1496 = vst [vmem:[#allocation2 + $0xe0] sm:$0xff] %v1464
          %1497 = vst [vmem:[#allocation2 + $0xe8] sm:$0xff] %v1465
          %1498 = vst [vmem:[#allocation2 + $0xf0] sm:$0xff] %v1466
          %1499 = vst [vmem:[#allocation2 + $0xf8] sm:$0xff] %v1467
          %v1500 = vld [vmem:[#allocation20] sm:$0xff]
          %v1501 = vld [vmem:[#allocation20 + $0x8] sm:$0xff]
          %v1502 = vld [vmem:[#allocation20 + $0x10] sm:$0xff]
          %v1503 = vld [vmem:[#allocation20 + $0x18] sm:$0xff]
          %v1504 = vld [vmem:[#allocation20 + $0x20] sm:$0xff]
          %v1505 = vld [vmem:[#allocation20 + $0x28] sm:$0xff]
          %v1506 = vld [vmem:[#allocation20 + $0x30] sm:$0xff]
          %v1507 = vld [vmem:[#allocation20 + $0x38] sm:$0xff]
          %v1508 = vld [vmem:[#allocation20 + $0x40] sm:$0xff]
          %v1509 = vld [vmem:[#allocation20 + $0x48] sm:$0xff]
          %v1510 = vld [vmem:[#allocation20 + $0x50] sm:$0xff]
          %v1511 = vld [vmem:[#allocation20 + $0x58] sm:$0xff]
          %v1512 = vld [vmem:[#allocation20 + $0x60] sm:$0xff]
          %v1513 = vld [vmem:[#allocation20 + $0x68] sm:$0xff]
          %v1514 = vld [vmem:[#allocation20 + $0x70] sm:$0xff]
          %v1515 = vld [vmem:[#allocation20 + $0x78] sm:$0xff]
          %1516 = vmatprep.subr.mxu0 0.0
          %1517 = vmatpush1.msra.mxu0 %v1500
          %1518 = vmatprep.subr.mxu0 0.0
          %1519 = vmatpush1.msra.mxu0 %v1501
          %1520 = vmatprep.subr.mxu0 0.0
          %1521 = vmatpush1.msra.mxu0 %v1502
          %1522 = vmatprep.subr.mxu0 0.0
          %1523 = vmatpush1.msra.mxu0 %v1503
          %1524 = vmatprep.subr.mxu0 0.0
          %1525 = vmatpush1.msra.mxu0 %v1504
          %1526 = vmatprep.subr.mxu0 0.0
          %1527 = vmatpush1.msra.mxu0 %v1505
          %1528 = vmatprep.subr.mxu0 0.0
          %1529 = vmatpush1.msra.mxu0 %v1506
          %1530 = vmatprep.subr.mxu0 0.0
          %1531 = vmatpush1.msra.mxu0 %v1507
          %1532 = vmatprep.subr.mxu0 0.0
          %1533 = vmatpush1.msra.mxu0 %v1508
          %1534 = vmatprep.subr.mxu0 0.0
          %1535 = vmatpush1.msra.mxu0 %v1509
          %1536 = vmatprep.subr.mxu0 0.0
          %1537 = vmatpush1.msra.mxu0 %v1510
          %1538 = vmatprep.subr.mxu0 0.0
          %1539 = vmatpush1.msra.mxu0 %v1511
          %1540 = vmatprep.subr.mxu0 0.0
          %1541 = vmatpush1.msra.mxu0 %v1512
          %1542 = vmatprep.subr.mxu0 0.0
          %1543 = vmatpush1.msra.mxu0 %v1513
          %1544 = vmatprep.subr.mxu0 0.0
          %1545 = vmatpush1.msra.mxu0 %v1514
          %1546 = vmatprep.subr.mxu0 0.0
          %1547 = vmatpush1.msra.mxu0 %v1515
          %1548 = vmatprep.subr.mxu0 0.0
          %1549 = vmatpush1.msra.mxu0 0.0
          %1550 = vmatprep.subr.mxu0 0.0
          %1551 = vmatpush1.msra.mxu0 0.0
          %1552 = vmatprep.subr.mxu0 0.0
          %1553 = vmatpush1.msra.mxu0 0.0
          %1554 = vmatprep.subr.mxu0 0.0
          %1555 = vmatpush1.msra.mxu0 0.0
          %1556 = vmatprep.subr.mxu0 0.0
          %1557 = vmatpush1.msra.mxu0 0.0
          %1558 = vmatprep.subr.mxu0 0.0
          %1559 = vmatpush1.msra.mxu0 0.0
          %1560 = vmatprep.subr.mxu0 0.0
          %1561 = vmatpush1.msra.mxu0 0.0
          %1562 = vmatprep.subr.mxu0 0.0
          %1563 = vmatpush1.msra.mxu0 0.0
          %1564 = vmatprep.subr.mxu0 0.0
          %1565 = vmatpush1.msra.mxu0 0.0
          %1566 = vmatprep.subr.mxu0 0.0
          %1567 = vmatpush1.msra.mxu0 0.0
          %1568 = vmatprep.subr.mxu0 0.0
          %1569 = vmatpush1.msra.mxu0 0.0
          %1570 = vmatprep.subr.mxu0 0.0
          %1571 = vmatpush1.msra.mxu0 0.0
          %1572 = vmatprep.subr.mxu0 0.0
          %1573 = vmatpush1.msra.mxu0 0.0
          %1574 = vmatprep.subr.mxu0 0.0
          %1575 = vmatpush1.msra.mxu0 0.0
          %1576 = vmatprep.subr.mxu0 0.0
          %1577 = vmatpush1.msra.mxu0 0.0
          %1578 = vmatprep.subr.mxu0 0.0
          %1579 = vmatpush1.msra.mxu0 0.0
          %1580 = vmatprep.mubr.f32.mxu0 0.0
          %1581 = vmatmul.mubr.f32.gmra.mrb[0].mxu0 %v989
          %v1582 = vpop.f32.mrb[0].mxu0
          %v1583 = vadd.f32 0.0, %v1582
          %v1584 = vpop.f32.mrb[0].mxu0
          %1585 = vmatprep.mubr.f32.mxu0 0.0
          %1586 = vmatmul.mubr.f32.gmra.mrb[0].mxu0 %v990
          %v1587 = vpop.f32.mrb[0].mxu0
          %v1588 = vadd.f32 0.0, %v1587
          %v1589 = vpop.f32.mrb[0].mxu0
          %1590 = vmatprep.mubr.f32.mxu0 0.0
          %1591 = vmatmul.mubr.f32.gmra.mrb[0].mxu0 %v991
          %v1592 = vpop.f32.mrb[0].mxu0
          %v1593 = vadd.f32 0.0, %v1592
          %v1594 = vpop.f32.mrb[0].mxu0
          %1595 = vmatprep.mubr.f32.mxu0 0.0
          %1596 = vmatmul.mubr.f32.gmra.mrb[0].mxu0 %v992
          %v1597 = vpop.f32.mrb[0].mxu0
          %v1598 = vadd.f32 0.0, %v1597
          %v1599 = vpop.f32.mrb[0].mxu0
          %1600 = vmatprep.mubr.f32.mxu0 0.0
          %1601 = vmatmul.mubr.f32.gmra.mrb[0].mxu0 %v993
          %v1602 = vpop.f32.mrb[0].mxu0
          %v1603 = vadd.f32 0.0, %v1602
          %v1604 = vpop.f32.mrb[0].mxu0
          %1605 = vmatprep.mubr.f32.mxu0 0.0
          %1606 = vmatmul.mubr.f32.gmra.mrb[0].mxu0 %v994
          %v1607 = vpop.f32.mrb[0].mxu0
          %v1608 = vadd.f32 0.0, %v1607
          %v1609 = vpop.f32.mrb[0].mxu0
          %1610 = vmatprep.mubr.f32.mxu0 0.0
          %1611 = vmatmul.mubr.f32.gmra.mrb[0].mxu0 %v995
          %v1612 = vpop.f32.mrb[0].mxu0
          %v1613 = vadd.f32 0.0, %v1612
          %v1614 = vpop.f32.mrb[0].mxu0
          %1615 = vmatprep.mubr.f32.mxu0 0.0
          %1616 = vmatmul.mubr.f32.gmra.mrb[0].mxu0 %v996
          %v1617 = vpop.f32.mrb[0].mxu0
          %v1618 = vadd.f32 0.0, %v1617
          %v1619 = vpop.f32.mrb[0].mxu0
          %1620 = vmatprep.mubr.f32.mxu0 0.0
          %1621 = vmatmul.mubr.f32.gmra.mrb[0].mxu0 %v997
          %v1622 = vpop.f32.mrb[0].mxu0
          %v1623 = vadd.f32 0.0, %v1622
          %v1624 = vpop.f32.mrb[0].mxu0
          %1625 = vmatprep.mubr.f32.mxu0 0.0
          %1626 = vmatmul.mubr.f32.gmra.mrb[0].mxu0 %v998
          %v1627 = vpop.f32.mrb[0].mxu0
          %v1628 = vadd.f32 0.0, %v1627
          %v1629 = vpop.f32.mrb[0].mxu0
          %1630 = vmatprep.mubr.f32.mxu0 0.0
          %1631 = vmatmul.mubr.f32.gmra.mrb[0].mxu0 %v999
          %v1632 = vpop.f32.mrb[0].mxu0
          %v1633 = vadd.f32 0.0, %v1632
          %v1634 = vpop.f32.mrb[0].mxu0
          %1635 = vmatprep.mubr.f32.mxu0 0.0
          %1636 = vmatmul.mubr.f32.gmra.mrb[0].mxu0 %v1000
          %v1637 = vpop.f32.mrb[0].mxu0
          %v1638 = vadd.f32 0.0, %v1637
          %v1639 = vpop.f32.mrb[0].mxu0
          %1640 = vmatprep.mubr.f32.mxu0 0.0
          %1641 = vmatmul.mubr.f32.gmra.mrb[0].mxu0 %v1001
          %v1642 = vpop.f32.mrb[0].mxu0
          %v1643 = vadd.f32 0.0, %v1642
          %v1644 = vpop.f32.mrb[0].mxu0
          %1645 = vmatprep.mubr.f32.mxu0 0.0
          %1646 = vmatmul.mubr.f32.gmra.mrb[0].mxu0 %v1002
          %v1647 = vpop.f32.mrb[0].mxu0
          %v1648 = vadd.f32 0.0, %v1647
          %v1649 = vpop.f32.mrb[0].mxu0
          %1650 = vmatprep.mubr.f32.mxu0 0.0
          %1651 = vmatmul.mubr.f32.gmra.mrb[0].mxu0 %v1003
          %v1652 = vpop.f32.mrb[0].mxu0
          %v1653 = vadd.f32 0.0, %v1652
          %v1654 = vpop.f32.mrb[0].mxu0
          %1655 = vmatprep.mubr.f32.mxu0 0.0
          %1656 = vmatmul.mubr.f32.gmra.mrb[0].mxu0 %v1004
          %v1657 = vpop.f32.mrb[0].mxu0
          %v1658 = vadd.f32 0.0, %v1657
          %v1659 = vpop.f32.mrb[0].mxu0
          %1660 = vmatprep.mubr.f32.mxu0 0.0
          %1661 = vmatmul.mubr.f32.gmra.mrb[0].mxu0 %v1005
          %v1662 = vpop.f32.mrb[0].mxu0
          %v1663 = vadd.f32 0.0, %v1662
          %v1664 = vpop.f32.mrb[0].mxu0
          %1665 = vmatprep.mubr.f32.mxu0 0.0
          %1666 = vmatmul.mubr.f32.gmra.mrb[0].mxu0 %v1006
          %v1667 = vpop.f32.mrb[0].mxu0
          %v1668 = vadd.f32 0.0, %v1667
          %v1669 = vpop.f32.mrb[0].mxu0
          %1670 = vmatprep.mubr.f32.mxu0 0.0
          %1671 = vmatmul.mubr.f32.gmra.mrb[0].mxu0 %v1007
          %v1672 = vpop.f32.mrb[0].mxu0
          %v1673 = vadd.f32 0.0, %v1672
          %v1674 = vpop.f32.mrb[0].mxu0
          %1675 = vmatprep.mubr.f32.mxu0 0.0
          %1676 = vmatmul.mubr.f32.gmra.mrb[0].mxu0 %v1008
          %v1677 = vpop.f32.mrb[0].mxu0
          %v1678 = vadd.f32 0.0, %v1677
          %v1679 = vpop.f32.mrb[0].mxu0
          %1680 = vmatprep.mubr.f32.mxu0 0.0
          %1681 = vmatmul.mubr.f32.gmra.mrb[0].mxu0 %v1009
          %v1682 = vpop.f32.mrb[0].mxu0
          %v1683 = vadd.f32 0.0, %v1682
          %v1684 = vpop.f32.mrb[0].mxu0
          %1685 = vmatprep.mubr.f32.mxu0 0.0
          %1686 = vmatmul.mubr.f32.gmra.mrb[0].mxu0 %v1010
          %v1687 = vpop.f32.mrb[0].mxu0
          %v1688 = vadd.f32 0.0, %v1687
          %v1689 = vpop.f32.mrb[0].mxu0
          %1690 = vmatprep.mubr.f32.mxu0 0.0
          %1691 = vmatmul.mubr.f32.gmra.mrb[0].mxu0 %v1011
          %v1692 = vpop.f32.mrb[0].mxu0
          %v1693 = vadd.f32 0.0, %v1692
          %v1694 = vpop.f32.mrb[0].mxu0
          %1695 = vmatprep.mubr.f32.mxu0 0.0
          %1696 = vmatmul.mubr.f32.gmra.mrb[0].mxu0 %v1012
          %v1697 = vpop.f32.mrb[0].mxu0
          %v1698 = vadd.f32 0.0, %v1697
          %v1699 = vpop.f32.mrb[0].mxu0
          %1700 = vmatprep.mubr.f32.mxu0 0.0
          %1701 = vmatmul.mubr.f32.gmra.mrb[0].mxu0 %v1013
          %v1702 = vpop.f32.mrb[0].mxu0
          %v1703 = vadd.f32 0.0, %v1702
          %v1704 = vpop.f32.mrb[0].mxu0
          %1705 = vmatprep.mubr.f32.mxu0 0.0
          %1706 = vmatmul.mubr.f32.gmra.mrb[0].mxu0 %v1014
          %v1707 = vpop.f32.mrb[0].mxu0
          %v1708 = vadd.f32 0.0, %v1707
          %v1709 = vpop.f32.mrb[0].mxu0
          %1710 = vmatprep.mubr.f32.mxu0 0.0
          %1711 = vmatmul.mubr.f32.gmra.mrb[0].mxu0 %v1015
          %v1712 = vpop.f32.mrb[0].mxu0
          %v1713 = vadd.f32 0.0, %v1712
          %v1714 = vpop.f32.mrb[0].mxu0
          %1715 = vmatprep.mubr.f32.mxu0 0.0
          %1716 = vmatmul.mubr.f32.gmra.mrb[0].mxu0 %v1016
          %v1717 = vpop.f32.mrb[0].mxu0
          %v1718 = vadd.f32 0.0, %v1717
          %v1719 = vpop.f32.mrb[0].mxu0
          %1720 = vmatprep.mubr.f32.mxu0 0.0
          %1721 = vmatmul.mubr.f32.gmra.mrb[0].mxu0 %v1017
          %v1722 = vpop.f32.mrb[0].mxu0
          %v1723 = vadd.f32 0.0, %v1722
          %v1724 = vpop.f32.mrb[0].mxu0
          %1725 = vmatprep.mubr.f32.mxu0 0.0
          %1726 = vmatmul.mubr.f32.gmra.mrb[0].mxu0 %v1018
          %v1727 = vpop.f32.mrb[0].mxu0
          %v1728 = vadd.f32 0.0, %v1727
          %v1729 = vpop.f32.mrb[0].mxu0
          %1730 = vmatprep.mubr.f32.mxu0 0.0
          %1731 = vmatmul.mubr.f32.gmra.mrb[0].mxu0 %v1019
          %v1732 = vpop.f32.mrb[0].mxu0
          %v1733 = vadd.f32 0.0, %v1732
          %v1734 = vpop.f32.mrb[0].mxu0
          %1735 = vmatprep.mubr.f32.mxu0 0.0
          %1736 = vmatmul.mubr.f32.gmra.mrb[0].mxu0 %v1020
          %v1737 = vpop.f32.mrb[0].mxu0
          %v1738 = vadd.f32 0.0, %v1737
          %v1739 = vpop.f32.mrb[0].mxu0
          %1740 = vdwg.mxu0
          %vm1741 = vcmask 1041408
          %v1742 = vsel %vm1741, %v1021, 0.0
          %1743 = vadd.xlane.f32.xlu0 %v1742
          %v1744 = vpop.xlane.xlu0 %1743
          %v1745 = vmax.f32 %v1744, 1.0
          %v1746 = vrcp.pop %v1745
          %v1747 = vadd.f32 %v1583, %v1588
          %v1748 = vadd.f32 %v1747, %v1593
          %v1749 = vadd.f32 %v1748, %v1598
          %v1750 = vadd.f32 %v1749, %v1603
          %v1751 = vadd.f32 %v1750, %v1608
          %v1752 = vadd.f32 %v1751, %v1613
          %v1753 = vadd.f32 %v1752, %v1618
          %v1754 = vadd.f32 %v1753, %v1623
          %v1755 = vadd.f32 %v1754, %v1628
          %v1756 = vadd.f32 %v1755, %v1633
          %v1757 = vadd.f32 %v1756, %v1638
          %v1758 = vadd.f32 %v1757, %v1643
          %v1759 = vadd.f32 %v1758, %v1648
          %v1760 = vadd.f32 %v1759, %v1653
          %v1761 = vadd.f32 %v1760, %v1658
          %v1762 = vrot.slane %v1761, 4
          %v1763 = vadd.f32 %v1761, %v1762
          %v1764 = vrot.slane %v1763, 2
          %v1765 = vadd.f32 %v1763, %v1764
          %v1766 = vrot.slane %v1765, 1
          %v1767 = vadd.f32 %v1765, %v1766
          %v1768 = vadd.f32 %v1663, %v1668
          %v1769 = vadd.f32 %v1768, %v1673
          %v1770 = vadd.f32 %v1769, %v1678
          %v1771 = vadd.f32 %v1770, %v1683
          %v1772 = vadd.f32 %v1771, %v1688
          %v1773 = vadd.f32 %v1772, %v1693
          %v1774 = vadd.f32 %v1773, %v1698
          %v1775 = vadd.f32 %v1774, %v1703
          %v1776 = vadd.f32 %v1775, %v1708
          %v1777 = vadd.f32 %v1776, %v1713
          %v1778 = vadd.f32 %v1777, %v1718
          %v1779 = vadd.f32 %v1778, %v1723
          %v1780 = vadd.f32 %v1779, %v1728
          %v1781 = vadd.f32 %v1780, %v1733
          %v1782 = vadd.f32 %v1781, %v1738
          %v1783 = vrot.slane %v1782, 4
          %v1784 = vadd.f32 %v1782, %v1783
          %v1785 = vrot.slane %v1784, 2
          %v1786 = vadd.f32 %v1784, %v1785
          %v1787 = vrot.slane %v1786, 1
          %v1788 = vadd.f32 %v1786, %v1787
          %v1789 = vld [vmem:[#allocation21] sm:$0x1]
          %v1790 = vmul.f32 %v1789, 64.0
          %v1792 = vlaneseq
          %v1793 = vshrl.u32 %v1792, 7
          %v1794 = vsub.s32 0, %v1793
          %v1795 = vrot.slane %v1790, %v1794
          %v1797 = vadd.f32 %v1767, %v1795
          %v1798 = vadd.f32 %v1788, %v1795
          %v1800 = vrot.slane %v1746, 1
          %v1803 = vmul.f32 %v1797, %v1746
          %v1804 = vmul.f32 %v1798, %v1800
          %v1807 = vrot.slane %v1804, 7
          %vm1808 = vcmask 1041409
          %v1809 = vsel %vm1808, %v1807, %v1803
          %1811 = vst [vmem:[#allocation3] sm:$0x3] %v1809
          %v1812 = vadd.f32 %v989, %v990
          %v1813 = vadd.f32 %v1812, %v991
          %v1814 = vadd.f32 %v1813, %v992
          %v1815 = vadd.f32 %v1814, %v993
          %v1816 = vadd.f32 %v1815, %v994
          %v1817 = vadd.f32 %v1816, %v995
          %v1818 = vadd.f32 %v1817, %v996
          %v1819 = vadd.f32 %v1818, %v997
          %v1820 = vadd.f32 %v1819, %v998
          %v1821 = vadd.f32 %v1820, %v999
          %v1822 = vadd.f32 %v1821, %v1000
          %v1823 = vadd.f32 %v1822, %v1001
          %v1824 = vadd.f32 %v1823, %v1002
          %v1825 = vadd.f32 %v1824, %v1003
          %v1826 = vadd.f32 %v1825, %v1004
          %v1827 = vrot.slane %v1826, 4
          %v1828 = vadd.f32 %v1826, %v1827
          %v1829 = vrot.slane %v1828, 2
          %v1830 = vadd.f32 %v1828, %v1829
          %v1831 = vrot.slane %v1830, 1
          %v1832 = vadd.f32 %v1830, %v1831
          %v1833 = vadd.f32 %v1005, %v1006
          %v1834 = vadd.f32 %v1833, %v1007
          %v1835 = vadd.f32 %v1834, %v1008
          %v1836 = vadd.f32 %v1835, %v1009
          %v1837 = vadd.f32 %v1836, %v1010
          %v1838 = vadd.f32 %v1837, %v1011
          %v1839 = vadd.f32 %v1838, %v1012
          %v1840 = vadd.f32 %v1839, %v1013
          %v1841 = vadd.f32 %v1840, %v1014
          %v1842 = vadd.f32 %v1841, %v1015
          %v1843 = vadd.f32 %v1842, %v1016
          %v1844 = vadd.f32 %v1843, %v1017
          %v1845 = vadd.f32 %v1844, %v1018
          %v1846 = vadd.f32 %v1845, %v1019
          %v1847 = vadd.f32 %v1846, %v1020
          %v1848 = vrot.slane %v1847, 4
          %v1849 = vadd.f32 %v1847, %v1848
          %v1850 = vrot.slane %v1849, 2
          %v1851 = vadd.f32 %v1849, %v1850
          %v1852 = vrot.slane %v1851, 1
          %v1853 = vadd.f32 %v1851, %v1852
          %v1854 = vmul.f32 %v1832, %v1746
          %v1855 = vmul.f32 %v1853, %v1800
          %v1858 = vrot.slane %v1855, 7
          %v1859 = vsel %vm1808, %v1858, %v1854
          %1861 = vst [vmem:[#allocation4] sm:$0x3] %v1859
          %1862 = vst [vmem:[#allocation5] sm:$0x3] 0.0
          %1863 = vst [vmem:[#allocation6] sm:$0x3] 0.0
        $region196: #{tpu_custom_call.1} parent=107 // pred_fallthru
          _
        %v1864 = vld [vmem:[#allocation4] sm:$0x3]
        %v1865 = vld [vmem:[#allocation3] sm:$0x3]
        %v1866 = vld [vmem:[#allocation5] sm:$0x3]
        %v1867 = vld [vmem:[#allocation6] sm:$0x3]
        %v1868 = vld [vmem:[#allocation9] sm:$0xff]
        %v1869 = vld [vmem:[#allocation9 + $0x8] sm:$0xff]
        %v1870 = vld [vmem:[#allocation9 + $0x10] sm:$0xff]
        %v1871 = vld [vmem:[#allocation9 + $0x18] sm:$0xff]
        %v1872 = vld [vmem:[#allocation9 + $0x20] sm:$0xff]
        %v1873 = vld [vmem:[#allocation9 + $0x28] sm:$0xff]
        %v1874 = vld [vmem:[#allocation9 + $0x30] sm:$0xff]
        %v1875 = vld [vmem:[#allocation9 + $0x38] sm:$0xff]
        %v1876 = vld [vmem:[#allocation9 + $0x40] sm:$0xff]
        %v1877 = vld [vmem:[#allocation9 + $0x48] sm:$0xff]
        %v1878 = vld [vmem:[#allocation9 + $0x50] sm:$0xff]
        %v1879 = vld [vmem:[#allocation9 + $0x58] sm:$0xff]
        %v1880 = vld [vmem:[#allocation9 + $0x60] sm:$0xff]
        %v1881 = vld [vmem:[#allocation9 + $0x68] sm:$0xff]
        %v1882 = vld [vmem:[#allocation9 + $0x70] sm:$0xff]
        %v1883 = vld [vmem:[#allocation9 + $0x78] sm:$0xff]
        %v1884 = vld [vmem:[#allocation9 + $0x80] sm:$0xff]
        %v1885 = vld [vmem:[#allocation9 + $0x88] sm:$0xff]
        %v1886 = vld [vmem:[#allocation9 + $0x90] sm:$0xff]
        %v1887 = vld [vmem:[#allocation9 + $0x98] sm:$0xff]
        %v1888 = vld [vmem:[#allocation9 + $0xa0] sm:$0xff]
        %v1889 = vld [vmem:[#allocation9 + $0xa8] sm:$0xff]
        %v1890 = vld [vmem:[#allocation9 + $0xb0] sm:$0xff]
        %v1891 = vld [vmem:[#allocation9 + $0xb8] sm:$0xff]
        %v1892 = vld [vmem:[#allocation9 + $0xc0] sm:$0xff]
        %v1893 = vld [vmem:[#allocation9 + $0xc8] sm:$0xff]
        %v1894 = vld [vmem:[#allocation9 + $0xd0] sm:$0xff]
        %v1895 = vld [vmem:[#allocation9 + $0xd8] sm:$0xff]
        %v1896 = vld [vmem:[#allocation9 + $0xe0] sm:$0xff]
        %v1897 = vld [vmem:[#allocation9 + $0xe8] sm:$0xff]
        %v1898 = vld [vmem:[#allocation9 + $0xf0] sm:$0xff]
        %v1899 = vld [vmem:[#allocation9 + $0xf8] sm:$0xff]
        %v1900 = vld [vmem:[#allocation12] sm:$0x3]
        %1901 = vst [vmem:[#allocation7] sm:$0x3] %v1864
        %1902 = vst [vmem:[#allocation7 + $0x2] sm:$0x3] %v1865
        %v1903 = vld [vmem:[#allocation7] sm:$0xf]
        %v1904 = vld [vmem:[#allocation23] sm:$0xff]
        %v1905 = vld [vmem:[#allocation23 + $0x8] sm:$0xff]
        %v1906 = vld [vmem:[#allocation23 + $0x10] sm:$0xff]
        %v1907 = vld [vmem:[#allocation23 + $0x18] sm:$0xff]
        %v1908 = vld [vmem:[#allocation23 + $0x20] sm:$0xff]
        %v1909 = vld [vmem:[#allocation23 + $0x28] sm:$0xff]
        %v1910 = vld [vmem:[#allocation23 + $0x30] sm:$0xff]
        %v1911 = vld [vmem:[#allocation23 + $0x38] sm:$0xff]
        %v1912 = vld [vmem:[#allocation23 + $0x40] sm:$0xff]
        %v1913 = vld [vmem:[#allocation23 + $0x48] sm:$0xff]
        %v1914 = vld [vmem:[#allocation23 + $0x50] sm:$0xff]
        %v1915 = vld [vmem:[#allocation23 + $0x58] sm:$0xff]
        %v1916 = vld [vmem:[#allocation23 + $0x60] sm:$0xff]
        %v1917 = vld [vmem:[#allocation23 + $0x68] sm:$0xff]
        %v1918 = vld [vmem:[#allocation23 + $0x70] sm:$0xff]
        %v1919 = vld [vmem:[#allocation23 + $0x78] sm:$0xff]
        %v1920 = vld [vmem:[#allocation23 + $0x80] sm:$0xff]
        %v1921 = vld [vmem:[#allocation23 + $0x88] sm:$0xff]
        %v1922 = vld [vmem:[#allocation23 + $0x90] sm:$0xff]
        %v1923 = vld [vmem:[#allocation23 + $0x98] sm:$0xff]
        %v1924 = vld [vmem:[#allocation23 + $0xa0] sm:$0xff]
        %v1925 = vld [vmem:[#allocation23 + $0xa8] sm:$0xff]
        %v1926 = vld [vmem:[#allocation23 + $0xb0] sm:$0xff]
        %v1927 = vld [vmem:[#allocation23 + $0xb8] sm:$0xff]
        %v1928 = vld [vmem:[#allocation23 + $0xc0] sm:$0xff]
        %v1929 = vld [vmem:[#allocation23 + $0xc8] sm:$0xff]
        %v1930 = vld [vmem:[#allocation23 + $0xd0] sm:$0xff]
        %v1931 = vld [vmem:[#allocation23 + $0xd8] sm:$0xff]
        %v1932 = vld [vmem:[#allocation23 + $0xe0] sm:$0xff]
        %v1933 = vld [vmem:[#allocation23 + $0xe8] sm:$0xff]
        %v1934 = vld [vmem:[#allocation23 + $0xf0] sm:$0xff]
        %v1935 = vld [vmem:[#allocation23 + $0xf8] sm:$0xff]
        %v1936 = vld [vmem:[#allocation23 + $0x100] sm:$0xff]
        %v1937 = vld [vmem:[#allocation23 + $0x108] sm:$0xff]
        %v1938 = vld [vmem:[#allocation23 + $0x110] sm:$0xff]
        %v1939 = vld [vmem:[#allocation23 + $0x118] sm:$0xff]
        %v1940 = vld [vmem:[#allocation23 + $0x120] sm:$0xff]
        %v1941 = vld [vmem:[#allocation23 + $0x128] sm:$0xff]
        %v1942 = vld [vmem:[#allocation23 + $0x130] sm:$0xff]
        %v1943 = vld [vmem:[#allocation23 + $0x138] sm:$0xff]
        %v1944 = vld [vmem:[#allocation23 + $0x140] sm:$0xff]
        %v1945 = vld [vmem:[#allocation23 + $0x148] sm:$0xff]
        %v1946 = vld [vmem:[#allocation23 + $0x150] sm:$0xff]
        %v1947 = vld [vmem:[#allocation23 + $0x158] sm:$0xff]
        %v1948 = vld [vmem:[#allocation23 + $0x160] sm:$0xff]
        %v1949 = vld [vmem:[#allocation23 + $0x168] sm:$0xff]
        %v1950 = vld [vmem:[#allocation23 + $0x170] sm:$0xff]
        %v1951 = vld [vmem:[#allocation23 + $0x178] sm:$0xff]
        %v1952 = vld [vmem:[#allocation23 + $0x180] sm:$0xff]
        %v1953 = vld [vmem:[#allocation23 + $0x188] sm:$0xff]
        %v1954 = vld [vmem:[#allocation23 + $0x190] sm:$0xff]
        %v1955 = vld [vmem:[#allocation23 + $0x198] sm:$0xff]
        %v1956 = vld [vmem:[#allocation23 + $0x1a0] sm:$0xff]
        %v1957 = vld [vmem:[#allocation23 + $0x1a8] sm:$0xff]
        %v1958 = vld [vmem:[#allocation23 + $0x1b0] sm:$0xff]
        %v1959 = vld [vmem:[#allocation23 + $0x1b8] sm:$0xff]
        %v1960 = vld [vmem:[#allocation23 + $0x1c0] sm:$0xff]
        %v1961 = vld [vmem:[#allocation23 + $0x1c8] sm:$0xff]
        %v1962 = vld [vmem:[#allocation23 + $0x1d0] sm:$0xff]
        %v1963 = vld [vmem:[#allocation23 + $0x1d8] sm:$0xff]
        %v1964 = vld [vmem:[#allocation23 + $0x1e0] sm:$0xff]
        %v1965 = vld [vmem:[#allocation23 + $0x1e8] sm:$0xff]
        %v1966 = vld [vmem:[#allocation23 + $0x1f0] sm:$0xff]
        %v1967 = vld [vmem:[#allocation23 + $0x1f8] sm:$0xff]
        %v1968 = vld [vmem:[#allocation23 + $0x200] sm:$0xff]
        %v1969 = vld [vmem:[#allocation23 + $0x208] sm:$0xff]
        %v1970 = vld [vmem:[#allocation23 + $0x210] sm:$0xff]
        %v1971 = vld [vmem:[#allocation23 + $0x218] sm:$0xff]
        %v1972 = vld [vmem:[#allocation23 + $0x220] sm:$0xff]
        %v1973 = vld [vmem:[#allocation23 + $0x228] sm:$0xff]
        %v1974 = vld [vmem:[#allocation23 + $0x230] sm:$0xff]
        %v1975 = vld [vmem:[#allocation23 + $0x238] sm:$0xff]
        %v1976 = vld [vmem:[#allocation23 + $0x240] sm:$0xff]
        %v1977 = vld [vmem:[#allocation23 + $0x248] sm:$0xff]
        %v1978 = vld [vmem:[#allocation23 + $0x250] sm:$0xff]
        %v1979 = vld [vmem:[#allocation23 + $0x258] sm:$0xff]
        %v1980 = vld [vmem:[#allocation23 + $0x260] sm:$0xff]
        %v1981 = vld [vmem:[#allocation23 + $0x268] sm:$0xff]
        %v1982 = vld [vmem:[#allocation23 + $0x270] sm:$0xff]
        %v1983 = vld [vmem:[#allocation23 + $0x278] sm:$0xff]
        %v1984 = vld [vmem:[#allocation23 + $0x280] sm:$0xff]
        %v1985 = vld [vmem:[#allocation23 + $0x288] sm:$0xff]
        %v1986 = vld [vmem:[#allocation23 + $0x290] sm:$0xff]
        %v1987 = vld [vmem:[#allocation23 + $0x298] sm:$0xff]
        %v1988 = vld [vmem:[#allocation23 + $0x2a0] sm:$0xff]
        %v1989 = vld [vmem:[#allocation23 + $0x2a8] sm:$0xff]
        %v1990 = vld [vmem:[#allocation23 + $0x2b0] sm:$0xff]
        %v1991 = vld [vmem:[#allocation23 + $0x2b8] sm:$0xff]
        %v1992 = vld [vmem:[#allocation23 + $0x2c0] sm:$0xff]
        %v1993 = vld [vmem:[#allocation23 + $0x2c8] sm:$0xff]
        %v1994 = vld [vmem:[#allocation23 + $0x2d0] sm:$0xff]
        %v1995 = vld [vmem:[#allocation23 + $0x2d8] sm:$0xff]
        %v1996 = vld [vmem:[#allocation23 + $0x2e0] sm:$0xff]
        %v1997 = vld [vmem:[#allocation23 + $0x2e8] sm:$0xff]
        %v1998 = vld [vmem:[#allocation23 + $0x2f0] sm:$0xff]
        %v1999 = vld [vmem:[#allocation23 + $0x2f8] sm:$0xff]
        %v2000 = vld [vmem:[#allocation23 + $0x300] sm:$0xff]
        %v2001 = vld [vmem:[#allocation23 + $0x308] sm:$0xff]
        %v2002 = vld [vmem:[#allocation23 + $0x310] sm:$0xff]
        %v2003 = vld [vmem:[#allocation23 + $0x318] sm:$0xff]
        %v2004 = vld [vmem:[#allocation23 + $0x320] sm:$0xff]
        %v2005 = vld [vmem:[#allocation23 + $0x328] sm:$0xff]
        %v2006 = vld [vmem:[#allocation23 + $0x330] sm:$0xff]
        %v2007 = vld [vmem:[#allocation23 + $0x338] sm:$0xff]
        %v2008 = vld [vmem:[#allocation23 + $0x340] sm:$0xff]
        %v2009 = vld [vmem:[#allocation23 + $0x348] sm:$0xff]
        %v2010 = vld [vmem:[#allocation23 + $0x350] sm:$0xff]
        %v2011 = vld [vmem:[#allocation23 + $0x358] sm:$0xff]
        %v2012 = vld [vmem:[#allocation23 + $0x360] sm:$0xff]
        %v2013 = vld [vmem:[#allocation23 + $0x368] sm:$0xff]
        %v2014 = vld [vmem:[#allocation23 + $0x370] sm:$0xff]
        %v2015 = vld [vmem:[#allocation23 + $0x378] sm:$0xff]
        %v2016 = vld [vmem:[#allocation23 + $0x380] sm:$0xff]
        %v2017 = vld [vmem:[#allocation23 + $0x388] sm:$0xff]
        %v2018 = vld [vmem:[#allocation23 + $0x390] sm:$0xff]
        %v2019 = vld [vmem:[#allocation23 + $0x398] sm:$0xff]
        %v2020 = vld [vmem:[#allocation23 + $0x3a0] sm:$0xff]
        %v2021 = vld [vmem:[#allocation23 + $0x3a8] sm:$0xff]
        %v2022 = vld [vmem:[#allocation23 + $0x3b0] sm:$0xff]
        %v2023 = vld [vmem:[#allocation23 + $0x3b8] sm:$0xff]
        %v2024 = vld [vmem:[#allocation23 + $0x3c0] sm:$0xff]
        %v2025 = vld [vmem:[#allocation23 + $0x3c8] sm:$0xff]
        %v2026 = vld [vmem:[#allocation23 + $0x3d0] sm:$0xff]
        %v2027 = vld [vmem:[#allocation23 + $0x3d8] sm:$0xff]
        %v2028 = vld [vmem:[#allocation23 + $0x3e0] sm:$0xff]
        %v2029 = vld [vmem:[#allocation23 + $0x3e8] sm:$0xff]
        %v2030 = vld [vmem:[#allocation23 + $0x3f0] sm:$0xff]
        %v2031 = vld [vmem:[#allocation23 + $0x3f8] sm:$0xff]
        %v2032 = vld [vmem:[#allocation24] sm:$0xf]
        %v2034 = vlaneseq
        %v2035 = vshrl.u32 %v2034, 7
        %v2036 = vsub.s32 0, %v2035
        %v2037 = vrot.slane %v2032, %v2036
        %v2038 = vlaneseq
        %v2039 = vshrl.u32 %v2038, 7
        %v2040 = vsub.s32 1, %v2039
        %v2041 = vrot.slane %v2032, %v2040
        %v2042 = vlaneseq
        %v2043 = vshrl.u32 %v2042, 7
        %v2044 = vsub.s32 2, %v2043
        %v2045 = vrot.slane %v2032, %v2044
        %v2046 = vlaneseq
        %v2047 = vshrl.u32 %v2046, 7
        %v2048 = vsub.s32 3, %v2047
        %v2049 = vrot.slane %v2032, %v2048
        %v2056 = vunpack.c.l.s4 1983009808
        %v2057 = vunpack.c.0.s8 %v2056
        %v2058 = vlaneseq
        %v2059 = vshrl.u32 %v2058, 7
        %v2060 = vsub.s32 %v2057, %v2059
        %v2061 = vrot.slane %v1903, %v2060
        %v2062 = vcombine.high %v2061, %v2061
        %2065 = vmatprep.subr.mxu0 %v1905
        %2066 = vmatpush1.msra.mxu0 %v1904
        %2067 = vmatprep.subr.mxu0 %v1909
        %2068 = vmatpush1.msra.mxu0 %v1908
        %2069 = vmatprep.subr.mxu0 %v1913
        %2070 = vmatpush1.msra.mxu0 %v1912
        %2071 = vmatprep.subr.mxu0 %v1917
        %2072 = vmatpush1.msra.mxu0 %v1916
        %2073 = vmatprep.subr.mxu0 %v1921
        %2074 = vmatpush1.msra.mxu0 %v1920
        %2075 = vmatprep.subr.mxu0 %v1925
        %2076 = vmatpush1.msra.mxu0 %v1924
        %2077 = vmatprep.subr.mxu0 %v1929
        %2078 = vmatpush1.msra.mxu0 %v1928
        %2079 = vmatprep.subr.mxu0 %v1933
        %2080 = vmatpush1.msra.mxu0 %v1932
        %2081 = vmatprep.subr.mxu0 %v1937
        %2082 = vmatpush1.msra.mxu0 %v1936
        %2083 = vmatprep.subr.mxu0 %v1941
        %2084 = vmatpush1.msra.mxu0 %v1940
        %2085 = vmatprep.subr.mxu0 %v1945
        %2086 = vmatpush1.msra.mxu0 %v1944
        %2087 = vmatprep.subr.mxu0 %v1949
        %2088 = vmatpush1.msra.mxu0 %v1948
        %2089 = vmatprep.subr.mxu0 %v1953
        %2090 = vmatpush1.msra.mxu0 %v1952
        %2091 = vmatprep.subr.mxu0 %v1957
        %2092 = vmatpush1.msra.mxu0 %v1956
        %2093 = vmatprep.subr.mxu0 %v1961
        %2094 = vmatpush1.msra.mxu0 %v1960
        %2095 = vmatprep.subr.mxu0 %v1965
        %2096 = vmatpush1.msra.mxu0 %v1964
        %2097 = vmatprep.subr.mxu0 %v1969
        %2098 = vmatpush1.msra.mxu0 %v1968
        %2099 = vmatprep.subr.mxu0 %v1973
        %2100 = vmatpush1.msra.mxu0 %v1972
        %2101 = vmatprep.subr.mxu0 %v1977
        %2102 = vmatpush1.msra.mxu0 %v1976
        %2103 = vmatprep.subr.mxu0 %v1981
        %2104 = vmatpush1.msra.mxu0 %v1980
        %2105 = vmatprep.subr.mxu0 %v1985
        %2106 = vmatpush1.msra.mxu0 %v1984
        %2107 = vmatprep.subr.mxu0 %v1989
        %2108 = vmatpush1.msra.mxu0 %v1988
        %2109 = vmatprep.subr.mxu0 %v1993
        %2110 = vmatpush1.msra.mxu0 %v1992
        %2111 = vmatprep.subr.mxu0 %v1997
        %2112 = vmatpush1.msra.mxu0 %v1996
        %2113 = vmatprep.subr.mxu0 %v2001
        %2114 = vmatpush1.msra.mxu0 %v2000
        %2115 = vmatprep.subr.mxu0 %v2005
        %2116 = vmatpush1.msra.mxu0 %v2004
        %2117 = vmatprep.subr.mxu0 %v2009
        %2118 = vmatpush1.msra.mxu0 %v2008
        %2119 = vmatprep.subr.mxu0 %v2013
        %2120 = vmatpush1.msra.mxu0 %v2012
        %2121 = vmatprep.subr.mxu0 %v2017
        %2122 = vmatpush1.msra.mxu0 %v2016
        %2123 = vmatprep.subr.mxu0 %v2021
        %2124 = vmatpush1.msra.mxu0 %v2020
        %2125 = vmatprep.subr.mxu0 %v2025
        %2126 = vmatpush1.msra.mxu0 %v2024
        %2127 = vmatprep.subr.mxu0 %v2029
        %2128 = vmatpush1.msra.mxu0 %v2028
        %2129 = vmatprep.mubr.f32.mxu0 %v2062
        %2130 = vmatmul.mubr.f32.gmra.mrb[0].mxu0 %v2061
        %v2131 = vpop.f32.mrb[0].mxu0
        %v2132 = vadd.f32 %v2037, %v2131
        %v2133 = vpop.f32.mrb[0].mxu0
        %v2134 = vadd.f32 %v2041, %v2133
        %2135 = vdwg.mxu0
        %2136 = vmatprep.subr.mxu0 %v1907
        %2137 = vmatpush1.msra.mxu0 %v1906
        %2138 = vmatprep.subr.mxu0 %v1911
        %2139 = vmatpush1.msra.mxu0 %v1910
        %2140 = vmatprep.subr.mxu0 %v1915
        %2141 = vmatpush1.msra.mxu0 %v1914
        %2142 = vmatprep.subr.mxu0 %v1919
        %2143 = vmatpush1.msra.mxu0 %v1918
        %2144 = vmatprep.subr.mxu0 %v1923
        %2145 = vmatpush1.msra.mxu0 %v1922
        %2146 = vmatprep.subr.mxu0 %v1927
        %2147 = vmatpush1.msra.mxu0 %v1926
        %2148 = vmatprep.subr.mxu0 %v1931
        %2149 = vmatpush1.msra.mxu0 %v1930
        %2150 = vmatprep.subr.mxu0 %v1935
        %2151 = vmatpush1.msra.mxu0 %v1934
        %2152 = vmatprep.subr.mxu0 %v1939
        %2153 = vmatpush1.msra.mxu0 %v1938
        %2154 = vmatprep.subr.mxu0 %v1943
        %2155 = vmatpush1.msra.mxu0 %v1942
        %2156 = vmatprep.subr.mxu0 %v1947
        %2157 = vmatpush1.msra.mxu0 %v1946
        %2158 = vmatprep.subr.mxu0 %v1951
        %2159 = vmatpush1.msra.mxu0 %v1950
        %2160 = vmatprep.subr.mxu0 %v1955
        %2161 = vmatpush1.msra.mxu0 %v1954
        %2162 = vmatprep.subr.mxu0 %v1959
        %2163 = vmatpush1.msra.mxu0 %v1958
        %2164 = vmatprep.subr.mxu0 %v1963
        %2165 = vmatpush1.msra.mxu0 %v1962
        %2166 = vmatprep.subr.mxu0 %v1967
        %2167 = vmatpush1.msra.mxu0 %v1966
        %2168 = vmatprep.subr.mxu0 %v1971
        %2169 = vmatpush1.msra.mxu0 %v1970
        %2170 = vmatprep.subr.mxu0 %v1975
        %2171 = vmatpush1.msra.mxu0 %v1974
        %2172 = vmatprep.subr.mxu0 %v1979
        %2173 = vmatpush1.msra.mxu0 %v1978
        %2174 = vmatprep.subr.mxu0 %v1983
        %2175 = vmatpush1.msra.mxu0 %v1982
        %2176 = vmatprep.subr.mxu0 %v1987
        %2177 = vmatpush1.msra.mxu0 %v1986
        %2178 = vmatprep.subr.mxu0 %v1991
        %2179 = vmatpush1.msra.mxu0 %v1990
        %2180 = vmatprep.subr.mxu0 %v1995
        %2181 = vmatpush1.msra.mxu0 %v1994
        %2182 = vmatprep.subr.mxu0 %v1999
        %2183 = vmatpush1.msra.mxu0 %v1998
        %2184 = vmatprep.subr.mxu0 %v2003
        %2185 = vmatpush1.msra.mxu0 %v2002
        %2186 = vmatprep.subr.mxu0 %v2007
        %2187 = vmatpush1.msra.mxu0 %v2006
        %2188 = vmatprep.subr.mxu0 %v2011
        %2189 = vmatpush1.msra.mxu0 %v2010
        %2190 = vmatprep.subr.mxu0 %v2015
        %2191 = vmatpush1.msra.mxu0 %v2014
        %2192 = vmatprep.subr.mxu0 %v2019
        %2193 = vmatpush1.msra.mxu0 %v2018
        %2194 = vmatprep.subr.mxu0 %v2023
        %2195 = vmatpush1.msra.mxu0 %v2022
        %2196 = vmatprep.subr.mxu0 %v2027
        %2197 = vmatpush1.msra.mxu0 %v2026
        %2198 = vmatprep.subr.mxu0 %v2031
        %2199 = vmatpush1.msra.mxu0 %v2030
        %2200 = vmatprep.mubr.f32.mxu0 %v2062
        %2201 = vmatmul.mubr.f32.gmra.mrb[0].mxu0 %v2061
        %v2202 = vpop.f32.mrb[0].mxu0
        %v2203 = vadd.f32 %v2045, %v2202
        %v2204 = vpop.f32.mrb[0].mxu0
        %v2205 = vadd.f32 %v2049, %v2204
        %2206 = vdwg.mxu0
        %v2207 = vxor.u32 %v2132, 2147483648
        %v2208 = vmul.f32 %v2207, 1.442695
        %v2209 = vpow.pop %v2208
        %v2210 = vadd.f32 %v2209, 1.0
        %v2211 = vrcp.pop %v2210
        %v2212 = vmul.f32 1.0, %v2211
        %v2213 = vxor.u32 %v2134, 2147483648
        %v2214 = vmul.f32 %v2213, 1.442695
        %v2215 = vpow.pop %v2214
        %v2216 = vadd.f32 %v2215, 1.0
        %v2217 = vrcp.pop %v2216
        %v2218 = vmul.f32 1.0, %v2217
        %v2219 = vmul.f32 %v2212, %v2205
        %v2220 = vadd.f32 %v2203, %v2219
        %v2221 = vtanh.pop %v2220
        %v2222 = vsub.f32 1.0, %v2218
        %v2223 = vmul.f32 %v2222, %v2221
        %v2224 = vmul.f32 %v2218, %v1865
        %v2225 = vadd.f32 %v2223, %v2224
        %2226 = vst [vmem:[#allocation7] sm:$0x3] %v1864
        %2227 = vst [vmem:[#allocation7 + $0x2] sm:$0x3] %v2225
        %v2228 = vld [vmem:[#allocation7] sm:$0xf]
        %v2229 = vld [vmem:[#allocation26] sm:$0xff]
        %v2230 = vld [vmem:[#allocation26 + $0x8] sm:$0xff]
        %v2231 = vld [vmem:[#allocation26 + $0x10] sm:$0xff]
        %v2232 = vld [vmem:[#allocation26 + $0x18] sm:$0xff]
        %v2233 = vld [vmem:[#allocation26 + $0x20] sm:$0xff]
        %v2234 = vld [vmem:[#allocation26 + $0x28] sm:$0xff]
        %v2235 = vld [vmem:[#allocation26 + $0x30] sm:$0xff]
        %v2236 = vld [vmem:[#allocation26 + $0x38] sm:$0xff]
        %v2237 = vld [vmem:[#allocation26 + $0x40] sm:$0xff]
        %v2238 = vld [vmem:[#allocation26 + $0x48] sm:$0xff]
        %v2239 = vld [vmem:[#allocation26 + $0x50] sm:$0xff]
        %v2240 = vld [vmem:[#allocation26 + $0x58] sm:$0xff]
        %v2241 = vld [vmem:[#allocation26 + $0x60] sm:$0xff]
        %v2242 = vld [vmem:[#allocation26 + $0x68] sm:$0xff]
        %v2243 = vld [vmem:[#allocation26 + $0x70] sm:$0xff]
        %v2244 = vld [vmem:[#allocation26 + $0x78] sm:$0xff]
        %v2245 = vld [vmem:[#allocation26 + $0x80] sm:$0xff]
        %v2246 = vld [vmem:[#allocation26 + $0x88] sm:$0xff]
        %v2247 = vld [vmem:[#allocation26 + $0x90] sm:$0xff]
        %v2248 = vld [vmem:[#allocation26 + $0x98] sm:$0xff]
        %v2249 = vld [vmem:[#allocation26 + $0xa0] sm:$0xff]
        %v2250 = vld [vmem:[#allocation26 + $0xa8] sm:$0xff]
        %v2251 = vld [vmem:[#allocation26 + $0xb0] sm:$0xff]
        %v2252 = vld [vmem:[#allocation26 + $0xb8] sm:$0xff]
        %v2253 = vld [vmem:[#allocation26 + $0xc0] sm:$0xff]
        %v2254 = vld [vmem:[#allocation26 + $0xc8] sm:$0xff]
        %v2255 = vld [vmem:[#allocation26 + $0xd0] sm:$0xff]
        %v2256 = vld [vmem:[#allocation26 + $0xd8] sm:$0xff]
        %v2257 = vld [vmem:[#allocation26 + $0xe0] sm:$0xff]
        %v2258 = vld [vmem:[#allocation26 + $0xe8] sm:$0xff]
        %v2259 = vld [vmem:[#allocation26 + $0xf0] sm:$0xff]
        %v2260 = vld [vmem:[#allocation26 + $0xf8] sm:$0xff]
        %v2261 = vld [vmem:[#allocation27] sm:$0x1]
        %v2263 = vlaneseq
        %v2264 = vshrl.u32 %v2263, 7
        %v2265 = vsub.s32 0, %v2264
        %v2266 = vrot.slane %v2261, %v2265
        %v2270 = vunpack.c.l.s4 1983009808
        %v2271 = vunpack.c.0.s8 %v2270
        %v2272 = vlaneseq
        %v2273 = vshrl.u32 %v2272, 7
        %v2274 = vsub.s32 %v2271, %v2273
        %v2275 = vrot.slane %v2228, %v2274
        %v2276 = vcombine.high %v2275, %v2275
        %2279 = vmatprep.subr.mxu0 0.0
        %2280 = vmatpush1.msra.mxu0 %v2229
        %2281 = vmatprep.subr.mxu0 0.0
        %2282 = vmatpush1.msra.mxu0 %v2230
        %2283 = vmatprep.subr.mxu0 0.0
        %2284 = vmatpush1.msra.mxu0 %v2231
        %2285 = vmatprep.subr.mxu0 0.0
        %2286 = vmatpush1.msra.mxu0 %v2232
        %2287 = vmatprep.subr.mxu0 0.0
        %2288 = vmatpush1.msra.mxu0 %v2233
        %2289 = vmatprep.subr.mxu0 0.0
        %2290 = vmatpush1.msra.mxu0 %v2234
        %2291 = vmatprep.subr.mxu0 0.0
        %2292 = vmatpush1.msra.mxu0 %v2235
        %2293 = vmatprep.subr.mxu0 0.0
        %2294 = vmatpush1.msra.mxu0 %v2236
        %2295 = vmatprep.subr.mxu0 0.0
        %2296 = vmatpush1.msra.mxu0 %v2237
        %2297 = vmatprep.subr.mxu0 0.0
        %2298 = vmatpush1.msra.mxu0 %v2238
        %2299 = vmatprep.subr.mxu0 0.0
        %2300 = vmatpush1.msra.mxu0 %v2239
        %2301 = vmatprep.subr.mxu0 0.0
        %2302 = vmatpush1.msra.mxu0 %v2240
        %2303 = vmatprep.subr.mxu0 0.0
        %2304 = vmatpush1.msra.mxu0 %v2241
        %2305 = vmatprep.subr.mxu0 0.0
        %2306 = vmatpush1.msra.mxu0 %v2242
        %2307 = vmatprep.subr.mxu0 0.0
        %2308 = vmatpush1.msra.mxu0 %v2243
        %2309 = vmatprep.subr.mxu0 0.0
        %2310 = vmatpush1.msra.mxu0 %v2244
        %2311 = vmatprep.subr.mxu0 0.0
        %2312 = vmatpush1.msra.mxu0 %v2245
        %2313 = vmatprep.subr.mxu0 0.0
        %2314 = vmatpush1.msra.mxu0 %v2246
        %2315 = vmatprep.subr.mxu0 0.0
        %2316 = vmatpush1.msra.mxu0 %v2247
        %2317 = vmatprep.subr.mxu0 0.0
        %2318 = vmatpush1.msra.mxu0 %v2248
        %2319 = vmatprep.subr.mxu0 0.0
        %2320 = vmatpush1.msra.mxu0 %v2249
        %2321 = vmatprep.subr.mxu0 0.0
        %2322 = vmatpush1.msra.mxu0 %v2250
        %2323 = vmatprep.subr.mxu0 0.0
        %2324 = vmatpush1.msra.mxu0 %v2251
        %2325 = vmatprep.subr.mxu0 0.0
        %2326 = vmatpush1.msra.mxu0 %v2252
        %2327 = vmatprep.subr.mxu0 0.0
        %2328 = vmatpush1.msra.mxu0 %v2253
        %2329 = vmatprep.subr.mxu0 0.0
        %2330 = vmatpush1.msra.mxu0 %v2254
        %2331 = vmatprep.subr.mxu0 0.0
        %2332 = vmatpush1.msra.mxu0 %v2255
        %2333 = vmatprep.subr.mxu0 0.0
        %2334 = vmatpush1.msra.mxu0 %v2256
        %2335 = vmatprep.subr.mxu0 0.0
        %2336 = vmatpush1.msra.mxu0 %v2257
        %2337 = vmatprep.subr.mxu0 0.0
        %2338 = vmatpush1.msra.mxu0 %v2258
        %2339 = vmatprep.subr.mxu0 0.0
        %2340 = vmatpush1.msra.mxu0 %v2259
        %2341 = vmatprep.subr.mxu0 0.0
        %2342 = vmatpush1.msra.mxu0 %v2260
        %2343 = vmatprep.mubr.f32.mxu0 %v2276
        %2344 = vmatmul.mubr.f32.gmra.mrb[0].mxu0 %v2275
        %v2345 = vpop.f32.mrb[0].mxu0
        %v2346 = vadd.f32 %v2266, %v2345
        %v2347 = vpop.f32.mrb[0].mxu0
        %2348 = vdwg.mxu0
        %v2349 = vld [vmem:[#allocation15] sm:$0x1]
        %2350 = vrot.lane.b32.xlu0 %v1866, 9
        %v2351 = vpop.permute.xlu0 %2350
        %v2352 = vlaneseq
        %v2353 = vshrl.u32 %v2352, 7
        %v2354 = vsub.s32 0, %v2353
        %v2355 = vrot.slane %v2349, %v2354
        %v2356 = vmul.f32 %v2351, %v2355
        %2357 = vrot.lane.b32.xlu0 %v1867, 9
        %v2358 = vpop.permute.xlu0 %2357
        %v2359 = vmul.f32 %v2358, %v2355
        %v2360 = vlaneseq
        %v2361 = vshrl.u32 %v2360, 7
        %v2362 = vsub.s32 0, %v2361
        %v2363 = vrot.slane %v2356, %v2362
        %2365 = vbcast.lane.b32.xlu0 %v2363, 256
        %v2366 = vpop.permute.xlu0 %2365
        %s2368 = sor.u32 256, 8
        %2369 = vbcast.lane.b32.xlu0 %v2363, %s2368
        %v2370 = vpop.permute.xlu0 %2369
        %s2372 = sor.u32 256, 16
        %2373 = vbcast.lane.b32.xlu0 %v2363, %s2372
        %v2374 = vpop.permute.xlu0 %2373
        %s2376 = sor.u32 256, 24
        %2377 = vbcast.lane.b32.xlu0 %v2363, %s2376
        %v2378 = vpop.permute.xlu0 %2377
        %s2380 = sor.u32 256, 32
        %2381 = vbcast.lane.b32.xlu0 %v2363, %s2380
        %v2382 = vpop.permute.xlu0 %2381
        %s2384 = sor.u32 256, 40
        %2385 = vbcast.lane.b32.xlu0 %v2363, %s2384
        %v2386 = vpop.permute.xlu0 %2385
        %s2388 = sor.u32 256, 48
        %2389 = vbcast.lane.b32.xlu0 %v2363, %s2388
        %v2390 = vpop.permute.xlu0 %2389
        %s2392 = sor.u32 256, 56
        %2393 = vbcast.lane.b32.xlu0 %v2363, %s2392
        %v2394 = vpop.permute.xlu0 %2393
        %s2396 = sor.u32 256, 64
        %2397 = vbcast.lane.b32.xlu0 %v2363, %s2396
        %v2398 = vpop.permute.xlu0 %2397
        %s2400 = sor.u32 256, 72
        %2401 = vbcast.lane.b32.xlu0 %v2363, %s2400
        %v2402 = vpop.permute.xlu0 %2401
        %s2404 = sor.u32 256, 80
        %2405 = vbcast.lane.b32.xlu0 %v2363, %s2404
        %v2406 = vpop.permute.xlu0 %2405
        %s2408 = sor.u32 256, 88
        %2409 = vbcast.lane.b32.xlu0 %v2363, %s2408
        %v2410 = vpop.permute.xlu0 %2409
        %s2412 = sor.u32 256, 96
        %2413 = vbcast.lane.b32.xlu0 %v2363, %s2412
        %v2414 = vpop.permute.xlu0 %2413
        %s2416 = sor.u32 256, 104
        %2417 = vbcast.lane.b32.xlu0 %v2363, %s2416
        %v2418 = vpop.permute.xlu0 %2417
        %s2420 = sor.u32 256, 112
        %2421 = vbcast.lane.b32.xlu0 %v2363, %s2420
        %v2422 = vpop.permute.xlu0 %2421
        %s2424 = sor.u32 256, 120
        %2425 = vbcast.lane.b32.xlu0 %v2363, %s2424
        %v2426 = vpop.permute.xlu0 %2425
        %v2427 = vlaneseq
        %v2428 = vshrl.u32 %v2427, 7
        %v2429 = vsub.s32 1, %v2428
        %v2430 = vrot.slane %v2356, %v2429
        %2432 = vbcast.lane.b32.xlu0 %v2430, 256
        %v2433 = vpop.permute.xlu0 %2432
        %s2435 = sor.u32 256, 8
        %2436 = vbcast.lane.b32.xlu0 %v2430, %s2435
        %v2437 = vpop.permute.xlu0 %2436
        %s2439 = sor.u32 256, 16
        %2440 = vbcast.lane.b32.xlu0 %v2430, %s2439
        %v2441 = vpop.permute.xlu0 %2440
        %s2443 = sor.u32 256, 24
        %2444 = vbcast.lane.b32.xlu0 %v2430, %s2443
        %v2445 = vpop.permute.xlu0 %2444
        %s2447 = sor.u32 256, 32
        %2448 = vbcast.lane.b32.xlu0 %v2430, %s2447
        %v2449 = vpop.permute.xlu0 %2448
        %s2451 = sor.u32 256, 40
        %2452 = vbcast.lane.b32.xlu0 %v2430, %s2451
        %v2453 = vpop.permute.xlu0 %2452
        %s2455 = sor.u32 256, 48
        %2456 = vbcast.lane.b32.xlu0 %v2430, %s2455
        %v2457 = vpop.permute.xlu0 %2456
        %s2459 = sor.u32 256, 56
        %2460 = vbcast.lane.b32.xlu0 %v2430, %s2459
        %v2461 = vpop.permute.xlu0 %2460
        %s2463 = sor.u32 256, 64
        %2464 = vbcast.lane.b32.xlu0 %v2430, %s2463
        %v2465 = vpop.permute.xlu0 %2464
        %s2467 = sor.u32 256, 72
        %2468 = vbcast.lane.b32.xlu0 %v2430, %s2467
        %v2469 = vpop.permute.xlu0 %2468
        %s2471 = sor.u32 256, 80
        %2472 = vbcast.lane.b32.xlu0 %v2430, %s2471
        %v2473 = vpop.permute.xlu0 %2472
        %s2475 = sor.u32 256, 88
        %2476 = vbcast.lane.b32.xlu0 %v2430, %s2475
        %v2477 = vpop.permute.xlu0 %2476
        %s2479 = sor.u32 256, 96
        %2480 = vbcast.lane.b32.xlu0 %v2430, %s2479
        %v2481 = vpop.permute.xlu0 %2480
        %s2483 = sor.u32 256, 104
        %2484 = vbcast.lane.b32.xlu0 %v2430, %s2483
        %v2485 = vpop.permute.xlu0 %2484
        %s2487 = sor.u32 256, 112
        %2488 = vbcast.lane.b32.xlu0 %v2430, %s2487
        %v2489 = vpop.permute.xlu0 %2488
        %s2491 = sor.u32 256, 120
        %2492 = vbcast.lane.b32.xlu0 %v2430, %s2491
        %v2493 = vpop.permute.xlu0 %2492
        %v2494 = vld [vmem:[#allocation29] sm:$0x1]
        %v2495 = vlaneseq
        %v2496 = vshrl.u32 %v2495, 7
        %v2497 = vsub.s32 0, %v2496
        %v2498 = vrot.slane %v2494, %v2497
        %v2499 = vmul.f32 %v2366, %v2498
        %v2500 = vmul.f32 %v2370, %v2498
        %v2501 = vmul.f32 %v2374, %v2498
        %v2502 = vmul.f32 %v2378, %v2498
        %v2503 = vmul.f32 %v2382, %v2498
        %v2504 = vmul.f32 %v2386, %v2498
        %v2505 = vmul.f32 %v2390, %v2498
        %v2506 = vmul.f32 %v2394, %v2498
        %v2507 = vmul.f32 %v2398, %v2498
        %v2508 = vmul.f32 %v2402, %v2498
        %v2509 = vmul.f32 %v2406, %v2498
        %v2510 = vmul.f32 %v2410, %v2498
        %v2511 = vmul.f32 %v2414, %v2498
        %v2512 = vmul.f32 %v2418, %v2498
        %v2513 = vmul.f32 %v2422, %v2498
        %v2514 = vmul.f32 %v2426, %v2498
        %v2515 = vmul.f32 %v2433, %v2498
        %v2516 = vmul.f32 %v2437, %v2498
        %v2517 = vmul.f32 %v2441, %v2498
        %v2518 = vmul.f32 %v2445, %v2498
        %v2519 = vmul.f32 %v2449, %v2498
        %v2520 = vmul.f32 %v2453, %v2498
        %v2521 = vmul.f32 %v2457, %v2498
        %v2522 = vmul.f32 %v2461, %v2498
        %v2523 = vmul.f32 %v2465, %v2498
        %v2524 = vmul.f32 %v2469, %v2498
        %v2525 = vmul.f32 %v2473, %v2498
        %v2526 = vmul.f32 %v2477, %v2498
        %v2527 = vmul.f32 %v2481, %v2498
        %v2528 = vmul.f32 %v2485, %v2498
        %v2529 = vmul.f32 %v2489, %v2498
        %v2530 = vmul.f32 %v2493, %v2498
        %v2531 = vadd.f32 %v2499, 0.0
        %v2532 = vadd.f32 %v2500, 0.0
        %v2533 = vadd.f32 %v2501, 0.0
        %v2534 = vadd.f32 %v2502, 0.0
        %v2535 = vadd.f32 %v2503, 0.0
        %v2536 = vadd.f32 %v2504, 0.0
        %v2537 = vadd.f32 %v2505, 0.0
        %v2538 = vadd.f32 %v2506, 0.0
        %v2539 = vadd.f32 %v2507, 0.0
        %v2540 = vadd.f32 %v2508, 0.0
        %v2541 = vadd.f32 %v2509, 0.0
        %v2542 = vadd.f32 %v2510, 0.0
        %v2543 = vadd.f32 %v2511, 0.0
        %v2544 = vadd.f32 %v2512, 0.0
        %v2545 = vadd.f32 %v2513, 0.0
        %v2546 = vadd.f32 %v2514, 0.0
        %v2547 = vadd.f32 %v2515, 0.0
        %v2548 = vadd.f32 %v2516, 0.0
        %v2549 = vadd.f32 %v2517, 0.0
        %v2550 = vadd.f32 %v2518, 0.0
        %v2551 = vadd.f32 %v2519, 0.0
        %v2552 = vadd.f32 %v2520, 0.0
        %v2553 = vadd.f32 %v2521, 0.0
        %v2554 = vadd.f32 %v2522, 0.0
        %v2555 = vadd.f32 %v2523, 0.0
        %v2556 = vadd.f32 %v2524, 0.0
        %v2557 = vadd.f32 %v2525, 0.0
        %v2558 = vadd.f32 %v2526, 0.0
        %v2559 = vadd.f32 %v2527, 0.0
        %v2560 = vadd.f32 %v2528, 0.0
        %v2561 = vadd.f32 %v2529, 0.0
        %v2562 = vadd.f32 %v2530, 0.0
        %v2563 = vlaneseq
        %v2564 = vshrl.u32 %v2563, 7
        %v2565 = vsub.s32 0, %v2564
        %v2566 = vrot.slane %v2359, %v2565
        %2568 = vbcast.lane.b32.xlu0 %v2566, 256
        %v2569 = vpop.permute.xlu0 %2568
        %s2571 = sor.u32 256, 8
        %2572 = vbcast.lane.b32.xlu0 %v2566, %s2571
        %v2573 = vpop.permute.xlu0 %2572
        %s2575 = sor.u32 256, 16
        %2576 = vbcast.lane.b32.xlu0 %v2566, %s2575
        %v2577 = vpop.permute.xlu0 %2576
        %s2579 = sor.u32 256, 24
        %2580 = vbcast.lane.b32.xlu0 %v2566, %s2579
        %v2581 = vpop.permute.xlu0 %2580
        %s2583 = sor.u32 256, 32
        %2584 = vbcast.lane.b32.xlu0 %v2566, %s2583
        %v2585 = vpop.permute.xlu0 %2584
        %s2587 = sor.u32 256, 40
        %2588 = vbcast.lane.b32.xlu0 %v2566, %s2587
        %v2589 = vpop.permute.xlu0 %2588
        %s2591 = sor.u32 256, 48
        %2592 = vbcast.lane.b32.xlu0 %v2566, %s2591
        %v2593 = vpop.permute.xlu0 %2592
        %s2595 = sor.u32 256, 56
        %2596 = vbcast.lane.b32.xlu0 %v2566, %s2595
        %v2597 = vpop.permute.xlu0 %2596
        %s2599 = sor.u32 256, 64
        %2600 = vbcast.lane.b32.xlu0 %v2566, %s2599
        %v2601 = vpop.permute.xlu0 %2600
        %s2603 = sor.u32 256, 72
        %2604 = vbcast.lane.b32.xlu0 %v2566, %s2603
        %v2605 = vpop.permute.xlu0 %2604
        %s2607 = sor.u32 256, 80
        %2608 = vbcast.lane.b32.xlu0 %v2566, %s2607
        %v2609 = vpop.permute.xlu0 %2608
        %s2611 = sor.u32 256, 88
        %2612 = vbcast.lane.b32.xlu0 %v2566, %s2611
        %v2613 = vpop.permute.xlu0 %2612
        %s2615 = sor.u32 256, 96
        %2616 = vbcast.lane.b32.xlu0 %v2566, %s2615
        %v2617 = vpop.permute.xlu0 %2616
        %s2619 = sor.u32 256, 104
        %2620 = vbcast.lane.b32.xlu0 %v2566, %s2619
        %v2621 = vpop.permute.xlu0 %2620
        %s2623 = sor.u32 256, 112
        %2624 = vbcast.lane.b32.xlu0 %v2566, %s2623
        %v2625 = vpop.permute.xlu0 %2624
        %s2627 = sor.u32 256, 120
        %2628 = vbcast.lane.b32.xlu0 %v2566, %s2627
        %v2629 = vpop.permute.xlu0 %2628
        %v2630 = vlaneseq
        %v2631 = vshrl.u32 %v2630, 7
        %v2632 = vsub.s32 1, %v2631
        %v2633 = vrot.slane %v2359, %v2632
        %2635 = vbcast.lane.b32.xlu0 %v2633, 256
        %v2636 = vpop.permute.xlu0 %2635
        %s2638 = sor.u32 256, 8
        %2639 = vbcast.lane.b32.xlu0 %v2633, %s2638
        %v2640 = vpop.permute.xlu0 %2639
        %s2642 = sor.u32 256, 16
        %2643 = vbcast.lane.b32.xlu0 %v2633, %s2642
        %v2644 = vpop.permute.xlu0 %2643
        %s2646 = sor.u32 256, 24
        %2647 = vbcast.lane.b32.xlu0 %v2633, %s2646
        %v2648 = vpop.permute.xlu0 %2647
        %s2650 = sor.u32 256, 32
        %2651 = vbcast.lane.b32.xlu0 %v2633, %s2650
        %v2652 = vpop.permute.xlu0 %2651
        %s2654 = sor.u32 256, 40
        %2655 = vbcast.lane.b32.xlu0 %v2633, %s2654
        %v2656 = vpop.permute.xlu0 %2655
        %s2658 = sor.u32 256, 48
        %2659 = vbcast.lane.b32.xlu0 %v2633, %s2658
        %v2660 = vpop.permute.xlu0 %2659
        %s2662 = sor.u32 256, 56
        %2663 = vbcast.lane.b32.xlu0 %v2633, %s2662
        %v2664 = vpop.permute.xlu0 %2663
        %s2666 = sor.u32 256, 64
        %2667 = vbcast.lane.b32.xlu0 %v2633, %s2666
        %v2668 = vpop.permute.xlu0 %2667
        %s2670 = sor.u32 256, 72
        %2671 = vbcast.lane.b32.xlu0 %v2633, %s2670
        %v2672 = vpop.permute.xlu0 %2671
        %s2674 = sor.u32 256, 80
        %2675 = vbcast.lane.b32.xlu0 %v2633, %s2674
        %v2676 = vpop.permute.xlu0 %2675
        %s2678 = sor.u32 256, 88
        %2679 = vbcast.lane.b32.xlu0 %v2633, %s2678
        %v2680 = vpop.permute.xlu0 %2679
        %s2682 = sor.u32 256, 96
        %2683 = vbcast.lane.b32.xlu0 %v2633, %s2682
        %v2684 = vpop.permute.xlu0 %2683
        %s2686 = sor.u32 256, 104
        %2687 = vbcast.lane.b32.xlu0 %v2633, %s2686
        %v2688 = vpop.permute.xlu0 %2687
        %s2690 = sor.u32 256, 112
        %2691 = vbcast.lane.b32.xlu0 %v2633, %s2690
        %v2692 = vpop.permute.xlu0 %2691
        %s2694 = sor.u32 256, 120
        %2695 = vbcast.lane.b32.xlu0 %v2633, %s2694
        %v2696 = vpop.permute.xlu0 %2695
        %v2697 = vld [vmem:[#allocation29 + $0x9] sm:$0x1]
        %v2698 = vlaneseq
        %v2699 = vshrl.u32 %v2698, 7
        %v2700 = vsub.s32 0, %v2699
        %v2701 = vrot.slane %v2697, %v2700
        %v2702 = vmul.f32 %v2569, %v2701
        %v2703 = vmul.f32 %v2573, %v2701
        %v2704 = vmul.f32 %v2577, %v2701
        %v2705 = vmul.f32 %v2581, %v2701
        %v2706 = vmul.f32 %v2585, %v2701
        %v2707 = vmul.f32 %v2589, %v2701
        %v2708 = vmul.f32 %v2593, %v2701
        %v2709 = vmul.f32 %v2597, %v2701
        %v2710 = vmul.f32 %v2601, %v2701
        %v2711 = vmul.f32 %v2605, %v2701
        %v2712 = vmul.f32 %v2609, %v2701
        %v2713 = vmul.f32 %v2613, %v2701
        %v2714 = vmul.f32 %v2617, %v2701
        %v2715 = vmul.f32 %v2621, %v2701
        %v2716 = vmul.f32 %v2625, %v2701
        %v2717 = vmul.f32 %v2629, %v2701
        %v2718 = vmul.f32 %v2636, %v2701
        %v2719 = vmul.f32 %v2640, %v2701
        %v2720 = vmul.f32 %v2644, %v2701
        %v2721 = vmul.f32 %v2648, %v2701
        %v2722 = vmul.f32 %v2652, %v2701
        %v2723 = vmul.f32 %v2656, %v2701
        %v2724 = vmul.f32 %v2660, %v2701
        %v2725 = vmul.f32 %v2664, %v2701
        %v2726 = vmul.f32 %v2668, %v2701
        %v2727 = vmul.f32 %v2672, %v2701
        %v2728 = vmul.f32 %v2676, %v2701
        %v2729 = vmul.f32 %v2680, %v2701
        %v2730 = vmul.f32 %v2684, %v2701
        %v2731 = vmul.f32 %v2688, %v2701
        %v2732 = vmul.f32 %v2692, %v2701
        %v2733 = vmul.f32 %v2696, %v2701
        %v2734 = vadd.f32 %v2531, %v2702
        %v2735 = vadd.f32 %v2532, %v2703
        %v2736 = vadd.f32 %v2533, %v2704
        %v2737 = vadd.f32 %v2534, %v2705
        %v2738 = vadd.f32 %v2535, %v2706
        %v2739 = vadd.f32 %v2536, %v2707
        %v2740 = vadd.f32 %v2537, %v2708
        %v2741 = vadd.f32 %v2538, %v2709
        %v2742 = vadd.f32 %v2539, %v2710
        %v2743 = vadd.f32 %v2540, %v2711
        %v2744 = vadd.f32 %v2541, %v2712
        %v2745 = vadd.f32 %v2542, %v2713
        %v2746 = vadd.f32 %v2543, %v2714
        %v2747 = vadd.f32 %v2544, %v2715
        %v2748 = vadd.f32 %v2545, %v2716
        %v2749 = vadd.f32 %v2546, %v2717
        %v2750 = vadd.f32 %v2547, %v2718
        %v2751 = vadd.f32 %v2548, %v2719
        %v2752 = vadd.f32 %v2549, %v2720
        %v2753 = vadd.f32 %v2550, %v2721
        %v2754 = vadd.f32 %v2551, %v2722
        %v2755 = vadd.f32 %v2552, %v2723
        %v2756 = vadd.f32 %v2553, %v2724
        %v2757 = vadd.f32 %v2554, %v2725
        %v2758 = vadd.f32 %v2555, %v2726
        %v2759 = vadd.f32 %v2556, %v2727
        %v2760 = vadd.f32 %v2557, %v2728
        %v2761 = vadd.f32 %v2558, %v2729
        %v2762 = vadd.f32 %v2559, %v2730
        %v2763 = vadd.f32 %v2560, %v2731
        %v2764 = vadd.f32 %v2561, %v2732
        %v2765 = vadd.f32 %v2562, %v2733
        %v2766 = vld [vmem:[#allocation15 + $0x1] sm:$0x1]
        %2767 = vrot.lane.b32.xlu0 %v1866, 8
        %v2768 = vpop.permute.xlu0 %2767
        %v2769 = vlaneseq
        %v2770 = vshrl.u32 %v2769, 7
        %v2771 = vsub.s32 0, %v2770
        %v2772 = vrot.slane %v2766, %v2771
        %v2773 = vmul.f32 %v2768, %v2772
        %2774 = vrot.lane.b32.xlu0 %v1867, 8
        %v2775 = vpop.permute.xlu0 %2774
        %v2776 = vmul.f32 %v2775, %v2772
        %v2777 = vlaneseq
        %v2778 = vshrl.u32 %v2777, 7
        %v2779 = vsub.s32 0, %v2778
        %v2780 = vrot.slane %v2773, %v2779
        %2782 = vbcast.lane.b32.xlu0 %v2780, 256
        %v2783 = vpop.permute.xlu0 %2782
        %s2785 = sor.u32 256, 8
        %2786 = vbcast.lane.b32.xlu0 %v2780, %s2785
        %v2787 = vpop.permute.xlu0 %2786
        %s2789 = sor.u32 256, 16
        %2790 = vbcast.lane.b32.xlu0 %v2780, %s2789
        %v2791 = vpop.permute.xlu0 %2790
        %s2793 = sor.u32 256, 24
        %2794 = vbcast.lane.b32.xlu0 %v2780, %s2793
        %v2795 = vpop.permute.xlu0 %2794
        %s2797 = sor.u32 256, 32
        %2798 = vbcast.lane.b32.xlu0 %v2780, %s2797
        %v2799 = vpop.permute.xlu0 %2798
        %s2801 = sor.u32 256, 40
        %2802 = vbcast.lane.b32.xlu0 %v2780, %s2801
        %v2803 = vpop.permute.xlu0 %2802
        %s2805 = sor.u32 256, 48
        %2806 = vbcast.lane.b32.xlu0 %v2780, %s2805
        %v2807 = vpop.permute.xlu0 %2806
        %s2809 = sor.u32 256, 56
        %2810 = vbcast.lane.b32.xlu0 %v2780, %s2809
        %v2811 = vpop.permute.xlu0 %2810
        %s2813 = sor.u32 256, 64
        %2814 = vbcast.lane.b32.xlu0 %v2780, %s2813
        %v2815 = vpop.permute.xlu0 %2814
        %s2817 = sor.u32 256, 72
        %2818 = vbcast.lane.b32.xlu0 %v2780, %s2817
        %v2819 = vpop.permute.xlu0 %2818
        %s2821 = sor.u32 256, 80
        %2822 = vbcast.lane.b32.xlu0 %v2780, %s2821
        %v2823 = vpop.permute.xlu0 %2822
        %s2825 = sor.u32 256, 88
        %2826 = vbcast.lane.b32.xlu0 %v2780, %s2825
        %v2827 = vpop.permute.xlu0 %2826
        %s2829 = sor.u32 256, 96
        %2830 = vbcast.lane.b32.xlu0 %v2780, %s2829
        %v2831 = vpop.permute.xlu0 %2830
        %s2833 = sor.u32 256, 104
        %2834 = vbcast.lane.b32.xlu0 %v2780, %s2833
        %v2835 = vpop.permute.xlu0 %2834
        %s2837 = sor.u32 256, 112
        %2838 = vbcast.lane.b32.xlu0 %v2780, %s2837
        %v2839 = vpop.permute.xlu0 %2838
        %s2841 = sor.u32 256, 120
        %2842 = vbcast.lane.b32.xlu0 %v2780, %s2841
        %v2843 = vpop.permute.xlu0 %2842
        %v2844 = vlaneseq
        %v2845 = vshrl.u32 %v2844, 7
        %v2846 = vsub.s32 1, %v2845
        %v2847 = vrot.slane %v2773, %v2846
        %2849 = vbcast.lane.b32.xlu0 %v2847, 256
        %v2850 = vpop.permute.xlu0 %2849
        %s2852 = sor.u32 256, 8
        %2853 = vbcast.lane.b32.xlu0 %v2847, %s2852
        %v2854 = vpop.permute.xlu0 %2853
        %s2856 = sor.u32 256, 16
        %2857 = vbcast.lane.b32.xlu0 %v2847, %s2856
        %v2858 = vpop.permute.xlu0 %2857
        %s2860 = sor.u32 256, 24
        %2861 = vbcast.lane.b32.xlu0 %v2847, %s2860
        %v2862 = vpop.permute.xlu0 %2861
        %s2864 = sor.u32 256, 32
        %2865 = vbcast.lane.b32.xlu0 %v2847, %s2864
        %v2866 = vpop.permute.xlu0 %2865
        %s2868 = sor.u32 256, 40
        %2869 = vbcast.lane.b32.xlu0 %v2847, %s2868
        %v2870 = vpop.permute.xlu0 %2869
        %s2872 = sor.u32 256, 48
        %2873 = vbcast.lane.b32.xlu0 %v2847, %s2872
        %v2874 = vpop.permute.xlu0 %2873
        %s2876 = sor.u32 256, 56
        %2877 = vbcast.lane.b32.xlu0 %v2847, %s2876
        %v2878 = vpop.permute.xlu0 %2877
        %s2880 = sor.u32 256, 64
        %2881 = vbcast.lane.b32.xlu0 %v2847, %s2880
        %v2882 = vpop.permute.xlu0 %2881
        %s2884 = sor.u32 256, 72
        %2885 = vbcast.lane.b32.xlu0 %v2847, %s2884
        %v2886 = vpop.permute.xlu0 %2885
        %s2888 = sor.u32 256, 80
        %2889 = vbcast.lane.b32.xlu0 %v2847, %s2888
        %v2890 = vpop.permute.xlu0 %2889
        %s2892 = sor.u32 256, 88
        %2893 = vbcast.lane.b32.xlu0 %v2847, %s2892
        %v2894 = vpop.permute.xlu0 %2893
        %s2896 = sor.u32 256, 96
        %2897 = vbcast.lane.b32.xlu0 %v2847, %s2896
        %v2898 = vpop.permute.xlu0 %2897
        %s2900 = sor.u32 256, 104
        %2901 = vbcast.lane.b32.xlu0 %v2847, %s2900
        %v2902 = vpop.permute.xlu0 %2901
        %s2904 = sor.u32 256, 112
        %2905 = vbcast.lane.b32.xlu0 %v2847, %s2904
        %v2906 = vpop.permute.xlu0 %2905
        %s2908 = sor.u32 256, 120
        %2909 = vbcast.lane.b32.xlu0 %v2847, %s2908
        %v2910 = vpop.permute.xlu0 %2909
        %v2911 = vld [vmem:[#allocation29 + $0x1] sm:$0x1]
        %v2912 = vlaneseq
        %v2913 = vshrl.u32 %v2912, 7
        %v2914 = vsub.s32 0, %v2913
        %v2915 = vrot.slane %v2911, %v2914
        %v2916 = vmul.f32 %v2783, %v2915
        %v2917 = vmul.f32 %v2787, %v2915
        %v2918 = vmul.f32 %v2791, %v2915
        %v2919 = vmul.f32 %v2795, %v2915
        %v2920 = vmul.f32 %v2799, %v2915
        %v2921 = vmul.f32 %v2803, %v2915
        %v2922 = vmul.f32 %v2807, %v2915
        %v2923 = vmul.f32 %v2811, %v2915
        %v2924 = vmul.f32 %v2815, %v2915
        %v2925 = vmul.f32 %v2819, %v2915
        %v2926 = vmul.f32 %v2823, %v2915
        %v2927 = vmul.f32 %v2827, %v2915
        %v2928 = vmul.f32 %v2831, %v2915
        %v2929 = vmul.f32 %v2835, %v2915
        %v2930 = vmul.f32 %v2839, %v2915
        %v2931 = vmul.f32 %v2843, %v2915
        %v2932 = vmul.f32 %v2850, %v2915
        %v2933 = vmul.f32 %v2854, %v2915
        %v2934 = vmul.f32 %v2858, %v2915
        %v2935 = vmul.f32 %v2862, %v2915
        %v2936 = vmul.f32 %v2866, %v2915
        %v2937 = vmul.f32 %v2870, %v2915
        %v2938 = vmul.f32 %v2874, %v2915
        %v2939 = vmul.f32 %v2878, %v2915
        %v2940 = vmul.f32 %v2882, %v2915
        %v2941 = vmul.f32 %v2886, %v2915
        %v2942 = vmul.f32 %v2890, %v2915
        %v2943 = vmul.f32 %v2894, %v2915
        %v2944 = vmul.f32 %v2898, %v2915
        %v2945 = vmul.f32 %v2902, %v2915
        %v2946 = vmul.f32 %v2906, %v2915
        %v2947 = vmul.f32 %v2910, %v2915
        %v2948 = vadd.f32 %v2734, %v2916
        %v2949 = vadd.f32 %v2735, %v2917
        %v2950 = vadd.f32 %v2736, %v2918
        %v2951 = vadd.f32 %v2737, %v2919
        %v2952 = vadd.f32 %v2738, %v2920
        %v2953 = vadd.f32 %v2739, %v2921
        %v2954 = vadd.f32 %v2740, %v2922
        %v2955 = vadd.f32 %v2741, %v2923
        %v2956 = vadd.f32 %v2742, %v2924
        %v2957 = vadd.f32 %v2743, %v2925
        %v2958 = vadd.f32 %v2744, %v2926
        %v2959 = vadd.f32 %v2745, %v2927
        %v2960 = vadd.f32 %v2746, %v2928
        %v2961 = vadd.f32 %v2747, %v2929
        %v2962 = vadd.f32 %v2748, %v2930
        %v2963 = vadd.f32 %v2749, %v2931
        %v2964 = vadd.f32 %v2750, %v2932
        %v2965 = vadd.f32 %v2751, %v2933
        %v2966 = vadd.f32 %v2752, %v2934
        %v2967 = vadd.f32 %v2753, %v2935
        %v2968 = vadd.f32 %v2754, %v2936
        %v2969 = vadd.f32 %v2755, %v2937
        %v2970 = vadd.f32 %v2756, %v2938
        %v2971 = vadd.f32 %v2757, %v2939
        %v2972 = vadd.f32 %v2758, %v2940
        %v2973 = vadd.f32 %v2759, %v2941
        %v2974 = vadd.f32 %v2760, %v2942
        %v2975 = vadd.f32 %v2761, %v2943
        %v2976 = vadd.f32 %v2762, %v2944
        %v2977 = vadd.f32 %v2763, %v2945
        %v2978 = vadd.f32 %v2764, %v2946
        %v2979 = vadd.f32 %v2765, %v2947
        %v2980 = vlaneseq
        %v2981 = vshrl.u32 %v2980, 7
        %v2982 = vsub.s32 0, %v2981
        %v2983 = vrot.slane %v2776, %v2982
        %2985 = vbcast.lane.b32.xlu0 %v2983, 256
        %v2986 = vpop.permute.xlu0 %2985
        %s2988 = sor.u32 256, 8
        %2989 = vbcast.lane.b32.xlu0 %v2983, %s2988
        %v2990 = vpop.permute.xlu0 %2989
        %s2992 = sor.u32 256, 16
        %2993 = vbcast.lane.b32.xlu0 %v2983, %s2992
        %v2994 = vpop.permute.xlu0 %2993
        %s2996 = sor.u32 256, 24
        %2997 = vbcast.lane.b32.xlu0 %v2983, %s2996
        %v2998 = vpop.permute.xlu0 %2997
        %s3000 = sor.u32 256, 32
        %3001 = vbcast.lane.b32.xlu0 %v2983, %s3000
        %v3002 = vpop.permute.xlu0 %3001
        %s3004 = sor.u32 256, 40
        %3005 = vbcast.lane.b32.xlu0 %v2983, %s3004
        %v3006 = vpop.permute.xlu0 %3005
        %s3008 = sor.u32 256, 48
        %3009 = vbcast.lane.b32.xlu0 %v2983, %s3008
        %v3010 = vpop.permute.xlu0 %3009
        %s3012 = sor.u32 256, 56
        %3013 = vbcast.lane.b32.xlu0 %v2983, %s3012
        %v3014 = vpop.permute.xlu0 %3013
        %s3016 = sor.u32 256, 64
        %3017 = vbcast.lane.b32.xlu0 %v2983, %s3016
        %v3018 = vpop.permute.xlu0 %3017
        %s3020 = sor.u32 256, 72
        %3021 = vbcast.lane.b32.xlu0 %v2983, %s3020
        %v3022 = vpop.permute.xlu0 %3021
        %s3024 = sor.u32 256, 80
        %3025 = vbcast.lane.b32.xlu0 %v2983, %s3024
        %v3026 = vpop.permute.xlu0 %3025
        %s3028 = sor.u32 256, 88
        %3029 = vbcast.lane.b32.xlu0 %v2983, %s3028
        %v3030 = vpop.permute.xlu0 %3029
        %s3032 = sor.u32 256, 96
        %3033 = vbcast.lane.b32.xlu0 %v2983, %s3032
        %v3034 = vpop.permute.xlu0 %3033
        %s3036 = sor.u32 256, 104
        %3037 = vbcast.lane.b32.xlu0 %v2983, %s3036
        %v3038 = vpop.permute.xlu0 %3037
        %s3040 = sor.u32 256, 112
        %3041 = vbcast.lane.b32.xlu0 %v2983, %s3040
        %v3042 = vpop.permute.xlu0 %3041
        %s3044 = sor.u32 256, 120
        %3045 = vbcast.lane.b32.xlu0 %v2983, %s3044
        %v3046 = vpop.permute.xlu0 %3045
        %v3047 = vlaneseq
        %v3048 = vshrl.u32 %v3047, 7
        %v3049 = vsub.s32 1, %v3048
        %v3050 = vrot.slane %v2776, %v3049
        %3052 = vbcast.lane.b32.xlu0 %v3050, 256
        %v3053 = vpop.permute.xlu0 %3052
        %s3055 = sor.u32 256, 8
        %3056 = vbcast.lane.b32.xlu0 %v3050, %s3055
        %v3057 = vpop.permute.xlu0 %3056
        %s3059 = sor.u32 256, 16
        %3060 = vbcast.lane.b32.xlu0 %v3050, %s3059
        %v3061 = vpop.permute.xlu0 %3060
        %s3063 = sor.u32 256, 24
        %3064 = vbcast.lane.b32.xlu0 %v3050, %s3063
        %v3065 = vpop.permute.xlu0 %3064
        %s3067 = sor.u32 256, 32
        %3068 = vbcast.lane.b32.xlu0 %v3050, %s3067
        %v3069 = vpop.permute.xlu0 %3068
        %s3071 = sor.u32 256, 40
        %3072 = vbcast.lane.b32.xlu0 %v3050, %s3071
        %v3073 = vpop.permute.xlu0 %3072
        %s3075 = sor.u32 256, 48
        %3076 = vbcast.lane.b32.xlu0 %v3050, %s3075
        %v3077 = vpop.permute.xlu0 %3076
        %s3079 = sor.u32 256, 56
        %3080 = vbcast.lane.b32.xlu0 %v3050, %s3079
        %v3081 = vpop.permute.xlu0 %3080
        %s3083 = sor.u32 256, 64
        %3084 = vbcast.lane.b32.xlu0 %v3050, %s3083
        %v3085 = vpop.permute.xlu0 %3084
        %s3087 = sor.u32 256, 72
        %3088 = vbcast.lane.b32.xlu0 %v3050, %s3087
        %v3089 = vpop.permute.xlu0 %3088
        %s3091 = sor.u32 256, 80
        %3092 = vbcast.lane.b32.xlu0 %v3050, %s3091
        %v3093 = vpop.permute.xlu0 %3092
        %s3095 = sor.u32 256, 88
        %3096 = vbcast.lane.b32.xlu0 %v3050, %s3095
        %v3097 = vpop.permute.xlu0 %3096
        %s3099 = sor.u32 256, 96
        %3100 = vbcast.lane.b32.xlu0 %v3050, %s3099
        %v3101 = vpop.permute.xlu0 %3100
        %s3103 = sor.u32 256, 104
        %3104 = vbcast.lane.b32.xlu0 %v3050, %s3103
        %v3105 = vpop.permute.xlu0 %3104
        %s3107 = sor.u32 256, 112
        %3108 = vbcast.lane.b32.xlu0 %v3050, %s3107
        %v3109 = vpop.permute.xlu0 %3108
        %s3111 = sor.u32 256, 120
        %3112 = vbcast.lane.b32.xlu0 %v3050, %s3111
        %v3113 = vpop.permute.xlu0 %3112
        %v3114 = vld [vmem:[#allocation29 + $0xa] sm:$0x1]
        %v3115 = vlaneseq
        %v3116 = vshrl.u32 %v3115, 7
        %v3117 = vsub.s32 0, %v3116
        %v3118 = vrot.slane %v3114, %v3117
        %v3119 = vmul.f32 %v2986, %v3118
        %v3120 = vmul.f32 %v2990, %v3118
        %v3121 = vmul.f32 %v2994, %v3118
        %v3122 = vmul.f32 %v2998, %v3118
        %v3123 = vmul.f32 %v3002, %v3118
        %v3124 = vmul.f32 %v3006, %v3118
        %v3125 = vmul.f32 %v3010, %v3118
        %v3126 = vmul.f32 %v3014, %v3118
        %v3127 = vmul.f32 %v3018, %v3118
        %v3128 = vmul.f32 %v3022, %v3118
        %v3129 = vmul.f32 %v3026, %v3118
        %v3130 = vmul.f32 %v3030, %v3118
        %v3131 = vmul.f32 %v3034, %v3118
        %v3132 = vmul.f32 %v3038, %v3118
        %v3133 = vmul.f32 %v3042, %v3118
        %v3134 = vmul.f32 %v3046, %v3118
        %v3135 = vmul.f32 %v3053, %v3118
        %v3136 = vmul.f32 %v3057, %v3118
        %v3137 = vmul.f32 %v3061, %v3118
        %v3138 = vmul.f32 %v3065, %v3118
        %v3139 = vmul.f32 %v3069, %v3118
        %v3140 = vmul.f32 %v3073, %v3118
        %v3141 = vmul.f32 %v3077, %v3118
        %v3142 = vmul.f32 %v3081, %v3118
        %v3143 = vmul.f32 %v3085, %v3118
        %v3144 = vmul.f32 %v3089, %v3118
        %v3145 = vmul.f32 %v3093, %v3118
        %v3146 = vmul.f32 %v3097, %v3118
        %v3147 = vmul.f32 %v3101, %v3118
        %v3148 = vmul.f32 %v3105, %v3118
        %v3149 = vmul.f32 %v3109, %v3118
        %v3150 = vmul.f32 %v3113, %v3118
        %v3151 = vadd.f32 %v2948, %v3119
        %v3152 = vadd.f32 %v2949, %v3120
        %v3153 = vadd.f32 %v2950, %v3121
        %v3154 = vadd.f32 %v2951, %v3122
        %v3155 = vadd.f32 %v2952, %v3123
        %v3156 = vadd.f32 %v2953, %v3124
        %v3157 = vadd.f32 %v2954, %v3125
        %v3158 = vadd.f32 %v2955, %v3126
        %v3159 = vadd.f32 %v2956, %v3127
        %v3160 = vadd.f32 %v2957, %v3128
        %v3161 = vadd.f32 %v2958, %v3129
        %v3162 = vadd.f32 %v2959, %v3130
        %v3163 = vadd.f32 %v2960, %v3131
        %v3164 = vadd.f32 %v2961, %v3132
        %v3165 = vadd.f32 %v2962, %v3133
        %v3166 = vadd.f32 %v2963, %v3134
        %v3167 = vadd.f32 %v2964, %v3135
        %v3168 = vadd.f32 %v2965, %v3136
        %v3169 = vadd.f32 %v2966, %v3137
        %v3170 = vadd.f32 %v2967, %v3138
        %v3171 = vadd.f32 %v2968, %v3139
        %v3172 = vadd.f32 %v2969, %v3140
        %v3173 = vadd.f32 %v2970, %v3141
        %v3174 = vadd.f32 %v2971, %v3142
        %v3175 = vadd.f32 %v2972, %v3143
        %v3176 = vadd.f32 %v2973, %v3144
        %v3177 = vadd.f32 %v2974, %v3145
        %v3178 = vadd.f32 %v2975, %v3146
        %v3179 = vadd.f32 %v2976, %v3147
        %v3180 = vadd.f32 %v2977, %v3148
        %v3181 = vadd.f32 %v2978, %v3149
        %v3182 = vadd.f32 %v2979, %v3150
        %v3183 = vld [vmem:[#allocation15 + $0x2] sm:$0x1]
        %3184 = vrot.lane.b32.xlu0 %v1866, 7
        %v3185 = vpop.permute.xlu0 %3184
        %v3186 = vlaneseq
        %v3187 = vshrl.u32 %v3186, 7
        %v3188 = vsub.s32 0, %v3187
        %v3189 = vrot.slane %v3183, %v3188
        %v3190 = vmul.f32 %v3185, %v3189
        %3191 = vrot.lane.b32.xlu0 %v1867, 7
        %v3192 = vpop.permute.xlu0 %3191
        %v3193 = vmul.f32 %v3192, %v3189
        %v3194 = vlaneseq
        %v3195 = vshrl.u32 %v3194, 7
        %v3196 = vsub.s32 0, %v3195
        %v3197 = vrot.slane %v3190, %v3196
        %3199 = vbcast.lane.b32.xlu0 %v3197, 256
        %v3200 = vpop.permute.xlu0 %3199
        %s3202 = sor.u32 256, 8
        %3203 = vbcast.lane.b32.xlu0 %v3197, %s3202
        %v3204 = vpop.permute.xlu0 %3203
        %s3206 = sor.u32 256, 16
        %3207 = vbcast.lane.b32.xlu0 %v3197, %s3206
        %v3208 = vpop.permute.xlu0 %3207
        %s3210 = sor.u32 256, 24
        %3211 = vbcast.lane.b32.xlu0 %v3197, %s3210
        %v3212 = vpop.permute.xlu0 %3211
        %s3214 = sor.u32 256, 32
        %3215 = vbcast.lane.b32.xlu0 %v3197, %s3214
        %v3216 = vpop.permute.xlu0 %3215
        %s3218 = sor.u32 256, 40
        %3219 = vbcast.lane.b32.xlu0 %v3197, %s3218
        %v3220 = vpop.permute.xlu0 %3219
        %s3222 = sor.u32 256, 48
        %3223 = vbcast.lane.b32.xlu0 %v3197, %s3222
        %v3224 = vpop.permute.xlu0 %3223
        %s3226 = sor.u32 256, 56
        %3227 = vbcast.lane.b32.xlu0 %v3197, %s3226
        %v3228 = vpop.permute.xlu0 %3227
        %s3230 = sor.u32 256, 64
        %3231 = vbcast.lane.b32.xlu0 %v3197, %s3230
        %v3232 = vpop.permute.xlu0 %3231
        %s3234 = sor.u32 256, 72
        %3235 = vbcast.lane.b32.xlu0 %v3197, %s3234
        %v3236 = vpop.permute.xlu0 %3235
        %s3238 = sor.u32 256, 80
        %3239 = vbcast.lane.b32.xlu0 %v3197, %s3238
        %v3240 = vpop.permute.xlu0 %3239
        %s3242 = sor.u32 256, 88
        %3243 = vbcast.lane.b32.xlu0 %v3197, %s3242
        %v3244 = vpop.permute.xlu0 %3243
        %s3246 = sor.u32 256, 96
        %3247 = vbcast.lane.b32.xlu0 %v3197, %s3246
        %v3248 = vpop.permute.xlu0 %3247
        %s3250 = sor.u32 256, 104
        %3251 = vbcast.lane.b32.xlu0 %v3197, %s3250
        %v3252 = vpop.permute.xlu0 %3251
        %s3254 = sor.u32 256, 112
        %3255 = vbcast.lane.b32.xlu0 %v3197, %s3254
        %v3256 = vpop.permute.xlu0 %3255
        %s3258 = sor.u32 256, 120
        %3259 = vbcast.lane.b32.xlu0 %v3197, %s3258
        %v3260 = vpop.permute.xlu0 %3259
        %v3261 = vlaneseq
        %v3262 = vshrl.u32 %v3261, 7
        %v3263 = vsub.s32 1, %v3262
        %v3264 = vrot.slane %v3190, %v3263
        %3266 = vbcast.lane.b32.xlu0 %v3264, 256
        %v3267 = vpop.permute.xlu0 %3266
        %s3269 = sor.u32 256, 8
        %3270 = vbcast.lane.b32.xlu0 %v3264, %s3269
        %v3271 = vpop.permute.xlu0 %3270
        %s3273 = sor.u32 256, 16
        %3274 = vbcast.lane.b32.xlu0 %v3264, %s3273
        %v3275 = vpop.permute.xlu0 %3274
        %s3277 = sor.u32 256, 24
        %3278 = vbcast.lane.b32.xlu0 %v3264, %s3277
        %v3279 = vpop.permute.xlu0 %3278
        %s3281 = sor.u32 256, 32
        %3282 = vbcast.lane.b32.xlu0 %v3264, %s3281
        %v3283 = vpop.permute.xlu0 %3282
        %s3285 = sor.u32 256, 40
        %3286 = vbcast.lane.b32.xlu0 %v3264, %s3285
        %v3287 = vpop.permute.xlu0 %3286
        %s3289 = sor.u32 256, 48
        %3290 = vbcast.lane.b32.xlu0 %v3264, %s3289
        %v3291 = vpop.permute.xlu0 %3290
        %s3293 = sor.u32 256, 56
        %3294 = vbcast.lane.b32.xlu0 %v3264, %s3293
        %v3295 = vpop.permute.xlu0 %3294
        %s3297 = sor.u32 256, 64
        %3298 = vbcast.lane.b32.xlu0 %v3264, %s3297
        %v3299 = vpop.permute.xlu0 %3298
        %s3301 = sor.u32 256, 72
        %3302 = vbcast.lane.b32.xlu0 %v3264, %s3301
        %v3303 = vpop.permute.xlu0 %3302
        %s3305 = sor.u32 256, 80
        %3306 = vbcast.lane.b32.xlu0 %v3264, %s3305
        %v3307 = vpop.permute.xlu0 %3306
        %s3309 = sor.u32 256, 88
        %3310 = vbcast.lane.b32.xlu0 %v3264, %s3309
        %v3311 = vpop.permute.xlu0 %3310
        %s3313 = sor.u32 256, 96
        %3314 = vbcast.lane.b32.xlu0 %v3264, %s3313
        %v3315 = vpop.permute.xlu0 %3314
        %s3317 = sor.u32 256, 104
        %3318 = vbcast.lane.b32.xlu0 %v3264, %s3317
        %v3319 = vpop.permute.xlu0 %3318
        %s3321 = sor.u32 256, 112
        %3322 = vbcast.lane.b32.xlu0 %v3264, %s3321
        %v3323 = vpop.permute.xlu0 %3322
        %s3325 = sor.u32 256, 120
        %3326 = vbcast.lane.b32.xlu0 %v3264, %s3325
        %v3327 = vpop.permute.xlu0 %3326
        %v3328 = vld [vmem:[#allocation29 + $0x2] sm:$0x1]
        %v3329 = vlaneseq
        %v3330 = vshrl.u32 %v3329, 7
        %v3331 = vsub.s32 0, %v3330
        %v3332 = vrot.slane %v3328, %v3331
        %v3333 = vmul.f32 %v3200, %v3332
        %v3334 = vmul.f32 %v3204, %v3332
        %v3335 = vmul.f32 %v3208, %v3332
        %v3336 = vmul.f32 %v3212, %v3332
        %v3337 = vmul.f32 %v3216, %v3332
        %v3338 = vmul.f32 %v3220, %v3332
        %v3339 = vmul.f32 %v3224, %v3332
        %v3340 = vmul.f32 %v3228, %v3332
        %v3341 = vmul.f32 %v3232, %v3332
        %v3342 = vmul.f32 %v3236, %v3332
        %v3343 = vmul.f32 %v3240, %v3332
        %v3344 = vmul.f32 %v3244, %v3332
        %v3345 = vmul.f32 %v3248, %v3332
        %v3346 = vmul.f32 %v3252, %v3332
        %v3347 = vmul.f32 %v3256, %v3332
        %v3348 = vmul.f32 %v3260, %v3332
        %v3349 = vmul.f32 %v3267, %v3332
        %v3350 = vmul.f32 %v3271, %v3332
        %v3351 = vmul.f32 %v3275, %v3332
        %v3352 = vmul.f32 %v3279, %v3332
        %v3353 = vmul.f32 %v3283, %v3332
        %v3354 = vmul.f32 %v3287, %v3332
        %v3355 = vmul.f32 %v3291, %v3332
        %v3356 = vmul.f32 %v3295, %v3332
        %v3357 = vmul.f32 %v3299, %v3332
        %v3358 = vmul.f32 %v3303, %v3332
        %v3359 = vmul.f32 %v3307, %v3332
        %v3360 = vmul.f32 %v3311, %v3332
        %v3361 = vmul.f32 %v3315, %v3332
        %v3362 = vmul.f32 %v3319, %v3332
        %v3363 = vmul.f32 %v3323, %v3332
        %v3364 = vmul.f32 %v3327, %v3332
        %v3365 = vadd.f32 %v3151, %v3333
        %v3366 = vadd.f32 %v3152, %v3334
        %v3367 = vadd.f32 %v3153, %v3335
        %v3368 = vadd.f32 %v3154, %v3336
        %v3369 = vadd.f32 %v3155, %v3337
        %v3370 = vadd.f32 %v3156, %v3338
        %v3371 = vadd.f32 %v3157, %v3339
        %v3372 = vadd.f32 %v3158, %v3340
        %v3373 = vadd.f32 %v3159, %v3341
        %v3374 = vadd.f32 %v3160, %v3342
        %v3375 = vadd.f32 %v3161, %v3343
        %v3376 = vadd.f32 %v3162, %v3344
        %v3377 = vadd.f32 %v3163, %v3345
        %v3378 = vadd.f32 %v3164, %v3346
        %v3379 = vadd.f32 %v3165, %v3347
        %v3380 = vadd.f32 %v3166, %v3348
        %v3381 = vadd.f32 %v3167, %v3349
        %v3382 = vadd.f32 %v3168, %v3350
        %v3383 = vadd.f32 %v3169, %v3351
        %v3384 = vadd.f32 %v3170, %v3352
        %v3385 = vadd.f32 %v3171, %v3353
        %v3386 = vadd.f32 %v3172, %v3354
        %v3387 = vadd.f32 %v3173, %v3355
        %v3388 = vadd.f32 %v3174, %v3356
        %v3389 = vadd.f32 %v3175, %v3357
        %v3390 = vadd.f32 %v3176, %v3358
        %v3391 = vadd.f32 %v3177, %v3359
        %v3392 = vadd.f32 %v3178, %v3360
        %v3393 = vadd.f32 %v3179, %v3361
        %v3394 = vadd.f32 %v3180, %v3362
        %v3395 = vadd.f32 %v3181, %v3363
        %v3396 = vadd.f32 %v3182, %v3364
        %v3397 = vlaneseq
        %v3398 = vshrl.u32 %v3397, 7
        %v3399 = vsub.s32 0, %v3398
        %v3400 = vrot.slane %v3193, %v3399
        %3402 = vbcast.lane.b32.xlu0 %v3400, 256
        %v3403 = vpop.permute.xlu0 %3402
        %s3405 = sor.u32 256, 8
        %3406 = vbcast.lane.b32.xlu0 %v3400, %s3405
        %v3407 = vpop.permute.xlu0 %3406
        %s3409 = sor.u32 256, 16
        %3410 = vbcast.lane.b32.xlu0 %v3400, %s3409
        %v3411 = vpop.permute.xlu0 %3410
        %s3413 = sor.u32 256, 24
        %3414 = vbcast.lane.b32.xlu0 %v3400, %s3413
        %v3415 = vpop.permute.xlu0 %3414
        %s3417 = sor.u32 256, 32
        %3418 = vbcast.lane.b32.xlu0 %v3400, %s3417
        %v3419 = vpop.permute.xlu0 %3418
        %s3421 = sor.u32 256, 40
        %3422 = vbcast.lane.b32.xlu0 %v3400, %s3421
        %v3423 = vpop.permute.xlu0 %3422
        %s3425 = sor.u32 256, 48
        %3426 = vbcast.lane.b32.xlu0 %v3400, %s3425
        %v3427 = vpop.permute.xlu0 %3426
        %s3429 = sor.u32 256, 56
        %3430 = vbcast.lane.b32.xlu0 %v3400, %s3429
        %v3431 = vpop.permute.xlu0 %3430
        %s3433 = sor.u32 256, 64
        %3434 = vbcast.lane.b32.xlu0 %v3400, %s3433
        %v3435 = vpop.permute.xlu0 %3434
        %s3437 = sor.u32 256, 72
        %3438 = vbcast.lane.b32.xlu0 %v3400, %s3437
        %v3439 = vpop.permute.xlu0 %3438
        %s3441 = sor.u32 256, 80
        %3442 = vbcast.lane.b32.xlu0 %v3400, %s3441
        %v3443 = vpop.permute.xlu0 %3442
        %s3445 = sor.u32 256, 88
        %3446 = vbcast.lane.b32.xlu0 %v3400, %s3445
        %v3447 = vpop.permute.xlu0 %3446
        %s3449 = sor.u32 256, 96
        %3450 = vbcast.lane.b32.xlu0 %v3400, %s3449
        %v3451 = vpop.permute.xlu0 %3450
        %s3453 = sor.u32 256, 104
        %3454 = vbcast.lane.b32.xlu0 %v3400, %s3453
        %v3455 = vpop.permute.xlu0 %3454
        %s3457 = sor.u32 256, 112
        %3458 = vbcast.lane.b32.xlu0 %v3400, %s3457
        %v3459 = vpop.permute.xlu0 %3458
        %s3461 = sor.u32 256, 120
        %3462 = vbcast.lane.b32.xlu0 %v3400, %s3461
        %v3463 = vpop.permute.xlu0 %3462
        %v3464 = vlaneseq
        %v3465 = vshrl.u32 %v3464, 7
        %v3466 = vsub.s32 1, %v3465
        %v3467 = vrot.slane %v3193, %v3466
        %3469 = vbcast.lane.b32.xlu0 %v3467, 256
        %v3470 = vpop.permute.xlu0 %3469
        %s3472 = sor.u32 256, 8
        %3473 = vbcast.lane.b32.xlu0 %v3467, %s3472
        %v3474 = vpop.permute.xlu0 %3473
        %s3476 = sor.u32 256, 16
        %3477 = vbcast.lane.b32.xlu0 %v3467, %s3476
        %v3478 = vpop.permute.xlu0 %3477
        %s3480 = sor.u32 256, 24
        %3481 = vbcast.lane.b32.xlu0 %v3467, %s3480
        %v3482 = vpop.permute.xlu0 %3481
        %s3484 = sor.u32 256, 32
        %3485 = vbcast.lane.b32.xlu0 %v3467, %s3484
        %v3486 = vpop.permute.xlu0 %3485
        %s3488 = sor.u32 256, 40
        %3489 = vbcast.lane.b32.xlu0 %v3467, %s3488
        %v3490 = vpop.permute.xlu0 %3489
        %s3492 = sor.u32 256, 48
        %3493 = vbcast.lane.b32.xlu0 %v3467, %s3492
        %v3494 = vpop.permute.xlu0 %3493
        %s3496 = sor.u32 256, 56
        %3497 = vbcast.lane.b32.xlu0 %v3467, %s3496
        %v3498 = vpop.permute.xlu0 %3497
        %s3500 = sor.u32 256, 64
        %3501 = vbcast.lane.b32.xlu0 %v3467, %s3500
        %v3502 = vpop.permute.xlu0 %3501
        %s3504 = sor.u32 256, 72
        %3505 = vbcast.lane.b32.xlu0 %v3467, %s3504
        %v3506 = vpop.permute.xlu0 %3505
        %s3508 = sor.u32 256, 80
        %3509 = vbcast.lane.b32.xlu0 %v3467, %s3508
        %v3510 = vpop.permute.xlu0 %3509
        %s3512 = sor.u32 256, 88
        %3513 = vbcast.lane.b32.xlu0 %v3467, %s3512
        %v3514 = vpop.permute.xlu0 %3513
        %s3516 = sor.u32 256, 96
        %3517 = vbcast.lane.b32.xlu0 %v3467, %s3516
        %v3518 = vpop.permute.xlu0 %3517
        %s3520 = sor.u32 256, 104
        %3521 = vbcast.lane.b32.xlu0 %v3467, %s3520
        %v3522 = vpop.permute.xlu0 %3521
        %s3524 = sor.u32 256, 112
        %3525 = vbcast.lane.b32.xlu0 %v3467, %s3524
        %v3526 = vpop.permute.xlu0 %3525
        %s3528 = sor.u32 256, 120
        %3529 = vbcast.lane.b32.xlu0 %v3467, %s3528
        %v3530 = vpop.permute.xlu0 %3529
        %v3531 = vld [vmem:[#allocation29 + $0xb] sm:$0x1]
        %v3532 = vlaneseq
        %v3533 = vshrl.u32 %v3532, 7
        %v3534 = vsub.s32 0, %v3533
        %v3535 = vrot.slane %v3531, %v3534
        %v3536 = vmul.f32 %v3403, %v3535
        %v3537 = vmul.f32 %v3407, %v3535
        %v3538 = vmul.f32 %v3411, %v3535
        %v3539 = vmul.f32 %v3415, %v3535
        %v3540 = vmul.f32 %v3419, %v3535
        %v3541 = vmul.f32 %v3423, %v3535
        %v3542 = vmul.f32 %v3427, %v3535
        %v3543 = vmul.f32 %v3431, %v3535
        %v3544 = vmul.f32 %v3435, %v3535
        %v3545 = vmul.f32 %v3439, %v3535
        %v3546 = vmul.f32 %v3443, %v3535
        %v3547 = vmul.f32 %v3447, %v3535
        %v3548 = vmul.f32 %v3451, %v3535
        %v3549 = vmul.f32 %v3455, %v3535
        %v3550 = vmul.f32 %v3459, %v3535
        %v3551 = vmul.f32 %v3463, %v3535
        %v3552 = vmul.f32 %v3470, %v3535
        %v3553 = vmul.f32 %v3474, %v3535
        %v3554 = vmul.f32 %v3478, %v3535
        %v3555 = vmul.f32 %v3482, %v3535
        %v3556 = vmul.f32 %v3486, %v3535
        %v3557 = vmul.f32 %v3490, %v3535
        %v3558 = vmul.f32 %v3494, %v3535
        %v3559 = vmul.f32 %v3498, %v3535
        %v3560 = vmul.f32 %v3502, %v3535
        %v3561 = vmul.f32 %v3506, %v3535
        %v3562 = vmul.f32 %v3510, %v3535
        %v3563 = vmul.f32 %v3514, %v3535
        %v3564 = vmul.f32 %v3518, %v3535
        %v3565 = vmul.f32 %v3522, %v3535
        %v3566 = vmul.f32 %v3526, %v3535
        %v3567 = vmul.f32 %v3530, %v3535
        %v3568 = vadd.f32 %v3365, %v3536
        %v3569 = vadd.f32 %v3366, %v3537
        %v3570 = vadd.f32 %v3367, %v3538
        %v3571 = vadd.f32 %v3368, %v3539
        %v3572 = vadd.f32 %v3369, %v3540
        %v3573 = vadd.f32 %v3370, %v3541
        %v3574 = vadd.f32 %v3371, %v3542
        %v3575 = vadd.f32 %v3372, %v3543
        %v3576 = vadd.f32 %v3373, %v3544
        %v3577 = vadd.f32 %v3374, %v3545
        %v3578 = vadd.f32 %v3375, %v3546
        %v3579 = vadd.f32 %v3376, %v3547
        %v3580 = vadd.f32 %v3377, %v3548
        %v3581 = vadd.f32 %v3378, %v3549
        %v3582 = vadd.f32 %v3379, %v3550
        %v3583 = vadd.f32 %v3380, %v3551
        %v3584 = vadd.f32 %v3381, %v3552
        %v3585 = vadd.f32 %v3382, %v3553
        %v3586 = vadd.f32 %v3383, %v3554
        %v3587 = vadd.f32 %v3384, %v3555
        %v3588 = vadd.f32 %v3385, %v3556
        %v3589 = vadd.f32 %v3386, %v3557
        %v3590 = vadd.f32 %v3387, %v3558
        %v3591 = vadd.f32 %v3388, %v3559
        %v3592 = vadd.f32 %v3389, %v3560
        %v3593 = vadd.f32 %v3390, %v3561
        %v3594 = vadd.f32 %v3391, %v3562
        %v3595 = vadd.f32 %v3392, %v3563
        %v3596 = vadd.f32 %v3393, %v3564
        %v3597 = vadd.f32 %v3394, %v3565
        %v3598 = vadd.f32 %v3395, %v3566
        %v3599 = vadd.f32 %v3396, %v3567
        %v3600 = vld [vmem:[#allocation15 + $0x3] sm:$0x1]
        %3601 = vrot.lane.b32.xlu0 %v1866, 1
        %v3602 = vpop.permute.xlu0 %3601
        %v3603 = vlaneseq
        %v3604 = vshrl.u32 %v3603, 7
        %v3605 = vsub.s32 0, %v3604
        %v3606 = vrot.slane %v3600, %v3605
        %v3607 = vmul.f32 %v3602, %v3606
        %3608 = vrot.lane.b32.xlu0 %v1867, 1
        %v3609 = vpop.permute.xlu0 %3608
        %v3610 = vmul.f32 %v3609, %v3606
        %v3611 = vlaneseq
        %v3612 = vshrl.u32 %v3611, 7
        %v3613 = vsub.s32 0, %v3612
        %v3614 = vrot.slane %v3607, %v3613
        %3616 = vbcast.lane.b32.xlu0 %v3614, 256
        %v3617 = vpop.permute.xlu0 %3616
        %s3619 = sor.u32 256, 8
        %3620 = vbcast.lane.b32.xlu0 %v3614, %s3619
        %v3621 = vpop.permute.xlu0 %3620
        %s3623 = sor.u32 256, 16
        %3624 = vbcast.lane.b32.xlu0 %v3614, %s3623
        %v3625 = vpop.permute.xlu0 %3624
        %s3627 = sor.u32 256, 24
        %3628 = vbcast.lane.b32.xlu0 %v3614, %s3627
        %v3629 = vpop.permute.xlu0 %3628
        %s3631 = sor.u32 256, 32
        %3632 = vbcast.lane.b32.xlu0 %v3614, %s3631
        %v3633 = vpop.permute.xlu0 %3632
        %s3635 = sor.u32 256, 40
        %3636 = vbcast.lane.b32.xlu0 %v3614, %s3635
        %v3637 = vpop.permute.xlu0 %3636
        %s3639 = sor.u32 256, 48
        %3640 = vbcast.lane.b32.xlu0 %v3614, %s3639
        %v3641 = vpop.permute.xlu0 %3640
        %s3643 = sor.u32 256, 56
        %3644 = vbcast.lane.b32.xlu0 %v3614, %s3643
        %v3645 = vpop.permute.xlu0 %3644
        %s3647 = sor.u32 256, 64
        %3648 = vbcast.lane.b32.xlu0 %v3614, %s3647
        %v3649 = vpop.permute.xlu0 %3648
        %s3651 = sor.u32 256, 72
        %3652 = vbcast.lane.b32.xlu0 %v3614, %s3651
        %v3653 = vpop.permute.xlu0 %3652
        %s3655 = sor.u32 256, 80
        %3656 = vbcast.lane.b32.xlu0 %v3614, %s3655
        %v3657 = vpop.permute.xlu0 %3656
        %s3659 = sor.u32 256, 88
        %3660 = vbcast.lane.b32.xlu0 %v3614, %s3659
        %v3661 = vpop.permute.xlu0 %3660
        %s3663 = sor.u32 256, 96
        %3664 = vbcast.lane.b32.xlu0 %v3614, %s3663
        %v3665 = vpop.permute.xlu0 %3664
        %s3667 = sor.u32 256, 104
        %3668 = vbcast.lane.b32.xlu0 %v3614, %s3667
        %v3669 = vpop.permute.xlu0 %3668
        %s3671 = sor.u32 256, 112
        %3672 = vbcast.lane.b32.xlu0 %v3614, %s3671
        %v3673 = vpop.permute.xlu0 %3672
        %s3675 = sor.u32 256, 120
        %3676 = vbcast.lane.b32.xlu0 %v3614, %s3675
        %v3677 = vpop.permute.xlu0 %3676
        %v3678 = vlaneseq
        %v3679 = vshrl.u32 %v3678, 7
        %v3680 = vsub.s32 1, %v3679
        %v3681 = vrot.slane %v3607, %v3680
        %3683 = vbcast.lane.b32.xlu0 %v3681, 256
        %v3684 = vpop.permute.xlu0 %3683
        %s3686 = sor.u32 256, 8
        %3687 = vbcast.lane.b32.xlu0 %v3681, %s3686
        %v3688 = vpop.permute.xlu0 %3687
        %s3690 = sor.u32 256, 16
        %3691 = vbcast.lane.b32.xlu0 %v3681, %s3690
        %v3692 = vpop.permute.xlu0 %3691
        %s3694 = sor.u32 256, 24
        %3695 = vbcast.lane.b32.xlu0 %v3681, %s3694
        %v3696 = vpop.permute.xlu0 %3695
        %s3698 = sor.u32 256, 32
        %3699 = vbcast.lane.b32.xlu0 %v3681, %s3698
        %v3700 = vpop.permute.xlu0 %3699
        %s3702 = sor.u32 256, 40
        %3703 = vbcast.lane.b32.xlu0 %v3681, %s3702
        %v3704 = vpop.permute.xlu0 %3703
        %s3706 = sor.u32 256, 48
        %3707 = vbcast.lane.b32.xlu0 %v3681, %s3706
        %v3708 = vpop.permute.xlu0 %3707
        %s3710 = sor.u32 256, 56
        %3711 = vbcast.lane.b32.xlu0 %v3681, %s3710
        %v3712 = vpop.permute.xlu0 %3711
        %s3714 = sor.u32 256, 64
        %3715 = vbcast.lane.b32.xlu0 %v3681, %s3714
        %v3716 = vpop.permute.xlu0 %3715
        %s3718 = sor.u32 256, 72
        %3719 = vbcast.lane.b32.xlu0 %v3681, %s3718
        %v3720 = vpop.permute.xlu0 %3719
        %s3722 = sor.u32 256, 80
        %3723 = vbcast.lane.b32.xlu0 %v3681, %s3722
        %v3724 = vpop.permute.xlu0 %3723
        %s3726 = sor.u32 256, 88
        %3727 = vbcast.lane.b32.xlu0 %v3681, %s3726
        %v3728 = vpop.permute.xlu0 %3727
        %s3730 = sor.u32 256, 96
        %3731 = vbcast.lane.b32.xlu0 %v3681, %s3730
        %v3732 = vpop.permute.xlu0 %3731
        %s3734 = sor.u32 256, 104
        %3735 = vbcast.lane.b32.xlu0 %v3681, %s3734
        %v3736 = vpop.permute.xlu0 %3735
        %s3738 = sor.u32 256, 112
        %3739 = vbcast.lane.b32.xlu0 %v3681, %s3738
        %v3740 = vpop.permute.xlu0 %3739
        %s3742 = sor.u32 256, 120
        %3743 = vbcast.lane.b32.xlu0 %v3681, %s3742
        %v3744 = vpop.permute.xlu0 %3743
        %v3745 = vld [vmem:[#allocation29 + $0x3] sm:$0x1]
        %v3746 = vlaneseq
        %v3747 = vshrl.u32 %v3746, 7
        %v3748 = vsub.s32 0, %v3747
        %v3749 = vrot.slane %v3745, %v3748
        %v3750 = vmul.f32 %v3617, %v3749
        %v3751 = vmul.f32 %v3621, %v3749
        %v3752 = vmul.f32 %v3625, %v3749
        %v3753 = vmul.f32 %v3629, %v3749
        %v3754 = vmul.f32 %v3633, %v3749
        %v3755 = vmul.f32 %v3637, %v3749
        %v3756 = vmul.f32 %v3641, %v3749
        %v3757 = vmul.f32 %v3645, %v3749
        %v3758 = vmul.f32 %v3649, %v3749
        %v3759 = vmul.f32 %v3653, %v3749
        %v3760 = vmul.f32 %v3657, %v3749
        %v3761 = vmul.f32 %v3661, %v3749
        %v3762 = vmul.f32 %v3665, %v3749
        %v3763 = vmul.f32 %v3669, %v3749
        %v3764 = vmul.f32 %v3673, %v3749
        %v3765 = vmul.f32 %v3677, %v3749
        %v3766 = vmul.f32 %v3684, %v3749
        %v3767 = vmul.f32 %v3688, %v3749
        %v3768 = vmul.f32 %v3692, %v3749
        %v3769 = vmul.f32 %v3696, %v3749
        %v3770 = vmul.f32 %v3700, %v3749
        %v3771 = vmul.f32 %v3704, %v3749
        %v3772 = vmul.f32 %v3708, %v3749
        %v3773 = vmul.f32 %v3712, %v3749
        %v3774 = vmul.f32 %v3716, %v3749
        %v3775 = vmul.f32 %v3720, %v3749
        %v3776 = vmul.f32 %v3724, %v3749
        %v3777 = vmul.f32 %v3728, %v3749
        %v3778 = vmul.f32 %v3732, %v3749
        %v3779 = vmul.f32 %v3736, %v3749
        %v3780 = vmul.f32 %v3740, %v3749
        %v3781 = vmul.f32 %v3744, %v3749
        %v3782 = vadd.f32 %v3568, %v3750
        %v3783 = vadd.f32 %v3569, %v3751
        %v3784 = vadd.f32 %v3570, %v3752
        %v3785 = vadd.f32 %v3571, %v3753
        %v3786 = vadd.f32 %v3572, %v3754
        %v3787 = vadd.f32 %v3573, %v3755
        %v3788 = vadd.f32 %v3574, %v3756
        %v3789 = vadd.f32 %v3575, %v3757
        %v3790 = vadd.f32 %v3576, %v3758
        %v3791 = vadd.f32 %v3577, %v3759
        %v3792 = vadd.f32 %v3578, %v3760
        %v3793 = vadd.f32 %v3579, %v3761
        %v3794 = vadd.f32 %v3580, %v3762
        %v3795 = vadd.f32 %v3581, %v3763
        %v3796 = vadd.f32 %v3582, %v3764
        %v3797 = vadd.f32 %v3583, %v3765
        %v3798 = vadd.f32 %v3584, %v3766
        %v3799 = vadd.f32 %v3585, %v3767
        %v3800 = vadd.f32 %v3586, %v3768
        %v3801 = vadd.f32 %v3587, %v3769
        %v3802 = vadd.f32 %v3588, %v3770
        %v3803 = vadd.f32 %v3589, %v3771
        %v3804 = vadd.f32 %v3590, %v3772
        %v3805 = vadd.f32 %v3591, %v3773
        %v3806 = vadd.f32 %v3592, %v3774
        %v3807 = vadd.f32 %v3593, %v3775
        %v3808 = vadd.f32 %v3594, %v3776
        %v3809 = vadd.f32 %v3595, %v3777
        %v3810 = vadd.f32 %v3596, %v3778
        %v3811 = vadd.f32 %v3597, %v3779
        %v3812 = vadd.f32 %v3598, %v3780
        %v3813 = vadd.f32 %v3599, %v3781
        %v3814 = vlaneseq
        %v3815 = vshrl.u32 %v3814, 7
        %v3816 = vsub.s32 0, %v3815
        %v3817 = vrot.slane %v3610, %v3816
        %3819 = vbcast.lane.b32.xlu0 %v3817, 256
        %v3820 = vpop.permute.xlu0 %3819
        %s3822 = sor.u32 256, 8
        %3823 = vbcast.lane.b32.xlu0 %v3817, %s3822
        %v3824 = vpop.permute.xlu0 %3823
        %s3826 = sor.u32 256, 16
        %3827 = vbcast.lane.b32.xlu0 %v3817, %s3826
        %v3828 = vpop.permute.xlu0 %3827
        %s3830 = sor.u32 256, 24
        %3831 = vbcast.lane.b32.xlu0 %v3817, %s3830
        %v3832 = vpop.permute.xlu0 %3831
        %s3834 = sor.u32 256, 32
        %3835 = vbcast.lane.b32.xlu0 %v3817, %s3834
        %v3836 = vpop.permute.xlu0 %3835
        %s3838 = sor.u32 256, 40
        %3839 = vbcast.lane.b32.xlu0 %v3817, %s3838
        %v3840 = vpop.permute.xlu0 %3839
        %s3842 = sor.u32 256, 48
        %3843 = vbcast.lane.b32.xlu0 %v3817, %s3842
        %v3844 = vpop.permute.xlu0 %3843
        %s3846 = sor.u32 256, 56
        %3847 = vbcast.lane.b32.xlu0 %v3817, %s3846
        %v3848 = vpop.permute.xlu0 %3847
        %s3850 = sor.u32 256, 64
        %3851 = vbcast.lane.b32.xlu0 %v3817, %s3850
        %v3852 = vpop.permute.xlu0 %3851
        %s3854 = sor.u32 256, 72
        %3855 = vbcast.lane.b32.xlu0 %v3817, %s3854
        %v3856 = vpop.permute.xlu0 %3855
        %s3858 = sor.u32 256, 80
        %3859 = vbcast.lane.b32.xlu0 %v3817, %s3858
        %v3860 = vpop.permute.xlu0 %3859
        %s3862 = sor.u32 256, 88
        %3863 = vbcast.lane.b32.xlu0 %v3817, %s3862
        %v3864 = vpop.permute.xlu0 %3863
        %s3866 = sor.u32 256, 96
        %3867 = vbcast.lane.b32.xlu0 %v3817, %s3866
        %v3868 = vpop.permute.xlu0 %3867
        %s3870 = sor.u32 256, 104
        %3871 = vbcast.lane.b32.xlu0 %v3817, %s3870
        %v3872 = vpop.permute.xlu0 %3871
        %s3874 = sor.u32 256, 112
        %3875 = vbcast.lane.b32.xlu0 %v3817, %s3874
        %v3876 = vpop.permute.xlu0 %3875
        %s3878 = sor.u32 256, 120
        %3879 = vbcast.lane.b32.xlu0 %v3817, %s3878
        %v3880 = vpop.permute.xlu0 %3879
        %v3881 = vlaneseq
        %v3882 = vshrl.u32 %v3881, 7
        %v3883 = vsub.s32 1, %v3882
        %v3884 = vrot.slane %v3610, %v3883
        %3886 = vbcast.lane.b32.xlu0 %v3884, 256
        %v3887 = vpop.permute.xlu0 %3886
        %s3889 = sor.u32 256, 8
        %3890 = vbcast.lane.b32.xlu0 %v3884, %s3889
        %v3891 = vpop.permute.xlu0 %3890
        %s3893 = sor.u32 256, 16
        %3894 = vbcast.lane.b32.xlu0 %v3884, %s3893
        %v3895 = vpop.permute.xlu0 %3894
        %s3897 = sor.u32 256, 24
        %3898 = vbcast.lane.b32.xlu0 %v3884, %s3897
        %v3899 = vpop.permute.xlu0 %3898
        %s3901 = sor.u32 256, 32
        %3902 = vbcast.lane.b32.xlu0 %v3884, %s3901
        %v3903 = vpop.permute.xlu0 %3902
        %s3905 = sor.u32 256, 40
        %3906 = vbcast.lane.b32.xlu0 %v3884, %s3905
        %v3907 = vpop.permute.xlu0 %3906
        %s3909 = sor.u32 256, 48
        %3910 = vbcast.lane.b32.xlu0 %v3884, %s3909
        %v3911 = vpop.permute.xlu0 %3910
        %s3913 = sor.u32 256, 56
        %3914 = vbcast.lane.b32.xlu0 %v3884, %s3913
        %v3915 = vpop.permute.xlu0 %3914
        %s3917 = sor.u32 256, 64
        %3918 = vbcast.lane.b32.xlu0 %v3884, %s3917
        %v3919 = vpop.permute.xlu0 %3918
        %s3921 = sor.u32 256, 72
        %3922 = vbcast.lane.b32.xlu0 %v3884, %s3921
        %v3923 = vpop.permute.xlu0 %3922
        %s3925 = sor.u32 256, 80
        %3926 = vbcast.lane.b32.xlu0 %v3884, %s3925
        %v3927 = vpop.permute.xlu0 %3926
        %s3929 = sor.u32 256, 88
        %3930 = vbcast.lane.b32.xlu0 %v3884, %s3929
        %v3931 = vpop.permute.xlu0 %3930
        %s3933 = sor.u32 256, 96
        %3934 = vbcast.lane.b32.xlu0 %v3884, %s3933
        %v3935 = vpop.permute.xlu0 %3934
        %s3937 = sor.u32 256, 104
        %3938 = vbcast.lane.b32.xlu0 %v3884, %s3937
        %v3939 = vpop.permute.xlu0 %3938
        %s3941 = sor.u32 256, 112
        %3942 = vbcast.lane.b32.xlu0 %v3884, %s3941
        %v3943 = vpop.permute.xlu0 %3942
        %s3945 = sor.u32 256, 120
        %3946 = vbcast.lane.b32.xlu0 %v3884, %s3945
        %v3947 = vpop.permute.xlu0 %3946
        %v3948 = vld [vmem:[#allocation29 + $0xc] sm:$0x1]
        %v3949 = vlaneseq
        %v3950 = vshrl.u32 %v3949, 7
        %v3951 = vsub.s32 0, %v3950
        %v3952 = vrot.slane %v3948, %v3951
        %v3953 = vmul.f32 %v3820, %v3952
        %v3954 = vmul.f32 %v3824, %v3952
        %v3955 = vmul.f32 %v3828, %v3952
        %v3956 = vmul.f32 %v3832, %v3952
        %v3957 = vmul.f32 %v3836, %v3952
        %v3958 = vmul.f32 %v3840, %v3952
        %v3959 = vmul.f32 %v3844, %v3952
        %v3960 = vmul.f32 %v3848, %v3952
        %v3961 = vmul.f32 %v3852, %v3952
        %v3962 = vmul.f32 %v3856, %v3952
        %v3963 = vmul.f32 %v3860, %v3952
        %v3964 = vmul.f32 %v3864, %v3952
        %v3965 = vmul.f32 %v3868, %v3952
        %v3966 = vmul.f32 %v3872, %v3952
        %v3967 = vmul.f32 %v3876, %v3952
        %v3968 = vmul.f32 %v3880, %v3952
        %v3969 = vmul.f32 %v3887, %v3952
        %v3970 = vmul.f32 %v3891, %v3952
        %v3971 = vmul.f32 %v3895, %v3952
        %v3972 = vmul.f32 %v3899, %v3952
        %v3973 = vmul.f32 %v3903, %v3952
        %v3974 = vmul.f32 %v3907, %v3952
        %v3975 = vmul.f32 %v3911, %v3952
        %v3976 = vmul.f32 %v3915, %v3952
        %v3977 = vmul.f32 %v3919, %v3952
        %v3978 = vmul.f32 %v3923, %v3952
        %v3979 = vmul.f32 %v3927, %v3952
        %v3980 = vmul.f32 %v3931, %v3952
        %v3981 = vmul.f32 %v3935, %v3952
        %v3982 = vmul.f32 %v3939, %v3952
        %v3983 = vmul.f32 %v3943, %v3952
        %v3984 = vmul.f32 %v3947, %v3952
        %v3985 = vadd.f32 %v3782, %v3953
        %v3986 = vadd.f32 %v3783, %v3954
        %v3987 = vadd.f32 %v3784, %v3955
        %v3988 = vadd.f32 %v3785, %v3956
        %v3989 = vadd.f32 %v3786, %v3957
        %v3990 = vadd.f32 %v3787, %v3958
        %v3991 = vadd.f32 %v3788, %v3959
        %v3992 = vadd.f32 %v3789, %v3960
        %v3993 = vadd.f32 %v3790, %v3961
        %v3994 = vadd.f32 %v3791, %v3962
        %v3995 = vadd.f32 %v3792, %v3963
        %v3996 = vadd.f32 %v3793, %v3964
        %v3997 = vadd.f32 %v3794, %v3965
        %v3998 = vadd.f32 %v3795, %v3966
        %v3999 = vadd.f32 %v3796, %v3967
        %v4000 = vadd.f32 %v3797, %v3968
        %v4001 = vadd.f32 %v3798, %v3969
        %v4002 = vadd.f32 %v3799, %v3970
        %v4003 = vadd.f32 %v3800, %v3971
        %v4004 = vadd.f32 %v3801, %v3972
        %v4005 = vadd.f32 %v3802, %v3973
        %v4006 = vadd.f32 %v3803, %v3974
        %v4007 = vadd.f32 %v3804, %v3975
        %v4008 = vadd.f32 %v3805, %v3976
        %v4009 = vadd.f32 %v3806, %v3977
        %v4010 = vadd.f32 %v3807, %v3978
        %v4011 = vadd.f32 %v3808, %v3979
        %v4012 = vadd.f32 %v3809, %v3980
        %v4013 = vadd.f32 %v3810, %v3981
        %v4014 = vadd.f32 %v3811, %v3982
        %v4015 = vadd.f32 %v3812, %v3983
        %v4016 = vadd.f32 %v3813, %v3984
        %v4017 = vld [vmem:[#allocation15 + $0x4] sm:$0x1]
        %v4018 = vlaneseq
        %v4019 = vshrl.u32 %v4018, 7
        %v4020 = vsub.s32 0, %v4019
        %v4021 = vrot.slane %v4017, %v4020
        %v4022 = vmul.f32 %v1866, %v4021
        %v4023 = vmul.f32 %v1867, %v4021
        %v4024 = vlaneseq
        %v4025 = vshrl.u32 %v4024, 7
        %v4026 = vsub.s32 0, %v4025
        %v4027 = vrot.slane %v4022, %v4026
        %4029 = vbcast.lane.b32.xlu0 %v4027, 256
        %v4030 = vpop.permute.xlu0 %4029
        %s4032 = sor.u32 256, 8
        %4033 = vbcast.lane.b32.xlu0 %v4027, %s4032
        %v4034 = vpop.permute.xlu0 %4033
        %s4036 = sor.u32 256, 16
        %4037 = vbcast.lane.b32.xlu0 %v4027, %s4036
        %v4038 = vpop.permute.xlu0 %4037
        %s4040 = sor.u32 256, 24
        %4041 = vbcast.lane.b32.xlu0 %v4027, %s4040
        %v4042 = vpop.permute.xlu0 %4041
        %s4044 = sor.u32 256, 32
        %4045 = vbcast.lane.b32.xlu0 %v4027, %s4044
        %v4046 = vpop.permute.xlu0 %4045
        %s4048 = sor.u32 256, 40
        %4049 = vbcast.lane.b32.xlu0 %v4027, %s4048
        %v4050 = vpop.permute.xlu0 %4049
        %s4052 = sor.u32 256, 48
        %4053 = vbcast.lane.b32.xlu0 %v4027, %s4052
        %v4054 = vpop.permute.xlu0 %4053
        %s4056 = sor.u32 256, 56
        %4057 = vbcast.lane.b32.xlu0 %v4027, %s4056
        %v4058 = vpop.permute.xlu0 %4057
        %s4060 = sor.u32 256, 64
        %4061 = vbcast.lane.b32.xlu0 %v4027, %s4060
        %v4062 = vpop.permute.xlu0 %4061
        %s4064 = sor.u32 256, 72
        %4065 = vbcast.lane.b32.xlu0 %v4027, %s4064
        %v4066 = vpop.permute.xlu0 %4065
        %s4068 = sor.u32 256, 80
        %4069 = vbcast.lane.b32.xlu0 %v4027, %s4068
        %v4070 = vpop.permute.xlu0 %4069
        %s4072 = sor.u32 256, 88
        %4073 = vbcast.lane.b32.xlu0 %v4027, %s4072
        %v4074 = vpop.permute.xlu0 %4073
        %s4076 = sor.u32 256, 96
        %4077 = vbcast.lane.b32.xlu0 %v4027, %s4076
        %v4078 = vpop.permute.xlu0 %4077
        %s4080 = sor.u32 256, 104
        %4081 = vbcast.lane.b32.xlu0 %v4027, %s4080
        %v4082 = vpop.permute.xlu0 %4081
        %s4084 = sor.u32 256, 112
        %4085 = vbcast.lane.b32.xlu0 %v4027, %s4084
        %v4086 = vpop.permute.xlu0 %4085
        %s4088 = sor.u32 256, 120
        %4089 = vbcast.lane.b32.xlu0 %v4027, %s4088
        %v4090 = vpop.permute.xlu0 %4089
        %v4091 = vlaneseq
        %v4092 = vshrl.u32 %v4091, 7
        %v4093 = vsub.s32 1, %v4092
        %v4094 = vrot.slane %v4022, %v4093
        %4096 = vbcast.lane.b32.xlu0 %v4094, 256
        %v4097 = vpop.permute.xlu0 %4096
        %s4099 = sor.u32 256, 8
        %4100 = vbcast.lane.b32.xlu0 %v4094, %s4099
        %v4101 = vpop.permute.xlu0 %4100
        %s4103 = sor.u32 256, 16
        %4104 = vbcast.lane.b32.xlu0 %v4094, %s4103
        %v4105 = vpop.permute.xlu0 %4104
        %s4107 = sor.u32 256, 24
        %4108 = vbcast.lane.b32.xlu0 %v4094, %s4107
        %v4109 = vpop.permute.xlu0 %4108
        %s4111 = sor.u32 256, 32
        %4112 = vbcast.lane.b32.xlu0 %v4094, %s4111
        %v4113 = vpop.permute.xlu0 %4112
        %s4115 = sor.u32 256, 40
        %4116 = vbcast.lane.b32.xlu0 %v4094, %s4115
        %v4117 = vpop.permute.xlu0 %4116
        %s4119 = sor.u32 256, 48
        %4120 = vbcast.lane.b32.xlu0 %v4094, %s4119
        %v4121 = vpop.permute.xlu0 %4120
        %s4123 = sor.u32 256, 56
        %4124 = vbcast.lane.b32.xlu0 %v4094, %s4123
        %v4125 = vpop.permute.xlu0 %4124
        %s4127 = sor.u32 256, 64
        %4128 = vbcast.lane.b32.xlu0 %v4094, %s4127
        %v4129 = vpop.permute.xlu0 %4128
        %s4131 = sor.u32 256, 72
        %4132 = vbcast.lane.b32.xlu0 %v4094, %s4131
        %v4133 = vpop.permute.xlu0 %4132
        %s4135 = sor.u32 256, 80
        %4136 = vbcast.lane.b32.xlu0 %v4094, %s4135
        %v4137 = vpop.permute.xlu0 %4136
        %s4139 = sor.u32 256, 88
        %4140 = vbcast.lane.b32.xlu0 %v4094, %s4139
        %v4141 = vpop.permute.xlu0 %4140
        %s4143 = sor.u32 256, 96
        %4144 = vbcast.lane.b32.xlu0 %v4094, %s4143
        %v4145 = vpop.permute.xlu0 %4144
        %s4147 = sor.u32 256, 104
        %4148 = vbcast.lane.b32.xlu0 %v4094, %s4147
        %v4149 = vpop.permute.xlu0 %4148
        %s4151 = sor.u32 256, 112
        %4152 = vbcast.lane.b32.xlu0 %v4094, %s4151
        %v4153 = vpop.permute.xlu0 %4152
        %s4155 = sor.u32 256, 120
        %4156 = vbcast.lane.b32.xlu0 %v4094, %s4155
        %v4157 = vpop.permute.xlu0 %4156
        %v4158 = vld [vmem:[#allocation29 + $0x4] sm:$0x1]
        %v4159 = vlaneseq
        %v4160 = vshrl.u32 %v4159, 7
        %v4161 = vsub.s32 0, %v4160
        %v4162 = vrot.slane %v4158, %v4161
        %v4163 = vmul.f32 %v4030, %v4162
        %v4164 = vmul.f32 %v4034, %v4162
        %v4165 = vmul.f32 %v4038, %v4162
        %v4166 = vmul.f32 %v4042, %v4162
        %v4167 = vmul.f32 %v4046, %v4162
        %v4168 = vmul.f32 %v4050, %v4162
        %v4169 = vmul.f32 %v4054, %v4162
        %v4170 = vmul.f32 %v4058, %v4162
        %v4171 = vmul.f32 %v4062, %v4162
        %v4172 = vmul.f32 %v4066, %v4162
        %v4173 = vmul.f32 %v4070, %v4162
        %v4174 = vmul.f32 %v4074, %v4162
        %v4175 = vmul.f32 %v4078, %v4162
        %v4176 = vmul.f32 %v4082, %v4162
        %v4177 = vmul.f32 %v4086, %v4162
        %v4178 = vmul.f32 %v4090, %v4162
        %v4179 = vmul.f32 %v4097, %v4162
        %v4180 = vmul.f32 %v4101, %v4162
        %v4181 = vmul.f32 %v4105, %v4162
        %v4182 = vmul.f32 %v4109, %v4162
        %v4183 = vmul.f32 %v4113, %v4162
        %v4184 = vmul.f32 %v4117, %v4162
        %v4185 = vmul.f32 %v4121, %v4162
        %v4186 = vmul.f32 %v4125, %v4162
        %v4187 = vmul.f32 %v4129, %v4162
        %v4188 = vmul.f32 %v4133, %v4162
        %v4189 = vmul.f32 %v4137, %v4162
        %v4190 = vmul.f32 %v4141, %v4162
        %v4191 = vmul.f32 %v4145, %v4162
        %v4192 = vmul.f32 %v4149, %v4162
        %v4193 = vmul.f32 %v4153, %v4162
        %v4194 = vmul.f32 %v4157, %v4162
        %v4195 = vadd.f32 %v3985, %v4163
        %v4196 = vadd.f32 %v3986, %v4164
        %v4197 = vadd.f32 %v3987, %v4165
        %v4198 = vadd.f32 %v3988, %v4166
        %v4199 = vadd.f32 %v3989, %v4167
        %v4200 = vadd.f32 %v3990, %v4168
        %v4201 = vadd.f32 %v3991, %v4169
        %v4202 = vadd.f32 %v3992, %v4170
        %v4203 = vadd.f32 %v3993, %v4171
        %v4204 = vadd.f32 %v3994, %v4172
        %v4205 = vadd.f32 %v3995, %v4173
        %v4206 = vadd.f32 %v3996, %v4174
        %v4207 = vadd.f32 %v3997, %v4175
        %v4208 = vadd.f32 %v3998, %v4176
        %v4209 = vadd.f32 %v3999, %v4177
        %v4210 = vadd.f32 %v4000, %v4178
        %v4211 = vadd.f32 %v4001, %v4179
        %v4212 = vadd.f32 %v4002, %v4180
        %v4213 = vadd.f32 %v4003, %v4181
        %v4214 = vadd.f32 %v4004, %v4182
        %v4215 = vadd.f32 %v4005, %v4183
        %v4216 = vadd.f32 %v4006, %v4184
        %v4217 = vadd.f32 %v4007, %v4185
        %v4218 = vadd.f32 %v4008, %v4186
        %v4219 = vadd.f32 %v4009, %v4187
        %v4220 = vadd.f32 %v4010, %v4188
        %v4221 = vadd.f32 %v4011, %v4189
        %v4222 = vadd.f32 %v4012, %v4190
        %v4223 = vadd.f32 %v4013, %v4191
        %v4224 = vadd.f32 %v4014, %v4192
        %v4225 = vadd.f32 %v4015, %v4193
        %v4226 = vadd.f32 %v4016, %v4194
        %v4227 = vlaneseq
        %v4228 = vshrl.u32 %v4227, 7
        %v4229 = vsub.s32 0, %v4228
        %v4230 = vrot.slane %v4023, %v4229
        %4232 = vbcast.lane.b32.xlu0 %v4230, 256
        %v4233 = vpop.permute.xlu0 %4232
        %s4235 = sor.u32 256, 8
        %4236 = vbcast.lane.b32.xlu0 %v4230, %s4235
        %v4237 = vpop.permute.xlu0 %4236
        %s4239 = sor.u32 256, 16
        %4240 = vbcast.lane.b32.xlu0 %v4230, %s4239
        %v4241 = vpop.permute.xlu0 %4240
        %s4243 = sor.u32 256, 24
        %4244 = vbcast.lane.b32.xlu0 %v4230, %s4243
        %v4245 = vpop.permute.xlu0 %4244
        %s4247 = sor.u32 256, 32
        %4248 = vbcast.lane.b32.xlu0 %v4230, %s4247
        %v4249 = vpop.permute.xlu0 %4248
        %s4251 = sor.u32 256, 40
        %4252 = vbcast.lane.b32.xlu0 %v4230, %s4251
        %v4253 = vpop.permute.xlu0 %4252
        %s4255 = sor.u32 256, 48
        %4256 = vbcast.lane.b32.xlu0 %v4230, %s4255
        %v4257 = vpop.permute.xlu0 %4256
        %s4259 = sor.u32 256, 56
        %4260 = vbcast.lane.b32.xlu0 %v4230, %s4259
        %v4261 = vpop.permute.xlu0 %4260
        %s4263 = sor.u32 256, 64
        %4264 = vbcast.lane.b32.xlu0 %v4230, %s4263
        %v4265 = vpop.permute.xlu0 %4264
        %s4267 = sor.u32 256, 72
        %4268 = vbcast.lane.b32.xlu0 %v4230, %s4267
        %v4269 = vpop.permute.xlu0 %4268
        %s4271 = sor.u32 256, 80
        %4272 = vbcast.lane.b32.xlu0 %v4230, %s4271
        %v4273 = vpop.permute.xlu0 %4272
        %s4275 = sor.u32 256, 88
        %4276 = vbcast.lane.b32.xlu0 %v4230, %s4275
        %v4277 = vpop.permute.xlu0 %4276
        %s4279 = sor.u32 256, 96
        %4280 = vbcast.lane.b32.xlu0 %v4230, %s4279
        %v4281 = vpop.permute.xlu0 %4280
        %s4283 = sor.u32 256, 104
        %4284 = vbcast.lane.b32.xlu0 %v4230, %s4283
        %v4285 = vpop.permute.xlu0 %4284
        %s4287 = sor.u32 256, 112
        %4288 = vbcast.lane.b32.xlu0 %v4230, %s4287
        %v4289 = vpop.permute.xlu0 %4288
        %s4291 = sor.u32 256, 120
        %4292 = vbcast.lane.b32.xlu0 %v4230, %s4291
        %v4293 = vpop.permute.xlu0 %4292
        %v4294 = vlaneseq
        %v4295 = vshrl.u32 %v4294, 7
        %v4296 = vsub.s32 1, %v4295
        %v4297 = vrot.slane %v4023, %v4296
        %4299 = vbcast.lane.b32.xlu0 %v4297, 256
        %v4300 = vpop.permute.xlu0 %4299
        %s4302 = sor.u32 256, 8
        %4303 = vbcast.lane.b32.xlu0 %v4297, %s4302
        %v4304 = vpop.permute.xlu0 %4303
        %s4306 = sor.u32 256, 16
        %4307 = vbcast.lane.b32.xlu0 %v4297, %s4306
        %v4308 = vpop.permute.xlu0 %4307
        %s4310 = sor.u32 256, 24
        %4311 = vbcast.lane.b32.xlu0 %v4297, %s4310
        %v4312 = vpop.permute.xlu0 %4311
        %s4314 = sor.u32 256, 32
        %4315 = vbcast.lane.b32.xlu0 %v4297, %s4314
        %v4316 = vpop.permute.xlu0 %4315
        %s4318 = sor.u32 256, 40
        %4319 = vbcast.lane.b32.xlu0 %v4297, %s4318
        %v4320 = vpop.permute.xlu0 %4319
        %s4322 = sor.u32 256, 48
        %4323 = vbcast.lane.b32.xlu0 %v4297, %s4322
        %v4324 = vpop.permute.xlu0 %4323
        %s4326 = sor.u32 256, 56
        %4327 = vbcast.lane.b32.xlu0 %v4297, %s4326
        %v4328 = vpop.permute.xlu0 %4327
        %s4330 = sor.u32 256, 64
        %4331 = vbcast.lane.b32.xlu0 %v4297, %s4330
        %v4332 = vpop.permute.xlu0 %4331
        %s4334 = sor.u32 256, 72
        %4335 = vbcast.lane.b32.xlu0 %v4297, %s4334
        %v4336 = vpop.permute.xlu0 %4335
        %s4338 = sor.u32 256, 80
        %4339 = vbcast.lane.b32.xlu0 %v4297, %s4338
        %v4340 = vpop.permute.xlu0 %4339
        %s4342 = sor.u32 256, 88
        %4343 = vbcast.lane.b32.xlu0 %v4297, %s4342
        %v4344 = vpop.permute.xlu0 %4343
        %s4346 = sor.u32 256, 96
        %4347 = vbcast.lane.b32.xlu0 %v4297, %s4346
        %v4348 = vpop.permute.xlu0 %4347
        %s4350 = sor.u32 256, 104
        %4351 = vbcast.lane.b32.xlu0 %v4297, %s4350
        %v4352 = vpop.permute.xlu0 %4351
        %s4354 = sor.u32 256, 112
        %4355 = vbcast.lane.b32.xlu0 %v4297, %s4354
        %v4356 = vpop.permute.xlu0 %4355
        %s4358 = sor.u32 256, 120
        %4359 = vbcast.lane.b32.xlu0 %v4297, %s4358
        %v4360 = vpop.permute.xlu0 %4359
        %v4361 = vld [vmem:[#allocation29 + $0xd] sm:$0x1]
        %v4362 = vlaneseq
        %v4363 = vshrl.u32 %v4362, 7
        %v4364 = vsub.s32 0, %v4363
        %v4365 = vrot.slane %v4361, %v4364
        %v4366 = vmul.f32 %v4233, %v4365
        %v4367 = vmul.f32 %v4237, %v4365
        %v4368 = vmul.f32 %v4241, %v4365
        %v4369 = vmul.f32 %v4245, %v4365
        %v4370 = vmul.f32 %v4249, %v4365
        %v4371 = vmul.f32 %v4253, %v4365
        %v4372 = vmul.f32 %v4257, %v4365
        %v4373 = vmul.f32 %v4261, %v4365
        %v4374 = vmul.f32 %v4265, %v4365
        %v4375 = vmul.f32 %v4269, %v4365
        %v4376 = vmul.f32 %v4273, %v4365
        %v4377 = vmul.f32 %v4277, %v4365
        %v4378 = vmul.f32 %v4281, %v4365
        %v4379 = vmul.f32 %v4285, %v4365
        %v4380 = vmul.f32 %v4289, %v4365
        %v4381 = vmul.f32 %v4293, %v4365
        %v4382 = vmul.f32 %v4300, %v4365
        %v4383 = vmul.f32 %v4304, %v4365
        %v4384 = vmul.f32 %v4308, %v4365
        %v4385 = vmul.f32 %v4312, %v4365
        %v4386 = vmul.f32 %v4316, %v4365
        %v4387 = vmul.f32 %v4320, %v4365
        %v4388 = vmul.f32 %v4324, %v4365
        %v4389 = vmul.f32 %v4328, %v4365
        %v4390 = vmul.f32 %v4332, %v4365
        %v4391 = vmul.f32 %v4336, %v4365
        %v4392 = vmul.f32 %v4340, %v4365
        %v4393 = vmul.f32 %v4344, %v4365
        %v4394 = vmul.f32 %v4348, %v4365
        %v4395 = vmul.f32 %v4352, %v4365
        %v4396 = vmul.f32 %v4356, %v4365
        %v4397 = vmul.f32 %v4360, %v4365
        %v4398 = vadd.f32 %v4195, %v4366
        %v4399 = vadd.f32 %v4196, %v4367
        %v4400 = vadd.f32 %v4197, %v4368
        %v4401 = vadd.f32 %v4198, %v4369
        %v4402 = vadd.f32 %v4199, %v4370
        %v4403 = vadd.f32 %v4200, %v4371
        %v4404 = vadd.f32 %v4201, %v4372
        %v4405 = vadd.f32 %v4202, %v4373
        %v4406 = vadd.f32 %v4203, %v4374
        %v4407 = vadd.f32 %v4204, %v4375
        %v4408 = vadd.f32 %v4205, %v4376
        %v4409 = vadd.f32 %v4206, %v4377
        %v4410 = vadd.f32 %v4207, %v4378
        %v4411 = vadd.f32 %v4208, %v4379
        %v4412 = vadd.f32 %v4209, %v4380
        %v4413 = vadd.f32 %v4210, %v4381
        %v4414 = vadd.f32 %v4211, %v4382
        %v4415 = vadd.f32 %v4212, %v4383
        %v4416 = vadd.f32 %v4213, %v4384
        %v4417 = vadd.f32 %v4214, %v4385
        %v4418 = vadd.f32 %v4215, %v4386
        %v4419 = vadd.f32 %v4216, %v4387
        %v4420 = vadd.f32 %v4217, %v4388
        %v4421 = vadd.f32 %v4218, %v4389
        %v4422 = vadd.f32 %v4219, %v4390
        %v4423 = vadd.f32 %v4220, %v4391
        %v4424 = vadd.f32 %v4221, %v4392
        %v4425 = vadd.f32 %v4222, %v4393
        %v4426 = vadd.f32 %v4223, %v4394
        %v4427 = vadd.f32 %v4224, %v4395
        %v4428 = vadd.f32 %v4225, %v4396
        %v4429 = vadd.f32 %v4226, %v4397
        %v4430 = vld [vmem:[#allocation15 + $0x5] sm:$0x1]
        %4431 = vrot.lane.b32.xlu0 %v1866, 127
        %v4432 = vpop.permute.xlu0 %4431
        %v4433 = vlaneseq
        %v4434 = vshrl.u32 %v4433, 7
        %v4435 = vsub.s32 0, %v4434
        %v4436 = vrot.slane %v4430, %v4435
        %v4437 = vmul.f32 %v4432, %v4436
        %4438 = vrot.lane.b32.xlu0 %v1867, 127
        %v4439 = vpop.permute.xlu0 %4438
        %v4440 = vmul.f32 %v4439, %v4436
        %v4441 = vlaneseq
        %v4442 = vshrl.u32 %v4441, 7
        %v4443 = vsub.s32 0, %v4442
        %v4444 = vrot.slane %v4437, %v4443
        %4446 = vbcast.lane.b32.xlu0 %v4444, 256
        %v4447 = vpop.permute.xlu0 %4446
        %s4449 = sor.u32 256, 8
        %4450 = vbcast.lane.b32.xlu0 %v4444, %s4449
        %v4451 = vpop.permute.xlu0 %4450
        %s4453 = sor.u32 256, 16
        %4454 = vbcast.lane.b32.xlu0 %v4444, %s4453
        %v4455 = vpop.permute.xlu0 %4454
        %s4457 = sor.u32 256, 24
        %4458 = vbcast.lane.b32.xlu0 %v4444, %s4457
        %v4459 = vpop.permute.xlu0 %4458
        %s4461 = sor.u32 256, 32
        %4462 = vbcast.lane.b32.xlu0 %v4444, %s4461
        %v4463 = vpop.permute.xlu0 %4462
        %s4465 = sor.u32 256, 40
        %4466 = vbcast.lane.b32.xlu0 %v4444, %s4465
        %v4467 = vpop.permute.xlu0 %4466
        %s4469 = sor.u32 256, 48
        %4470 = vbcast.lane.b32.xlu0 %v4444, %s4469
        %v4471 = vpop.permute.xlu0 %4470
        %s4473 = sor.u32 256, 56
        %4474 = vbcast.lane.b32.xlu0 %v4444, %s4473
        %v4475 = vpop.permute.xlu0 %4474
        %s4477 = sor.u32 256, 64
        %4478 = vbcast.lane.b32.xlu0 %v4444, %s4477
        %v4479 = vpop.permute.xlu0 %4478
        %s4481 = sor.u32 256, 72
        %4482 = vbcast.lane.b32.xlu0 %v4444, %s4481
        %v4483 = vpop.permute.xlu0 %4482
        %s4485 = sor.u32 256, 80
        %4486 = vbcast.lane.b32.xlu0 %v4444, %s4485
        %v4487 = vpop.permute.xlu0 %4486
        %s4489 = sor.u32 256, 88
        %4490 = vbcast.lane.b32.xlu0 %v4444, %s4489
        %v4491 = vpop.permute.xlu0 %4490
        %s4493 = sor.u32 256, 96
        %4494 = vbcast.lane.b32.xlu0 %v4444, %s4493
        %v4495 = vpop.permute.xlu0 %4494
        %s4497 = sor.u32 256, 104
        %4498 = vbcast.lane.b32.xlu0 %v4444, %s4497
        %v4499 = vpop.permute.xlu0 %4498
        %s4501 = sor.u32 256, 112
        %4502 = vbcast.lane.b32.xlu0 %v4444, %s4501
        %v4503 = vpop.permute.xlu0 %4502
        %s4505 = sor.u32 256, 120
        %4506 = vbcast.lane.b32.xlu0 %v4444, %s4505
        %v4507 = vpop.permute.xlu0 %4506
        %v4508 = vlaneseq
        %v4509 = vshrl.u32 %v4508, 7
        %v4510 = vsub.s32 1, %v4509
        %v4511 = vrot.slane %v4437, %v4510
        %4513 = vbcast.lane.b32.xlu0 %v4511, 256
        %v4514 = vpop.permute.xlu0 %4513
        %s4516 = sor.u32 256, 8
        %4517 = vbcast.lane.b32.xlu0 %v4511, %s4516
        %v4518 = vpop.permute.xlu0 %4517
        %s4520 = sor.u32 256, 16
        %4521 = vbcast.lane.b32.xlu0 %v4511, %s4520
        %v4522 = vpop.permute.xlu0 %4521
        %s4524 = sor.u32 256, 24
        %4525 = vbcast.lane.b32.xlu0 %v4511, %s4524
        %v4526 = vpop.permute.xlu0 %4525
        %s4528 = sor.u32 256, 32
        %4529 = vbcast.lane.b32.xlu0 %v4511, %s4528
        %v4530 = vpop.permute.xlu0 %4529
        %s4532 = sor.u32 256, 40
        %4533 = vbcast.lane.b32.xlu0 %v4511, %s4532
        %v4534 = vpop.permute.xlu0 %4533
        %s4536 = sor.u32 256, 48
        %4537 = vbcast.lane.b32.xlu0 %v4511, %s4536
        %v4538 = vpop.permute.xlu0 %4537
        %s4540 = sor.u32 256, 56
        %4541 = vbcast.lane.b32.xlu0 %v4511, %s4540
        %v4542 = vpop.permute.xlu0 %4541
        %s4544 = sor.u32 256, 64
        %4545 = vbcast.lane.b32.xlu0 %v4511, %s4544
        %v4546 = vpop.permute.xlu0 %4545
        %s4548 = sor.u32 256, 72
        %4549 = vbcast.lane.b32.xlu0 %v4511, %s4548
        %v4550 = vpop.permute.xlu0 %4549
        %s4552 = sor.u32 256, 80
        %4553 = vbcast.lane.b32.xlu0 %v4511, %s4552
        %v4554 = vpop.permute.xlu0 %4553
        %s4556 = sor.u32 256, 88
        %4557 = vbcast.lane.b32.xlu0 %v4511, %s4556
        %v4558 = vpop.permute.xlu0 %4557
        %s4560 = sor.u32 256, 96
        %4561 = vbcast.lane.b32.xlu0 %v4511, %s4560
        %v4562 = vpop.permute.xlu0 %4561
        %s4564 = sor.u32 256, 104
        %4565 = vbcast.lane.b32.xlu0 %v4511, %s4564
        %v4566 = vpop.permute.xlu0 %4565
        %s4568 = sor.u32 256, 112
        %4569 = vbcast.lane.b32.xlu0 %v4511, %s4568
        %v4570 = vpop.permute.xlu0 %4569
        %s4572 = sor.u32 256, 120
        %4573 = vbcast.lane.b32.xlu0 %v4511, %s4572
        %v4574 = vpop.permute.xlu0 %4573
        %v4575 = vld [vmem:[#allocation29 + $0x5] sm:$0x1]
        %v4576 = vlaneseq
        %v4577 = vshrl.u32 %v4576, 7
        %v4578 = vsub.s32 0, %v4577
        %v4579 = vrot.slane %v4575, %v4578
        %v4580 = vmul.f32 %v4447, %v4579
        %v4581 = vmul.f32 %v4451, %v4579
        %v4582 = vmul.f32 %v4455, %v4579
        %v4583 = vmul.f32 %v4459, %v4579
        %v4584 = vmul.f32 %v4463, %v4579
        %v4585 = vmul.f32 %v4467, %v4579
        %v4586 = vmul.f32 %v4471, %v4579
        %v4587 = vmul.f32 %v4475, %v4579
        %v4588 = vmul.f32 %v4479, %v4579
        %v4589 = vmul.f32 %v4483, %v4579
        %v4590 = vmul.f32 %v4487, %v4579
        %v4591 = vmul.f32 %v4491, %v4579
        %v4592 = vmul.f32 %v4495, %v4579
        %v4593 = vmul.f32 %v4499, %v4579
        %v4594 = vmul.f32 %v4503, %v4579
        %v4595 = vmul.f32 %v4507, %v4579
        %v4596 = vmul.f32 %v4514, %v4579
        %v4597 = vmul.f32 %v4518, %v4579
        %v4598 = vmul.f32 %v4522, %v4579
        %v4599 = vmul.f32 %v4526, %v4579
        %v4600 = vmul.f32 %v4530, %v4579
        %v4601 = vmul.f32 %v4534, %v4579
        %v4602 = vmul.f32 %v4538, %v4579
        %v4603 = vmul.f32 %v4542, %v4579
        %v4604 = vmul.f32 %v4546, %v4579
        %v4605 = vmul.f32 %v4550, %v4579
        %v4606 = vmul.f32 %v4554, %v4579
        %v4607 = vmul.f32 %v4558, %v4579
        %v4608 = vmul.f32 %v4562, %v4579
        %v4609 = vmul.f32 %v4566, %v4579
        %v4610 = vmul.f32 %v4570, %v4579
        %v4611 = vmul.f32 %v4574, %v4579
        %v4612 = vadd.f32 %v4398, %v4580
        %v4613 = vadd.f32 %v4399, %v4581
        %v4614 = vadd.f32 %v4400, %v4582
        %v4615 = vadd.f32 %v4401, %v4583
        %v4616 = vadd.f32 %v4402, %v4584
        %v4617 = vadd.f32 %v4403, %v4585
        %v4618 = vadd.f32 %v4404, %v4586
        %v4619 = vadd.f32 %v4405, %v4587
        %v4620 = vadd.f32 %v4406, %v4588
        %v4621 = vadd.f32 %v4407, %v4589
        %v4622 = vadd.f32 %v4408, %v4590
        %v4623 = vadd.f32 %v4409, %v4591
        %v4624 = vadd.f32 %v4410, %v4592
        %v4625 = vadd.f32 %v4411, %v4593
        %v4626 = vadd.f32 %v4412, %v4594
        %v4627 = vadd.f32 %v4413, %v4595
        %v4628 = vadd.f32 %v4414, %v4596
        %v4629 = vadd.f32 %v4415, %v4597
        %v4630 = vadd.f32 %v4416, %v4598
        %v4631 = vadd.f32 %v4417, %v4599
        %v4632 = vadd.f32 %v4418, %v4600
        %v4633 = vadd.f32 %v4419, %v4601
        %v4634 = vadd.f32 %v4420, %v4602
        %v4635 = vadd.f32 %v4421, %v4603
        %v4636 = vadd.f32 %v4422, %v4604
        %v4637 = vadd.f32 %v4423, %v4605
        %v4638 = vadd.f32 %v4424, %v4606
        %v4639 = vadd.f32 %v4425, %v4607
        %v4640 = vadd.f32 %v4426, %v4608
        %v4641 = vadd.f32 %v4427, %v4609
        %v4642 = vadd.f32 %v4428, %v4610
        %v4643 = vadd.f32 %v4429, %v4611
        %v4644 = vlaneseq
        %v4645 = vshrl.u32 %v4644, 7
        %v4646 = vsub.s32 0, %v4645
        %v4647 = vrot.slane %v4440, %v4646
        %4649 = vbcast.lane.b32.xlu0 %v4647, 256
        %v4650 = vpop.permute.xlu0 %4649
        %s4652 = sor.u32 256, 8
        %4653 = vbcast.lane.b32.xlu0 %v4647, %s4652
        %v4654 = vpop.permute.xlu0 %4653
        %s4656 = sor.u32 256, 16
        %4657 = vbcast.lane.b32.xlu0 %v4647, %s4656
        %v4658 = vpop.permute.xlu0 %4657
        %s4660 = sor.u32 256, 24
        %4661 = vbcast.lane.b32.xlu0 %v4647, %s4660
        %v4662 = vpop.permute.xlu0 %4661
        %s4664 = sor.u32 256, 32
        %4665 = vbcast.lane.b32.xlu0 %v4647, %s4664
        %v4666 = vpop.permute.xlu0 %4665
        %s4668 = sor.u32 256, 40
        %4669 = vbcast.lane.b32.xlu0 %v4647, %s4668
        %v4670 = vpop.permute.xlu0 %4669
        %s4672 = sor.u32 256, 48
        %4673 = vbcast.lane.b32.xlu0 %v4647, %s4672
        %v4674 = vpop.permute.xlu0 %4673
        %s4676 = sor.u32 256, 56
        %4677 = vbcast.lane.b32.xlu0 %v4647, %s4676
        %v4678 = vpop.permute.xlu0 %4677
        %s4680 = sor.u32 256, 64
        %4681 = vbcast.lane.b32.xlu0 %v4647, %s4680
        %v4682 = vpop.permute.xlu0 %4681
        %s4684 = sor.u32 256, 72
        %4685 = vbcast.lane.b32.xlu0 %v4647, %s4684
        %v4686 = vpop.permute.xlu0 %4685
        %s4688 = sor.u32 256, 80
        %4689 = vbcast.lane.b32.xlu0 %v4647, %s4688
        %v4690 = vpop.permute.xlu0 %4689
        %s4692 = sor.u32 256, 88
        %4693 = vbcast.lane.b32.xlu0 %v4647, %s4692
        %v4694 = vpop.permute.xlu0 %4693
        %s4696 = sor.u32 256, 96
        %4697 = vbcast.lane.b32.xlu0 %v4647, %s4696
        %v4698 = vpop.permute.xlu0 %4697
        %s4700 = sor.u32 256, 104
        %4701 = vbcast.lane.b32.xlu0 %v4647, %s4700
        %v4702 = vpop.permute.xlu0 %4701
        %s4704 = sor.u32 256, 112
        %4705 = vbcast.lane.b32.xlu0 %v4647, %s4704
        %v4706 = vpop.permute.xlu0 %4705
        %s4708 = sor.u32 256, 120
        %4709 = vbcast.lane.b32.xlu0 %v4647, %s4708
        %v4710 = vpop.permute.xlu0 %4709
        %v4711 = vlaneseq
        %v4712 = vshrl.u32 %v4711, 7
        %v4713 = vsub.s32 1, %v4712
        %v4714 = vrot.slane %v4440, %v4713
        %4716 = vbcast.lane.b32.xlu0 %v4714, 256
        %v4717 = vpop.permute.xlu0 %4716
        %s4719 = sor.u32 256, 8
        %4720 = vbcast.lane.b32.xlu0 %v4714, %s4719
        %v4721 = vpop.permute.xlu0 %4720
        %s4723 = sor.u32 256, 16
        %4724 = vbcast.lane.b32.xlu0 %v4714, %s4723
        %v4725 = vpop.permute.xlu0 %4724
        %s4727 = sor.u32 256, 24
        %4728 = vbcast.lane.b32.xlu0 %v4714, %s4727
        %v4729 = vpop.permute.xlu0 %4728
        %s4731 = sor.u32 256, 32
        %4732 = vbcast.lane.b32.xlu0 %v4714, %s4731
        %v4733 = vpop.permute.xlu0 %4732
        %s4735 = sor.u32 256, 40
        %4736 = vbcast.lane.b32.xlu0 %v4714, %s4735
        %v4737 = vpop.permute.xlu0 %4736
        %s4739 = sor.u32 256, 48
        %4740 = vbcast.lane.b32.xlu0 %v4714, %s4739
        %v4741 = vpop.permute.xlu0 %4740
        %s4743 = sor.u32 256, 56
        %4744 = vbcast.lane.b32.xlu0 %v4714, %s4743
        %v4745 = vpop.permute.xlu0 %4744
        %s4747 = sor.u32 256, 64
        %4748 = vbcast.lane.b32.xlu0 %v4714, %s4747
        %v4749 = vpop.permute.xlu0 %4748
        %s4751 = sor.u32 256, 72
        %4752 = vbcast.lane.b32.xlu0 %v4714, %s4751
        %v4753 = vpop.permute.xlu0 %4752
        %s4755 = sor.u32 256, 80
        %4756 = vbcast.lane.b32.xlu0 %v4714, %s4755
        %v4757 = vpop.permute.xlu0 %4756
        %s4759 = sor.u32 256, 88
        %4760 = vbcast.lane.b32.xlu0 %v4714, %s4759
        %v4761 = vpop.permute.xlu0 %4760
        %s4763 = sor.u32 256, 96
        %4764 = vbcast.lane.b32.xlu0 %v4714, %s4763
        %v4765 = vpop.permute.xlu0 %4764
        %s4767 = sor.u32 256, 104
        %4768 = vbcast.lane.b32.xlu0 %v4714, %s4767
        %v4769 = vpop.permute.xlu0 %4768
        %s4771 = sor.u32 256, 112
        %4772 = vbcast.lane.b32.xlu0 %v4714, %s4771
        %v4773 = vpop.permute.xlu0 %4772
        %s4775 = sor.u32 256, 120
        %4776 = vbcast.lane.b32.xlu0 %v4714, %s4775
        %v4777 = vpop.permute.xlu0 %4776
        %v4778 = vld [vmem:[#allocation29 + $0xe] sm:$0x1]
        %v4779 = vlaneseq
        %v4780 = vshrl.u32 %v4779, 7
        %v4781 = vsub.s32 0, %v4780
        %v4782 = vrot.slane %v4778, %v4781
        %v4783 = vmul.f32 %v4650, %v4782
        %v4784 = vmul.f32 %v4654, %v4782
        %v4785 = vmul.f32 %v4658, %v4782
        %v4786 = vmul.f32 %v4662, %v4782
        %v4787 = vmul.f32 %v4666, %v4782
        %v4788 = vmul.f32 %v4670, %v4782
        %v4789 = vmul.f32 %v4674, %v4782
        %v4790 = vmul.f32 %v4678, %v4782
        %v4791 = vmul.f32 %v4682, %v4782
        %v4792 = vmul.f32 %v4686, %v4782
        %v4793 = vmul.f32 %v4690, %v4782
        %v4794 = vmul.f32 %v4694, %v4782
        %v4795 = vmul.f32 %v4698, %v4782
        %v4796 = vmul.f32 %v4702, %v4782
        %v4797 = vmul.f32 %v4706, %v4782
        %v4798 = vmul.f32 %v4710, %v4782
        %v4799 = vmul.f32 %v4717, %v4782
        %v4800 = vmul.f32 %v4721, %v4782
        %v4801 = vmul.f32 %v4725, %v4782
        %v4802 = vmul.f32 %v4729, %v4782
        %v4803 = vmul.f32 %v4733, %v4782
        %v4804 = vmul.f32 %v4737, %v4782
        %v4805 = vmul.f32 %v4741, %v4782
        %v4806 = vmul.f32 %v4745, %v4782
        %v4807 = vmul.f32 %v4749, %v4782
        %v4808 = vmul.f32 %v4753, %v4782
        %v4809 = vmul.f32 %v4757, %v4782
        %v4810 = vmul.f32 %v4761, %v4782
        %v4811 = vmul.f32 %v4765, %v4782
        %v4812 = vmul.f32 %v4769, %v4782
        %v4813 = vmul.f32 %v4773, %v4782
        %v4814 = vmul.f32 %v4777, %v4782
        %v4815 = vadd.f32 %v4612, %v4783
        %v4816 = vadd.f32 %v4613, %v4784
        %v4817 = vadd.f32 %v4614, %v4785
        %v4818 = vadd.f32 %v4615, %v4786
        %v4819 = vadd.f32 %v4616, %v4787
        %v4820 = vadd.f32 %v4617, %v4788
        %v4821 = vadd.f32 %v4618, %v4789
        %v4822 = vadd.f32 %v4619, %v4790
        %v4823 = vadd.f32 %v4620, %v4791
        %v4824 = vadd.f32 %v4621, %v4792
        %v4825 = vadd.f32 %v4622, %v4793
        %v4826 = vadd.f32 %v4623, %v4794
        %v4827 = vadd.f32 %v4624, %v4795
        %v4828 = vadd.f32 %v4625, %v4796
        %v4829 = vadd.f32 %v4626, %v4797
        %v4830 = vadd.f32 %v4627, %v4798
        %v4831 = vadd.f32 %v4628, %v4799
        %v4832 = vadd.f32 %v4629, %v4800
        %v4833 = vadd.f32 %v4630, %v4801
        %v4834 = vadd.f32 %v4631, %v4802
        %v4835 = vadd.f32 %v4632, %v4803
        %v4836 = vadd.f32 %v4633, %v4804
        %v4837 = vadd.f32 %v4634, %v4805
        %v4838 = vadd.f32 %v4635, %v4806
        %v4839 = vadd.f32 %v4636, %v4807
        %v4840 = vadd.f32 %v4637, %v4808
        %v4841 = vadd.f32 %v4638, %v4809
        %v4842 = vadd.f32 %v4639, %v4810
        %v4843 = vadd.f32 %v4640, %v4811
        %v4844 = vadd.f32 %v4641, %v4812
        %v4845 = vadd.f32 %v4642, %v4813
        %v4846 = vadd.f32 %v4643, %v4814
        %v4847 = vld [vmem:[#allocation15 + $0x6] sm:$0x1]
        %4848 = vrot.lane.b32.xlu0 %v1866, 121
        %v4849 = vpop.permute.xlu0 %4848
        %v4850 = vlaneseq
        %v4851 = vshrl.u32 %v4850, 7
        %v4852 = vsub.s32 0, %v4851
        %v4853 = vrot.slane %v4847, %v4852
        %v4854 = vmul.f32 %v4849, %v4853
        %4855 = vrot.lane.b32.xlu0 %v1867, 121
        %v4856 = vpop.permute.xlu0 %4855
        %v4857 = vmul.f32 %v4856, %v4853
        %v4858 = vlaneseq
        %v4859 = vshrl.u32 %v4858, 7
        %v4860 = vsub.s32 0, %v4859
        %v4861 = vrot.slane %v4854, %v4860
        %4863 = vbcast.lane.b32.xlu0 %v4861, 256
        %v4864 = vpop.permute.xlu0 %4863
        %s4866 = sor.u32 256, 8
        %4867 = vbcast.lane.b32.xlu0 %v4861, %s4866
        %v4868 = vpop.permute.xlu0 %4867
        %s4870 = sor.u32 256, 16
        %4871 = vbcast.lane.b32.xlu0 %v4861, %s4870
        %v4872 = vpop.permute.xlu0 %4871
        %s4874 = sor.u32 256, 24
        %4875 = vbcast.lane.b32.xlu0 %v4861, %s4874
        %v4876 = vpop.permute.xlu0 %4875
        %s4878 = sor.u32 256, 32
        %4879 = vbcast.lane.b32.xlu0 %v4861, %s4878
        %v4880 = vpop.permute.xlu0 %4879
        %s4882 = sor.u32 256, 40
        %4883 = vbcast.lane.b32.xlu0 %v4861, %s4882
        %v4884 = vpop.permute.xlu0 %4883
        %s4886 = sor.u32 256, 48
        %4887 = vbcast.lane.b32.xlu0 %v4861, %s4886
        %v4888 = vpop.permute.xlu0 %4887
        %s4890 = sor.u32 256, 56
        %4891 = vbcast.lane.b32.xlu0 %v4861, %s4890
        %v4892 = vpop.permute.xlu0 %4891
        %s4894 = sor.u32 256, 64
        %4895 = vbcast.lane.b32.xlu0 %v4861, %s4894
        %v4896 = vpop.permute.xlu0 %4895
        %s4898 = sor.u32 256, 72
        %4899 = vbcast.lane.b32.xlu0 %v4861, %s4898
        %v4900 = vpop.permute.xlu0 %4899
        %s4902 = sor.u32 256, 80
        %4903 = vbcast.lane.b32.xlu0 %v4861, %s4902
        %v4904 = vpop.permute.xlu0 %4903
        %s4906 = sor.u32 256, 88
        %4907 = vbcast.lane.b32.xlu0 %v4861, %s4906
        %v4908 = vpop.permute.xlu0 %4907
        %s4910 = sor.u32 256, 96
        %4911 = vbcast.lane.b32.xlu0 %v4861, %s4910
        %v4912 = vpop.permute.xlu0 %4911
        %s4914 = sor.u32 256, 104
        %4915 = vbcast.lane.b32.xlu0 %v4861, %s4914
        %v4916 = vpop.permute.xlu0 %4915
        %s4918 = sor.u32 256, 112
        %4919 = vbcast.lane.b32.xlu0 %v4861, %s4918
        %v4920 = vpop.permute.xlu0 %4919
        %s4922 = sor.u32 256, 120
        %4923 = vbcast.lane.b32.xlu0 %v4861, %s4922
        %v4924 = vpop.permute.xlu0 %4923
        %v4925 = vlaneseq
        %v4926 = vshrl.u32 %v4925, 7
        %v4927 = vsub.s32 1, %v4926
        %v4928 = vrot.slane %v4854, %v4927
        %4930 = vbcast.lane.b32.xlu0 %v4928, 256
        %v4931 = vpop.permute.xlu0 %4930
        %s4933 = sor.u32 256, 8
        %4934 = vbcast.lane.b32.xlu0 %v4928, %s4933
        %v4935 = vpop.permute.xlu0 %4934
        %s4937 = sor.u32 256, 16
        %4938 = vbcast.lane.b32.xlu0 %v4928, %s4937
        %v4939 = vpop.permute.xlu0 %4938
        %s4941 = sor.u32 256, 24
        %4942 = vbcast.lane.b32.xlu0 %v4928, %s4941
        %v4943 = vpop.permute.xlu0 %4942
        %s4945 = sor.u32 256, 32
        %4946 = vbcast.lane.b32.xlu0 %v4928, %s4945
        %v4947 = vpop.permute.xlu0 %4946
        %s4949 = sor.u32 256, 40
        %4950 = vbcast.lane.b32.xlu0 %v4928, %s4949
        %v4951 = vpop.permute.xlu0 %4950
        %s4953 = sor.u32 256, 48
        %4954 = vbcast.lane.b32.xlu0 %v4928, %s4953
        %v4955 = vpop.permute.xlu0 %4954
        %s4957 = sor.u32 256, 56
        %4958 = vbcast.lane.b32.xlu0 %v4928, %s4957
        %v4959 = vpop.permute.xlu0 %4958
        %s4961 = sor.u32 256, 64
        %4962 = vbcast.lane.b32.xlu0 %v4928, %s4961
        %v4963 = vpop.permute.xlu0 %4962
        %s4965 = sor.u32 256, 72
        %4966 = vbcast.lane.b32.xlu0 %v4928, %s4965
        %v4967 = vpop.permute.xlu0 %4966
        %s4969 = sor.u32 256, 80
        %4970 = vbcast.lane.b32.xlu0 %v4928, %s4969
        %v4971 = vpop.permute.xlu0 %4970
        %s4973 = sor.u32 256, 88
        %4974 = vbcast.lane.b32.xlu0 %v4928, %s4973
        %v4975 = vpop.permute.xlu0 %4974
        %s4977 = sor.u32 256, 96
        %4978 = vbcast.lane.b32.xlu0 %v4928, %s4977
        %v4979 = vpop.permute.xlu0 %4978
        %s4981 = sor.u32 256, 104
        %4982 = vbcast.lane.b32.xlu0 %v4928, %s4981
        %v4983 = vpop.permute.xlu0 %4982
        %s4985 = sor.u32 256, 112
        %4986 = vbcast.lane.b32.xlu0 %v4928, %s4985
        %v4987 = vpop.permute.xlu0 %4986
        %s4989 = sor.u32 256, 120
        %4990 = vbcast.lane.b32.xlu0 %v4928, %s4989
        %v4991 = vpop.permute.xlu0 %4990
        %v4992 = vld [vmem:[#allocation29 + $0x6] sm:$0x1]
        %v4993 = vlaneseq
        %v4994 = vshrl.u32 %v4993, 7
        %v4995 = vsub.s32 0, %v4994
        %v4996 = vrot.slane %v4992, %v4995
        %v4997 = vmul.f32 %v4864, %v4996
        %v4998 = vmul.f32 %v4868, %v4996
        %v4999 = vmul.f32 %v4872, %v4996
        %v5000 = vmul.f32 %v4876, %v4996
        %v5001 = vmul.f32 %v4880, %v4996
        %v5002 = vmul.f32 %v4884, %v4996
        %v5003 = vmul.f32 %v4888, %v4996
        %v5004 = vmul.f32 %v4892, %v4996
        %v5005 = vmul.f32 %v4896, %v4996
        %v5006 = vmul.f32 %v4900, %v4996
        %v5007 = vmul.f32 %v4904, %v4996
        %v5008 = vmul.f32 %v4908, %v4996
        %v5009 = vmul.f32 %v4912, %v4996
        %v5010 = vmul.f32 %v4916, %v4996
        %v5011 = vmul.f32 %v4920, %v4996
        %v5012 = vmul.f32 %v4924, %v4996
        %v5013 = vmul.f32 %v4931, %v4996
        %v5014 = vmul.f32 %v4935, %v4996
        %v5015 = vmul.f32 %v4939, %v4996
        %v5016 = vmul.f32 %v4943, %v4996
        %v5017 = vmul.f32 %v4947, %v4996
        %v5018 = vmul.f32 %v4951, %v4996
        %v5019 = vmul.f32 %v4955, %v4996
        %v5020 = vmul.f32 %v4959, %v4996
        %v5021 = vmul.f32 %v4963, %v4996
        %v5022 = vmul.f32 %v4967, %v4996
        %v5023 = vmul.f32 %v4971, %v4996
        %v5024 = vmul.f32 %v4975, %v4996
        %v5025 = vmul.f32 %v4979, %v4996
        %v5026 = vmul.f32 %v4983, %v4996
        %v5027 = vmul.f32 %v4987, %v4996
        %v5028 = vmul.f32 %v4991, %v4996
        %v5029 = vadd.f32 %v4815, %v4997
        %v5030 = vadd.f32 %v4816, %v4998
        %v5031 = vadd.f32 %v4817, %v4999
        %v5032 = vadd.f32 %v4818, %v5000
        %v5033 = vadd.f32 %v4819, %v5001
        %v5034 = vadd.f32 %v4820, %v5002
        %v5035 = vadd.f32 %v4821, %v5003
        %v5036 = vadd.f32 %v4822, %v5004
        %v5037 = vadd.f32 %v4823, %v5005
        %v5038 = vadd.f32 %v4824, %v5006
        %v5039 = vadd.f32 %v4825, %v5007
        %v5040 = vadd.f32 %v4826, %v5008
        %v5041 = vadd.f32 %v4827, %v5009
        %v5042 = vadd.f32 %v4828, %v5010
        %v5043 = vadd.f32 %v4829, %v5011
        %v5044 = vadd.f32 %v4830, %v5012
        %v5045 = vadd.f32 %v4831, %v5013
        %v5046 = vadd.f32 %v4832, %v5014
        %v5047 = vadd.f32 %v4833, %v5015
        %v5048 = vadd.f32 %v4834, %v5016
        %v5049 = vadd.f32 %v4835, %v5017
        %v5050 = vadd.f32 %v4836, %v5018
        %v5051 = vadd.f32 %v4837, %v5019
        %v5052 = vadd.f32 %v4838, %v5020
        %v5053 = vadd.f32 %v4839, %v5021
        %v5054 = vadd.f32 %v4840, %v5022
        %v5055 = vadd.f32 %v4841, %v5023
        %v5056 = vadd.f32 %v4842, %v5024
        %v5057 = vadd.f32 %v4843, %v5025
        %v5058 = vadd.f32 %v4844, %v5026
        %v5059 = vadd.f32 %v4845, %v5027
        %v5060 = vadd.f32 %v4846, %v5028
        %v5061 = vlaneseq
        %v5062 = vshrl.u32 %v5061, 7
        %v5063 = vsub.s32 0, %v5062
        %v5064 = vrot.slane %v4857, %v5063
        %5066 = vbcast.lane.b32.xlu0 %v5064, 256
        %v5067 = vpop.permute.xlu0 %5066
        %s5069 = sor.u32 256, 8
        %5070 = vbcast.lane.b32.xlu0 %v5064, %s5069
        %v5071 = vpop.permute.xlu0 %5070
        %s5073 = sor.u32 256, 16
        %5074 = vbcast.lane.b32.xlu0 %v5064, %s5073
        %v5075 = vpop.permute.xlu0 %5074
        %s5077 = sor.u32 256, 24
        %5078 = vbcast.lane.b32.xlu0 %v5064, %s5077
        %v5079 = vpop.permute.xlu0 %5078
        %s5081 = sor.u32 256, 32
        %5082 = vbcast.lane.b32.xlu0 %v5064, %s5081
        %v5083 = vpop.permute.xlu0 %5082
        %s5085 = sor.u32 256, 40
        %5086 = vbcast.lane.b32.xlu0 %v5064, %s5085
        %v5087 = vpop.permute.xlu0 %5086
        %s5089 = sor.u32 256, 48
        %5090 = vbcast.lane.b32.xlu0 %v5064, %s5089
        %v5091 = vpop.permute.xlu0 %5090
        %s5093 = sor.u32 256, 56
        %5094 = vbcast.lane.b32.xlu0 %v5064, %s5093
        %v5095 = vpop.permute.xlu0 %5094
        %s5097 = sor.u32 256, 64
        %5098 = vbcast.lane.b32.xlu0 %v5064, %s5097
        %v5099 = vpop.permute.xlu0 %5098
        %s5101 = sor.u32 256, 72
        %5102 = vbcast.lane.b32.xlu0 %v5064, %s5101
        %v5103 = vpop.permute.xlu0 %5102
        %s5105 = sor.u32 256, 80
        %5106 = vbcast.lane.b32.xlu0 %v5064, %s5105
        %v5107 = vpop.permute.xlu0 %5106
        %s5109 = sor.u32 256, 88
        %5110 = vbcast.lane.b32.xlu0 %v5064, %s5109
        %v5111 = vpop.permute.xlu0 %5110
        %s5113 = sor.u32 256, 96
        %5114 = vbcast.lane.b32.xlu0 %v5064, %s5113
        %v5115 = vpop.permute.xlu0 %5114
        %s5117 = sor.u32 256, 104
        %5118 = vbcast.lane.b32.xlu0 %v5064, %s5117
        %v5119 = vpop.permute.xlu0 %5118
        %s5121 = sor.u32 256, 112
        %5122 = vbcast.lane.b32.xlu0 %v5064, %s5121
        %v5123 = vpop.permute.xlu0 %5122
        %s5125 = sor.u32 256, 120
        %5126 = vbcast.lane.b32.xlu0 %v5064, %s5125
        %v5127 = vpop.permute.xlu0 %5126
        %v5128 = vlaneseq
        %v5129 = vshrl.u32 %v5128, 7
        %v5130 = vsub.s32 1, %v5129
        %v5131 = vrot.slane %v4857, %v5130
        %5133 = vbcast.lane.b32.xlu0 %v5131, 256
        %v5134 = vpop.permute.xlu0 %5133
        %s5136 = sor.u32 256, 8
        %5137 = vbcast.lane.b32.xlu0 %v5131, %s5136
        %v5138 = vpop.permute.xlu0 %5137
        %s5140 = sor.u32 256, 16
        %5141 = vbcast.lane.b32.xlu0 %v5131, %s5140
        %v5142 = vpop.permute.xlu0 %5141
        %s5144 = sor.u32 256, 24
        %5145 = vbcast.lane.b32.xlu0 %v5131, %s5144
        %v5146 = vpop.permute.xlu0 %5145
        %s5148 = sor.u32 256, 32
        %5149 = vbcast.lane.b32.xlu0 %v5131, %s5148
        %v5150 = vpop.permute.xlu0 %5149
        %s5152 = sor.u32 256, 40
        %5153 = vbcast.lane.b32.xlu0 %v5131, %s5152
        %v5154 = vpop.permute.xlu0 %5153
        %s5156 = sor.u32 256, 48
        %5157 = vbcast.lane.b32.xlu0 %v5131, %s5156
        %v5158 = vpop.permute.xlu0 %5157
        %s5160 = sor.u32 256, 56
        %5161 = vbcast.lane.b32.xlu0 %v5131, %s5160
        %v5162 = vpop.permute.xlu0 %5161
        %s5164 = sor.u32 256, 64
        %5165 = vbcast.lane.b32.xlu0 %v5131, %s5164
        %v5166 = vpop.permute.xlu0 %5165
        %s5168 = sor.u32 256, 72
        %5169 = vbcast.lane.b32.xlu0 %v5131, %s5168
        %v5170 = vpop.permute.xlu0 %5169
        %s5172 = sor.u32 256, 80
        %5173 = vbcast.lane.b32.xlu0 %v5131, %s5172
        %v5174 = vpop.permute.xlu0 %5173
        %s5176 = sor.u32 256, 88
        %5177 = vbcast.lane.b32.xlu0 %v5131, %s5176
        %v5178 = vpop.permute.xlu0 %5177
        %s5180 = sor.u32 256, 96
        %5181 = vbcast.lane.b32.xlu0 %v5131, %s5180
        %v5182 = vpop.permute.xlu0 %5181
        %s5184 = sor.u32 256, 104
        %5185 = vbcast.lane.b32.xlu0 %v5131, %s5184
        %v5186 = vpop.permute.xlu0 %5185
        %s5188 = sor.u32 256, 112
        %5189 = vbcast.lane.b32.xlu0 %v5131, %s5188
        %v5190 = vpop.permute.xlu0 %5189
        %s5192 = sor.u32 256, 120
        %5193 = vbcast.lane.b32.xlu0 %v5131, %s5192
        %v5194 = vpop.permute.xlu0 %5193
        %v5195 = vld [vmem:[#allocation29 + $0xf] sm:$0x1]
        %v5196 = vlaneseq
        %v5197 = vshrl.u32 %v5196, 7
        %v5198 = vsub.s32 0, %v5197
        %v5199 = vrot.slane %v5195, %v5198
        %v5200 = vmul.f32 %v5067, %v5199
        %v5201 = vmul.f32 %v5071, %v5199
        %v5202 = vmul.f32 %v5075, %v5199
        %v5203 = vmul.f32 %v5079, %v5199
        %v5204 = vmul.f32 %v5083, %v5199
        %v5205 = vmul.f32 %v5087, %v5199
        %v5206 = vmul.f32 %v5091, %v5199
        %v5207 = vmul.f32 %v5095, %v5199
        %v5208 = vmul.f32 %v5099, %v5199
        %v5209 = vmul.f32 %v5103, %v5199
        %v5210 = vmul.f32 %v5107, %v5199
        %v5211 = vmul.f32 %v5111, %v5199
        %v5212 = vmul.f32 %v5115, %v5199
        %v5213 = vmul.f32 %v5119, %v5199
        %v5214 = vmul.f32 %v5123, %v5199
        %v5215 = vmul.f32 %v5127, %v5199
        %v5216 = vmul.f32 %v5134, %v5199
        %v5217 = vmul.f32 %v5138, %v5199
        %v5218 = vmul.f32 %v5142, %v5199
        %v5219 = vmul.f32 %v5146, %v5199
        %v5220 = vmul.f32 %v5150, %v5199
        %v5221 = vmul.f32 %v5154, %v5199
        %v5222 = vmul.f32 %v5158, %v5199
        %v5223 = vmul.f32 %v5162, %v5199
        %v5224 = vmul.f32 %v5166, %v5199
        %v5225 = vmul.f32 %v5170, %v5199
        %v5226 = vmul.f32 %v5174, %v5199
        %v5227 = vmul.f32 %v5178, %v5199
        %v5228 = vmul.f32 %v5182, %v5199
        %v5229 = vmul.f32 %v5186, %v5199
        %v5230 = vmul.f32 %v5190, %v5199
        %v5231 = vmul.f32 %v5194, %v5199
        %v5232 = vadd.f32 %v5029, %v5200
        %v5233 = vadd.f32 %v5030, %v5201
        %v5234 = vadd.f32 %v5031, %v5202
        %v5235 = vadd.f32 %v5032, %v5203
        %v5236 = vadd.f32 %v5033, %v5204
        %v5237 = vadd.f32 %v5034, %v5205
        %v5238 = vadd.f32 %v5035, %v5206
        %v5239 = vadd.f32 %v5036, %v5207
        %v5240 = vadd.f32 %v5037, %v5208
        %v5241 = vadd.f32 %v5038, %v5209
        %v5242 = vadd.f32 %v5039, %v5210
        %v5243 = vadd.f32 %v5040, %v5211
        %v5244 = vadd.f32 %v5041, %v5212
        %v5245 = vadd.f32 %v5042, %v5213
        %v5246 = vadd.f32 %v5043, %v5214
        %v5247 = vadd.f32 %v5044, %v5215
        %v5248 = vadd.f32 %v5045, %v5216
        %v5249 = vadd.f32 %v5046, %v5217
        %v5250 = vadd.f32 %v5047, %v5218
        %v5251 = vadd.f32 %v5048, %v5219
        %v5252 = vadd.f32 %v5049, %v5220
        %v5253 = vadd.f32 %v5050, %v5221
        %v5254 = vadd.f32 %v5051, %v5222
        %v5255 = vadd.f32 %v5052, %v5223
        %v5256 = vadd.f32 %v5053, %v5224
        %v5257 = vadd.f32 %v5054, %v5225
        %v5258 = vadd.f32 %v5055, %v5226
        %v5259 = vadd.f32 %v5056, %v5227
        %v5260 = vadd.f32 %v5057, %v5228
        %v5261 = vadd.f32 %v5058, %v5229
        %v5262 = vadd.f32 %v5059, %v5230
        %v5263 = vadd.f32 %v5060, %v5231
        %v5264 = vld [vmem:[#allocation15 + $0x7] sm:$0x1]
        %5265 = vrot.lane.b32.xlu0 %v1866, 120
        %v5266 = vpop.permute.xlu0 %5265
        %v5267 = vlaneseq
        %v5268 = vshrl.u32 %v5267, 7
        %v5269 = vsub.s32 0, %v5268
        %v5270 = vrot.slane %v5264, %v5269
        %v5271 = vmul.f32 %v5266, %v5270
        %5272 = vrot.lane.b32.xlu0 %v1867, 120
        %v5273 = vpop.permute.xlu0 %5272
        %v5274 = vmul.f32 %v5273, %v5270
        %v5275 = vlaneseq
        %v5276 = vshrl.u32 %v5275, 7
        %v5277 = vsub.s32 0, %v5276
        %v5278 = vrot.slane %v5271, %v5277
        %5280 = vbcast.lane.b32.xlu0 %v5278, 256
        %v5281 = vpop.permute.xlu0 %5280
        %s5283 = sor.u32 256, 8
        %5284 = vbcast.lane.b32.xlu0 %v5278, %s5283
        %v5285 = vpop.permute.xlu0 %5284
        %s5287 = sor.u32 256, 16
        %5288 = vbcast.lane.b32.xlu0 %v5278, %s5287
        %v5289 = vpop.permute.xlu0 %5288
        %s5291 = sor.u32 256, 24
        %5292 = vbcast.lane.b32.xlu0 %v5278, %s5291
        %v5293 = vpop.permute.xlu0 %5292
        %s5295 = sor.u32 256, 32
        %5296 = vbcast.lane.b32.xlu0 %v5278, %s5295
        %v5297 = vpop.permute.xlu0 %5296
        %s5299 = sor.u32 256, 40
        %5300 = vbcast.lane.b32.xlu0 %v5278, %s5299
        %v5301 = vpop.permute.xlu0 %5300
        %s5303 = sor.u32 256, 48
        %5304 = vbcast.lane.b32.xlu0 %v5278, %s5303
        %v5305 = vpop.permute.xlu0 %5304
        %s5307 = sor.u32 256, 56
        %5308 = vbcast.lane.b32.xlu0 %v5278, %s5307
        %v5309 = vpop.permute.xlu0 %5308
        %s5311 = sor.u32 256, 64
        %5312 = vbcast.lane.b32.xlu0 %v5278, %s5311
        %v5313 = vpop.permute.xlu0 %5312
        %s5315 = sor.u32 256, 72
        %5316 = vbcast.lane.b32.xlu0 %v5278, %s5315
        %v5317 = vpop.permute.xlu0 %5316
        %s5319 = sor.u32 256, 80
        %5320 = vbcast.lane.b32.xlu0 %v5278, %s5319
        %v5321 = vpop.permute.xlu0 %5320
        %s5323 = sor.u32 256, 88
        %5324 = vbcast.lane.b32.xlu0 %v5278, %s5323
        %v5325 = vpop.permute.xlu0 %5324
        %s5327 = sor.u32 256, 96
        %5328 = vbcast.lane.b32.xlu0 %v5278, %s5327
        %v5329 = vpop.permute.xlu0 %5328
        %s5331 = sor.u32 256, 104
        %5332 = vbcast.lane.b32.xlu0 %v5278, %s5331
        %v5333 = vpop.permute.xlu0 %5332
        %s5335 = sor.u32 256, 112
        %5336 = vbcast.lane.b32.xlu0 %v5278, %s5335
        %v5337 = vpop.permute.xlu0 %5336
        %s5339 = sor.u32 256, 120
        %5340 = vbcast.lane.b32.xlu0 %v5278, %s5339
        %v5341 = vpop.permute.xlu0 %5340
        %v5342 = vlaneseq
        %v5343 = vshrl.u32 %v5342, 7
        %v5344 = vsub.s32 1, %v5343
        %v5345 = vrot.slane %v5271, %v5344
        %5347 = vbcast.lane.b32.xlu0 %v5345, 256
        %v5348 = vpop.permute.xlu0 %5347
        %s5350 = sor.u32 256, 8
        %5351 = vbcast.lane.b32.xlu0 %v5345, %s5350
        %v5352 = vpop.permute.xlu0 %5351
        %s5354 = sor.u32 256, 16
        %5355 = vbcast.lane.b32.xlu0 %v5345, %s5354
        %v5356 = vpop.permute.xlu0 %5355
        %s5358 = sor.u32 256, 24
        %5359 = vbcast.lane.b32.xlu0 %v5345, %s5358
        %v5360 = vpop.permute.xlu0 %5359
        %s5362 = sor.u32 256, 32
        %5363 = vbcast.lane.b32.xlu0 %v5345, %s5362
        %v5364 = vpop.permute.xlu0 %5363
        %s5366 = sor.u32 256, 40
        %5367 = vbcast.lane.b32.xlu0 %v5345, %s5366
        %v5368 = vpop.permute.xlu0 %5367
        %s5370 = sor.u32 256, 48
        %5371 = vbcast.lane.b32.xlu0 %v5345, %s5370
        %v5372 = vpop.permute.xlu0 %5371
        %s5374 = sor.u32 256, 56
        %5375 = vbcast.lane.b32.xlu0 %v5345, %s5374
        %v5376 = vpop.permute.xlu0 %5375
        %s5378 = sor.u32 256, 64
        %5379 = vbcast.lane.b32.xlu0 %v5345, %s5378
        %v5380 = vpop.permute.xlu0 %5379
        %s5382 = sor.u32 256, 72
        %5383 = vbcast.lane.b32.xlu0 %v5345, %s5382
        %v5384 = vpop.permute.xlu0 %5383
        %s5386 = sor.u32 256, 80
        %5387 = vbcast.lane.b32.xlu0 %v5345, %s5386
        %v5388 = vpop.permute.xlu0 %5387
        %s5390 = sor.u32 256, 88
        %5391 = vbcast.lane.b32.xlu0 %v5345, %s5390
        %v5392 = vpop.permute.xlu0 %5391
        %s5394 = sor.u32 256, 96
        %5395 = vbcast.lane.b32.xlu0 %v5345, %s5394
        %v5396 = vpop.permute.xlu0 %5395
        %s5398 = sor.u32 256, 104
        %5399 = vbcast.lane.b32.xlu0 %v5345, %s5398
        %v5400 = vpop.permute.xlu0 %5399
        %s5402 = sor.u32 256, 112
        %5403 = vbcast.lane.b32.xlu0 %v5345, %s5402
        %v5404 = vpop.permute.xlu0 %5403
        %s5406 = sor.u32 256, 120
        %5407 = vbcast.lane.b32.xlu0 %v5345, %s5406
        %v5408 = vpop.permute.xlu0 %5407
        %v5409 = vld [vmem:[#allocation29 + $0x7] sm:$0x1]
        %v5410 = vlaneseq
        %v5411 = vshrl.u32 %v5410, 7
        %v5412 = vsub.s32 0, %v5411
        %v5413 = vrot.slane %v5409, %v5412
        %v5414 = vmul.f32 %v5281, %v5413
        %v5415 = vmul.f32 %v5285, %v5413
        %v5416 = vmul.f32 %v5289, %v5413
        %v5417 = vmul.f32 %v5293, %v5413
        %v5418 = vmul.f32 %v5297, %v5413
        %v5419 = vmul.f32 %v5301, %v5413
        %v5420 = vmul.f32 %v5305, %v5413
        %v5421 = vmul.f32 %v5309, %v5413
        %v5422 = vmul.f32 %v5313, %v5413
        %v5423 = vmul.f32 %v5317, %v5413
        %v5424 = vmul.f32 %v5321, %v5413
        %v5425 = vmul.f32 %v5325, %v5413
        %v5426 = vmul.f32 %v5329, %v5413
        %v5427 = vmul.f32 %v5333, %v5413
        %v5428 = vmul.f32 %v5337, %v5413
        %v5429 = vmul.f32 %v5341, %v5413
        %v5430 = vmul.f32 %v5348, %v5413
        %v5431 = vmul.f32 %v5352, %v5413
        %v5432 = vmul.f32 %v5356, %v5413
        %v5433 = vmul.f32 %v5360, %v5413
        %v5434 = vmul.f32 %v5364, %v5413
        %v5435 = vmul.f32 %v5368, %v5413
        %v5436 = vmul.f32 %v5372, %v5413
        %v5437 = vmul.f32 %v5376, %v5413
        %v5438 = vmul.f32 %v5380, %v5413
        %v5439 = vmul.f32 %v5384, %v5413
        %v5440 = vmul.f32 %v5388, %v5413
        %v5441 = vmul.f32 %v5392, %v5413
        %v5442 = vmul.f32 %v5396, %v5413
        %v5443 = vmul.f32 %v5400, %v5413
        %v5444 = vmul.f32 %v5404, %v5413
        %v5445 = vmul.f32 %v5408, %v5413
        %v5446 = vadd.f32 %v5232, %v5414
        %v5447 = vadd.f32 %v5233, %v5415
        %v5448 = vadd.f32 %v5234, %v5416
        %v5449 = vadd.f32 %v5235, %v5417
        %v5450 = vadd.f32 %v5236, %v5418
        %v5451 = vadd.f32 %v5237, %v5419
        %v5452 = vadd.f32 %v5238, %v5420
        %v5453 = vadd.f32 %v5239, %v5421
        %v5454 = vadd.f32 %v5240, %v5422
        %v5455 = vadd.f32 %v5241, %v5423
        %v5456 = vadd.f32 %v5242, %v5424
        %v5457 = vadd.f32 %v5243, %v5425
        %v5458 = vadd.f32 %v5244, %v5426
        %v5459 = vadd.f32 %v5245, %v5427
        %v5460 = vadd.f32 %v5246, %v5428
        %v5461 = vadd.f32 %v5247, %v5429
        %v5462 = vadd.f32 %v5248, %v5430
        %v5463 = vadd.f32 %v5249, %v5431
        %v5464 = vadd.f32 %v5250, %v5432
        %v5465 = vadd.f32 %v5251, %v5433
        %v5466 = vadd.f32 %v5252, %v5434
        %v5467 = vadd.f32 %v5253, %v5435
        %v5468 = vadd.f32 %v5254, %v5436
        %v5469 = vadd.f32 %v5255, %v5437
        %v5470 = vadd.f32 %v5256, %v5438
        %v5471 = vadd.f32 %v5257, %v5439
        %v5472 = vadd.f32 %v5258, %v5440
        %v5473 = vadd.f32 %v5259, %v5441
        %v5474 = vadd.f32 %v5260, %v5442
        %v5475 = vadd.f32 %v5261, %v5443
        %v5476 = vadd.f32 %v5262, %v5444
        %v5477 = vadd.f32 %v5263, %v5445
        %v5478 = vlaneseq
        %v5479 = vshrl.u32 %v5478, 7
        %v5480 = vsub.s32 0, %v5479
        %v5481 = vrot.slane %v5274, %v5480
        %5483 = vbcast.lane.b32.xlu0 %v5481, 256
        %v5484 = vpop.permute.xlu0 %5483
        %s5486 = sor.u32 256, 8
        %5487 = vbcast.lane.b32.xlu0 %v5481, %s5486
        %v5488 = vpop.permute.xlu0 %5487
        %s5490 = sor.u32 256, 16
        %5491 = vbcast.lane.b32.xlu0 %v5481, %s5490
        %v5492 = vpop.permute.xlu0 %5491
        %s5494 = sor.u32 256, 24
        %5495 = vbcast.lane.b32.xlu0 %v5481, %s5494
        %v5496 = vpop.permute.xlu0 %5495
        %s5498 = sor.u32 256, 32
        %5499 = vbcast.lane.b32.xlu0 %v5481, %s5498
        %v5500 = vpop.permute.xlu0 %5499
        %s5502 = sor.u32 256, 40
        %5503 = vbcast.lane.b32.xlu0 %v5481, %s5502
        %v5504 = vpop.permute.xlu0 %5503
        %s5506 = sor.u32 256, 48
        %5507 = vbcast.lane.b32.xlu0 %v5481, %s5506
        %v5508 = vpop.permute.xlu0 %5507
        %s5510 = sor.u32 256, 56
        %5511 = vbcast.lane.b32.xlu0 %v5481, %s5510
        %v5512 = vpop.permute.xlu0 %5511
        %s5514 = sor.u32 256, 64
        %5515 = vbcast.lane.b32.xlu0 %v5481, %s5514
        %v5516 = vpop.permute.xlu0 %5515
        %s5518 = sor.u32 256, 72
        %5519 = vbcast.lane.b32.xlu0 %v5481, %s5518
        %v5520 = vpop.permute.xlu0 %5519
        %s5522 = sor.u32 256, 80
        %5523 = vbcast.lane.b32.xlu0 %v5481, %s5522
        %v5524 = vpop.permute.xlu0 %5523
        %s5526 = sor.u32 256, 88
        %5527 = vbcast.lane.b32.xlu0 %v5481, %s5526
        %v5528 = vpop.permute.xlu0 %5527
        %s5530 = sor.u32 256, 96
        %5531 = vbcast.lane.b32.xlu0 %v5481, %s5530
        %v5532 = vpop.permute.xlu0 %5531
        %s5534 = sor.u32 256, 104
        %5535 = vbcast.lane.b32.xlu0 %v5481, %s5534
        %v5536 = vpop.permute.xlu0 %5535
        %s5538 = sor.u32 256, 112
        %5539 = vbcast.lane.b32.xlu0 %v5481, %s5538
        %v5540 = vpop.permute.xlu0 %5539
        %s5542 = sor.u32 256, 120
        %5543 = vbcast.lane.b32.xlu0 %v5481, %s5542
        %v5544 = vpop.permute.xlu0 %5543
        %v5545 = vlaneseq
        %v5546 = vshrl.u32 %v5545, 7
        %v5547 = vsub.s32 1, %v5546
        %v5548 = vrot.slane %v5274, %v5547
        %5550 = vbcast.lane.b32.xlu0 %v5548, 256
        %v5551 = vpop.permute.xlu0 %5550
        %s5553 = sor.u32 256, 8
        %5554 = vbcast.lane.b32.xlu0 %v5548, %s5553
        %v5555 = vpop.permute.xlu0 %5554
        %s5557 = sor.u32 256, 16
        %5558 = vbcast.lane.b32.xlu0 %v5548, %s5557
        %v5559 = vpop.permute.xlu0 %5558
        %s5561 = sor.u32 256, 24
        %5562 = vbcast.lane.b32.xlu0 %v5548, %s5561
        %v5563 = vpop.permute.xlu0 %5562
        %s5565 = sor.u32 256, 32
        %5566 = vbcast.lane.b32.xlu0 %v5548, %s5565
        %v5567 = vpop.permute.xlu0 %5566
        %s5569 = sor.u32 256, 40
        %5570 = vbcast.lane.b32.xlu0 %v5548, %s5569
        %v5571 = vpop.permute.xlu0 %5570
        %s5573 = sor.u32 256, 48
        %5574 = vbcast.lane.b32.xlu0 %v5548, %s5573
        %v5575 = vpop.permute.xlu0 %5574
        %s5577 = sor.u32 256, 56
        %5578 = vbcast.lane.b32.xlu0 %v5548, %s5577
        %v5579 = vpop.permute.xlu0 %5578
        %s5581 = sor.u32 256, 64
        %5582 = vbcast.lane.b32.xlu0 %v5548, %s5581
        %v5583 = vpop.permute.xlu0 %5582
        %s5585 = sor.u32 256, 72
        %5586 = vbcast.lane.b32.xlu0 %v5548, %s5585
        %v5587 = vpop.permute.xlu0 %5586
        %s5589 = sor.u32 256, 80
        %5590 = vbcast.lane.b32.xlu0 %v5548, %s5589
        %v5591 = vpop.permute.xlu0 %5590
        %s5593 = sor.u32 256, 88
        %5594 = vbcast.lane.b32.xlu0 %v5548, %s5593
        %v5595 = vpop.permute.xlu0 %5594
        %s5597 = sor.u32 256, 96
        %5598 = vbcast.lane.b32.xlu0 %v5548, %s5597
        %v5599 = vpop.permute.xlu0 %5598
        %s5601 = sor.u32 256, 104
        %5602 = vbcast.lane.b32.xlu0 %v5548, %s5601
        %v5603 = vpop.permute.xlu0 %5602
        %s5605 = sor.u32 256, 112
        %5606 = vbcast.lane.b32.xlu0 %v5548, %s5605
        %v5607 = vpop.permute.xlu0 %5606
        %s5609 = sor.u32 256, 120
        %5610 = vbcast.lane.b32.xlu0 %v5548, %s5609
        %v5611 = vpop.permute.xlu0 %5610
        %v5612 = vld [vmem:[#allocation29 + $0x10] sm:$0x1]
        %v5613 = vlaneseq
        %v5614 = vshrl.u32 %v5613, 7
        %v5615 = vsub.s32 0, %v5614
        %v5616 = vrot.slane %v5612, %v5615
        %v5617 = vmul.f32 %v5484, %v5616
        %v5618 = vmul.f32 %v5488, %v5616
        %v5619 = vmul.f32 %v5492, %v5616
        %v5620 = vmul.f32 %v5496, %v5616
        %v5621 = vmul.f32 %v5500, %v5616
        %v5622 = vmul.f32 %v5504, %v5616
        %v5623 = vmul.f32 %v5508, %v5616
        %v5624 = vmul.f32 %v5512, %v5616
        %v5625 = vmul.f32 %v5516, %v5616
        %v5626 = vmul.f32 %v5520, %v5616
        %v5627 = vmul.f32 %v5524, %v5616
        %v5628 = vmul.f32 %v5528, %v5616
        %v5629 = vmul.f32 %v5532, %v5616
        %v5630 = vmul.f32 %v5536, %v5616
        %v5631 = vmul.f32 %v5540, %v5616
        %v5632 = vmul.f32 %v5544, %v5616
        %v5633 = vmul.f32 %v5551, %v5616
        %v5634 = vmul.f32 %v5555, %v5616
        %v5635 = vmul.f32 %v5559, %v5616
        %v5636 = vmul.f32 %v5563, %v5616
        %v5637 = vmul.f32 %v5567, %v5616
        %v5638 = vmul.f32 %v5571, %v5616
        %v5639 = vmul.f32 %v5575, %v5616
        %v5640 = vmul.f32 %v5579, %v5616
        %v5641 = vmul.f32 %v5583, %v5616
        %v5642 = vmul.f32 %v5587, %v5616
        %v5643 = vmul.f32 %v5591, %v5616
        %v5644 = vmul.f32 %v5595, %v5616
        %v5645 = vmul.f32 %v5599, %v5616
        %v5646 = vmul.f32 %v5603, %v5616
        %v5647 = vmul.f32 %v5607, %v5616
        %v5648 = vmul.f32 %v5611, %v5616
        %v5649 = vadd.f32 %v5446, %v5617
        %v5650 = vadd.f32 %v5447, %v5618
        %v5651 = vadd.f32 %v5448, %v5619
        %v5652 = vadd.f32 %v5449, %v5620
        %v5653 = vadd.f32 %v5450, %v5621
        %v5654 = vadd.f32 %v5451, %v5622
        %v5655 = vadd.f32 %v5452, %v5623
        %v5656 = vadd.f32 %v5453, %v5624
        %v5657 = vadd.f32 %v5454, %v5625
        %v5658 = vadd.f32 %v5455, %v5626
        %v5659 = vadd.f32 %v5456, %v5627
        %v5660 = vadd.f32 %v5457, %v5628
        %v5661 = vadd.f32 %v5458, %v5629
        %v5662 = vadd.f32 %v5459, %v5630
        %v5663 = vadd.f32 %v5460, %v5631
        %v5664 = vadd.f32 %v5461, %v5632
        %v5665 = vadd.f32 %v5462, %v5633
        %v5666 = vadd.f32 %v5463, %v5634
        %v5667 = vadd.f32 %v5464, %v5635
        %v5668 = vadd.f32 %v5465, %v5636
        %v5669 = vadd.f32 %v5466, %v5637
        %v5670 = vadd.f32 %v5467, %v5638
        %v5671 = vadd.f32 %v5468, %v5639
        %v5672 = vadd.f32 %v5469, %v5640
        %v5673 = vadd.f32 %v5470, %v5641
        %v5674 = vadd.f32 %v5471, %v5642
        %v5675 = vadd.f32 %v5472, %v5643
        %v5676 = vadd.f32 %v5473, %v5644
        %v5677 = vadd.f32 %v5474, %v5645
        %v5678 = vadd.f32 %v5475, %v5646
        %v5679 = vadd.f32 %v5476, %v5647
        %v5680 = vadd.f32 %v5477, %v5648
        %v5681 = vld [vmem:[#allocation15 + $0x8] sm:$0x1]
        %5682 = vrot.lane.b32.xlu0 %v1866, 119
        %v5683 = vpop.permute.xlu0 %5682
        %v5684 = vlaneseq
        %v5685 = vshrl.u32 %v5684, 7
        %v5686 = vsub.s32 0, %v5685
        %v5687 = vrot.slane %v5681, %v5686
        %v5688 = vmul.f32 %v5683, %v5687
        %5689 = vrot.lane.b32.xlu0 %v1867, 119
        %v5690 = vpop.permute.xlu0 %5689
        %v5691 = vmul.f32 %v5690, %v5687
        %v5692 = vlaneseq
        %v5693 = vshrl.u32 %v5692, 7
        %v5694 = vsub.s32 0, %v5693
        %v5695 = vrot.slane %v5688, %v5694
        %5697 = vbcast.lane.b32.xlu0 %v5695, 256
        %v5698 = vpop.permute.xlu0 %5697
        %s5700 = sor.u32 256, 8
        %5701 = vbcast.lane.b32.xlu0 %v5695, %s5700
        %v5702 = vpop.permute.xlu0 %5701
        %s5704 = sor.u32 256, 16
        %5705 = vbcast.lane.b32.xlu0 %v5695, %s5704
        %v5706 = vpop.permute.xlu0 %5705
        %s5708 = sor.u32 256, 24
        %5709 = vbcast.lane.b32.xlu0 %v5695, %s5708
        %v5710 = vpop.permute.xlu0 %5709
        %s5712 = sor.u32 256, 32
        %5713 = vbcast.lane.b32.xlu0 %v5695, %s5712
        %v5714 = vpop.permute.xlu0 %5713
        %s5716 = sor.u32 256, 40
        %5717 = vbcast.lane.b32.xlu0 %v5695, %s5716
        %v5718 = vpop.permute.xlu0 %5717
        %s5720 = sor.u32 256, 48
        %5721 = vbcast.lane.b32.xlu0 %v5695, %s5720
        %v5722 = vpop.permute.xlu0 %5721
        %s5724 = sor.u32 256, 56
        %5725 = vbcast.lane.b32.xlu0 %v5695, %s5724
        %v5726 = vpop.permute.xlu0 %5725
        %s5728 = sor.u32 256, 64
        %5729 = vbcast.lane.b32.xlu0 %v5695, %s5728
        %v5730 = vpop.permute.xlu0 %5729
        %s5732 = sor.u32 256, 72
        %5733 = vbcast.lane.b32.xlu0 %v5695, %s5732
        %v5734 = vpop.permute.xlu0 %5733
        %s5736 = sor.u32 256, 80
        %5737 = vbcast.lane.b32.xlu0 %v5695, %s5736
        %v5738 = vpop.permute.xlu0 %5737
        %s5740 = sor.u32 256, 88
        %5741 = vbcast.lane.b32.xlu0 %v5695, %s5740
        %v5742 = vpop.permute.xlu0 %5741
        %s5744 = sor.u32 256, 96
        %5745 = vbcast.lane.b32.xlu0 %v5695, %s5744
        %v5746 = vpop.permute.xlu0 %5745
        %s5748 = sor.u32 256, 104
        %5749 = vbcast.lane.b32.xlu0 %v5695, %s5748
        %v5750 = vpop.permute.xlu0 %5749
        %s5752 = sor.u32 256, 112
        %5753 = vbcast.lane.b32.xlu0 %v5695, %s5752
        %v5754 = vpop.permute.xlu0 %5753
        %s5756 = sor.u32 256, 120
        %5757 = vbcast.lane.b32.xlu0 %v5695, %s5756
        %v5758 = vpop.permute.xlu0 %5757
        %v5759 = vlaneseq
        %v5760 = vshrl.u32 %v5759, 7
        %v5761 = vsub.s32 1, %v5760
        %v5762 = vrot.slane %v5688, %v5761
        %5764 = vbcast.lane.b32.xlu0 %v5762, 256
        %v5765 = vpop.permute.xlu0 %5764
        %s5767 = sor.u32 256, 8
        %5768 = vbcast.lane.b32.xlu0 %v5762, %s5767
        %v5769 = vpop.permute.xlu0 %5768
        %s5771 = sor.u32 256, 16
        %5772 = vbcast.lane.b32.xlu0 %v5762, %s5771
        %v5773 = vpop.permute.xlu0 %5772
        %s5775 = sor.u32 256, 24
        %5776 = vbcast.lane.b32.xlu0 %v5762, %s5775
        %v5777 = vpop.permute.xlu0 %5776
        %s5779 = sor.u32 256, 32
        %5780 = vbcast.lane.b32.xlu0 %v5762, %s5779
        %v5781 = vpop.permute.xlu0 %5780
        %s5783 = sor.u32 256, 40
        %5784 = vbcast.lane.b32.xlu0 %v5762, %s5783
        %v5785 = vpop.permute.xlu0 %5784
        %s5787 = sor.u32 256, 48
        %5788 = vbcast.lane.b32.xlu0 %v5762, %s5787
        %v5789 = vpop.permute.xlu0 %5788
        %s5791 = sor.u32 256, 56
        %5792 = vbcast.lane.b32.xlu0 %v5762, %s5791
        %v5793 = vpop.permute.xlu0 %5792
        %s5795 = sor.u32 256, 64
        %5796 = vbcast.lane.b32.xlu0 %v5762, %s5795
        %v5797 = vpop.permute.xlu0 %5796
        %s5799 = sor.u32 256, 72
        %5800 = vbcast.lane.b32.xlu0 %v5762, %s5799
        %v5801 = vpop.permute.xlu0 %5800
        %s5803 = sor.u32 256, 80
        %5804 = vbcast.lane.b32.xlu0 %v5762, %s5803
        %v5805 = vpop.permute.xlu0 %5804
        %s5807 = sor.u32 256, 88
        %5808 = vbcast.lane.b32.xlu0 %v5762, %s5807
        %v5809 = vpop.permute.xlu0 %5808
        %s5811 = sor.u32 256, 96
        %5812 = vbcast.lane.b32.xlu0 %v5762, %s5811
        %v5813 = vpop.permute.xlu0 %5812
        %s5815 = sor.u32 256, 104
        %5816 = vbcast.lane.b32.xlu0 %v5762, %s5815
        %v5817 = vpop.permute.xlu0 %5816
        %s5819 = sor.u32 256, 112
        %5820 = vbcast.lane.b32.xlu0 %v5762, %s5819
        %v5821 = vpop.permute.xlu0 %5820
        %s5823 = sor.u32 256, 120
        %5824 = vbcast.lane.b32.xlu0 %v5762, %s5823
        %v5825 = vpop.permute.xlu0 %5824
        %v5826 = vld [vmem:[#allocation29 + $0x8] sm:$0x1]
        %v5827 = vlaneseq
        %v5828 = vshrl.u32 %v5827, 7
        %v5829 = vsub.s32 0, %v5828
        %v5830 = vrot.slane %v5826, %v5829
        %v5831 = vmul.f32 %v5698, %v5830
        %v5832 = vmul.f32 %v5702, %v5830
        %v5833 = vmul.f32 %v5706, %v5830
        %v5834 = vmul.f32 %v5710, %v5830
        %v5835 = vmul.f32 %v5714, %v5830
        %v5836 = vmul.f32 %v5718, %v5830
        %v5837 = vmul.f32 %v5722, %v5830
        %v5838 = vmul.f32 %v5726, %v5830
        %v5839 = vmul.f32 %v5730, %v5830
        %v5840 = vmul.f32 %v5734, %v5830
        %v5841 = vmul.f32 %v5738, %v5830
        %v5842 = vmul.f32 %v5742, %v5830
        %v5843 = vmul.f32 %v5746, %v5830
        %v5844 = vmul.f32 %v5750, %v5830
        %v5845 = vmul.f32 %v5754, %v5830
        %v5846 = vmul.f32 %v5758, %v5830
        %v5847 = vmul.f32 %v5765, %v5830
        %v5848 = vmul.f32 %v5769, %v5830
        %v5849 = vmul.f32 %v5773, %v5830
        %v5850 = vmul.f32 %v5777, %v5830
        %v5851 = vmul.f32 %v5781, %v5830
        %v5852 = vmul.f32 %v5785, %v5830
        %v5853 = vmul.f32 %v5789, %v5830
        %v5854 = vmul.f32 %v5793, %v5830
        %v5855 = vmul.f32 %v5797, %v5830
        %v5856 = vmul.f32 %v5801, %v5830
        %v5857 = vmul.f32 %v5805, %v5830
        %v5858 = vmul.f32 %v5809, %v5830
        %v5859 = vmul.f32 %v5813, %v5830
        %v5860 = vmul.f32 %v5817, %v5830
        %v5861 = vmul.f32 %v5821, %v5830
        %v5862 = vmul.f32 %v5825, %v5830
        %v5863 = vadd.f32 %v5649, %v5831
        %v5864 = vadd.f32 %v5650, %v5832
        %v5865 = vadd.f32 %v5651, %v5833
        %v5866 = vadd.f32 %v5652, %v5834
        %v5867 = vadd.f32 %v5653, %v5835
        %v5868 = vadd.f32 %v5654, %v5836
        %v5869 = vadd.f32 %v5655, %v5837
        %v5870 = vadd.f32 %v5656, %v5838
        %v5871 = vadd.f32 %v5657, %v5839
        %v5872 = vadd.f32 %v5658, %v5840
        %v5873 = vadd.f32 %v5659, %v5841
        %v5874 = vadd.f32 %v5660, %v5842
        %v5875 = vadd.f32 %v5661, %v5843
        %v5876 = vadd.f32 %v5662, %v5844
        %v5877 = vadd.f32 %v5663, %v5845
        %v5878 = vadd.f32 %v5664, %v5846
        %v5879 = vadd.f32 %v5665, %v5847
        %v5880 = vadd.f32 %v5666, %v5848
        %v5881 = vadd.f32 %v5667, %v5849
        %v5882 = vadd.f32 %v5668, %v5850
        %v5883 = vadd.f32 %v5669, %v5851
        %v5884 = vadd.f32 %v5670, %v5852
        %v5885 = vadd.f32 %v5671, %v5853
        %v5886 = vadd.f32 %v5672, %v5854
        %v5887 = vadd.f32 %v5673, %v5855
        %v5888 = vadd.f32 %v5674, %v5856
        %v5889 = vadd.f32 %v5675, %v5857
        %v5890 = vadd.f32 %v5676, %v5858
        %v5891 = vadd.f32 %v5677, %v5859
        %v5892 = vadd.f32 %v5678, %v5860
        %v5893 = vadd.f32 %v5679, %v5861
        %v5894 = vadd.f32 %v5680, %v5862
        %v5895 = vlaneseq
        %v5896 = vshrl.u32 %v5895, 7
        %v5897 = vsub.s32 0, %v5896
        %v5898 = vrot.slane %v5691, %v5897
        %5900 = vbcast.lane.b32.xlu0 %v5898, 256
        %v5901 = vpop.permute.xlu0 %5900
        %s5903 = sor.u32 256, 8
        %5904 = vbcast.lane.b32.xlu0 %v5898, %s5903
        %v5905 = vpop.permute.xlu0 %5904
        %s5907 = sor.u32 256, 16
        %5908 = vbcast.lane.b32.xlu0 %v5898, %s5907
        %v5909 = vpop.permute.xlu0 %5908
        %s5911 = sor.u32 256, 24
        %5912 = vbcast.lane.b32.xlu0 %v5898, %s5911
        %v5913 = vpop.permute.xlu0 %5912
        %s5915 = sor.u32 256, 32
        %5916 = vbcast.lane.b32.xlu0 %v5898, %s5915
        %v5917 = vpop.permute.xlu0 %5916
        %s5919 = sor.u32 256, 40
        %5920 = vbcast.lane.b32.xlu0 %v5898, %s5919
        %v5921 = vpop.permute.xlu0 %5920
        %s5923 = sor.u32 256, 48
        %5924 = vbcast.lane.b32.xlu0 %v5898, %s5923
        %v5925 = vpop.permute.xlu0 %5924
        %s5927 = sor.u32 256, 56
        %5928 = vbcast.lane.b32.xlu0 %v5898, %s5927
        %v5929 = vpop.permute.xlu0 %5928
        %s5931 = sor.u32 256, 64
        %5932 = vbcast.lane.b32.xlu0 %v5898, %s5931
        %v5933 = vpop.permute.xlu0 %5932
        %s5935 = sor.u32 256, 72
        %5936 = vbcast.lane.b32.xlu0 %v5898, %s5935
        %v5937 = vpop.permute.xlu0 %5936
        %s5939 = sor.u32 256, 80
        %5940 = vbcast.lane.b32.xlu0 %v5898, %s5939
        %v5941 = vpop.permute.xlu0 %5940
        %s5943 = sor.u32 256, 88
        %5944 = vbcast.lane.b32.xlu0 %v5898, %s5943
        %v5945 = vpop.permute.xlu0 %5944
        %s5947 = sor.u32 256, 96
        %5948 = vbcast.lane.b32.xlu0 %v5898, %s5947
        %v5949 = vpop.permute.xlu0 %5948
        %s5951 = sor.u32 256, 104
        %5952 = vbcast.lane.b32.xlu0 %v5898, %s5951
        %v5953 = vpop.permute.xlu0 %5952
        %s5955 = sor.u32 256, 112
        %5956 = vbcast.lane.b32.xlu0 %v5898, %s5955
        %v5957 = vpop.permute.xlu0 %5956
        %s5959 = sor.u32 256, 120
        %5960 = vbcast.lane.b32.xlu0 %v5898, %s5959
        %v5961 = vpop.permute.xlu0 %5960
        %v5962 = vlaneseq
        %v5963 = vshrl.u32 %v5962, 7
        %v5964 = vsub.s32 1, %v5963
        %v5965 = vrot.slane %v5691, %v5964
        %5967 = vbcast.lane.b32.xlu0 %v5965, 256
        %v5968 = vpop.permute.xlu0 %5967
        %s5970 = sor.u32 256, 8
        %5971 = vbcast.lane.b32.xlu0 %v5965, %s5970
        %v5972 = vpop.permute.xlu0 %5971
        %s5974 = sor.u32 256, 16
        %5975 = vbcast.lane.b32.xlu0 %v5965, %s5974
        %v5976 = vpop.permute.xlu0 %5975
        %s5978 = sor.u32 256, 24
        %5979 = vbcast.lane.b32.xlu0 %v5965, %s5978
        %v5980 = vpop.permute.xlu0 %5979
        %s5982 = sor.u32 256, 32
        %5983 = vbcast.lane.b32.xlu0 %v5965, %s5982
        %v5984 = vpop.permute.xlu0 %5983
        %s5986 = sor.u32 256, 40
        %5987 = vbcast.lane.b32.xlu0 %v5965, %s5986
        %v5988 = vpop.permute.xlu0 %5987
        %s5990 = sor.u32 256, 48
        %5991 = vbcast.lane.b32.xlu0 %v5965, %s5990
        %v5992 = vpop.permute.xlu0 %5991
        %s5994 = sor.u32 256, 56
        %5995 = vbcast.lane.b32.xlu0 %v5965, %s5994
        %v5996 = vpop.permute.xlu0 %5995
        %s5998 = sor.u32 256, 64
        %5999 = vbcast.lane.b32.xlu0 %v5965, %s5998
        %v6000 = vpop.permute.xlu0 %5999
        %s6002 = sor.u32 256, 72
        %6003 = vbcast.lane.b32.xlu0 %v5965, %s6002
        %v6004 = vpop.permute.xlu0 %6003
        %s6006 = sor.u32 256, 80
        %6007 = vbcast.lane.b32.xlu0 %v5965, %s6006
        %v6008 = vpop.permute.xlu0 %6007
        %s6010 = sor.u32 256, 88
        %6011 = vbcast.lane.b32.xlu0 %v5965, %s6010
        %v6012 = vpop.permute.xlu0 %6011
        %s6014 = sor.u32 256, 96
        %6015 = vbcast.lane.b32.xlu0 %v5965, %s6014
        %v6016 = vpop.permute.xlu0 %6015
        %s6018 = sor.u32 256, 104
        %6019 = vbcast.lane.b32.xlu0 %v5965, %s6018
        %v6020 = vpop.permute.xlu0 %6019
        %s6022 = sor.u32 256, 112
        %6023 = vbcast.lane.b32.xlu0 %v5965, %s6022
        %v6024 = vpop.permute.xlu0 %6023
        %s6026 = sor.u32 256, 120
        %6027 = vbcast.lane.b32.xlu0 %v5965, %s6026
        %v6028 = vpop.permute.xlu0 %6027
        %v6029 = vld [vmem:[#allocation29 + $0x11] sm:$0x1]
        %v6030 = vlaneseq
        %v6031 = vshrl.u32 %v6030, 7
        %v6032 = vsub.s32 0, %v6031
        %v6033 = vrot.slane %v6029, %v6032
        %v6034 = vmul.f32 %v5901, %v6033
        %v6035 = vmul.f32 %v5905, %v6033
        %v6036 = vmul.f32 %v5909, %v6033
        %v6037 = vmul.f32 %v5913, %v6033
        %v6038 = vmul.f32 %v5917, %v6033
        %v6039 = vmul.f32 %v5921, %v6033
        %v6040 = vmul.f32 %v5925, %v6033
        %v6041 = vmul.f32 %v5929, %v6033
        %v6042 = vmul.f32 %v5933, %v6033
        %v6043 = vmul.f32 %v5937, %v6033
        %v6044 = vmul.f32 %v5941, %v6033
        %v6045 = vmul.f32 %v5945, %v6033
        %v6046 = vmul.f32 %v5949, %v6033
        %v6047 = vmul.f32 %v5953, %v6033
        %v6048 = vmul.f32 %v5957, %v6033
        %v6049 = vmul.f32 %v5961, %v6033
        %v6050 = vmul.f32 %v5968, %v6033
        %v6051 = vmul.f32 %v5972, %v6033
        %v6052 = vmul.f32 %v5976, %v6033
        %v6053 = vmul.f32 %v5980, %v6033
        %v6054 = vmul.f32 %v5984, %v6033
        %v6055 = vmul.f32 %v5988, %v6033
        %v6056 = vmul.f32 %v5992, %v6033
        %v6057 = vmul.f32 %v5996, %v6033
        %v6058 = vmul.f32 %v6000, %v6033
        %v6059 = vmul.f32 %v6004, %v6033
        %v6060 = vmul.f32 %v6008, %v6033
        %v6061 = vmul.f32 %v6012, %v6033
        %v6062 = vmul.f32 %v6016, %v6033
        %v6063 = vmul.f32 %v6020, %v6033
        %v6064 = vmul.f32 %v6024, %v6033
        %v6065 = vmul.f32 %v6028, %v6033
        %v6066 = vadd.f32 %v5863, %v6034
        %v6067 = vadd.f32 %v5864, %v6035
        %v6068 = vadd.f32 %v5865, %v6036
        %v6069 = vadd.f32 %v5866, %v6037
        %v6070 = vadd.f32 %v5867, %v6038
        %v6071 = vadd.f32 %v5868, %v6039
        %v6072 = vadd.f32 %v5869, %v6040
        %v6073 = vadd.f32 %v5870, %v6041
        %v6074 = vadd.f32 %v5871, %v6042
        %v6075 = vadd.f32 %v5872, %v6043
        %v6076 = vadd.f32 %v5873, %v6044
        %v6077 = vadd.f32 %v5874, %v6045
        %v6078 = vadd.f32 %v5875, %v6046
        %v6079 = vadd.f32 %v5876, %v6047
        %v6080 = vadd.f32 %v5877, %v6048
        %v6081 = vadd.f32 %v5878, %v6049
        %v6082 = vadd.f32 %v5879, %v6050
        %v6083 = vadd.f32 %v5880, %v6051
        %v6084 = vadd.f32 %v5881, %v6052
        %v6085 = vadd.f32 %v5882, %v6053
        %v6086 = vadd.f32 %v5883, %v6054
        %v6087 = vadd.f32 %v5884, %v6055
        %v6088 = vadd.f32 %v5885, %v6056
        %v6089 = vadd.f32 %v5886, %v6057
        %v6090 = vadd.f32 %v5887, %v6058
        %v6091 = vadd.f32 %v5888, %v6059
        %v6092 = vadd.f32 %v5889, %v6060
        %v6093 = vadd.f32 %v5890, %v6061
        %v6094 = vadd.f32 %v5891, %v6062
        %v6095 = vadd.f32 %v5892, %v6063
        %v6096 = vadd.f32 %v5893, %v6064
        %v6097 = vadd.f32 %v5894, %v6065
        %v6098 = vld [vmem:[#allocation2] sm:$0xff]
        %v6099 = vld [vmem:[#allocation2 + $0x8] sm:$0xff]
        %v6100 = vld [vmem:[#allocation2 + $0x10] sm:$0xff]
        %v6101 = vld [vmem:[#allocation2 + $0x18] sm:$0xff]
        %v6102 = vld [vmem:[#allocation2 + $0x20] sm:$0xff]
        %v6103 = vld [vmem:[#allocation2 + $0x28] sm:$0xff]
        %v6104 = vld [vmem:[#allocation2 + $0x30] sm:$0xff]
        %v6105 = vld [vmem:[#allocation2 + $0x38] sm:$0xff]
        %v6106 = vld [vmem:[#allocation2 + $0x40] sm:$0xff]
        %v6107 = vld [vmem:[#allocation2 + $0x48] sm:$0xff]
        %v6108 = vld [vmem:[#allocation2 + $0x50] sm:$0xff]
        %v6109 = vld [vmem:[#allocation2 + $0x58] sm:$0xff]
        %v6110 = vld [vmem:[#allocation2 + $0x60] sm:$0xff]
        %v6111 = vld [vmem:[#allocation2 + $0x68] sm:$0xff]
        %v6112 = vld [vmem:[#allocation2 + $0x70] sm:$0xff]
        %v6113 = vld [vmem:[#allocation2 + $0x78] sm:$0xff]
        %v6114 = vld [vmem:[#allocation2 + $0x80] sm:$0xff]
        %v6115 = vld [vmem:[#allocation2 + $0x88] sm:$0xff]
        %v6116 = vld [vmem:[#allocation2 + $0x90] sm:$0xff]
        %v6117 = vld [vmem:[#allocation2 + $0x98] sm:$0xff]
        %v6118 = vld [vmem:[#allocation2 + $0xa0] sm:$0xff]
        %v6119 = vld [vmem:[#allocation2 + $0xa8] sm:$0xff]
        %v6120 = vld [vmem:[#allocation2 + $0xb0] sm:$0xff]
        %v6121 = vld [vmem:[#allocation2 + $0xb8] sm:$0xff]
        %v6122 = vld [vmem:[#allocation2 + $0xc0] sm:$0xff]
        %v6123 = vld [vmem:[#allocation2 + $0xc8] sm:$0xff]
        %v6124 = vld [vmem:[#allocation2 + $0xd0] sm:$0xff]
        %v6125 = vld [vmem:[#allocation2 + $0xd8] sm:$0xff]
        %v6126 = vld [vmem:[#allocation2 + $0xe0] sm:$0xff]
        %v6127 = vld [vmem:[#allocation2 + $0xe8] sm:$0xff]
        %v6128 = vld [vmem:[#allocation2 + $0xf0] sm:$0xff]
        %v6129 = vld [vmem:[#allocation2 + $0xf8] sm:$0xff]
        %v6132 = vunpack.c.l.s4 1966171168
        %v6133 = vunpack.c.0.s8 %v6132
        %v6134 = vlaneseq
        %v6135 = vshrl.u32 %v6134, 7
        %v6136 = vsub.s32 %v6133, %v6135
        %v6137 = vrot.slane %v2346, %v6136
        %v6138 = vcombine.high %v6137, %v6137
        %v6140 = vunpack.c.l.s4 1966171168
        %v6141 = vunpack.c.0.s8 %v6140
        %v6142 = vlaneseq
        %v6143 = vshrl.u32 %v6142, 7
        %v6144 = vsub.s32 %v6141, %v6143
        %v6145 = vrot.slane %v6137, %v6144
        %v6147 = vunpack.c.l.s4 1966171168
        %v6148 = vunpack.c.0.s8 %v6147
        %v6149 = vlaneseq
        %v6150 = vshrl.u32 %v6149, 7
        %v6151 = vsub.s32 %v6148, %v6150
        %v6152 = vrot.slane %v6138, %v6151
        %v6153 = vlaneseq
        %v6154 = vshrl.u32 %v6153, 7
        %v6155 = vsub.s32 0, %v6154
        %v6156 = vrot.slane %v6145, %v6155
        %v6157 = vlaneseq
        %v6158 = vshrl.u32 %v6157, 7
        %v6159 = vsub.s32 0, %v6158
        %v6160 = vrot.slane %v6152, %v6159
        %v6163 = vadd.f32 %v6098, %v6156
        %v6164 = vadd.f32 %v6099, %v6156
        %v6165 = vadd.f32 %v6100, %v6156
        %v6166 = vadd.f32 %v6101, %v6156
        %v6167 = vadd.f32 %v6102, %v6156
        %v6168 = vadd.f32 %v6103, %v6156
        %v6169 = vadd.f32 %v6104, %v6156
        %v6170 = vadd.f32 %v6105, %v6156
        %v6171 = vadd.f32 %v6106, %v6156
        %v6172 = vadd.f32 %v6107, %v6156
        %v6173 = vadd.f32 %v6108, %v6156
        %v6174 = vadd.f32 %v6109, %v6156
        %v6175 = vadd.f32 %v6110, %v6156
        %v6176 = vadd.f32 %v6111, %v6156
        %v6177 = vadd.f32 %v6112, %v6156
        %v6178 = vadd.f32 %v6113, %v6156
        %v6179 = vadd.f32 %v6114, %v6160
        %v6180 = vadd.f32 %v6115, %v6160
        %v6181 = vadd.f32 %v6116, %v6160
        %v6182 = vadd.f32 %v6117, %v6160
        %v6183 = vadd.f32 %v6118, %v6160
        %v6184 = vadd.f32 %v6119, %v6160
        %v6185 = vadd.f32 %v6120, %v6160
        %v6186 = vadd.f32 %v6121, %v6160
        %v6187 = vadd.f32 %v6122, %v6160
        %v6188 = vadd.f32 %v6123, %v6160
        %v6189 = vadd.f32 %v6124, %v6160
        %v6190 = vadd.f32 %v6125, %v6160
        %v6191 = vadd.f32 %v6126, %v6160
        %v6192 = vadd.f32 %v6127, %v6160
        %v6193 = vadd.f32 %v6128, %v6160
        %v6194 = vadd.f32 %v6129, %v6160
        %v6195 = vadd.f32 %v6163, %v6066
        %v6196 = vadd.f32 %v6164, %v6067
        %v6197 = vadd.f32 %v6165, %v6068
        %v6198 = vadd.f32 %v6166, %v6069
        %v6199 = vadd.f32 %v6167, %v6070
        %v6200 = vadd.f32 %v6168, %v6071
        %v6201 = vadd.f32 %v6169, %v6072
        %v6202 = vadd.f32 %v6170, %v6073
        %v6203 = vadd.f32 %v6171, %v6074
        %v6204 = vadd.f32 %v6172, %v6075
        %v6205 = vadd.f32 %v6173, %v6076
        %v6206 = vadd.f32 %v6174, %v6077
        %v6207 = vadd.f32 %v6175, %v6078
        %v6208 = vadd.f32 %v6176, %v6079
        %v6209 = vadd.f32 %v6177, %v6080
        %v6210 = vadd.f32 %v6178, %v6081
        %v6211 = vadd.f32 %v6179, %v6082
        %v6212 = vadd.f32 %v6180, %v6083
        %v6213 = vadd.f32 %v6181, %v6084
        %v6214 = vadd.f32 %v6182, %v6085
        %v6215 = vadd.f32 %v6183, %v6086
        %v6216 = vadd.f32 %v6184, %v6087
        %v6217 = vadd.f32 %v6185, %v6088
        %v6218 = vadd.f32 %v6186, %v6089
        %v6219 = vadd.f32 %v6187, %v6090
        %v6220 = vadd.f32 %v6188, %v6091
        %v6221 = vadd.f32 %v6189, %v6092
        %v6222 = vadd.f32 %v6190, %v6093
        %v6223 = vadd.f32 %v6191, %v6094
        %v6224 = vadd.f32 %v6192, %v6095
        %v6225 = vadd.f32 %v6193, %v6096
        %v6226 = vadd.f32 %v6194, %v6097
        %v6227 = vld [vmem:[#allocation30] sm:$0x1]
        %v6229 = vlaneseq
        %v6230 = vshrl.u32 %v6229, 7
        %v6231 = vsub.s32 0, %v6230
        %v6232 = vrot.slane %v6227, %v6231
        %v6234 = vadd.f32 %v6195, %v6232
        %v6235 = vadd.f32 %v6196, %v6232
        %v6236 = vadd.f32 %v6197, %v6232
        %v6237 = vadd.f32 %v6198, %v6232
        %v6238 = vadd.f32 %v6199, %v6232
        %v6239 = vadd.f32 %v6200, %v6232
        %v6240 = vadd.f32 %v6201, %v6232
        %v6241 = vadd.f32 %v6202, %v6232
        %v6242 = vadd.f32 %v6203, %v6232
        %v6243 = vadd.f32 %v6204, %v6232
        %v6244 = vadd.f32 %v6205, %v6232
        %v6245 = vadd.f32 %v6206, %v6232
        %v6246 = vadd.f32 %v6207, %v6232
        %v6247 = vadd.f32 %v6208, %v6232
        %v6248 = vadd.f32 %v6209, %v6232
        %v6249 = vadd.f32 %v6210, %v6232
        %v6250 = vadd.f32 %v6211, %v6232
        %v6251 = vadd.f32 %v6212, %v6232
        %v6252 = vadd.f32 %v6213, %v6232
        %v6253 = vadd.f32 %v6214, %v6232
        %v6254 = vadd.f32 %v6215, %v6232
        %v6255 = vadd.f32 %v6216, %v6232
        %v6256 = vadd.f32 %v6217, %v6232
        %v6257 = vadd.f32 %v6218, %v6232
        %v6258 = vadd.f32 %v6219, %v6232
        %v6259 = vadd.f32 %v6220, %v6232
        %v6260 = vadd.f32 %v6221, %v6232
        %v6261 = vadd.f32 %v6222, %v6232
        %v6262 = vadd.f32 %v6223, %v6232
        %v6263 = vadd.f32 %v6224, %v6232
        %v6264 = vadd.f32 %v6225, %v6232
        %v6265 = vadd.f32 %v6226, %v6232
        %v6266 = vtanh.pop %v6234
        %v6267 = vtanh.pop %v6235
        %v6268 = vtanh.pop %v6236
        %v6269 = vtanh.pop %v6237
        %v6270 = vtanh.pop %v6238
        %v6271 = vtanh.pop %v6239
        %v6272 = vtanh.pop %v6240
        %v6273 = vtanh.pop %v6241
        %v6274 = vtanh.pop %v6242
        %v6275 = vtanh.pop %v6243
        %v6276 = vtanh.pop %v6244
        %v6277 = vtanh.pop %v6245
        %v6278 = vtanh.pop %v6246
        %v6279 = vtanh.pop %v6247
        %v6280 = vtanh.pop %v6248
        %v6281 = vtanh.pop %v6249
        %v6282 = vtanh.pop %v6250
        %v6283 = vtanh.pop %v6251
        %v6284 = vtanh.pop %v6252
        %v6285 = vtanh.pop %v6253
        %v6286 = vtanh.pop %v6254
        %v6287 = vtanh.pop %v6255
        %v6288 = vtanh.pop %v6256
        %v6289 = vtanh.pop %v6257
        %v6290 = vtanh.pop %v6258
        %v6291 = vtanh.pop %v6259
        %v6292 = vtanh.pop %v6260
        %v6293 = vtanh.pop %v6261
        %v6294 = vtanh.pop %v6262
        %v6295 = vtanh.pop %v6263
        %v6296 = vtanh.pop %v6264
        %v6297 = vtanh.pop %v6265
        %v6298 = vld [vmem:[#allocation32] sm:$0x1]
        %v6300 = vlaneseq
        %v6301 = vshrl.u32 %v6300, 7
        %v6302 = vsub.s32 0, %v6301
        %v6303 = vrot.slane %v6298, %v6302
        %v6305 = vmul.f32 %v6266, %v6303
        %v6306 = vmul.f32 %v6267, %v6303
        %v6307 = vmul.f32 %v6268, %v6303
        %v6308 = vmul.f32 %v6269, %v6303
        %v6309 = vmul.f32 %v6270, %v6303
        %v6310 = vmul.f32 %v6271, %v6303
        %v6311 = vmul.f32 %v6272, %v6303
        %v6312 = vmul.f32 %v6273, %v6303
        %v6313 = vmul.f32 %v6274, %v6303
        %v6314 = vmul.f32 %v6275, %v6303
        %v6315 = vmul.f32 %v6276, %v6303
        %v6316 = vmul.f32 %v6277, %v6303
        %v6317 = vmul.f32 %v6278, %v6303
        %v6318 = vmul.f32 %v6279, %v6303
        %v6319 = vmul.f32 %v6280, %v6303
        %v6320 = vmul.f32 %v6281, %v6303
        %v6321 = vmul.f32 %v6282, %v6303
        %v6322 = vmul.f32 %v6283, %v6303
        %v6323 = vmul.f32 %v6284, %v6303
        %v6324 = vmul.f32 %v6285, %v6303
        %v6325 = vmul.f32 %v6286, %v6303
        %v6326 = vmul.f32 %v6287, %v6303
        %v6327 = vmul.f32 %v6288, %v6303
        %v6328 = vmul.f32 %v6289, %v6303
        %v6329 = vmul.f32 %v6290, %v6303
        %v6330 = vmul.f32 %v6291, %v6303
        %v6331 = vmul.f32 %v6292, %v6303
        %v6332 = vmul.f32 %v6293, %v6303
        %v6333 = vmul.f32 %v6294, %v6303
        %v6334 = vmul.f32 %v6295, %v6303
        %v6335 = vmul.f32 %v6296, %v6303
        %v6336 = vmul.f32 %v6297, %v6303
        %6337 = vadd.xlane.f32.xlu0 %v6305
        %v6338 = vpop.xlane.xlu0 %6337
        %6339 = vadd.xlane.f32.xlu0 %v6306
        %v6340 = vpop.xlane.xlu0 %6339
        %6341 = vadd.xlane.f32.xlu0 %v6307
        %v6342 = vpop.xlane.xlu0 %6341
        %6343 = vadd.xlane.f32.xlu0 %v6308
        %v6344 = vpop.xlane.xlu0 %6343
        %6345 = vadd.xlane.f32.xlu0 %v6309
        %v6346 = vpop.xlane.xlu0 %6345
        %6347 = vadd.xlane.f32.xlu0 %v6310
        %v6348 = vpop.xlane.xlu0 %6347
        %6349 = vadd.xlane.f32.xlu0 %v6311
        %v6350 = vpop.xlane.xlu0 %6349
        %6351 = vadd.xlane.f32.xlu0 %v6312
        %v6352 = vpop.xlane.xlu0 %6351
        %6353 = vadd.xlane.f32.xlu0 %v6313
        %v6354 = vpop.xlane.xlu0 %6353
        %6355 = vadd.xlane.f32.xlu0 %v6314
        %v6356 = vpop.xlane.xlu0 %6355
        %6357 = vadd.xlane.f32.xlu0 %v6315
        %v6358 = vpop.xlane.xlu0 %6357
        %6359 = vadd.xlane.f32.xlu0 %v6316
        %v6360 = vpop.xlane.xlu0 %6359
        %6361 = vadd.xlane.f32.xlu0 %v6317
        %v6362 = vpop.xlane.xlu0 %6361
        %6363 = vadd.xlane.f32.xlu0 %v6318
        %v6364 = vpop.xlane.xlu0 %6363
        %6365 = vadd.xlane.f32.xlu0 %v6319
        %v6366 = vpop.xlane.xlu0 %6365
        %6367 = vadd.xlane.f32.xlu0 %v6320
        %v6368 = vpop.xlane.xlu0 %6367
        %6369 = vadd.xlane.f32.xlu0 %v6321
        %v6370 = vpop.xlane.xlu0 %6369
        %6371 = vadd.xlane.f32.xlu0 %v6322
        %v6372 = vpop.xlane.xlu0 %6371
        %6373 = vadd.xlane.f32.xlu0 %v6323
        %v6374 = vpop.xlane.xlu0 %6373
        %6375 = vadd.xlane.f32.xlu0 %v6324
        %v6376 = vpop.xlane.xlu0 %6375
        %6377 = vadd.xlane.f32.xlu0 %v6325
        %v6378 = vpop.xlane.xlu0 %6377
        %6379 = vadd.xlane.f32.xlu0 %v6326
        %v6380 = vpop.xlane.xlu0 %6379
        %6381 = vadd.xlane.f32.xlu0 %v6327
        %v6382 = vpop.xlane.xlu0 %6381
        %6383 = vadd.xlane.f32.xlu0 %v6328
        %v6384 = vpop.xlane.xlu0 %6383
        %6385 = vadd.xlane.f32.xlu0 %v6329
        %v6386 = vpop.xlane.xlu0 %6385
        %6387 = vadd.xlane.f32.xlu0 %v6330
        %v6388 = vpop.xlane.xlu0 %6387
        %6389 = vadd.xlane.f32.xlu0 %v6331
        %v6390 = vpop.xlane.xlu0 %6389
        %6391 = vadd.xlane.f32.xlu0 %v6332
        %v6392 = vpop.xlane.xlu0 %6391
        %6393 = vadd.xlane.f32.xlu0 %v6333
        %v6394 = vpop.xlane.xlu0 %6393
        %6395 = vadd.xlane.f32.xlu0 %v6334
        %v6396 = vpop.xlane.xlu0 %6395
        %6397 = vadd.xlane.f32.xlu0 %v6335
        %v6398 = vpop.xlane.xlu0 %6397
        %6399 = vadd.xlane.f32.xlu0 %v6336
        %v6400 = vpop.xlane.xlu0 %6399
        %v6401 = vld [vmem:[#allocation8] sm:$0x1]
        %v6403 = vlaneseq
        %v6404 = vshrl.u32 %v6403, 7
        %v6405 = vsub.s32 0, %v6404
        %v6406 = vrot.slane %v6401, %v6405
        %6407 = vset.pattern.permute.xlu0 0
        %6408 = vperm.xlu0 %6407, %v6406
        %v6409 = vpop.permute.xlu0 %6408
        %v6411 = vadd.f32 %v6338, %v6409
        %v6412 = vadd.f32 %v6340, %v6409
        %v6413 = vadd.f32 %v6342, %v6409
        %v6414 = vadd.f32 %v6344, %v6409
        %v6415 = vadd.f32 %v6346, %v6409
        %v6416 = vadd.f32 %v6348, %v6409
        %v6417 = vadd.f32 %v6350, %v6409
        %v6418 = vadd.f32 %v6352, %v6409
        %v6419 = vadd.f32 %v6354, %v6409
        %v6420 = vadd.f32 %v6356, %v6409
        %v6421 = vadd.f32 %v6358, %v6409
        %v6422 = vadd.f32 %v6360, %v6409
        %v6423 = vadd.f32 %v6362, %v6409
        %v6424 = vadd.f32 %v6364, %v6409
        %v6425 = vadd.f32 %v6366, %v6409
        %v6426 = vadd.f32 %v6368, %v6409
        %v6427 = vadd.f32 %v6370, %v6409
        %v6428 = vadd.f32 %v6372, %v6409
        %v6429 = vadd.f32 %v6374, %v6409
        %v6430 = vadd.f32 %v6376, %v6409
        %v6431 = vadd.f32 %v6378, %v6409
        %v6432 = vadd.f32 %v6380, %v6409
        %v6433 = vadd.f32 %v6382, %v6409
        %v6434 = vadd.f32 %v6384, %v6409
        %v6435 = vadd.f32 %v6386, %v6409
        %v6436 = vadd.f32 %v6388, %v6409
        %v6437 = vadd.f32 %v6390, %v6409
        %v6438 = vadd.f32 %v6392, %v6409
        %v6439 = vadd.f32 %v6394, %v6409
        %v6440 = vadd.f32 %v6396, %v6409
        %v6441 = vadd.f32 %v6398, %v6409
        %v6442 = vadd.f32 %v6400, %v6409
        %v6475 = vlaneseq
        %v6476 = vand.u32 %v6475, 127
        %v6477 = vlaneseq
        %v6478 = vshrl.u32 %v6477, 7
        %v6479 = vsub.s32 %v6476, %v6478
        %v6480 = vrot.slane %v6411, %v6479
        %v6481 = vadd.s32 %v6476, 4294967288
        %v6482 = vlaneseq
        %v6483 = vshrl.u32 %v6482, 7
        %v6484 = vsub.s32 %v6481, %v6483
        %v6485 = vrot.slane %v6412, %v6484
        %vm6486 = vcmask 130112
        %v6487 = vsel %vm6486, %v6485, %v6480
        %v6488 = vadd.s32 %v6476, 4294967280
        %v6489 = vlaneseq
        %v6490 = vshrl.u32 %v6489, 7
        %v6491 = vsub.s32 %v6488, %v6490
        %v6492 = vrot.slane %v6413, %v6491
        %vm6493 = vcmask 195712
        %v6494 = vsel %vm6493, %v6492, %v6487
        %v6495 = vadd.s32 %v6476, 4294967272
        %v6496 = vlaneseq
        %v6497 = vshrl.u32 %v6496, 7
        %v6498 = vsub.s32 %v6495, %v6497
        %v6499 = vrot.slane %v6414, %v6498
        %vm6500 = vcmask 261312
        %v6501 = vsel %vm6500, %v6499, %v6494
        %v6502 = vadd.s32 %v6476, 4294967264
        %v6503 = vlaneseq
        %v6504 = vshrl.u32 %v6503, 7
        %v6505 = vsub.s32 %v6502, %v6504
        %v6506 = vrot.slane %v6415, %v6505
        %vm6507 = vcmask 326912
        %v6508 = vsel %vm6507, %v6506, %v6501
        %v6509 = vadd.s32 %v6476, 4294967256
        %v6510 = vlaneseq
        %v6511 = vshrl.u32 %v6510, 7
        %v6512 = vsub.s32 %v6509, %v6511
        %v6513 = vrot.slane %v6416, %v6512
        %vm6514 = vcmask 392512
        %v6515 = vsel %vm6514, %v6513, %v6508
        %v6516 = vadd.s32 %v6476, 4294967248
        %v6517 = vlaneseq
        %v6518 = vshrl.u32 %v6517, 7
        %v6519 = vsub.s32 %v6516, %v6518
        %v6520 = vrot.slane %v6417, %v6519
        %vm6521 = vcmask 458112
        %v6522 = vsel %vm6521, %v6520, %v6515
        %v6523 = vadd.s32 %v6476, 4294967240
        %v6524 = vlaneseq
        %v6525 = vshrl.u32 %v6524, 7
        %v6526 = vsub.s32 %v6523, %v6525
        %v6527 = vrot.slane %v6418, %v6526
        %vm6528 = vcmask 523712
        %v6529 = vsel %vm6528, %v6527, %v6522
        %v6530 = vadd.s32 %v6476, 4294967232
        %v6531 = vlaneseq
        %v6532 = vshrl.u32 %v6531, 7
        %v6533 = vsub.s32 %v6530, %v6532
        %v6534 = vrot.slane %v6419, %v6533
        %vm6535 = vcmask 589312
        %v6536 = vsel %vm6535, %v6534, %v6529
        %v6537 = vadd.s32 %v6476, 4294967224
        %v6538 = vlaneseq
        %v6539 = vshrl.u32 %v6538, 7
        %v6540 = vsub.s32 %v6537, %v6539
        %v6541 = vrot.slane %v6420, %v6540
        %vm6542 = vcmask 654912
        %v6543 = vsel %vm6542, %v6541, %v6536
        %v6544 = vadd.s32 %v6476, 4294967216
        %v6545 = vlaneseq
        %v6546 = vshrl.u32 %v6545, 7
        %v6547 = vsub.s32 %v6544, %v6546
        %v6548 = vrot.slane %v6421, %v6547
        %vm6549 = vcmask 720512
        %v6550 = vsel %vm6549, %v6548, %v6543
        %v6551 = vadd.s32 %v6476, 4294967208
        %v6552 = vlaneseq
        %v6553 = vshrl.u32 %v6552, 7
        %v6554 = vsub.s32 %v6551, %v6553
        %v6555 = vrot.slane %v6422, %v6554
        %vm6556 = vcmask 786112
        %v6557 = vsel %vm6556, %v6555, %v6550
        %v6558 = vadd.s32 %v6476, 4294967200
        %v6559 = vlaneseq
        %v6560 = vshrl.u32 %v6559, 7
        %v6561 = vsub.s32 %v6558, %v6560
        %v6562 = vrot.slane %v6423, %v6561
        %vm6563 = vcmask 851712
        %v6564 = vsel %vm6563, %v6562, %v6557
        %v6565 = vadd.s32 %v6476, 4294967192
        %v6566 = vlaneseq
        %v6567 = vshrl.u32 %v6566, 7
        %v6568 = vsub.s32 %v6565, %v6567
        %v6569 = vrot.slane %v6424, %v6568
        %vm6570 = vcmask 917312
        %v6571 = vsel %vm6570, %v6569, %v6564
        %v6572 = vadd.s32 %v6476, 4294967184
        %v6573 = vlaneseq
        %v6574 = vshrl.u32 %v6573, 7
        %v6575 = vsub.s32 %v6572, %v6574
        %v6576 = vrot.slane %v6425, %v6575
        %vm6577 = vcmask 982912
        %v6578 = vsel %vm6577, %v6576, %v6571
        %v6579 = vadd.s32 %v6476, 4294967176
        %v6580 = vlaneseq
        %v6581 = vshrl.u32 %v6580, 7
        %v6582 = vsub.s32 %v6579, %v6581
        %v6583 = vrot.slane %v6426, %v6582
        %vm6584 = vcmask 1048512
        %v6585 = vsel %vm6584, %v6583, %v6578
        %v6586 = vlaneseq
        %v6587 = vshrl.u32 %v6586, 7
        %v6588 = vsub.s32 %v6476, %v6587
        %v6589 = vrot.slane %v6427, %v6588
        %v6590 = vlaneseq
        %v6591 = vshrl.u32 %v6590, 7
        %v6592 = vsub.s32 %v6481, %v6591
        %v6593 = vrot.slane %v6428, %v6592
        %v6594 = vsel %vm6486, %v6593, %v6589
        %v6595 = vlaneseq
        %v6596 = vshrl.u32 %v6595, 7
        %v6597 = vsub.s32 %v6488, %v6596
        %v6598 = vrot.slane %v6429, %v6597
        %v6599 = vsel %vm6493, %v6598, %v6594
        %v6600 = vlaneseq
        %v6601 = vshrl.u32 %v6600, 7
        %v6602 = vsub.s32 %v6495, %v6601
        %v6603 = vrot.slane %v6430, %v6602
        %v6604 = vsel %vm6500, %v6603, %v6599
        %v6605 = vlaneseq
        %v6606 = vshrl.u32 %v6605, 7
        %v6607 = vsub.s32 %v6502, %v6606
        %v6608 = vrot.slane %v6431, %v6607
        %v6609 = vsel %vm6507, %v6608, %v6604
        %v6610 = vlaneseq
        %v6611 = vshrl.u32 %v6610, 7
        %v6612 = vsub.s32 %v6509, %v6611
        %v6613 = vrot.slane %v6432, %v6612
        %v6614 = vsel %vm6514, %v6613, %v6609
        %v6615 = vlaneseq
        %v6616 = vshrl.u32 %v6615, 7
        %v6617 = vsub.s32 %v6516, %v6616
        %v6618 = vrot.slane %v6433, %v6617
        %v6619 = vsel %vm6521, %v6618, %v6614
        %v6620 = vlaneseq
        %v6621 = vshrl.u32 %v6620, 7
        %v6622 = vsub.s32 %v6523, %v6621
        %v6623 = vrot.slane %v6434, %v6622
        %v6624 = vsel %vm6528, %v6623, %v6619
        %v6625 = vlaneseq
        %v6626 = vshrl.u32 %v6625, 7
        %v6627 = vsub.s32 %v6530, %v6626
        %v6628 = vrot.slane %v6435, %v6627
        %v6629 = vsel %vm6535, %v6628, %v6624
        %v6630 = vlaneseq
        %v6631 = vshrl.u32 %v6630, 7
        %v6632 = vsub.s32 %v6537, %v6631
        %v6633 = vrot.slane %v6436, %v6632
        %v6634 = vsel %vm6542, %v6633, %v6629
        %v6635 = vlaneseq
        %v6636 = vshrl.u32 %v6635, 7
        %v6637 = vsub.s32 %v6544, %v6636
        %v6638 = vrot.slane %v6437, %v6637
        %v6639 = vsel %vm6549, %v6638, %v6634
        %v6640 = vlaneseq
        %v6641 = vshrl.u32 %v6640, 7
        %v6642 = vsub.s32 %v6551, %v6641
        %v6643 = vrot.slane %v6438, %v6642
        %v6644 = vsel %vm6556, %v6643, %v6639
        %v6645 = vlaneseq
        %v6646 = vshrl.u32 %v6645, 7
        %v6647 = vsub.s32 %v6558, %v6646
        %v6648 = vrot.slane %v6439, %v6647
        %v6649 = vsel %vm6563, %v6648, %v6644
        %v6650 = vlaneseq
        %v6651 = vshrl.u32 %v6650, 7
        %v6652 = vsub.s32 %v6565, %v6651
        %v6653 = vrot.slane %v6440, %v6652
        %v6654 = vsel %vm6570, %v6653, %v6649
        %v6655 = vlaneseq
        %v6656 = vshrl.u32 %v6655, 7
        %v6657 = vsub.s32 %v6572, %v6656
        %v6658 = vrot.slane %v6441, %v6657
        %v6659 = vsel %vm6577, %v6658, %v6654
        %v6660 = vlaneseq
        %v6661 = vshrl.u32 %v6660, 7
        %v6662 = vsub.s32 %v6579, %v6661
        %v6663 = vrot.slane %v6442, %v6662
        %v6664 = vsel %vm6584, %v6663, %v6659
        %vm6665 = vcmask 1041409
        %v6666 = vsel %vm6665, %v6664, %v6585
        %6668 = vst [vmem:[%s984] sm:$0x3] %v6666
        %v6669 = vsub.f32 1.0, %v1900
        %v6670 = vmul.f32 %v6669, 1e+08
        %v6672 = vlaneseq
        %v6673 = vshrl.u32 %v6672, 7
        %v6674 = vsub.s32 0, %v6673
        %v6675 = vrot.slane %v6670, %v6674
        %6677 = vbcast.lane.b32.xlu0 %v6675, 256
        %v6678 = vpop.permute.xlu0 %6677
        %s6680 = sor.u32 256, 8
        %6681 = vbcast.lane.b32.xlu0 %v6675, %s6680
        %v6682 = vpop.permute.xlu0 %6681
        %s6684 = sor.u32 256, 16
        %6685 = vbcast.lane.b32.xlu0 %v6675, %s6684
        %v6686 = vpop.permute.xlu0 %6685
        %s6688 = sor.u32 256, 24
        %6689 = vbcast.lane.b32.xlu0 %v6675, %s6688
        %v6690 = vpop.permute.xlu0 %6689
        %s6692 = sor.u32 256, 32
        %6693 = vbcast.lane.b32.xlu0 %v6675, %s6692
        %v6694 = vpop.permute.xlu0 %6693
        %s6696 = sor.u32 256, 40
        %6697 = vbcast.lane.b32.xlu0 %v6675, %s6696
        %v6698 = vpop.permute.xlu0 %6697
        %s6700 = sor.u32 256, 48
        %6701 = vbcast.lane.b32.xlu0 %v6675, %s6700
        %v6702 = vpop.permute.xlu0 %6701
        %s6704 = sor.u32 256, 56
        %6705 = vbcast.lane.b32.xlu0 %v6675, %s6704
        %v6706 = vpop.permute.xlu0 %6705
        %s6708 = sor.u32 256, 64
        %6709 = vbcast.lane.b32.xlu0 %v6675, %s6708
        %v6710 = vpop.permute.xlu0 %6709
        %s6712 = sor.u32 256, 72
        %6713 = vbcast.lane.b32.xlu0 %v6675, %s6712
        %v6714 = vpop.permute.xlu0 %6713
        %s6716 = sor.u32 256, 80
        %6717 = vbcast.lane.b32.xlu0 %v6675, %s6716
        %v6718 = vpop.permute.xlu0 %6717
        %s6720 = sor.u32 256, 88
        %6721 = vbcast.lane.b32.xlu0 %v6675, %s6720
        %v6722 = vpop.permute.xlu0 %6721
        %s6724 = sor.u32 256, 96
        %6725 = vbcast.lane.b32.xlu0 %v6675, %s6724
        %v6726 = vpop.permute.xlu0 %6725
        %s6728 = sor.u32 256, 104
        %6729 = vbcast.lane.b32.xlu0 %v6675, %s6728
        %v6730 = vpop.permute.xlu0 %6729
        %s6732 = sor.u32 256, 112
        %6733 = vbcast.lane.b32.xlu0 %v6675, %s6732
        %v6734 = vpop.permute.xlu0 %6733
        %s6736 = sor.u32 256, 120
        %6737 = vbcast.lane.b32.xlu0 %v6675, %s6736
        %v6738 = vpop.permute.xlu0 %6737
        %v6739 = vlaneseq
        %v6740 = vshrl.u32 %v6739, 7
        %v6741 = vsub.s32 1, %v6740
        %v6742 = vrot.slane %v6670, %v6741
        %6744 = vbcast.lane.b32.xlu0 %v6742, 256
        %v6745 = vpop.permute.xlu0 %6744
        %s6747 = sor.u32 256, 8
        %6748 = vbcast.lane.b32.xlu0 %v6742, %s6747
        %v6749 = vpop.permute.xlu0 %6748
        %s6751 = sor.u32 256, 16
        %6752 = vbcast.lane.b32.xlu0 %v6742, %s6751
        %v6753 = vpop.permute.xlu0 %6752
        %s6755 = sor.u32 256, 24
        %6756 = vbcast.lane.b32.xlu0 %v6742, %s6755
        %v6757 = vpop.permute.xlu0 %6756
        %s6759 = sor.u32 256, 32
        %6760 = vbcast.lane.b32.xlu0 %v6742, %s6759
        %v6761 = vpop.permute.xlu0 %6760
        %s6763 = sor.u32 256, 40
        %6764 = vbcast.lane.b32.xlu0 %v6742, %s6763
        %v6765 = vpop.permute.xlu0 %6764
        %s6767 = sor.u32 256, 48
        %6768 = vbcast.lane.b32.xlu0 %v6742, %s6767
        %v6769 = vpop.permute.xlu0 %6768
        %s6771 = sor.u32 256, 56
        %6772 = vbcast.lane.b32.xlu0 %v6742, %s6771
        %v6773 = vpop.permute.xlu0 %6772
        %s6775 = sor.u32 256, 64
        %6776 = vbcast.lane.b32.xlu0 %v6742, %s6775
        %v6777 = vpop.permute.xlu0 %6776
        %s6779 = sor.u32 256, 72
        %6780 = vbcast.lane.b32.xlu0 %v6742, %s6779
        %v6781 = vpop.permute.xlu0 %6780
        %s6783 = sor.u32 256, 80
        %6784 = vbcast.lane.b32.xlu0 %v6742, %s6783
        %v6785 = vpop.permute.xlu0 %6784
        %s6787 = sor.u32 256, 88
        %6788 = vbcast.lane.b32.xlu0 %v6742, %s6787
        %v6789 = vpop.permute.xlu0 %6788
        %s6791 = sor.u32 256, 96
        %6792 = vbcast.lane.b32.xlu0 %v6742, %s6791
        %v6793 = vpop.permute.xlu0 %6792
        %s6795 = sor.u32 256, 104
        %6796 = vbcast.lane.b32.xlu0 %v6742, %s6795
        %v6797 = vpop.permute.xlu0 %6796
        %s6799 = sor.u32 256, 112
        %6800 = vbcast.lane.b32.xlu0 %v6742, %s6799
        %v6801 = vpop.permute.xlu0 %6800
        %s6803 = sor.u32 256, 120
        %6804 = vbcast.lane.b32.xlu0 %v6742, %s6803
        %v6805 = vpop.permute.xlu0 %6804
        %v6838 = vsub.f32 %v6411, %v6678
        %v6839 = vsub.f32 %v6412, %v6682
        %v6840 = vsub.f32 %v6413, %v6686
        %v6841 = vsub.f32 %v6414, %v6690
        %v6842 = vsub.f32 %v6415, %v6694
        %v6843 = vsub.f32 %v6416, %v6698
        %v6844 = vsub.f32 %v6417, %v6702
        %v6845 = vsub.f32 %v6418, %v6706
        %v6846 = vsub.f32 %v6419, %v6710
        %v6847 = vsub.f32 %v6420, %v6714
        %v6848 = vsub.f32 %v6421, %v6718
        %v6849 = vsub.f32 %v6422, %v6722
        %v6850 = vsub.f32 %v6423, %v6726
        %v6851 = vsub.f32 %v6424, %v6730
        %v6852 = vsub.f32 %v6425, %v6734
        %v6853 = vsub.f32 %v6426, %v6738
        %v6854 = vsub.f32 %v6427, %v6745
        %v6855 = vsub.f32 %v6428, %v6749
        %v6856 = vsub.f32 %v6429, %v6753
        %v6857 = vsub.f32 %v6430, %v6757
        %v6858 = vsub.f32 %v6431, %v6761
        %v6859 = vsub.f32 %v6432, %v6765
        %v6860 = vsub.f32 %v6433, %v6769
        %v6861 = vsub.f32 %v6434, %v6773
        %v6862 = vsub.f32 %v6435, %v6777
        %v6863 = vsub.f32 %v6436, %v6781
        %v6864 = vsub.f32 %v6437, %v6785
        %v6865 = vsub.f32 %v6438, %v6789
        %v6866 = vsub.f32 %v6439, %v6793
        %v6867 = vsub.f32 %v6440, %v6797
        %v6868 = vsub.f32 %v6441, %v6801
        %v6869 = vsub.f32 %v6442, %v6805
        %6902 = vset.pattern.permute.xlu0 0
        %6903 = vperm.xlu0 %6902, %v6838
        %v6904 = vpop.permute.xlu0 %6903
        %6905 = vset.pattern.permute.xlu0 0
        %6906 = vperm.xlu0 %6905, %v6839
        %v6907 = vpop.permute.xlu0 %6906
        %6908 = vset.pattern.permute.xlu0 0
        %6909 = vperm.xlu0 %6908, %v6840
        %v6910 = vpop.permute.xlu0 %6909
        %6911 = vset.pattern.permute.xlu0 0
        %6912 = vperm.xlu0 %6911, %v6841
        %v6913 = vpop.permute.xlu0 %6912
        %6914 = vset.pattern.permute.xlu0 0
        %6915 = vperm.xlu0 %6914, %v6842
        %v6916 = vpop.permute.xlu0 %6915
        %6917 = vset.pattern.permute.xlu0 0
        %6918 = vperm.xlu0 %6917, %v6843
        %v6919 = vpop.permute.xlu0 %6918
        %6920 = vset.pattern.permute.xlu0 0
        %6921 = vperm.xlu0 %6920, %v6844
        %v6922 = vpop.permute.xlu0 %6921
        %6923 = vset.pattern.permute.xlu0 0
        %6924 = vperm.xlu0 %6923, %v6845
        %v6925 = vpop.permute.xlu0 %6924
        %6926 = vset.pattern.permute.xlu0 0
        %6927 = vperm.xlu0 %6926, %v6846
        %v6928 = vpop.permute.xlu0 %6927
        %6929 = vset.pattern.permute.xlu0 0
        %6930 = vperm.xlu0 %6929, %v6847
        %v6931 = vpop.permute.xlu0 %6930
        %6932 = vset.pattern.permute.xlu0 0
        %6933 = vperm.xlu0 %6932, %v6848
        %v6934 = vpop.permute.xlu0 %6933
        %6935 = vset.pattern.permute.xlu0 0
        %6936 = vperm.xlu0 %6935, %v6849
        %v6937 = vpop.permute.xlu0 %6936
        %6938 = vset.pattern.permute.xlu0 0
        %6939 = vperm.xlu0 %6938, %v6850
        %v6940 = vpop.permute.xlu0 %6939
        %6941 = vset.pattern.permute.xlu0 0
        %6942 = vperm.xlu0 %6941, %v6851
        %v6943 = vpop.permute.xlu0 %6942
        %6944 = vset.pattern.permute.xlu0 0
        %6945 = vperm.xlu0 %6944, %v6852
        %v6946 = vpop.permute.xlu0 %6945
        %6947 = vset.pattern.permute.xlu0 0
        %6948 = vperm.xlu0 %6947, %v6853
        %v6949 = vpop.permute.xlu0 %6948
        %6950 = vset.pattern.permute.xlu0 0
        %6951 = vperm.xlu0 %6950, %v6854
        %v6952 = vpop.permute.xlu0 %6951
        %6953 = vset.pattern.permute.xlu0 0
        %6954 = vperm.xlu0 %6953, %v6855
        %v6955 = vpop.permute.xlu0 %6954
        %6956 = vset.pattern.permute.xlu0 0
        %6957 = vperm.xlu0 %6956, %v6856
        %v6958 = vpop.permute.xlu0 %6957
        %6959 = vset.pattern.permute.xlu0 0
        %6960 = vperm.xlu0 %6959, %v6857
        %v6961 = vpop.permute.xlu0 %6960
        %6962 = vset.pattern.permute.xlu0 0
        %6963 = vperm.xlu0 %6962, %v6858
        %v6964 = vpop.permute.xlu0 %6963
        %6965 = vset.pattern.permute.xlu0 0
        %6966 = vperm.xlu0 %6965, %v6859
        %v6967 = vpop.permute.xlu0 %6966
        %6968 = vset.pattern.permute.xlu0 0
        %6969 = vperm.xlu0 %6968, %v6860
        %v6970 = vpop.permute.xlu0 %6969
        %6971 = vset.pattern.permute.xlu0 0
        %6972 = vperm.xlu0 %6971, %v6861
        %v6973 = vpop.permute.xlu0 %6972
        %6974 = vset.pattern.permute.xlu0 0
        %6975 = vperm.xlu0 %6974, %v6862
        %v6976 = vpop.permute.xlu0 %6975
        %6977 = vset.pattern.permute.xlu0 0
        %6978 = vperm.xlu0 %6977, %v6863
        %v6979 = vpop.permute.xlu0 %6978
        %6980 = vset.pattern.permute.xlu0 0
        %6981 = vperm.xlu0 %6980, %v6864
        %v6982 = vpop.permute.xlu0 %6981
        %6983 = vset.pattern.permute.xlu0 0
        %6984 = vperm.xlu0 %6983, %v6865
        %v6985 = vpop.permute.xlu0 %6984
        %6986 = vset.pattern.permute.xlu0 0
        %6987 = vperm.xlu0 %6986, %v6866
        %v6988 = vpop.permute.xlu0 %6987
        %6989 = vset.pattern.permute.xlu0 0
        %6990 = vperm.xlu0 %6989, %v6867
        %v6991 = vpop.permute.xlu0 %6990
        %6992 = vset.pattern.permute.xlu0 0
        %6993 = vperm.xlu0 %6992, %v6868
        %v6994 = vpop.permute.xlu0 %6993
        %6995 = vset.pattern.permute.xlu0 0
        %6996 = vperm.xlu0 %6995, %v6869
        %v6997 = vpop.permute.xlu0 %6996
        %v6998 = vlaneseq
        %v6999 = vshrl.u32 %v6998, 7
        %v7000 = vsub.s32 %v6476, %v6999
        %v7001 = vrot.slane %v6904, %v7000
        %v7002 = vlaneseq
        %v7003 = vshrl.u32 %v7002, 7
        %v7004 = vsub.s32 %v6481, %v7003
        %v7005 = vrot.slane %v6907, %v7004
        %v7006 = vsel %vm6486, %v7005, %v7001
        %v7007 = vlaneseq
        %v7008 = vshrl.u32 %v7007, 7
        %v7009 = vsub.s32 %v6488, %v7008
        %v7010 = vrot.slane %v6910, %v7009
        %v7011 = vsel %vm6493, %v7010, %v7006
        %v7012 = vlaneseq
        %v7013 = vshrl.u32 %v7012, 7
        %v7014 = vsub.s32 %v6495, %v7013
        %v7015 = vrot.slane %v6913, %v7014
        %v7016 = vsel %vm6500, %v7015, %v7011
        %v7017 = vlaneseq
        %v7018 = vshrl.u32 %v7017, 7
        %v7019 = vsub.s32 %v6502, %v7018
        %v7020 = vrot.slane %v6916, %v7019
        %v7021 = vsel %vm6507, %v7020, %v7016
        %v7022 = vlaneseq
        %v7023 = vshrl.u32 %v7022, 7
        %v7024 = vsub.s32 %v6509, %v7023
        %v7025 = vrot.slane %v6919, %v7024
        %v7026 = vsel %vm6514, %v7025, %v7021
        %v7027 = vlaneseq
        %v7028 = vshrl.u32 %v7027, 7
        %v7029 = vsub.s32 %v6516, %v7028
        %v7030 = vrot.slane %v6922, %v7029
        %v7031 = vsel %vm6521, %v7030, %v7026
        %v7032 = vlaneseq
        %v7033 = vshrl.u32 %v7032, 7
        %v7034 = vsub.s32 %v6523, %v7033
        %v7035 = vrot.slane %v6925, %v7034
        %v7036 = vsel %vm6528, %v7035, %v7031
        %v7037 = vlaneseq
        %v7038 = vshrl.u32 %v7037, 7
        %v7039 = vsub.s32 %v6530, %v7038
        %v7040 = vrot.slane %v6928, %v7039
        %v7041 = vsel %vm6535, %v7040, %v7036
        %v7042 = vlaneseq
        %v7043 = vshrl.u32 %v7042, 7
        %v7044 = vsub.s32 %v6537, %v7043
        %v7045 = vrot.slane %v6931, %v7044
        %v7046 = vsel %vm6542, %v7045, %v7041
        %v7047 = vlaneseq
        %v7048 = vshrl.u32 %v7047, 7
        %v7049 = vsub.s32 %v6544, %v7048
        %v7050 = vrot.slane %v6934, %v7049
        %v7051 = vsel %vm6549, %v7050, %v7046
        %v7052 = vlaneseq
        %v7053 = vshrl.u32 %v7052, 7
        %v7054 = vsub.s32 %v6551, %v7053
        %v7055 = vrot.slane %v6937, %v7054
        %v7056 = vsel %vm6556, %v7055, %v7051
        %v7057 = vlaneseq
        %v7058 = vshrl.u32 %v7057, 7
        %v7059 = vsub.s32 %v6558, %v7058
        %v7060 = vrot.slane %v6940, %v7059
        %v7061 = vsel %vm6563, %v7060, %v7056
        %v7062 = vlaneseq
        %v7063 = vshrl.u32 %v7062, 7
        %v7064 = vsub.s32 %v6565, %v7063
        %v7065 = vrot.slane %v6943, %v7064
        %v7066 = vsel %vm6570, %v7065, %v7061
        %v7067 = vlaneseq
        %v7068 = vshrl.u32 %v7067, 7
        %v7069 = vsub.s32 %v6572, %v7068
        %v7070 = vrot.slane %v6946, %v7069
        %v7071 = vsel %vm6577, %v7070, %v7066
        %v7072 = vlaneseq
        %v7073 = vshrl.u32 %v7072, 7
        %v7074 = vsub.s32 %v6579, %v7073
        %v7075 = vrot.slane %v6949, %v7074
        %v7076 = vsel %vm6584, %v7075, %v7071
        %v7077 = vlaneseq
        %v7078 = vshrl.u32 %v7077, 7
        %v7079 = vsub.s32 %v6476, %v7078
        %v7080 = vrot.slane %v6952, %v7079
        %v7081 = vlaneseq
        %v7082 = vshrl.u32 %v7081, 7
        %v7083 = vsub.s32 %v6481, %v7082
        %v7084 = vrot.slane %v6955, %v7083
        %v7085 = vsel %vm6486, %v7084, %v7080
        %v7086 = vlaneseq
        %v7087 = vshrl.u32 %v7086, 7
        %v7088 = vsub.s32 %v6488, %v7087
        %v7089 = vrot.slane %v6958, %v7088
        %v7090 = vsel %vm6493, %v7089, %v7085
        %v7091 = vlaneseq
        %v7092 = vshrl.u32 %v7091, 7
        %v7093 = vsub.s32 %v6495, %v7092
        %v7094 = vrot.slane %v6961, %v7093
        %v7095 = vsel %vm6500, %v7094, %v7090
        %v7096 = vlaneseq
        %v7097 = vshrl.u32 %v7096, 7
        %v7098 = vsub.s32 %v6502, %v7097
        %v7099 = vrot.slane %v6964, %v7098
        %v7100 = vsel %vm6507, %v7099, %v7095
        %v7101 = vlaneseq
        %v7102 = vshrl.u32 %v7101, 7
        %v7103 = vsub.s32 %v6509, %v7102
        %v7104 = vrot.slane %v6967, %v7103
        %v7105 = vsel %vm6514, %v7104, %v7100
        %v7106 = vlaneseq
        %v7107 = vshrl.u32 %v7106, 7
        %v7108 = vsub.s32 %v6516, %v7107
        %v7109 = vrot.slane %v6970, %v7108
        %v7110 = vsel %vm6521, %v7109, %v7105
        %v7111 = vlaneseq
        %v7112 = vshrl.u32 %v7111, 7
        %v7113 = vsub.s32 %v6523, %v7112
        %v7114 = vrot.slane %v6973, %v7113
        %v7115 = vsel %vm6528, %v7114, %v7110
        %v7116 = vlaneseq
        %v7117 = vshrl.u32 %v7116, 7
        %v7118 = vsub.s32 %v6530, %v7117
        %v7119 = vrot.slane %v6976, %v7118
        %v7120 = vsel %vm6535, %v7119, %v7115
        %v7121 = vlaneseq
        %v7122 = vshrl.u32 %v7121, 7
        %v7123 = vsub.s32 %v6537, %v7122
        %v7124 = vrot.slane %v6979, %v7123
        %v7125 = vsel %vm6542, %v7124, %v7120
        %v7126 = vlaneseq
        %v7127 = vshrl.u32 %v7126, 7
        %v7128 = vsub.s32 %v6544, %v7127
        %v7129 = vrot.slane %v6982, %v7128
        %v7130 = vsel %vm6549, %v7129, %v7125
        %v7131 = vlaneseq
        %v7132 = vshrl.u32 %v7131, 7
        %v7133 = vsub.s32 %v6551, %v7132
        %v7134 = vrot.slane %v6985, %v7133
        %v7135 = vsel %vm6556, %v7134, %v7130
        %v7136 = vlaneseq
        %v7137 = vshrl.u32 %v7136, 7
        %v7138 = vsub.s32 %v6558, %v7137
        %v7139 = vrot.slane %v6988, %v7138
        %v7140 = vsel %vm6563, %v7139, %v7135
        %v7141 = vlaneseq
        %v7142 = vshrl.u32 %v7141, 7
        %v7143 = vsub.s32 %v6565, %v7142
        %v7144 = vrot.slane %v6991, %v7143
        %v7145 = vsel %vm6570, %v7144, %v7140
        %v7146 = vlaneseq
        %v7147 = vshrl.u32 %v7146, 7
        %v7148 = vsub.s32 %v6572, %v7147
        %v7149 = vrot.slane %v6994, %v7148
        %v7150 = vsel %vm6577, %v7149, %v7145
        %v7151 = vlaneseq
        %v7152 = vshrl.u32 %v7151, 7
        %v7153 = vsub.s32 %v6579, %v7152
        %v7154 = vrot.slane %v6997, %v7153
        %v7155 = vsel %vm6584, %v7154, %v7150
        %v7156 = vsel %vm6665, %v7155, %v7076
        %vm7158 = vcmask 1041408
        %v7159 = vsel %vm7158, %v7156, -inf
        %7160 = vmax.xlane.f32.xlu0 %v7159
        %v7161 = vpop.xlane.xlu0 %7160
        %v7163 = vlaneseq
        %v7164 = vshrl.u32 %v7163, 7
        %v7165 = vsub.s32 0, %v7164
        %v7166 = vrot.slane %v7161, %v7165
        %v7167 = vlaneseq
        %v7168 = vshrl.u32 %v7167, 7
        %v7169 = vsub.s32 1, %v7168
        %v7170 = vrot.slane %v7161, %v7169
        %v7173 = vsub.f32 %v6838, %v7166
        %v7174 = vsub.f32 %v6839, %v7166
        %v7175 = vsub.f32 %v6840, %v7166
        %v7176 = vsub.f32 %v6841, %v7166
        %v7177 = vsub.f32 %v6842, %v7166
        %v7178 = vsub.f32 %v6843, %v7166
        %v7179 = vsub.f32 %v6844, %v7166
        %v7180 = vsub.f32 %v6845, %v7166
        %v7181 = vsub.f32 %v6846, %v7166
        %v7182 = vsub.f32 %v6847, %v7166
        %v7183 = vsub.f32 %v6848, %v7166
        %v7184 = vsub.f32 %v6849, %v7166
        %v7185 = vsub.f32 %v6850, %v7166
        %v7186 = vsub.f32 %v6851, %v7166
        %v7187 = vsub.f32 %v6852, %v7166
        %v7188 = vsub.f32 %v6853, %v7166
        %v7189 = vsub.f32 %v6854, %v7170
        %v7190 = vsub.f32 %v6855, %v7170
        %v7191 = vsub.f32 %v6856, %v7170
        %v7192 = vsub.f32 %v6857, %v7170
        %v7193 = vsub.f32 %v6858, %v7170
        %v7194 = vsub.f32 %v6859, %v7170
        %v7195 = vsub.f32 %v6860, %v7170
        %v7196 = vsub.f32 %v6861, %v7170
        %v7197 = vsub.f32 %v6862, %v7170
        %v7198 = vsub.f32 %v6863, %v7170
        %v7199 = vsub.f32 %v6864, %v7170
        %v7200 = vsub.f32 %v6865, %v7170
        %v7201 = vsub.f32 %v6866, %v7170
        %v7202 = vsub.f32 %v6867, %v7170
        %v7203 = vsub.f32 %v6868, %v7170
        %v7204 = vsub.f32 %v6869, %v7170
        %v7205 = vmul.f32 %v7173, 1.442695
        %v7206 = vpow.pop %v7205
        %v7207 = vmul.f32 %v7174, 1.442695
        %v7208 = vpow.pop %v7207
        %v7209 = vmul.f32 %v7175, 1.442695
        %v7210 = vpow.pop %v7209
        %v7211 = vmul.f32 %v7176, 1.442695
        %v7212 = vpow.pop %v7211
        %v7213 = vmul.f32 %v7177, 1.442695
        %v7214 = vpow.pop %v7213
        %v7215 = vmul.f32 %v7178, 1.442695
        %v7216 = vpow.pop %v7215
        %v7217 = vmul.f32 %v7179, 1.442695
        %v7218 = vpow.pop %v7217
        %v7219 = vmul.f32 %v7180, 1.442695
        %v7220 = vpow.pop %v7219
        %v7221 = vmul.f32 %v7181, 1.442695
        %v7222 = vpow.pop %v7221
        %v7223 = vmul.f32 %v7182, 1.442695
        %v7224 = vpow.pop %v7223
        %v7225 = vmul.f32 %v7183, 1.442695
        %v7226 = vpow.pop %v7225
        %v7227 = vmul.f32 %v7184, 1.442695
        %v7228 = vpow.pop %v7227
        %v7229 = vmul.f32 %v7185, 1.442695
        %v7230 = vpow.pop %v7229
        %v7231 = vmul.f32 %v7186, 1.442695
        %v7232 = vpow.pop %v7231
        %v7233 = vmul.f32 %v7187, 1.442695
        %v7234 = vpow.pop %v7233
        %v7235 = vmul.f32 %v7188, 1.442695
        %v7236 = vpow.pop %v7235
        %v7237 = vmul.f32 %v7189, 1.442695
        %v7238 = vpow.pop %v7237
        %v7239 = vmul.f32 %v7190, 1.442695
        %v7240 = vpow.pop %v7239
        %v7241 = vmul.f32 %v7191, 1.442695
        %v7242 = vpow.pop %v7241
        %v7243 = vmul.f32 %v7192, 1.442695
        %v7244 = vpow.pop %v7243
        %v7245 = vmul.f32 %v7193, 1.442695
        %v7246 = vpow.pop %v7245
        %v7247 = vmul.f32 %v7194, 1.442695
        %v7248 = vpow.pop %v7247
        %v7249 = vmul.f32 %v7195, 1.442695
        %v7250 = vpow.pop %v7249
        %v7251 = vmul.f32 %v7196, 1.442695
        %v7252 = vpow.pop %v7251
        %v7253 = vmul.f32 %v7197, 1.442695
        %v7254 = vpow.pop %v7253
        %v7255 = vmul.f32 %v7198, 1.442695
        %v7256 = vpow.pop %v7255
        %v7257 = vmul.f32 %v7199, 1.442695
        %v7258 = vpow.pop %v7257
        %v7259 = vmul.f32 %v7200, 1.442695
        %v7260 = vpow.pop %v7259
        %v7261 = vmul.f32 %v7201, 1.442695
        %v7262 = vpow.pop %v7261
        %v7263 = vmul.f32 %v7202, 1.442695
        %v7264 = vpow.pop %v7263
        %v7265 = vmul.f32 %v7203, 1.442695
        %v7266 = vpow.pop %v7265
        %v7267 = vmul.f32 %v7204, 1.442695
        %v7268 = vpow.pop %v7267
        %7301 = vset.pattern.permute.xlu0 0
        %7302 = vperm.xlu0 %7301, %v7206
        %v7303 = vpop.permute.xlu0 %7302
        %7304 = vset.pattern.permute.xlu0 0
        %7305 = vperm.xlu0 %7304, %v7208
        %v7306 = vpop.permute.xlu0 %7305
        %7307 = vset.pattern.permute.xlu0 0
        %7308 = vperm.xlu0 %7307, %v7210
        %v7309 = vpop.permute.xlu0 %7308
        %7310 = vset.pattern.permute.xlu0 0
        %7311 = vperm.xlu0 %7310, %v7212
        %v7312 = vpop.permute.xlu0 %7311
        %7313 = vset.pattern.permute.xlu0 0
        %7314 = vperm.xlu0 %7313, %v7214
        %v7315 = vpop.permute.xlu0 %7314
        %7316 = vset.pattern.permute.xlu0 0
        %7317 = vperm.xlu0 %7316, %v7216
        %v7318 = vpop.permute.xlu0 %7317
        %7319 = vset.pattern.permute.xlu0 0
        %7320 = vperm.xlu0 %7319, %v7218
        %v7321 = vpop.permute.xlu0 %7320
        %7322 = vset.pattern.permute.xlu0 0
        %7323 = vperm.xlu0 %7322, %v7220
        %v7324 = vpop.permute.xlu0 %7323
        %7325 = vset.pattern.permute.xlu0 0
        %7326 = vperm.xlu0 %7325, %v7222
        %v7327 = vpop.permute.xlu0 %7326
        %7328 = vset.pattern.permute.xlu0 0
        %7329 = vperm.xlu0 %7328, %v7224
        %v7330 = vpop.permute.xlu0 %7329
        %7331 = vset.pattern.permute.xlu0 0
        %7332 = vperm.xlu0 %7331, %v7226
        %v7333 = vpop.permute.xlu0 %7332
        %7334 = vset.pattern.permute.xlu0 0
        %7335 = vperm.xlu0 %7334, %v7228
        %v7336 = vpop.permute.xlu0 %7335
        %7337 = vset.pattern.permute.xlu0 0
        %7338 = vperm.xlu0 %7337, %v7230
        %v7339 = vpop.permute.xlu0 %7338
        %7340 = vset.pattern.permute.xlu0 0
        %7341 = vperm.xlu0 %7340, %v7232
        %v7342 = vpop.permute.xlu0 %7341
        %7343 = vset.pattern.permute.xlu0 0
        %7344 = vperm.xlu0 %7343, %v7234
        %v7345 = vpop.permute.xlu0 %7344
        %7346 = vset.pattern.permute.xlu0 0
        %7347 = vperm.xlu0 %7346, %v7236
        %v7348 = vpop.permute.xlu0 %7347
        %7349 = vset.pattern.permute.xlu0 0
        %7350 = vperm.xlu0 %7349, %v7238
        %v7351 = vpop.permute.xlu0 %7350
        %7352 = vset.pattern.permute.xlu0 0
        %7353 = vperm.xlu0 %7352, %v7240
        %v7354 = vpop.permute.xlu0 %7353
        %7355 = vset.pattern.permute.xlu0 0
        %7356 = vperm.xlu0 %7355, %v7242
        %v7357 = vpop.permute.xlu0 %7356
        %7358 = vset.pattern.permute.xlu0 0
        %7359 = vperm.xlu0 %7358, %v7244
        %v7360 = vpop.permute.xlu0 %7359
        %7361 = vset.pattern.permute.xlu0 0
        %7362 = vperm.xlu0 %7361, %v7246
        %v7363 = vpop.permute.xlu0 %7362
        %7364 = vset.pattern.permute.xlu0 0
        %7365 = vperm.xlu0 %7364, %v7248
        %v7366 = vpop.permute.xlu0 %7365
        %7367 = vset.pattern.permute.xlu0 0
        %7368 = vperm.xlu0 %7367, %v7250
        %v7369 = vpop.permute.xlu0 %7368
        %7370 = vset.pattern.permute.xlu0 0
        %7371 = vperm.xlu0 %7370, %v7252
        %v7372 = vpop.permute.xlu0 %7371
        %7373 = vset.pattern.permute.xlu0 0
        %7374 = vperm.xlu0 %7373, %v7254
        %v7375 = vpop.permute.xlu0 %7374
        %7376 = vset.pattern.permute.xlu0 0
        %7377 = vperm.xlu0 %7376, %v7256
        %v7378 = vpop.permute.xlu0 %7377
        %7379 = vset.pattern.permute.xlu0 0
        %7380 = vperm.xlu0 %7379, %v7258
        %v7381 = vpop.permute.xlu0 %7380
        %7382 = vset.pattern.permute.xlu0 0
        %7383 = vperm.xlu0 %7382, %v7260
        %v7384 = vpop.permute.xlu0 %7383
        %7385 = vset.pattern.permute.xlu0 0
        %7386 = vperm.xlu0 %7385, %v7262
        %v7387 = vpop.permute.xlu0 %7386
        %7388 = vset.pattern.permute.xlu0 0
        %7389 = vperm.xlu0 %7388, %v7264
        %v7390 = vpop.permute.xlu0 %7389
        %7391 = vset.pattern.permute.xlu0 0
        %7392 = vperm.xlu0 %7391, %v7266
        %v7393 = vpop.permute.xlu0 %7392
        %7394 = vset.pattern.permute.xlu0 0
        %7395 = vperm.xlu0 %7394, %v7268
        %v7396 = vpop.permute.xlu0 %7395
        %v7397 = vlaneseq
        %v7398 = vshrl.u32 %v7397, 7
        %v7399 = vsub.s32 %v6476, %v7398
        %v7400 = vrot.slane %v7303, %v7399
        %v7401 = vlaneseq
        %v7402 = vshrl.u32 %v7401, 7
        %v7403 = vsub.s32 %v6481, %v7402
        %v7404 = vrot.slane %v7306, %v7403
        %v7405 = vsel %vm6486, %v7404, %v7400
        %v7406 = vlaneseq
        %v7407 = vshrl.u32 %v7406, 7
        %v7408 = vsub.s32 %v6488, %v7407
        %v7409 = vrot.slane %v7309, %v7408
        %v7410 = vsel %vm6493, %v7409, %v7405
        %v7411 = vlaneseq
        %v7412 = vshrl.u32 %v7411, 7
        %v7413 = vsub.s32 %v6495, %v7412
        %v7414 = vrot.slane %v7312, %v7413
        %v7415 = vsel %vm6500, %v7414, %v7410
        %v7416 = vlaneseq
        %v7417 = vshrl.u32 %v7416, 7
        %v7418 = vsub.s32 %v6502, %v7417
        %v7419 = vrot.slane %v7315, %v7418
        %v7420 = vsel %vm6507, %v7419, %v7415
        %v7421 = vlaneseq
        %v7422 = vshrl.u32 %v7421, 7
        %v7423 = vsub.s32 %v6509, %v7422
        %v7424 = vrot.slane %v7318, %v7423
        %v7425 = vsel %vm6514, %v7424, %v7420
        %v7426 = vlaneseq
        %v7427 = vshrl.u32 %v7426, 7
        %v7428 = vsub.s32 %v6516, %v7427
        %v7429 = vrot.slane %v7321, %v7428
        %v7430 = vsel %vm6521, %v7429, %v7425
        %v7431 = vlaneseq
        %v7432 = vshrl.u32 %v7431, 7
        %v7433 = vsub.s32 %v6523, %v7432
        %v7434 = vrot.slane %v7324, %v7433
        %v7435 = vsel %vm6528, %v7434, %v7430
        %v7436 = vlaneseq
        %v7437 = vshrl.u32 %v7436, 7
        %v7438 = vsub.s32 %v6530, %v7437
        %v7439 = vrot.slane %v7327, %v7438
        %v7440 = vsel %vm6535, %v7439, %v7435
        %v7441 = vlaneseq
        %v7442 = vshrl.u32 %v7441, 7
        %v7443 = vsub.s32 %v6537, %v7442
        %v7444 = vrot.slane %v7330, %v7443
        %v7445 = vsel %vm6542, %v7444, %v7440
        %v7446 = vlaneseq
        %v7447 = vshrl.u32 %v7446, 7
        %v7448 = vsub.s32 %v6544, %v7447
        %v7449 = vrot.slane %v7333, %v7448
        %v7450 = vsel %vm6549, %v7449, %v7445
        %v7451 = vlaneseq
        %v7452 = vshrl.u32 %v7451, 7
        %v7453 = vsub.s32 %v6551, %v7452
        %v7454 = vrot.slane %v7336, %v7453
        %v7455 = vsel %vm6556, %v7454, %v7450
        %v7456 = vlaneseq
        %v7457 = vshrl.u32 %v7456, 7
        %v7458 = vsub.s32 %v6558, %v7457
        %v7459 = vrot.slane %v7339, %v7458
        %v7460 = vsel %vm6563, %v7459, %v7455
        %v7461 = vlaneseq
        %v7462 = vshrl.u32 %v7461, 7
        %v7463 = vsub.s32 %v6565, %v7462
        %v7464 = vrot.slane %v7342, %v7463
        %v7465 = vsel %vm6570, %v7464, %v7460
        %v7466 = vlaneseq
        %v7467 = vshrl.u32 %v7466, 7
        %v7468 = vsub.s32 %v6572, %v7467
        %v7469 = vrot.slane %v7345, %v7468
        %v7470 = vsel %vm6577, %v7469, %v7465
        %v7471 = vlaneseq
        %v7472 = vshrl.u32 %v7471, 7
        %v7473 = vsub.s32 %v6579, %v7472
        %v7474 = vrot.slane %v7348, %v7473
        %v7475 = vsel %vm6584, %v7474, %v7470
        %v7476 = vlaneseq
        %v7477 = vshrl.u32 %v7476, 7
        %v7478 = vsub.s32 %v6476, %v7477
        %v7479 = vrot.slane %v7351, %v7478
        %v7480 = vlaneseq
        %v7481 = vshrl.u32 %v7480, 7
        %v7482 = vsub.s32 %v6481, %v7481
        %v7483 = vrot.slane %v7354, %v7482
        %v7484 = vsel %vm6486, %v7483, %v7479
        %v7485 = vlaneseq
        %v7486 = vshrl.u32 %v7485, 7
        %v7487 = vsub.s32 %v6488, %v7486
        %v7488 = vrot.slane %v7357, %v7487
        %v7489 = vsel %vm6493, %v7488, %v7484
        %v7490 = vlaneseq
        %v7491 = vshrl.u32 %v7490, 7
        %v7492 = vsub.s32 %v6495, %v7491
        %v7493 = vrot.slane %v7360, %v7492
        %v7494 = vsel %vm6500, %v7493, %v7489
        %v7495 = vlaneseq
        %v7496 = vshrl.u32 %v7495, 7
        %v7497 = vsub.s32 %v6502, %v7496
        %v7498 = vrot.slane %v7363, %v7497
        %v7499 = vsel %vm6507, %v7498, %v7494
        %v7500 = vlaneseq
        %v7501 = vshrl.u32 %v7500, 7
        %v7502 = vsub.s32 %v6509, %v7501
        %v7503 = vrot.slane %v7366, %v7502
        %v7504 = vsel %vm6514, %v7503, %v7499
        %v7505 = vlaneseq
        %v7506 = vshrl.u32 %v7505, 7
        %v7507 = vsub.s32 %v6516, %v7506
        %v7508 = vrot.slane %v7369, %v7507
        %v7509 = vsel %vm6521, %v7508, %v7504
        %v7510 = vlaneseq
        %v7511 = vshrl.u32 %v7510, 7
        %v7512 = vsub.s32 %v6523, %v7511
        %v7513 = vrot.slane %v7372, %v7512
        %v7514 = vsel %vm6528, %v7513, %v7509
        %v7515 = vlaneseq
        %v7516 = vshrl.u32 %v7515, 7
        %v7517 = vsub.s32 %v6530, %v7516
        %v7518 = vrot.slane %v7375, %v7517
        %v7519 = vsel %vm6535, %v7518, %v7514
        %v7520 = vlaneseq
        %v7521 = vshrl.u32 %v7520, 7
        %v7522 = vsub.s32 %v6537, %v7521
        %v7523 = vrot.slane %v7378, %v7522
        %v7524 = vsel %vm6542, %v7523, %v7519
        %v7525 = vlaneseq
        %v7526 = vshrl.u32 %v7525, 7
        %v7527 = vsub.s32 %v6544, %v7526
        %v7528 = vrot.slane %v7381, %v7527
        %v7529 = vsel %vm6549, %v7528, %v7524
        %v7530 = vlaneseq
        %v7531 = vshrl.u32 %v7530, 7
        %v7532 = vsub.s32 %v6551, %v7531
        %v7533 = vrot.slane %v7384, %v7532
        %v7534 = vsel %vm6556, %v7533, %v7529
        %v7535 = vlaneseq
        %v7536 = vshrl.u32 %v7535, 7
        %v7537 = vsub.s32 %v6558, %v7536
        %v7538 = vrot.slane %v7387, %v7537
        %v7539 = vsel %vm6563, %v7538, %v7534
        %v7540 = vlaneseq
        %v7541 = vshrl.u32 %v7540, 7
        %v7542 = vsub.s32 %v6565, %v7541
        %v7543 = vrot.slane %v7390, %v7542
        %v7544 = vsel %vm6570, %v7543, %v7539
        %v7545 = vlaneseq
        %v7546 = vshrl.u32 %v7545, 7
        %v7547 = vsub.s32 %v6572, %v7546
        %v7548 = vrot.slane %v7393, %v7547
        %v7549 = vsel %vm6577, %v7548, %v7544
        %v7550 = vlaneseq
        %v7551 = vshrl.u32 %v7550, 7
        %v7552 = vsub.s32 %v6579, %v7551
        %v7553 = vrot.slane %v7396, %v7552
        %v7554 = vsel %vm6584, %v7553, %v7549
        %v7555 = vsel %vm6665, %v7554, %v7475
        %v7557 = vsel %vm7158, %v7555, 0.0
        %7558 = vadd.xlane.f32.xlu0 %v7557
        %v7559 = vpop.xlane.xlu0 %7558
        %v7560 = vrcp.pop %v7559
        %v7562 = vlaneseq
        %v7563 = vshrl.u32 %v7562, 7
        %v7564 = vsub.s32 0, %v7563
        %v7565 = vrot.slane %v7560, %v7564
        %v7566 = vlaneseq
        %v7567 = vshrl.u32 %v7566, 7
        %v7568 = vsub.s32 1, %v7567
        %v7569 = vrot.slane %v7560, %v7568
        %v7572 = vmul.f32 %v7206, %v7565
        %v7573 = vmul.f32 %v7208, %v7565
        %v7574 = vmul.f32 %v7210, %v7565
        %v7575 = vmul.f32 %v7212, %v7565
        %v7576 = vmul.f32 %v7214, %v7565
        %v7577 = vmul.f32 %v7216, %v7565
        %v7578 = vmul.f32 %v7218, %v7565
        %v7579 = vmul.f32 %v7220, %v7565
        %v7580 = vmul.f32 %v7222, %v7565
        %v7581 = vmul.f32 %v7224, %v7565
        %v7582 = vmul.f32 %v7226, %v7565
        %v7583 = vmul.f32 %v7228, %v7565
        %v7584 = vmul.f32 %v7230, %v7565
        %v7585 = vmul.f32 %v7232, %v7565
        %v7586 = vmul.f32 %v7234, %v7565
        %v7587 = vmul.f32 %v7236, %v7565
        %v7588 = vmul.f32 %v7238, %v7569
        %v7589 = vmul.f32 %v7240, %v7569
        %v7590 = vmul.f32 %v7242, %v7569
        %v7591 = vmul.f32 %v7244, %v7569
        %v7592 = vmul.f32 %v7246, %v7569
        %v7593 = vmul.f32 %v7248, %v7569
        %v7594 = vmul.f32 %v7250, %v7569
        %v7595 = vmul.f32 %v7252, %v7569
        %v7596 = vmul.f32 %v7254, %v7569
        %v7597 = vmul.f32 %v7256, %v7569
        %v7598 = vmul.f32 %v7258, %v7569
        %v7599 = vmul.f32 %v7260, %v7569
        %v7600 = vmul.f32 %v7262, %v7569
        %v7601 = vmul.f32 %v7264, %v7569
        %v7602 = vmul.f32 %v7266, %v7569
        %v7603 = vmul.f32 %v7268, %v7569
        %7636 = vset.pattern.permute.xlu0 0
        %7637 = vperm.xlu0 %7636, %v7572
        %v7638 = vpop.permute.xlu0 %7637
        %7639 = vset.pattern.permute.xlu0 0
        %7640 = vperm.xlu0 %7639, %v7573
        %v7641 = vpop.permute.xlu0 %7640
        %7642 = vset.pattern.permute.xlu0 0
        %7643 = vperm.xlu0 %7642, %v7574
        %v7644 = vpop.permute.xlu0 %7643
        %7645 = vset.pattern.permute.xlu0 0
        %7646 = vperm.xlu0 %7645, %v7575
        %v7647 = vpop.permute.xlu0 %7646
        %7648 = vset.pattern.permute.xlu0 0
        %7649 = vperm.xlu0 %7648, %v7576
        %v7650 = vpop.permute.xlu0 %7649
        %7651 = vset.pattern.permute.xlu0 0
        %7652 = vperm.xlu0 %7651, %v7577
        %v7653 = vpop.permute.xlu0 %7652
        %7654 = vset.pattern.permute.xlu0 0
        %7655 = vperm.xlu0 %7654, %v7578
        %v7656 = vpop.permute.xlu0 %7655
        %7657 = vset.pattern.permute.xlu0 0
        %7658 = vperm.xlu0 %7657, %v7579
        %v7659 = vpop.permute.xlu0 %7658
        %7660 = vset.pattern.permute.xlu0 0
        %7661 = vperm.xlu0 %7660, %v7580
        %v7662 = vpop.permute.xlu0 %7661
        %7663 = vset.pattern.permute.xlu0 0
        %7664 = vperm.xlu0 %7663, %v7581
        %v7665 = vpop.permute.xlu0 %7664
        %7666 = vset.pattern.permute.xlu0 0
        %7667 = vperm.xlu0 %7666, %v7582
        %v7668 = vpop.permute.xlu0 %7667
        %7669 = vset.pattern.permute.xlu0 0
        %7670 = vperm.xlu0 %7669, %v7583
        %v7671 = vpop.permute.xlu0 %7670
        %7672 = vset.pattern.permute.xlu0 0
        %7673 = vperm.xlu0 %7672, %v7584
        %v7674 = vpop.permute.xlu0 %7673
        %7675 = vset.pattern.permute.xlu0 0
        %7676 = vperm.xlu0 %7675, %v7585
        %v7677 = vpop.permute.xlu0 %7676
        %7678 = vset.pattern.permute.xlu0 0
        %7679 = vperm.xlu0 %7678, %v7586
        %v7680 = vpop.permute.xlu0 %7679
        %7681 = vset.pattern.permute.xlu0 0
        %7682 = vperm.xlu0 %7681, %v7587
        %v7683 = vpop.permute.xlu0 %7682
        %7684 = vset.pattern.permute.xlu0 0
        %7685 = vperm.xlu0 %7684, %v7588
        %v7686 = vpop.permute.xlu0 %7685
        %7687 = vset.pattern.permute.xlu0 0
        %7688 = vperm.xlu0 %7687, %v7589
        %v7689 = vpop.permute.xlu0 %7688
        %7690 = vset.pattern.permute.xlu0 0
        %7691 = vperm.xlu0 %7690, %v7590
        %v7692 = vpop.permute.xlu0 %7691
        %7693 = vset.pattern.permute.xlu0 0
        %7694 = vperm.xlu0 %7693, %v7591
        %v7695 = vpop.permute.xlu0 %7694
        %7696 = vset.pattern.permute.xlu0 0
        %7697 = vperm.xlu0 %7696, %v7592
        %v7698 = vpop.permute.xlu0 %7697
        %7699 = vset.pattern.permute.xlu0 0
        %7700 = vperm.xlu0 %7699, %v7593
        %v7701 = vpop.permute.xlu0 %7700
        %7702 = vset.pattern.permute.xlu0 0
        %7703 = vperm.xlu0 %7702, %v7594
        %v7704 = vpop.permute.xlu0 %7703
        %7705 = vset.pattern.permute.xlu0 0
        %7706 = vperm.xlu0 %7705, %v7595
        %v7707 = vpop.permute.xlu0 %7706
        %7708 = vset.pattern.permute.xlu0 0
        %7709 = vperm.xlu0 %7708, %v7596
        %v7710 = vpop.permute.xlu0 %7709
        %7711 = vset.pattern.permute.xlu0 0
        %7712 = vperm.xlu0 %7711, %v7597
        %v7713 = vpop.permute.xlu0 %7712
        %7714 = vset.pattern.permute.xlu0 0
        %7715 = vperm.xlu0 %7714, %v7598
        %v7716 = vpop.permute.xlu0 %7715
        %7717 = vset.pattern.permute.xlu0 0
        %7718 = vperm.xlu0 %7717, %v7599
        %v7719 = vpop.permute.xlu0 %7718
        %7720 = vset.pattern.permute.xlu0 0
        %7721 = vperm.xlu0 %7720, %v7600
        %v7722 = vpop.permute.xlu0 %7721
        %7723 = vset.pattern.permute.xlu0 0
        %7724 = vperm.xlu0 %7723, %v7601
        %v7725 = vpop.permute.xlu0 %7724
        %7726 = vset.pattern.permute.xlu0 0
        %7727 = vperm.xlu0 %7726, %v7602
        %v7728 = vpop.permute.xlu0 %7727
        %7729 = vset.pattern.permute.xlu0 0
        %7730 = vperm.xlu0 %7729, %v7603
        %v7731 = vpop.permute.xlu0 %7730
        %v7732 = vlaneseq
        %v7733 = vshrl.u32 %v7732, 7
        %v7734 = vsub.s32 %v6476, %v7733
        %v7735 = vrot.slane %v7638, %v7734
        %v7736 = vlaneseq
        %v7737 = vshrl.u32 %v7736, 7
        %v7738 = vsub.s32 %v6481, %v7737
        %v7739 = vrot.slane %v7641, %v7738
        %v7740 = vsel %vm6486, %v7739, %v7735
        %v7741 = vlaneseq
        %v7742 = vshrl.u32 %v7741, 7
        %v7743 = vsub.s32 %v6488, %v7742
        %v7744 = vrot.slane %v7644, %v7743
        %v7745 = vsel %vm6493, %v7744, %v7740
        %v7746 = vlaneseq
        %v7747 = vshrl.u32 %v7746, 7
        %v7748 = vsub.s32 %v6495, %v7747
        %v7749 = vrot.slane %v7647, %v7748
        %v7750 = vsel %vm6500, %v7749, %v7745
        %v7751 = vlaneseq
        %v7752 = vshrl.u32 %v7751, 7
        %v7753 = vsub.s32 %v6502, %v7752
        %v7754 = vrot.slane %v7650, %v7753
        %v7755 = vsel %vm6507, %v7754, %v7750
        %v7756 = vlaneseq
        %v7757 = vshrl.u32 %v7756, 7
        %v7758 = vsub.s32 %v6509, %v7757
        %v7759 = vrot.slane %v7653, %v7758
        %v7760 = vsel %vm6514, %v7759, %v7755
        %v7761 = vlaneseq
        %v7762 = vshrl.u32 %v7761, 7
        %v7763 = vsub.s32 %v6516, %v7762
        %v7764 = vrot.slane %v7656, %v7763
        %v7765 = vsel %vm6521, %v7764, %v7760
        %v7766 = vlaneseq
        %v7767 = vshrl.u32 %v7766, 7
        %v7768 = vsub.s32 %v6523, %v7767
        %v7769 = vrot.slane %v7659, %v7768
        %v7770 = vsel %vm6528, %v7769, %v7765
        %v7771 = vlaneseq
        %v7772 = vshrl.u32 %v7771, 7
        %v7773 = vsub.s32 %v6530, %v7772
        %v7774 = vrot.slane %v7662, %v7773
        %v7775 = vsel %vm6535, %v7774, %v7770
        %v7776 = vlaneseq
        %v7777 = vshrl.u32 %v7776, 7
        %v7778 = vsub.s32 %v6537, %v7777
        %v7779 = vrot.slane %v7665, %v7778
        %v7780 = vsel %vm6542, %v7779, %v7775
        %v7781 = vlaneseq
        %v7782 = vshrl.u32 %v7781, 7
        %v7783 = vsub.s32 %v6544, %v7782
        %v7784 = vrot.slane %v7668, %v7783
        %v7785 = vsel %vm6549, %v7784, %v7780
        %v7786 = vlaneseq
        %v7787 = vshrl.u32 %v7786, 7
        %v7788 = vsub.s32 %v6551, %v7787
        %v7789 = vrot.slane %v7671, %v7788
        %v7790 = vsel %vm6556, %v7789, %v7785
        %v7791 = vlaneseq
        %v7792 = vshrl.u32 %v7791, 7
        %v7793 = vsub.s32 %v6558, %v7792
        %v7794 = vrot.slane %v7674, %v7793
        %v7795 = vsel %vm6563, %v7794, %v7790
        %v7796 = vlaneseq
        %v7797 = vshrl.u32 %v7796, 7
        %v7798 = vsub.s32 %v6565, %v7797
        %v7799 = vrot.slane %v7677, %v7798
        %v7800 = vsel %vm6570, %v7799, %v7795
        %v7801 = vlaneseq
        %v7802 = vshrl.u32 %v7801, 7
        %v7803 = vsub.s32 %v6572, %v7802
        %v7804 = vrot.slane %v7680, %v7803
        %v7805 = vsel %vm6577, %v7804, %v7800
        %v7806 = vlaneseq
        %v7807 = vshrl.u32 %v7806, 7
        %v7808 = vsub.s32 %v6579, %v7807
        %v7809 = vrot.slane %v7683, %v7808
        %v7810 = vsel %vm6584, %v7809, %v7805
        %v7811 = vlaneseq
        %v7812 = vshrl.u32 %v7811, 7
        %v7813 = vsub.s32 %v6476, %v7812
        %v7814 = vrot.slane %v7686, %v7813
        %v7815 = vlaneseq
        %v7816 = vshrl.u32 %v7815, 7
        %v7817 = vsub.s32 %v6481, %v7816
        %v7818 = vrot.slane %v7689, %v7817
        %v7819 = vsel %vm6486, %v7818, %v7814
        %v7820 = vlaneseq
        %v7821 = vshrl.u32 %v7820, 7
        %v7822 = vsub.s32 %v6488, %v7821
        %v7823 = vrot.slane %v7692, %v7822
        %v7824 = vsel %vm6493, %v7823, %v7819
        %v7825 = vlaneseq
        %v7826 = vshrl.u32 %v7825, 7
        %v7827 = vsub.s32 %v6495, %v7826
        %v7828 = vrot.slane %v7695, %v7827
        %v7829 = vsel %vm6500, %v7828, %v7824
        %v7830 = vlaneseq
        %v7831 = vshrl.u32 %v7830, 7
        %v7832 = vsub.s32 %v6502, %v7831
        %v7833 = vrot.slane %v7698, %v7832
        %v7834 = vsel %vm6507, %v7833, %v7829
        %v7835 = vlaneseq
        %v7836 = vshrl.u32 %v7835, 7
        %v7837 = vsub.s32 %v6509, %v7836
        %v7838 = vrot.slane %v7701, %v7837
        %v7839 = vsel %vm6514, %v7838, %v7834
        %v7840 = vlaneseq
        %v7841 = vshrl.u32 %v7840, 7
        %v7842 = vsub.s32 %v6516, %v7841
        %v7843 = vrot.slane %v7704, %v7842
        %v7844 = vsel %vm6521, %v7843, %v7839
        %v7845 = vlaneseq
        %v7846 = vshrl.u32 %v7845, 7
        %v7847 = vsub.s32 %v6523, %v7846
        %v7848 = vrot.slane %v7707, %v7847
        %v7849 = vsel %vm6528, %v7848, %v7844
        %v7850 = vlaneseq
        %v7851 = vshrl.u32 %v7850, 7
        %v7852 = vsub.s32 %v6530, %v7851
        %v7853 = vrot.slane %v7710, %v7852
        %v7854 = vsel %vm6535, %v7853, %v7849
        %v7855 = vlaneseq
        %v7856 = vshrl.u32 %v7855, 7
        %v7857 = vsub.s32 %v6537, %v7856
        %v7858 = vrot.slane %v7713, %v7857
        %v7859 = vsel %vm6542, %v7858, %v7854
        %v7860 = vlaneseq
        %v7861 = vshrl.u32 %v7860, 7
        %v7862 = vsub.s32 %v6544, %v7861
        %v7863 = vrot.slane %v7716, %v7862
        %v7864 = vsel %vm6549, %v7863, %v7859
        %v7865 = vlaneseq
        %v7866 = vshrl.u32 %v7865, 7
        %v7867 = vsub.s32 %v6551, %v7866
        %v7868 = vrot.slane %v7719, %v7867
        %v7869 = vsel %vm6556, %v7868, %v7864
        %v7870 = vlaneseq
        %v7871 = vshrl.u32 %v7870, 7
        %v7872 = vsub.s32 %v6558, %v7871
        %v7873 = vrot.slane %v7722, %v7872
        %v7874 = vsel %vm6563, %v7873, %v7869
        %v7875 = vlaneseq
        %v7876 = vshrl.u32 %v7875, 7
        %v7877 = vsub.s32 %v6565, %v7876
        %v7878 = vrot.slane %v7725, %v7877
        %v7879 = vsel %vm6570, %v7878, %v7874
        %v7880 = vlaneseq
        %v7881 = vshrl.u32 %v7880, 7
        %v7882 = vsub.s32 %v6572, %v7881
        %v7883 = vrot.slane %v7728, %v7882
        %v7884 = vsel %vm6577, %v7883, %v7879
        %v7885 = vlaneseq
        %v7886 = vshrl.u32 %v7885, 7
        %v7887 = vsub.s32 %v6579, %v7886
        %v7888 = vrot.slane %v7731, %v7887
        %v7889 = vsel %vm6584, %v7888, %v7884
        %v7890 = vsel %vm6665, %v7889, %v7810
        %7892 = vst [vmem:[#allocation5] sm:$0x3] %v7890
        %v7893 = vld [vmem:[#allocation14] sm:$0x3]
        %v7894 = vstv %s54
        %vm7895 = vcmp.eq.s32.totalorder %v7893, %v7894
        %v7896 = vsel %vm7895, 1, 0
        %v7897 = vcvt.s32.f32 %v7896
        %v7898 = vsel %vm7158, %v7897, 0.0
        %7899 = vadd.xlane.f32.xlu0 %v7898
        %v7900 = vpop.xlane.xlu0 %7899
        %v7901 = vlaneseq
        %v7902 = vshrl.u32 %v7901, 7
        %v7903 = vsub.s32 0, %v7902
        %v7904 = vrot.slane %v7897, %v7903
        %7906 = vbcast.lane.b32.xlu0 %v7904, 256
        %v7907 = vpop.permute.xlu0 %7906
        %s7909 = sor.u32 256, 8
        %7910 = vbcast.lane.b32.xlu0 %v7904, %s7909
        %v7911 = vpop.permute.xlu0 %7910
        %s7913 = sor.u32 256, 16
        %7914 = vbcast.lane.b32.xlu0 %v7904, %s7913
        %v7915 = vpop.permute.xlu0 %7914
        %s7917 = sor.u32 256, 24
        %7918 = vbcast.lane.b32.xlu0 %v7904, %s7917
        %v7919 = vpop.permute.xlu0 %7918
        %s7921 = sor.u32 256, 32
        %7922 = vbcast.lane.b32.xlu0 %v7904, %s7921
        %v7923 = vpop.permute.xlu0 %7922
        %s7925 = sor.u32 256, 40
        %7926 = vbcast.lane.b32.xlu0 %v7904, %s7925
        %v7927 = vpop.permute.xlu0 %7926
        %s7929 = sor.u32 256, 48
        %7930 = vbcast.lane.b32.xlu0 %v7904, %s7929
        %v7931 = vpop.permute.xlu0 %7930
        %s7933 = sor.u32 256, 56
        %7934 = vbcast.lane.b32.xlu0 %v7904, %s7933
        %v7935 = vpop.permute.xlu0 %7934
        %s7937 = sor.u32 256, 64
        %7938 = vbcast.lane.b32.xlu0 %v7904, %s7937
        %v7939 = vpop.permute.xlu0 %7938
        %s7941 = sor.u32 256, 72
        %7942 = vbcast.lane.b32.xlu0 %v7904, %s7941
        %v7943 = vpop.permute.xlu0 %7942
        %s7945 = sor.u32 256, 80
        %7946 = vbcast.lane.b32.xlu0 %v7904, %s7945
        %v7947 = vpop.permute.xlu0 %7946
        %s7949 = sor.u32 256, 88
        %7950 = vbcast.lane.b32.xlu0 %v7904, %s7949
        %v7951 = vpop.permute.xlu0 %7950
        %s7953 = sor.u32 256, 96
        %7954 = vbcast.lane.b32.xlu0 %v7904, %s7953
        %v7955 = vpop.permute.xlu0 %7954
        %s7957 = sor.u32 256, 104
        %7958 = vbcast.lane.b32.xlu0 %v7904, %s7957
        %v7959 = vpop.permute.xlu0 %7958
        %s7961 = sor.u32 256, 112
        %7962 = vbcast.lane.b32.xlu0 %v7904, %s7961
        %v7963 = vpop.permute.xlu0 %7962
        %s7965 = sor.u32 256, 120
        %7966 = vbcast.lane.b32.xlu0 %v7904, %s7965
        %v7967 = vpop.permute.xlu0 %7966
        %v7968 = vlaneseq
        %v7969 = vshrl.u32 %v7968, 7
        %v7970 = vsub.s32 1, %v7969
        %v7971 = vrot.slane %v7897, %v7970
        %7973 = vbcast.lane.b32.xlu0 %v7971, 256
        %v7974 = vpop.permute.xlu0 %7973
        %s7976 = sor.u32 256, 8
        %7977 = vbcast.lane.b32.xlu0 %v7971, %s7976
        %v7978 = vpop.permute.xlu0 %7977
        %s7980 = sor.u32 256, 16
        %7981 = vbcast.lane.b32.xlu0 %v7971, %s7980
        %v7982 = vpop.permute.xlu0 %7981
        %s7984 = sor.u32 256, 24
        %7985 = vbcast.lane.b32.xlu0 %v7971, %s7984
        %v7986 = vpop.permute.xlu0 %7985
        %s7988 = sor.u32 256, 32
        %7989 = vbcast.lane.b32.xlu0 %v7971, %s7988
        %v7990 = vpop.permute.xlu0 %7989
        %s7992 = sor.u32 256, 40
        %7993 = vbcast.lane.b32.xlu0 %v7971, %s7992
        %v7994 = vpop.permute.xlu0 %7993
        %s7996 = sor.u32 256, 48
        %7997 = vbcast.lane.b32.xlu0 %v7971, %s7996
        %v7998 = vpop.permute.xlu0 %7997
        %s8000 = sor.u32 256, 56
        %8001 = vbcast.lane.b32.xlu0 %v7971, %s8000
        %v8002 = vpop.permute.xlu0 %8001
        %s8004 = sor.u32 256, 64
        %8005 = vbcast.lane.b32.xlu0 %v7971, %s8004
        %v8006 = vpop.permute.xlu0 %8005
        %s8008 = sor.u32 256, 72
        %8009 = vbcast.lane.b32.xlu0 %v7971, %s8008
        %v8010 = vpop.permute.xlu0 %8009
        %s8012 = sor.u32 256, 80
        %8013 = vbcast.lane.b32.xlu0 %v7971, %s8012
        %v8014 = vpop.permute.xlu0 %8013
        %s8016 = sor.u32 256, 88
        %8017 = vbcast.lane.b32.xlu0 %v7971, %s8016
        %v8018 = vpop.permute.xlu0 %8017
        %s8020 = sor.u32 256, 96
        %8021 = vbcast.lane.b32.xlu0 %v7971, %s8020
        %v8022 = vpop.permute.xlu0 %8021
        %s8024 = sor.u32 256, 104
        %8025 = vbcast.lane.b32.xlu0 %v7971, %s8024
        %v8026 = vpop.permute.xlu0 %8025
        %s8028 = sor.u32 256, 112
        %8029 = vbcast.lane.b32.xlu0 %v7971, %s8028
        %v8030 = vpop.permute.xlu0 %8029
        %s8032 = sor.u32 256, 120
        %8033 = vbcast.lane.b32.xlu0 %v7971, %s8032
        %v8034 = vpop.permute.xlu0 %8033
        %v8035 = vmul.f32 %v1868, %v7907
        %v8036 = vmul.f32 %v1869, %v7911
        %v8037 = vmul.f32 %v1870, %v7915
        %v8038 = vmul.f32 %v1871, %v7919
        %v8039 = vmul.f32 %v1872, %v7923
        %v8040 = vmul.f32 %v1873, %v7927
        %v8041 = vmul.f32 %v1874, %v7931
        %v8042 = vmul.f32 %v1875, %v7935
        %v8043 = vmul.f32 %v1876, %v7939
        %v8044 = vmul.f32 %v1877, %v7943
        %v8045 = vmul.f32 %v1878, %v7947
        %v8046 = vmul.f32 %v1879, %v7951
        %v8047 = vmul.f32 %v1880, %v7955
        %v8048 = vmul.f32 %v1881, %v7959
        %v8049 = vmul.f32 %v1882, %v7963
        %v8050 = vmul.f32 %v1883, %v7967
        %v8051 = vmul.f32 %v1884, %v7974
        %v8052 = vmul.f32 %v1885, %v7978
        %v8053 = vmul.f32 %v1886, %v7982
        %v8054 = vmul.f32 %v1887, %v7986
        %v8055 = vmul.f32 %v1888, %v7990
        %v8056 = vmul.f32 %v1889, %v7994
        %v8057 = vmul.f32 %v1890, %v7998
        %v8058 = vmul.f32 %v1891, %v8002
        %v8059 = vmul.f32 %v1892, %v8006
        %v8060 = vmul.f32 %v1893, %v8010
        %v8061 = vmul.f32 %v1894, %v8014
        %v8062 = vmul.f32 %v1895, %v8018
        %v8063 = vmul.f32 %v1896, %v8022
        %v8064 = vmul.f32 %v1897, %v8026
        %v8065 = vmul.f32 %v1898, %v8030
        %v8066 = vmul.f32 %v1899, %v8034
        %v8067 = vadd.f32 %v8035, %v8036
        %v8068 = vadd.f32 %v8067, %v8037
        %v8069 = vadd.f32 %v8068, %v8038
        %v8070 = vadd.f32 %v8069, %v8039
        %v8071 = vadd.f32 %v8070, %v8040
        %v8072 = vadd.f32 %v8071, %v8041
        %v8073 = vadd.f32 %v8072, %v8042
        %v8074 = vadd.f32 %v8073, %v8043
        %v8075 = vadd.f32 %v8074, %v8044
        %v8076 = vadd.f32 %v8075, %v8045
        %v8077 = vadd.f32 %v8076, %v8046
        %v8078 = vadd.f32 %v8077, %v8047
        %v8079 = vadd.f32 %v8078, %v8048
        %v8080 = vadd.f32 %v8079, %v8049
        %v8081 = vadd.f32 %v8080, %v8050
        %v8082 = vrot.slane %v8081, 4
        %v8083 = vadd.f32 %v8081, %v8082
        %v8084 = vrot.slane %v8083, 2
        %v8085 = vadd.f32 %v8083, %v8084
        %v8086 = vrot.slane %v8085, 1
        %v8087 = vadd.f32 %v8085, %v8086
        %v8088 = vadd.f32 %v8051, %v8052
        %v8089 = vadd.f32 %v8088, %v8053
        %v8090 = vadd.f32 %v8089, %v8054
        %v8091 = vadd.f32 %v8090, %v8055
        %v8092 = vadd.f32 %v8091, %v8056
        %v8093 = vadd.f32 %v8092, %v8057
        %v8094 = vadd.f32 %v8093, %v8058
        %v8095 = vadd.f32 %v8094, %v8059
        %v8096 = vadd.f32 %v8095, %v8060
        %v8097 = vadd.f32 %v8096, %v8061
        %v8098 = vadd.f32 %v8097, %v8062
        %v8099 = vadd.f32 %v8098, %v8063
        %v8100 = vadd.f32 %v8099, %v8064
        %v8101 = vadd.f32 %v8100, %v8065
        %v8102 = vadd.f32 %v8101, %v8066
        %v8103 = vrot.slane %v8102, 4
        %v8104 = vadd.f32 %v8102, %v8103
        %v8105 = vrot.slane %v8104, 2
        %v8106 = vadd.f32 %v8104, %v8105
        %v8107 = vrot.slane %v8106, 1
        %v8108 = vadd.f32 %v8106, %v8107
        %vm8109 = vcmp.gt.f32.partialorder %v7900, 0.0
        %v8110 = vmax.f32 %v7900, 1.0
        %v8111 = vrcp.pop %v8110
        %v8113 = vrot.slane %v8111, 1
        %v8116 = vmul.f32 %v8087, %v8111
        %v8117 = vmul.f32 %v8108, %v8113
        %v8118 = vsel %vm8109, 1, 0
        %vm8119 = vcmp.eq.s32.totalorder %v8118, 1
        %v8122 = vrot.slane %v8117, 7
        %v8123 = vsel %vm6665, %v8122, %v8116
        %v8125 = vsel %vm8119, %v8123, 0.0
        %8126 = vst [vmem:[#allocation4] sm:$0x3] %v8125
        %v8127 = vadd.f32 %v7897, %v1867
        %v8128 = vmin.f32 %v8127, 1.0
        %8129 = vst [vmem:[#allocation6] sm:$0x3] %v8128
        %8130 = vst [vmem:[#allocation7] sm:$0x3] %v8125
        %8131 = vst [vmem:[#allocation7 + $0x2] sm:$0x3] %v2225
        %v8132 = vld [vmem:[#allocation7] sm:$0xf]
        %v8133 = vld [vmem:[#allocation33] sm:$0xff]
        %v8134 = vld [vmem:[#allocation33 + $0x8] sm:$0xff]
        %v8135 = vld [vmem:[#allocation33 + $0x10] sm:$0xff]
        %v8136 = vld [vmem:[#allocation33 + $0x18] sm:$0xff]
        %v8137 = vld [vmem:[#allocation33 + $0x20] sm:$0xff]
        %v8138 = vld [vmem:[#allocation33 + $0x28] sm:$0xff]
        %v8139 = vld [vmem:[#allocation33 + $0x30] sm:$0xff]
        %v8140 = vld [vmem:[#allocation33 + $0x38] sm:$0xff]
        %v8141 = vld [vmem:[#allocation33 + $0x40] sm:$0xff]
        %v8142 = vld [vmem:[#allocation33 + $0x48] sm:$0xff]
        %v8143 = vld [vmem:[#allocation33 + $0x50] sm:$0xff]
        %v8144 = vld [vmem:[#allocation33 + $0x58] sm:$0xff]
        %v8145 = vld [vmem:[#allocation33 + $0x60] sm:$0xff]
        %v8146 = vld [vmem:[#allocation33 + $0x68] sm:$0xff]
        %v8147 = vld [vmem:[#allocation33 + $0x70] sm:$0xff]
        %v8148 = vld [vmem:[#allocation33 + $0x78] sm:$0xff]
        %v8149 = vld [vmem:[#allocation33 + $0x80] sm:$0xff]
        %v8150 = vld [vmem:[#allocation33 + $0x88] sm:$0xff]
        %v8151 = vld [vmem:[#allocation33 + $0x90] sm:$0xff]
        %v8152 = vld [vmem:[#allocation33 + $0x98] sm:$0xff]
        %v8153 = vld [vmem:[#allocation33 + $0xa0] sm:$0xff]
        %v8154 = vld [vmem:[#allocation33 + $0xa8] sm:$0xff]
        %v8155 = vld [vmem:[#allocation33 + $0xb0] sm:$0xff]
        %v8156 = vld [vmem:[#allocation33 + $0xb8] sm:$0xff]
        %v8157 = vld [vmem:[#allocation33 + $0xc0] sm:$0xff]
        %v8158 = vld [vmem:[#allocation33 + $0xc8] sm:$0xff]
        %v8159 = vld [vmem:[#allocation33 + $0xd0] sm:$0xff]
        %v8160 = vld [vmem:[#allocation33 + $0xd8] sm:$0xff]
        %v8161 = vld [vmem:[#allocation33 + $0xe0] sm:$0xff]
        %v8162 = vld [vmem:[#allocation33 + $0xe8] sm:$0xff]
        %v8163 = vld [vmem:[#allocation33 + $0xf0] sm:$0xff]
        %v8164 = vld [vmem:[#allocation33 + $0xf8] sm:$0xff]
        %v8165 = vld [vmem:[#allocation33 + $0x100] sm:$0xff]
        %v8166 = vld [vmem:[#allocation33 + $0x108] sm:$0xff]
        %v8167 = vld [vmem:[#allocation33 + $0x110] sm:$0xff]
        %v8168 = vld [vmem:[#allocation33 + $0x118] sm:$0xff]
        %v8169 = vld [vmem:[#allocation33 + $0x120] sm:$0xff]
        %v8170 = vld [vmem:[#allocation33 + $0x128] sm:$0xff]
        %v8171 = vld [vmem:[#allocation33 + $0x130] sm:$0xff]
        %v8172 = vld [vmem:[#allocation33 + $0x138] sm:$0xff]
        %v8173 = vld [vmem:[#allocation33 + $0x140] sm:$0xff]
        %v8174 = vld [vmem:[#allocation33 + $0x148] sm:$0xff]
        %v8175 = vld [vmem:[#allocation33 + $0x150] sm:$0xff]
        %v8176 = vld [vmem:[#allocation33 + $0x158] sm:$0xff]
        %v8177 = vld [vmem:[#allocation33 + $0x160] sm:$0xff]
        %v8178 = vld [vmem:[#allocation33 + $0x168] sm:$0xff]
        %v8179 = vld [vmem:[#allocation33 + $0x170] sm:$0xff]
        %v8180 = vld [vmem:[#allocation33 + $0x178] sm:$0xff]
        %v8181 = vld [vmem:[#allocation33 + $0x180] sm:$0xff]
        %v8182 = vld [vmem:[#allocation33 + $0x188] sm:$0xff]
        %v8183 = vld [vmem:[#allocation33 + $0x190] sm:$0xff]
        %v8184 = vld [vmem:[#allocation33 + $0x198] sm:$0xff]
        %v8185 = vld [vmem:[#allocation33 + $0x1a0] sm:$0xff]
        %v8186 = vld [vmem:[#allocation33 + $0x1a8] sm:$0xff]
        %v8187 = vld [vmem:[#allocation33 + $0x1b0] sm:$0xff]
        %v8188 = vld [vmem:[#allocation33 + $0x1b8] sm:$0xff]
        %v8189 = vld [vmem:[#allocation33 + $0x1c0] sm:$0xff]
        %v8190 = vld [vmem:[#allocation33 + $0x1c8] sm:$0xff]
        %v8191 = vld [vmem:[#allocation33 + $0x1d0] sm:$0xff]
        %v8192 = vld [vmem:[#allocation33 + $0x1d8] sm:$0xff]
        %v8193 = vld [vmem:[#allocation33 + $0x1e0] sm:$0xff]
        %v8194 = vld [vmem:[#allocation33 + $0x1e8] sm:$0xff]
        %v8195 = vld [vmem:[#allocation33 + $0x1f0] sm:$0xff]
        %v8196 = vld [vmem:[#allocation33 + $0x1f8] sm:$0xff]
        %v8197 = vld [vmem:[#allocation33 + $0x200] sm:$0xff]
        %v8198 = vld [vmem:[#allocation33 + $0x208] sm:$0xff]
        %v8199 = vld [vmem:[#allocation33 + $0x210] sm:$0xff]
        %v8200 = vld [vmem:[#allocation33 + $0x218] sm:$0xff]
        %v8201 = vld [vmem:[#allocation33 + $0x220] sm:$0xff]
        %v8202 = vld [vmem:[#allocation33 + $0x228] sm:$0xff]
        %v8203 = vld [vmem:[#allocation33 + $0x230] sm:$0xff]
        %v8204 = vld [vmem:[#allocation33 + $0x238] sm:$0xff]
        %v8205 = vld [vmem:[#allocation33 + $0x240] sm:$0xff]
        %v8206 = vld [vmem:[#allocation33 + $0x248] sm:$0xff]
        %v8207 = vld [vmem:[#allocation33 + $0x250] sm:$0xff]
        %v8208 = vld [vmem:[#allocation33 + $0x258] sm:$0xff]
        %v8209 = vld [vmem:[#allocation33 + $0x260] sm:$0xff]
        %v8210 = vld [vmem:[#allocation33 + $0x268] sm:$0xff]
        %v8211 = vld [vmem:[#allocation33 + $0x270] sm:$0xff]
        %v8212 = vld [vmem:[#allocation33 + $0x278] sm:$0xff]
        %v8213 = vld [vmem:[#allocation33 + $0x280] sm:$0xff]
        %v8214 = vld [vmem:[#allocation33 + $0x288] sm:$0xff]
        %v8215 = vld [vmem:[#allocation33 + $0x290] sm:$0xff]
        %v8216 = vld [vmem:[#allocation33 + $0x298] sm:$0xff]
        %v8217 = vld [vmem:[#allocation33 + $0x2a0] sm:$0xff]
        %v8218 = vld [vmem:[#allocation33 + $0x2a8] sm:$0xff]
        %v8219 = vld [vmem:[#allocation33 + $0x2b0] sm:$0xff]
        %v8220 = vld [vmem:[#allocation33 + $0x2b8] sm:$0xff]
        %v8221 = vld [vmem:[#allocation33 + $0x2c0] sm:$0xff]
        %v8222 = vld [vmem:[#allocation33 + $0x2c8] sm:$0xff]
        %v8223 = vld [vmem:[#allocation33 + $0x2d0] sm:$0xff]
        %v8224 = vld [vmem:[#allocation33 + $0x2d8] sm:$0xff]
        %v8225 = vld [vmem:[#allocation33 + $0x2e0] sm:$0xff]
        %v8226 = vld [vmem:[#allocation33 + $0x2e8] sm:$0xff]
        %v8227 = vld [vmem:[#allocation33 + $0x2f0] sm:$0xff]
        %v8228 = vld [vmem:[#allocation33 + $0x2f8] sm:$0xff]
        %v8229 = vld [vmem:[#allocation33 + $0x300] sm:$0xff]
        %v8230 = vld [vmem:[#allocation33 + $0x308] sm:$0xff]
        %v8231 = vld [vmem:[#allocation33 + $0x310] sm:$0xff]
        %v8232 = vld [vmem:[#allocation33 + $0x318] sm:$0xff]
        %v8233 = vld [vmem:[#allocation33 + $0x320] sm:$0xff]
        %v8234 = vld [vmem:[#allocation33 + $0x328] sm:$0xff]
        %v8235 = vld [vmem:[#allocation33 + $0x330] sm:$0xff]
        %v8236 = vld [vmem:[#allocation33 + $0x338] sm:$0xff]
        %v8237 = vld [vmem:[#allocation33 + $0x340] sm:$0xff]
        %v8238 = vld [vmem:[#allocation33 + $0x348] sm:$0xff]
        %v8239 = vld [vmem:[#allocation33 + $0x350] sm:$0xff]
        %v8240 = vld [vmem:[#allocation33 + $0x358] sm:$0xff]
        %v8241 = vld [vmem:[#allocation33 + $0x360] sm:$0xff]
        %v8242 = vld [vmem:[#allocation33 + $0x368] sm:$0xff]
        %v8243 = vld [vmem:[#allocation33 + $0x370] sm:$0xff]
        %v8244 = vld [vmem:[#allocation33 + $0x378] sm:$0xff]
        %v8245 = vld [vmem:[#allocation33 + $0x380] sm:$0xff]
        %v8246 = vld [vmem:[#allocation33 + $0x388] sm:$0xff]
        %v8247 = vld [vmem:[#allocation33 + $0x390] sm:$0xff]
        %v8248 = vld [vmem:[#allocation33 + $0x398] sm:$0xff]
        %v8249 = vld [vmem:[#allocation33 + $0x3a0] sm:$0xff]
        %v8250 = vld [vmem:[#allocation33 + $0x3a8] sm:$0xff]
        %v8251 = vld [vmem:[#allocation33 + $0x3b0] sm:$0xff]
        %v8252 = vld [vmem:[#allocation33 + $0x3b8] sm:$0xff]
        %v8253 = vld [vmem:[#allocation33 + $0x3c0] sm:$0xff]
        %v8254 = vld [vmem:[#allocation33 + $0x3c8] sm:$0xff]
        %v8255 = vld [vmem:[#allocation33 + $0x3d0] sm:$0xff]
        %v8256 = vld [vmem:[#allocation33 + $0x3d8] sm:$0xff]
        %v8257 = vld [vmem:[#allocation33 + $0x3e0] sm:$0xff]
        %v8258 = vld [vmem:[#allocation33 + $0x3e8] sm:$0xff]
        %v8259 = vld [vmem:[#allocation33 + $0x3f0] sm:$0xff]
        %v8260 = vld [vmem:[#allocation33 + $0x3f8] sm:$0xff]
        %v8261 = vld [vmem:[#allocation35] sm:$0xf]
        %v8263 = vlaneseq
        %v8264 = vshrl.u32 %v8263, 7
        %v8265 = vsub.s32 0, %v8264
        %v8266 = vrot.slane %v8261, %v8265
        %v8267 = vlaneseq
        %v8268 = vshrl.u32 %v8267, 7
        %v8269 = vsub.s32 1, %v8268
        %v8270 = vrot.slane %v8261, %v8269
        %v8271 = vlaneseq
        %v8272 = vshrl.u32 %v8271, 7
        %v8273 = vsub.s32 2, %v8272
        %v8274 = vrot.slane %v8261, %v8273
        %v8275 = vlaneseq
        %v8276 = vshrl.u32 %v8275, 7
        %v8277 = vsub.s32 3, %v8276
        %v8278 = vrot.slane %v8261, %v8277
        %v8285 = vunpack.c.l.s4 1983009808
        %v8286 = vunpack.c.0.s8 %v8285
        %v8287 = vlaneseq
        %v8288 = vshrl.u32 %v8287, 7
        %v8289 = vsub.s32 %v8286, %v8288
        %v8290 = vrot.slane %v8132, %v8289
        %v8291 = vcombine.high %v8290, %v8290
        %8294 = vmatprep.subr.mxu0 %v8134
        %8295 = vmatpush1.msra.mxu0 %v8133
        %8296 = vmatprep.subr.mxu0 %v8138
        %8297 = vmatpush1.msra.mxu0 %v8137
        %8298 = vmatprep.subr.mxu0 %v8142
        %8299 = vmatpush1.msra.mxu0 %v8141
        %8300 = vmatprep.subr.mxu0 %v8146
        %8301 = vmatpush1.msra.mxu0 %v8145
        %8302 = vmatprep.subr.mxu0 %v8150
        %8303 = vmatpush1.msra.mxu0 %v8149
        %8304 = vmatprep.subr.mxu0 %v8154
        %8305 = vmatpush1.msra.mxu0 %v8153
        %8306 = vmatprep.subr.mxu0 %v8158
        %8307 = vmatpush1.msra.mxu0 %v8157
        %8308 = vmatprep.subr.mxu0 %v8162
        %8309 = vmatpush1.msra.mxu0 %v8161
        %8310 = vmatprep.subr.mxu0 %v8166
        %8311 = vmatpush1.msra.mxu0 %v8165
        %8312 = vmatprep.subr.mxu0 %v8170
        %8313 = vmatpush1.msra.mxu0 %v8169
        %8314 = vmatprep.subr.mxu0 %v8174
        %8315 = vmatpush1.msra.mxu0 %v8173
        %8316 = vmatprep.subr.mxu0 %v8178
        %8317 = vmatpush1.msra.mxu0 %v8177
        %8318 = vmatprep.subr.mxu0 %v8182
        %8319 = vmatpush1.msra.mxu0 %v8181
        %8320 = vmatprep.subr.mxu0 %v8186
        %8321 = vmatpush1.msra.mxu0 %v8185
        %8322 = vmatprep.subr.mxu0 %v8190
        %8323 = vmatpush1.msra.mxu0 %v8189
        %8324 = vmatprep.subr.mxu0 %v8194
        %8325 = vmatpush1.msra.mxu0 %v8193
        %8326 = vmatprep.subr.mxu0 %v8198
        %8327 = vmatpush1.msra.mxu0 %v8197
        %8328 = vmatprep.subr.mxu0 %v8202
        %8329 = vmatpush1.msra.mxu0 %v8201
        %8330 = vmatprep.subr.mxu0 %v8206
        %8331 = vmatpush1.msra.mxu0 %v8205
        %8332 = vmatprep.subr.mxu0 %v8210
        %8333 = vmatpush1.msra.mxu0 %v8209
        %8334 = vmatprep.subr.mxu0 %v8214
        %8335 = vmatpush1.msra.mxu0 %v8213
        %8336 = vmatprep.subr.mxu0 %v8218
        %8337 = vmatpush1.msra.mxu0 %v8217
        %8338 = vmatprep.subr.mxu0 %v8222
        %8339 = vmatpush1.msra.mxu0 %v8221
        %8340 = vmatprep.subr.mxu0 %v8226
        %8341 = vmatpush1.msra.mxu0 %v8225
        %8342 = vmatprep.subr.mxu0 %v8230
        %8343 = vmatpush1.msra.mxu0 %v8229
        %8344 = vmatprep.subr.mxu0 %v8234
        %8345 = vmatpush1.msra.mxu0 %v8233
        %8346 = vmatprep.subr.mxu0 %v8238
        %8347 = vmatpush1.msra.mxu0 %v8237
        %8348 = vmatprep.subr.mxu0 %v8242
        %8349 = vmatpush1.msra.mxu0 %v8241
        %8350 = vmatprep.subr.mxu0 %v8246
        %8351 = vmatpush1.msra.mxu0 %v8245
        %8352 = vmatprep.subr.mxu0 %v8250
        %8353 = vmatpush1.msra.mxu0 %v8249
        %8354 = vmatprep.subr.mxu0 %v8254
        %8355 = vmatpush1.msra.mxu0 %v8253
        %8356 = vmatprep.subr.mxu0 %v8258
        %8357 = vmatpush1.msra.mxu0 %v8257
        %8358 = vmatprep.mubr.f32.mxu0 %v8291
        %8359 = vmatmul.mubr.f32.gmra.mrb[0].mxu0 %v8290
        %v8360 = vpop.f32.mrb[0].mxu0
        %v8361 = vadd.f32 %v8266, %v8360
        %v8362 = vpop.f32.mrb[0].mxu0
        %v8363 = vadd.f32 %v8270, %v8362
        %8364 = vdwg.mxu0
        %8365 = vmatprep.subr.mxu0 %v8136
        %8366 = vmatpush1.msra.mxu0 %v8135
        %8367 = vmatprep.subr.mxu0 %v8140
        %8368 = vmatpush1.msra.mxu0 %v8139
        %8369 = vmatprep.subr.mxu0 %v8144
        %8370 = vmatpush1.msra.mxu0 %v8143
        %8371 = vmatprep.subr.mxu0 %v8148
        %8372 = vmatpush1.msra.mxu0 %v8147
        %8373 = vmatprep.subr.mxu0 %v8152
        %8374 = vmatpush1.msra.mxu0 %v8151
        %8375 = vmatprep.subr.mxu0 %v8156
        %8376 = vmatpush1.msra.mxu0 %v8155
        %8377 = vmatprep.subr.mxu0 %v8160
        %8378 = vmatpush1.msra.mxu0 %v8159
        %8379 = vmatprep.subr.mxu0 %v8164
        %8380 = vmatpush1.msra.mxu0 %v8163
        %8381 = vmatprep.subr.mxu0 %v8168
        %8382 = vmatpush1.msra.mxu0 %v8167
        %8383 = vmatprep.subr.mxu0 %v8172
        %8384 = vmatpush1.msra.mxu0 %v8171
        %8385 = vmatprep.subr.mxu0 %v8176
        %8386 = vmatpush1.msra.mxu0 %v8175
        %8387 = vmatprep.subr.mxu0 %v8180
        %8388 = vmatpush1.msra.mxu0 %v8179
        %8389 = vmatprep.subr.mxu0 %v8184
        %8390 = vmatpush1.msra.mxu0 %v8183
        %8391 = vmatprep.subr.mxu0 %v8188
        %8392 = vmatpush1.msra.mxu0 %v8187
        %8393 = vmatprep.subr.mxu0 %v8192
        %8394 = vmatpush1.msra.mxu0 %v8191
        %8395 = vmatprep.subr.mxu0 %v8196
        %8396 = vmatpush1.msra.mxu0 %v8195
        %8397 = vmatprep.subr.mxu0 %v8200
        %8398 = vmatpush1.msra.mxu0 %v8199
        %8399 = vmatprep.subr.mxu0 %v8204
        %8400 = vmatpush1.msra.mxu0 %v8203
        %8401 = vmatprep.subr.mxu0 %v8208
        %8402 = vmatpush1.msra.mxu0 %v8207
        %8403 = vmatprep.subr.mxu0 %v8212
        %8404 = vmatpush1.msra.mxu0 %v8211
        %8405 = vmatprep.subr.mxu0 %v8216
        %8406 = vmatpush1.msra.mxu0 %v8215
        %8407 = vmatprep.subr.mxu0 %v8220
        %8408 = vmatpush1.msra.mxu0 %v8219
        %8409 = vmatprep.subr.mxu0 %v8224
        %8410 = vmatpush1.msra.mxu0 %v8223
        %8411 = vmatprep.subr.mxu0 %v8228
        %8412 = vmatpush1.msra.mxu0 %v8227
        %8413 = vmatprep.subr.mxu0 %v8232
        %8414 = vmatpush1.msra.mxu0 %v8231
        %8415 = vmatprep.subr.mxu0 %v8236
        %8416 = vmatpush1.msra.mxu0 %v8235
        %8417 = vmatprep.subr.mxu0 %v8240
        %8418 = vmatpush1.msra.mxu0 %v8239
        %8419 = vmatprep.subr.mxu0 %v8244
        %8420 = vmatpush1.msra.mxu0 %v8243
        %8421 = vmatprep.subr.mxu0 %v8248
        %8422 = vmatpush1.msra.mxu0 %v8247
        %8423 = vmatprep.subr.mxu0 %v8252
        %8424 = vmatpush1.msra.mxu0 %v8251
        %8425 = vmatprep.subr.mxu0 %v8256
        %8426 = vmatpush1.msra.mxu0 %v8255
        %8427 = vmatprep.subr.mxu0 %v8260
        %8428 = vmatpush1.msra.mxu0 %v8259
        %8429 = vmatprep.mubr.f32.mxu0 %v8291
        %8430 = vmatmul.mubr.f32.gmra.mrb[0].mxu0 %v8290
        %v8431 = vpop.f32.mrb[0].mxu0
        %v8432 = vadd.f32 %v8274, %v8431
        %v8433 = vpop.f32.mrb[0].mxu0
        %v8434 = vadd.f32 %v8278, %v8433
        %8435 = vdwg.mxu0
        %v8436 = vxor.u32 %v8361, 2147483648
        %v8437 = vmul.f32 %v8436, 1.442695
        %v8438 = vpow.pop %v8437
        %v8439 = vadd.f32 %v8438, 1.0
        %v8440 = vrcp.pop %v8439
        %v8441 = vmul.f32 1.0, %v8440
        %v8442 = vxor.u32 %v8363, 2147483648
        %v8443 = vmul.f32 %v8442, 1.442695
        %v8444 = vpow.pop %v8443
        %v8445 = vadd.f32 %v8444, 1.0
        %v8446 = vrcp.pop %v8445
        %v8447 = vmul.f32 1.0, %v8446
        %v8448 = vmul.f32 %v8441, %v8434
        %v8449 = vadd.f32 %v8432, %v8448
        %v8450 = vtanh.pop %v8449
        %v8451 = vsub.f32 1.0, %v8447
        %v8452 = vmul.f32 %v8451, %v8450
        %v8453 = vmul.f32 %v8447, %v2225
        %v8454 = vadd.f32 %v8452, %v8453
        %8455 = vst [vmem:[#allocation3] sm:$0x3] %v8454
        %8456 = vst [vmem:[#allocation7] sm:$0x3] %v8125
        %8457 = vst [vmem:[#allocation7 + $0x2] sm:$0x3] %v8454
        %v8458 = vld [vmem:[#allocation7] sm:$0xf]
        %v8459 = vld [vmem:[#allocation36] sm:$0xff]
        %v8460 = vld [vmem:[#allocation36 + $0x8] sm:$0xff]
        %v8461 = vld [vmem:[#allocation36 + $0x10] sm:$0xff]
        %v8462 = vld [vmem:[#allocation36 + $0x18] sm:$0xff]
        %v8463 = vld [vmem:[#allocation36 + $0x20] sm:$0xff]
        %v8464 = vld [vmem:[#allocation36 + $0x28] sm:$0xff]
        %v8465 = vld [vmem:[#allocation36 + $0x30] sm:$0xff]
        %v8466 = vld [vmem:[#allocation36 + $0x38] sm:$0xff]
        %v8467 = vld [vmem:[#allocation36 + $0x40] sm:$0xff]
        %v8468 = vld [vmem:[#allocation36 + $0x48] sm:$0xff]
        %v8469 = vld [vmem:[#allocation36 + $0x50] sm:$0xff]
        %v8470 = vld [vmem:[#allocation36 + $0x58] sm:$0xff]
        %v8471 = vld [vmem:[#allocation36 + $0x60] sm:$0xff]
        %v8472 = vld [vmem:[#allocation36 + $0x68] sm:$0xff]
        %v8473 = vld [vmem:[#allocation36 + $0x70] sm:$0xff]
        %v8474 = vld [vmem:[#allocation36 + $0x78] sm:$0xff]
        %v8475 = vld [vmem:[#allocation36 + $0x80] sm:$0xff]
        %v8476 = vld [vmem:[#allocation36 + $0x88] sm:$0xff]
        %v8477 = vld [vmem:[#allocation36 + $0x90] sm:$0xff]
        %v8478 = vld [vmem:[#allocation36 + $0x98] sm:$0xff]
        %v8479 = vld [vmem:[#allocation36 + $0xa0] sm:$0xff]
        %v8480 = vld [vmem:[#allocation36 + $0xa8] sm:$0xff]
        %v8481 = vld [vmem:[#allocation36 + $0xb0] sm:$0xff]
        %v8482 = vld [vmem:[#allocation36 + $0xb8] sm:$0xff]
        %v8483 = vld [vmem:[#allocation36 + $0xc0] sm:$0xff]
        %v8484 = vld [vmem:[#allocation36 + $0xc8] sm:$0xff]
        %v8485 = vld [vmem:[#allocation36 + $0xd0] sm:$0xff]
        %v8486 = vld [vmem:[#allocation36 + $0xd8] sm:$0xff]
        %v8487 = vld [vmem:[#allocation36 + $0xe0] sm:$0xff]
        %v8488 = vld [vmem:[#allocation36 + $0xe8] sm:$0xff]
        %v8489 = vld [vmem:[#allocation36 + $0xf0] sm:$0xff]
        %v8490 = vld [vmem:[#allocation36 + $0xf8] sm:$0xff]
        %v8491 = vld [vmem:[#allocation38] sm:$0x1]
        %v8493 = vlaneseq
        %v8494 = vshrl.u32 %v8493, 7
        %v8495 = vsub.s32 0, %v8494
        %v8496 = vrot.slane %v8491, %v8495
        %v8500 = vunpack.c.l.s4 1983009808
        %v8501 = vunpack.c.0.s8 %v8500
        %v8502 = vlaneseq
        %v8503 = vshrl.u32 %v8502, 7
        %v8504 = vsub.s32 %v8501, %v8503
        %v8505 = vrot.slane %v8458, %v8504
        %v8506 = vcombine.high %v8505, %v8505
        %8509 = vmatprep.subr.mxu0 0.0
        %8510 = vmatpush1.msra.mxu0 %v8459
        %8511 = vmatprep.subr.mxu0 0.0
        %8512 = vmatpush1.msra.mxu0 %v8460
        %8513 = vmatprep.subr.mxu0 0.0
        %8514 = vmatpush1.msra.mxu0 %v8461
        %8515 = vmatprep.subr.mxu0 0.0
        %8516 = vmatpush1.msra.mxu0 %v8462
        %8517 = vmatprep.subr.mxu0 0.0
        %8518 = vmatpush1.msra.mxu0 %v8463
        %8519 = vmatprep.subr.mxu0 0.0
        %8520 = vmatpush1.msra.mxu0 %v8464
        %8521 = vmatprep.subr.mxu0 0.0
        %8522 = vmatpush1.msra.mxu0 %v8465
        %8523 = vmatprep.subr.mxu0 0.0
        %8524 = vmatpush1.msra.mxu0 %v8466
        %8525 = vmatprep.subr.mxu0 0.0
        %8526 = vmatpush1.msra.mxu0 %v8467
        %8527 = vmatprep.subr.mxu0 0.0
        %8528 = vmatpush1.msra.mxu0 %v8468
        %8529 = vmatprep.subr.mxu0 0.0
        %8530 = vmatpush1.msra.mxu0 %v8469
        %8531 = vmatprep.subr.mxu0 0.0
        %8532 = vmatpush1.msra.mxu0 %v8470
        %8533 = vmatprep.subr.mxu0 0.0
        %8534 = vmatpush1.msra.mxu0 %v8471
        %8535 = vmatprep.subr.mxu0 0.0
        %8536 = vmatpush1.msra.mxu0 %v8472
        %8537 = vmatprep.subr.mxu0 0.0
        %8538 = vmatpush1.msra.mxu0 %v8473
        %8539 = vmatprep.subr.mxu0 0.0
        %8540 = vmatpush1.msra.mxu0 %v8474
        %8541 = vmatprep.subr.mxu0 0.0
        %8542 = vmatpush1.msra.mxu0 %v8475
        %8543 = vmatprep.subr.mxu0 0.0
        %8544 = vmatpush1.msra.mxu0 %v8476
        %8545 = vmatprep.subr.mxu0 0.0
        %8546 = vmatpush1.msra.mxu0 %v8477
        %8547 = vmatprep.subr.mxu0 0.0
        %8548 = vmatpush1.msra.mxu0 %v8478
        %8549 = vmatprep.subr.mxu0 0.0
        %8550 = vmatpush1.msra.mxu0 %v8479
        %8551 = vmatprep.subr.mxu0 0.0
        %8552 = vmatpush1.msra.mxu0 %v8480
        %8553 = vmatprep.subr.mxu0 0.0
        %8554 = vmatpush1.msra.mxu0 %v8481
        %8555 = vmatprep.subr.mxu0 0.0
        %8556 = vmatpush1.msra.mxu0 %v8482
        %8557 = vmatprep.subr.mxu0 0.0
        %8558 = vmatpush1.msra.mxu0 %v8483
        %8559 = vmatprep.subr.mxu0 0.0
        %8560 = vmatpush1.msra.mxu0 %v8484
        %8561 = vmatprep.subr.mxu0 0.0
        %8562 = vmatpush1.msra.mxu0 %v8485
        %8563 = vmatprep.subr.mxu0 0.0
        %8564 = vmatpush1.msra.mxu0 %v8486
        %8565 = vmatprep.subr.mxu0 0.0
        %8566 = vmatpush1.msra.mxu0 %v8487
        %8567 = vmatprep.subr.mxu0 0.0
        %8568 = vmatpush1.msra.mxu0 %v8488
        %8569 = vmatprep.subr.mxu0 0.0
        %8570 = vmatpush1.msra.mxu0 %v8489
        %8571 = vmatprep.subr.mxu0 0.0
        %8572 = vmatpush1.msra.mxu0 %v8490
        %8573 = vmatprep.mubr.f32.mxu0 %v8506
        %8574 = vmatmul.mubr.f32.gmra.mrb[0].mxu0 %v8505
        %v8575 = vpop.f32.mrb[0].mxu0
        %v8576 = vadd.f32 %v8496, %v8575
        %v8577 = vpop.f32.mrb[0].mxu0
        %8578 = vdwg.mxu0
        %v8579 = vtanh.pop %v8576
        %v8580 = vld [vmem:[#allocation39] sm:$0xff]
        %v8581 = vld [vmem:[#allocation39 + $0x8] sm:$0xff]
        %v8582 = vld [vmem:[#allocation39 + $0x10] sm:$0xff]
        %v8583 = vld [vmem:[#allocation39 + $0x18] sm:$0xff]
        %v8584 = vld [vmem:[#allocation39 + $0x20] sm:$0xff]
        %v8585 = vld [vmem:[#allocation39 + $0x28] sm:$0xff]
        %v8586 = vld [vmem:[#allocation39 + $0x30] sm:$0xff]
        %v8587 = vld [vmem:[#allocation39 + $0x38] sm:$0xff]
        %v8588 = vld [vmem:[#allocation39 + $0x40] sm:$0xff]
        %v8589 = vld [vmem:[#allocation39 + $0x48] sm:$0xff]
        %v8590 = vld [vmem:[#allocation39 + $0x50] sm:$0xff]
        %v8591 = vld [vmem:[#allocation39 + $0x58] sm:$0xff]
        %v8592 = vld [vmem:[#allocation39 + $0x60] sm:$0xff]
        %v8593 = vld [vmem:[#allocation39 + $0x68] sm:$0xff]
        %v8594 = vld [vmem:[#allocation39 + $0x70] sm:$0xff]
        %v8595 = vld [vmem:[#allocation39 + $0x78] sm:$0xff]
        %v8596 = vld [vmem:[#allocation41] sm:$0x1]
        %v8598 = vlaneseq
        %v8599 = vshrl.u32 %v8598, 7
        %v8600 = vsub.s32 0, %v8599
        %v8601 = vrot.slane %v8596, %v8600
        %8603 = vmatprep.subr.mxu0 0.0
        %8604 = vmatpush1.msra.mxu0 %v8580
        %8605 = vmatprep.subr.mxu0 0.0
        %8606 = vmatpush1.msra.mxu0 %v8581
        %8607 = vmatprep.subr.mxu0 0.0
        %8608 = vmatpush1.msra.mxu0 %v8582
        %8609 = vmatprep.subr.mxu0 0.0
        %8610 = vmatpush1.msra.mxu0 %v8583
        %8611 = vmatprep.subr.mxu0 0.0
        %8612 = vmatpush1.msra.mxu0 %v8584
        %8613 = vmatprep.subr.mxu0 0.0
        %8614 = vmatpush1.msra.mxu0 %v8585
        %8615 = vmatprep.subr.mxu0 0.0
        %8616 = vmatpush1.msra.mxu0 %v8586
        %8617 = vmatprep.subr.mxu0 0.0
        %8618 = vmatpush1.msra.mxu0 %v8587
        %8619 = vmatprep.subr.mxu0 0.0
        %8620 = vmatpush1.msra.mxu0 %v8588
        %8621 = vmatprep.subr.mxu0 0.0
        %8622 = vmatpush1.msra.mxu0 %v8589
        %8623 = vmatprep.subr.mxu0 0.0
        %8624 = vmatpush1.msra.mxu0 %v8590
        %8625 = vmatprep.subr.mxu0 0.0
        %8626 = vmatpush1.msra.mxu0 %v8591
        %8627 = vmatprep.subr.mxu0 0.0
        %8628 = vmatpush1.msra.mxu0 %v8592
        %8629 = vmatprep.subr.mxu0 0.0
        %8630 = vmatpush1.msra.mxu0 %v8593
        %8631 = vmatprep.subr.mxu0 0.0
        %8632 = vmatpush1.msra.mxu0 %v8594
        %8633 = vmatprep.subr.mxu0 0.0
        %8634 = vmatpush1.msra.mxu0 %v8595
        %8635 = vmatprep.subr.mxu0 0.0
        %8636 = vmatpush1.msra.mxu0 0.0
        %8637 = vmatprep.subr.mxu0 0.0
        %8638 = vmatpush1.msra.mxu0 0.0
        %8639 = vmatprep.subr.mxu0 0.0
        %8640 = vmatpush1.msra.mxu0 0.0
        %8641 = vmatprep.subr.mxu0 0.0
        %8642 = vmatpush1.msra.mxu0 0.0
        %8643 = vmatprep.subr.mxu0 0.0
        %8644 = vmatpush1.msra.mxu0 0.0
        %8645 = vmatprep.subr.mxu0 0.0
        %8646 = vmatpush1.msra.mxu0 0.0
        %8647 = vmatprep.subr.mxu0 0.0
        %8648 = vmatpush1.msra.mxu0 0.0
        %8649 = vmatprep.subr.mxu0 0.0
        %8650 = vmatpush1.msra.mxu0 0.0
        %8651 = vmatprep.subr.mxu0 0.0
        %8652 = vmatpush1.msra.mxu0 0.0
        %8653 = vmatprep.subr.mxu0 0.0
        %8654 = vmatpush1.msra.mxu0 0.0
        %8655 = vmatprep.subr.mxu0 0.0
        %8656 = vmatpush1.msra.mxu0 0.0
        %8657 = vmatprep.subr.mxu0 0.0
        %8658 = vmatpush1.msra.mxu0 0.0
        %8659 = vmatprep.subr.mxu0 0.0
        %8660 = vmatpush1.msra.mxu0 0.0
        %8661 = vmatprep.subr.mxu0 0.0
        %8662 = vmatpush1.msra.mxu0 0.0
        %8663 = vmatprep.subr.mxu0 0.0
        %8664 = vmatpush1.msra.mxu0 0.0
        %8665 = vmatprep.subr.mxu0 0.0
        %8666 = vmatpush1.msra.mxu0 0.0
        %8667 = vmatprep.mubr.f32.mxu0 0.0
        %8668 = vmatmul.mubr.f32.gmra.mrb[0].mxu0 %v8579
        %v8669 = vpop.f32.mrb[0].mxu0
        %v8670 = vadd.f32 %v8601, %v8669
        %v8671 = vpop.f32.mrb[0].mxu0
        %8672 = vdwg.mxu0
        %8673 = vst [vmem:[%s977] sm:$0x3] %v8670
        %s8674 = sand.u32 %s524, 1
        %s8675 = scalar_lea.sflag [#allocation11], %s8674
        %s8676 = sand.u32 %s524, 1
        %s8677 = smul.addr %s8676, 2
        %s8678 = scalar_lea.vmem [#allocation42], %s8677
        %s8679 = sand.u32 %s550, 1
        %s8680 = scalar_lea.sflag [#allocation44], %s8679
        %s8681 = sand.u32 %s550, 1
        %s8682 = smul.addr %s8681, 2
        %s8683 = scalar_lea.vmem [#allocation43], %s8682
        // Predicated region
        $region197: #{tpu_custom_call.1} parent=107 // pred_check
          %p8684 = pneg %p534
        $region198: #{tpu_custom_call.1} parent=107 // pred_check_branch
          %8686 = sbr.rel (%p8684) target = $region200
        $region199: #{tpu_custom_call.1} parent=107 // pred_region
          %s8688 = ssub.s32 32, 32
          %8689 = vsyncadd %s8675, %s8688
          %s8690 = smul.addr %s54, 32
          %s8691 = scalar_lea.hbm %s22, %s8690
          %s8693 = sshll.u32 %s8678, 4
          %s8694 = int_to_ptr.vmem [resolvable:$true] %s8693
          %8696 = dma.vmem_to_hbm [thread:$0]  %s8694, 32, %s8691, %s8675
        $region200: #{tpu_custom_call.1} parent=107 // pred_fallthru
          _
        // Predicated region
        $region201: #{tpu_custom_call.1} parent=107 // pred_check
          %p8697 = pneg %p560
        $region202: #{tpu_custom_call.1} parent=107 // pred_check_branch
          %8699 = sbr.rel (%p8697) target = $region204
        $region203: #{tpu_custom_call.1} parent=107 // pred_region
          %s8701 = ssub.s32 32, 32
          %8702 = vsyncadd %s8680, %s8701
          %s8703 = smul.addr %s54, 32
          %s8704 = scalar_lea.hbm %s23, %s8703
          %s8706 = sshll.u32 %s8683, 4
          %s8707 = int_to_ptr.vmem [resolvable:$true] %s8706
          %8709 = dma.vmem_to_hbm [thread:$0]  %s8707, 32, %s8704, %s8680
        $region204: #{tpu_custom_call.1} parent=107 // pred_fallthru
          _
      $region108: #{tpu_custom_call.1} parent=5 // pred_fallthru
        _
      %p8710 = scmp.le.s32.totalorder 2, %s49
      // Predicated region
      $region205: #{tpu_custom_call.1} parent=5 // pred_check
        %p8711 = pneg %p8710
      $region206: #{tpu_custom_call.1} parent=5 // pred_check_branch
        %8713 = sbr.rel (%p8711) target = $region208
      $region207: #{tpu_custom_call.1} parent=5 // pred_region
        %s8714 = ssub.s32 %s49, 2
        // Predicated region
        $region209: #{tpu_custom_call.1} parent=207 // pred_check
          %p8715 = pneg %p540
        $region210: #{tpu_custom_call.1} parent=207 // pred_check_branch
          %8717 = sbr.rel (%p8715) target = $region212
        $region211: #{tpu_custom_call.1} parent=207 // pred_region
          %s8718 = sand.u32 %s525, 1
          %s8719 = scalar_lea.sflag [#allocation11], %s8718
          %s8720 = sand.u32 %s525, 1
          %s8721 = smul.addr %s8720, 2
          %s8722 = scalar_lea.vmem [#allocation42], %s8721
          %8723 = dma.done %s8719, 32
        $region212: #{tpu_custom_call.1} parent=207 // pred_fallthru
          _
        // Predicated region
        $region213: #{tpu_custom_call.1} parent=207 // pred_check
          %p8724 = pneg %p566
        $region214: #{tpu_custom_call.1} parent=207 // pred_check_branch
          %8726 = sbr.rel (%p8724) target = $region216
        $region215: #{tpu_custom_call.1} parent=207 // pred_region
          %s8727 = sand.u32 %s551, 1
          %s8728 = scalar_lea.sflag [#allocation44], %s8727
          %s8729 = sand.u32 %s551, 1
          %s8730 = smul.addr %s8729, 2
          %s8731 = scalar_lea.vmem [#allocation43], %s8730
          %8732 = dma.done %s8728, 32
        $region216: #{tpu_custom_call.1} parent=207 // pred_fallthru
          _
      $region208: #{tpu_custom_call.1} parent=5 // pred_fallthru
        _
    $region6: #{tpu_custom_call.1} parent=1 // loop_footer
      %s53 = sadd.s32 1, %s49
    $region7: #{tpu_custom_call.1} parent=1 // loop_footer_branch
      %48 = sbr.rel target = $region3
    $region8: #{tpu_custom_call.1} parent=1 // loop_exit
      _
    %8733 = vsyncpa [#allocation10], 1
    %s8734 = scalar_lea.sflag [#allocation10], 1
    %8735 = vsyncpa %s8734, 1
    %8736 = vsyncpa [#allocation13], 1
    %8737 = vsyncpa [#allocation16], 1
    %8738 = vsyncpa [#allocation19], 1
    %8739 = vsyncpa [#allocation22], 1
    %8740 = vsyncpa [#allocation25], 1
    %8741 = vsyncpa [#allocation28], 1
    %8742 = vsyncpa [#allocation31], 1
    %8743 = vsyncpa [#allocation34], 1
    %8744 = vsyncpa [#allocation37], 1
    %8745 = vsyncpa [#allocation40], 1
    %8746 = vsyncpa [#allocation11], 1
    %s8747 = scalar_lea.sflag [#allocation11], 1
    %8748 = vsyncpa %s8747, 1
    %8749 = vsyncpa [#allocation44], 1
    %s8750 = scalar_lea.sflag [#allocation44], 1
    %8751 = vsyncpa %s8750, 1

</llo_original>
